<compile_context>
chip_gen: v7x
topology: tpu7x:2x2x1
jax: 0.10.0
libtpu: 0.0.40
codegen_flags: <defaults>
</compile_context>

<pallas_src>
import functools

import jax
import jax.numpy as jnp
from jax.experimental import pallas as pl
from jax.experimental.pallas import tpu as pltpu

HIDDEN = 32          # GRU hidden size (= embedding size, as in the tutorial)
VOCAB = 64           # output vocabulary size
N_LAYERS = 2         # decoder.n_layers (encoder uses the same, bidirectional)
SEQ_LEN = 8          # encoder input sequence length
MAX_LENGTH = 6       # greedy decode length
SOS_TOKEN = 1        # pp.SOS_token

_VMEM = pl.BlockSpec(memory_space=pltpu.MemorySpace.VMEM)

# ---- slab row offsets (shared by the packer and the kernel) ----
# slab B (cols = 3H): recurrent weights + decoder x-proj + embedding-folded x-proj
_B_W0FH = 0 * HIDDEN           # enc L0 fwd  W_hh^T
_B_W0BH = 1 * HIDDEN           # enc L0 bwd  W_hh^T
_B_W1FH = 2 * HIDDEN           # enc L1 fwd  W_hh^T
_B_W1BH = 3 * HIDDEN           # enc L1 bwd  W_hh^T
_B_WD0H = 4 * HIDDEN           # dec L0      W_hh^T
_B_WD1H = 5 * HIDDEN           # dec L1      W_hh^T
_B_WD1X = 6 * HIDDEN           # dec L1      W_ih^T
_B_EMBX = 7 * HIDDEN           # embedding @ dec L0 W_ih^T   (VOCAB rows)
# slab D (cols = VOCAB): output head / concat layer (32-wide pieces zero-padded)
_D_WO = 0                      # (VOCAB, VOCAB)  rows >= HIDDEN are zero
_D_WCR = VOCAB                 # (HIDDEN, VOCAB) cols >= HIDDEN are zero
_D_WCC = VOCAB + HIDDEN        # (HIDDEN, VOCAB) cols >= HIDDEN are zero
_D_BO = VOCAB + 2 * HIDDEN     # (1, VOCAB)
_D_BC = _D_BO + 1              # (1, VOCAB)      cols >= HIDDEN are zero


# ----------------------------------------------------------------------------- in-kernel GRU cell
def _gru_cell(gx, h, wh, b4):
    """PyTorch-semantics GRU cell.

    gx: (1, 3H) = x @ W_ih^T  (columns stacked [r|z|n] like torch, bias-free)
    h : (1, H)
    wh: (H, 3H) = W_hh^T
    b4: (1, 4H) = [b_ih_r + b_hh_r | b_ih_z + b_hh_z | b_ih_n | b_hh_n]
    """
    H = h.shape[1]
    gh = jnp.dot(h, wh, preferred_element_type=jnp.float32)
    rz = jax.nn.sigmoid(gx[:, :2 * H] + gh[:, :2 * H] + b4[:, :2 * H])
    r, z = rz[:, :H], rz[:, H:]
    n = jnp.tanh(gx[:, 2 * H:] + b4[:, 2 * H:3 * H] + r * (gh[:, 2 * H:] + b4[:, 3 * H:]))
    return (1.0 - z) * n + z * h


# ----------------------------------------------------------------------------- fused encoder + greedy-decode kernel
def _greedy_search_kernel(x_ref, wa_ref, wb_ref, wc_ref, wd_ref,
                          tok_ref, score_ref, *, max_length):
    H, S, V = HIDDEN, SEQ_LEN, VOCAB

    # ---------- unpack weight slabs (static slices, loaded once) ----------
    w0x = wa_ref[0:H, :]                               # (H, 6H)  enc L0 x-proj [fwd | bwd]
    w1xa = wa_ref[H:2 * H, :]                          # (H, 6H)  enc L1 x-proj, f0 part [fwd | bwd]
    w1xb = wa_ref[2 * H:3 * H, :]                      # (H, 6H)  enc L1 x-proj, b0 part [fwd | bwd]

    w0fh = wb_ref[_B_W0FH:_B_W0FH + H, :]
    w0bh = wb_ref[_B_W0BH:_B_W0BH + H, :]
    w1fh = wb_ref[_B_W1FH:_B_W1FH + H, :]
    w1bh = wb_ref[_B_W1BH:_B_W1BH + H, :]
    wd0h = wb_ref[_B_WD0H:_B_WD0H + H, :]
    wd1h = wb_ref[_B_WD1H:_B_WD1H + H, :]
    wd1x = wb_ref[_B_WD1X:_B_WD1X + H, :]
    embx = wb_ref[_B_EMBX:_B_EMBX + V, :]              # (V, 3H) = embedding @ dec L0 W_ih^T

    b0f = wc_ref[0:1, :]
    b0b = wc_ref[1:2, :]
    b1f = wc_ref[2:3, :]
    b1b = wc_ref[3:4, :]
    bd0 = wc_ref[4:5, :]
    bd1 = wc_ref[5:6, :]

    wo = wd_ref[_D_WO:_D_WO + V, :]                    # (V, V)  only first H rows nonzero
    wcr = wd_ref[_D_WCR:_D_WCR + H, :]                 # (H, V)  cols >= H are zero
    wcc = wd_ref[_D_WCC:_D_WCC + H, :]                 # (H, V)  cols >= H are zero
    bo = wd_ref[_D_BO:_D_BO + 1, :]                    # (1, V)
    bc = wd_ref[_D_BC:_D_BC + 1, :]                    # (1, V)  cols >= H are zero

    # ==================== encoder: 2-layer bidirectional GRU ====================
    x = x_ref[...]                                     # (S, H) embedded inputs, read once
    row_iota = jax.lax.broadcasted_iota(jnp.int32, (S, H), 0)

    def run_bidir_layer(gx_all, wfh, wbh, bf, bb):
        """Interleaved fwd/bwd recurrence. gx_all: (S, 6H) = [fwd 0:3H | bwd 3H:6H]."""
        gxf = gx_all[:, :3 * H]
        gxb = gx_all[:, 3 * H:]
        hf = jnp.zeros((1, H), jnp.float32)
        hb = jnp.zeros((1, H), jnp.float32)
        outf = jnp.zeros((S, H), jnp.float32)
        outb = jnp.zeros((S, H), jnp.float32)
        for s in range(S):
            tf, tb = s, S - 1 - s
            hf = _gru_cell(gxf[tf:tf + 1, :], hf, wfh, bf)
            hb = _gru_cell(gxb[tb:tb + 1, :], hb, wbh, bb)
            outf = jnp.where(row_iota == tf, hf, outf)
            outb = jnp.where(row_iota == tb, hb, outb)
        return outf, outb, hf, hb

    # layer 0: one batched x-projection for all timesteps and both directions
    gx0 = jnp.dot(x, w0x, preferred_element_type=jnp.float32)                 # (S, 6H)
    out0f, out0b, h0f, h0b = run_bidir_layer(gx0, w0fh, w0bh, b0f, b0b)

    # layer 1: input = [f0 | b0]; x-projection batched over all timesteps
    gx1 = (jnp.dot(out0f, w1xa, preferred_element_type=jnp.float32)
           + jnp.dot(out0b, w1xb, preferred_element_type=jnp.float32))        # (S, 6H)
    out1f, out1b, _, _ = run_bidir_layer(gx1, w1fh, w1bh, b1f, b1b)

    enc = out1f + out1b                                                       # (S, H) encoder outputs
    enc_t = enc.T                                                             # (H, S)  once per call
    enc_wcc = jnp.dot(enc, wcc, preferred_element_type=jnp.float32)           # (S, V)  pre-projected context path

    # ==================== greedy decode (token feedback stays on-chip) ====================
    # decoder_hidden = encoder_hidden[:n_layers]  ->  [enc L0 fwd, enc L0 bwd] final hiddens
    h_d = [h0f, h0b]
    lane_v = jax.lax.broadcasted_iota(jnp.int32, (1, V), 1)
    lane_t = jax.lax.broadcasted_iota(jnp.int32, (1, max_length), 1)

    onehot = (lane_v == SOS_TOKEN).astype(jnp.float32)                        # current input token
    toks = jnp.zeros((1, max_length), jnp.int32)
    scores = jnp.zeros((1, max_length), jnp.float32)

    for step in range(max_length):
        # embedding lookup folded into decoder layer-0 input projection (dropout is eval no-op)
        gxd0 = jnp.dot(onehot, embx, preferred_element_type=jnp.float32)      # (1, 3H)
        h_d[0] = _gru_cell(gxd0, h_d[0], wd0h, bd0)
        gxd1 = jnp.dot(h_d[0], wd1x, preferred_element_type=jnp.float32)
        h_d[1] = _gru_cell(gxd1, h_d[1], wd1h, bd1)
        rnn_out = h_d[1]                                                      # (1, H)

        # issued right after the GRU so it overlaps the attention chain
        rnn_proj = jnp.dot(rnn_out, wcr, preferred_element_type=jnp.float32)  # (1, V), pad lanes = 0

        # Luong dot attention over source positions
        energies = jnp.dot(rnn_out, enc_t, preferred_element_type=jnp.float32)  # (1, S)
        attn = jax.nn.softmax(energies, axis=1)
        ctx_proj = jnp.dot(attn, enc_wcc, preferred_element_type=jnp.float32)   # (1, V), pad lanes = 0

        # concat([rnn, context]) @ Wc^T + bc == rnn@Wcr + (attn@enc)@Wcc + bc ; pad lanes tanh(0)=0
        concat_out = jnp.tanh(rnn_proj + ctx_proj + bc)                         # (1, V)
        logits = jnp.dot(concat_out, wo, preferred_element_type=jnp.float32) + bo  # (1, V)

        # argmax(softmax) == argmax(logits); max softmax prob = 1 / sum(exp(l - max))
        max_logit = jnp.max(logits, axis=1, keepdims=True)
        score = 1.0 / jnp.sum(jnp.exp(logits - max_logit), axis=1, keepdims=True)
        tok = jnp.min(jnp.where(logits == max_logit, lane_v, V),
                      axis=1, keepdims=True)             # first index at max (torch.max tie-break)

        toks = jnp.where(lane_t == step, tok, toks)
        scores = jnp.where(lane_t == step, score, scores)
        onehot = (lane_v == tok).astype(jnp.float32)      # greedy token feedback, on-chip

    tok_ref[...] = toks
    score_ref[...] = scores


# ----------------------------------------------------------------------------- driver (plain JAX)
@functools.partial(jax.jit, static_argnums=(3,))
def greedy_search(params, input_seq, input_length, max_length):
    """Pallas/JAX equivalent of GreedySearchDecoder.forward."""
    # TODO(synk): pack_padded_sequence is a no-op at batch=1 with full-length input_length,
    # so masking by input_length (< SEQ_LEN) is not modeled here.
    del input_length
    x_seq = params['embedding'][input_seq]               # (S, H) encoder embedding gather (runs once)
    tok_row, score_row = pl.pallas_call(
        functools.partial(_greedy_search_kernel, max_length=max_length),
        in_specs=[_VMEM] * 5,
        out_specs=(_VMEM, _VMEM),
        out_shape=(jax.ShapeDtypeStruct((1, max_length), jnp.int32),
                   jax.ShapeDtypeStruct((1, max_length), jnp.float32)),
    )(x_seq, params['slab_a'], params['slab_b'], params['slab_c'], params['slab_d'])
    return tok_row[0], score_row[0]


# ----------------------------------------------------------------------------- parameter init / packing
def _u(key, shape):
    return jax.random.uniform(key, shape, jnp.float32, -0.1, 0.1)


def init_params(key):
    """Torch-layout parameters (weights already transposed to (in, out))."""
    keys = iter(jax.random.split(key, 64))
    params = {'embedding': _u(next(keys), (VOCAB, HIDDEN))}

    enc = []
    for l in range(N_LAYERS):
        h_in = HIDDEN if l == 0 else 2 * HIDDEN           # bidirectional stacking
        layer = {}
        for d in ('fwd', 'bwd'):
            layer[d] = dict(
                w_ih=_u(next(keys), (h_in, 3 * HIDDEN)),
                w_hh=_u(next(keys), (HIDDEN, 3 * HIDDEN)),
                b_ih=_u(next(keys), (1, 3 * HIDDEN)),
                b_hh=_u(next(keys), (1, 3 * HIDDEN)),
            )
        enc.append(layer)
    params['enc'] = enc

    dec = []
    for _ in range(N_LAYERS):
        dec.append(dict(
            w_ih=_u(next(keys), (HIDDEN, 3 * HIDDEN)),
            w_hh=_u(next(keys), (HIDDEN, 3 * HIDDEN)),
            b_ih=_u(next(keys), (1, 3 * HIDDEN)),
            b_hh=_u(next(keys), (1, 3 * HIDDEN)),
        ))
    params['dec'] = dec

    params['w_concat_r'] = _u(next(keys), (HIDDEN, HIDDEN))   # rnn_output half of concat W^T
    params['w_concat_c'] = _u(next(keys), (HIDDEN, HIDDEN))   # context half of concat W^T
    params['b_concat'] = _u(next(keys), (1, HIDDEN))
    params['w_out'] = _u(next(keys), (HIDDEN, VOCAB))
    params['b_out'] = _u(next(keys), (1, VOCAB))
    return params


def _fuse_bias(b_ih, b_hh):
    """[b_r(ih+hh) | b_z(ih+hh) | b_ih_n | b_hh_n] — n-gate biases kept separate for r*h_n term."""
    H = HIDDEN
    return jnp.concatenate([b_ih[:, :2 * H] + b_hh[:, :2 * H],
                            b_ih[:, 2 * H:],
                            b_hh[:, 2 * H:]], axis=1)          # (1, 4H)


def pack_params(params):
    """Host-side packing into 4 VMEM slabs (semantics identical to the torch layout)."""
    H, V = HIDDEN, VOCAB
    enc, dec = params['enc'], params['dec']

    # slab A (3H, 6H): column-concatenated [fwd | bwd] input projections
    w0x = jnp.concatenate([enc[0]['fwd']['w_ih'], enc[0]['bwd']['w_ih']], axis=1)
    w1xa = jnp.concatenate([enc[1]['fwd']['w_ih'][:H], enc[1]['bwd']['w_ih'][:H]], axis=1)
    w1xb = jnp.concatenate([enc[1]['fwd']['w_ih'][H:], enc[1]['bwd']['w_ih'][H:]], axis=1)
    slab_a = jnp.concatenate([w0x, w1xa, w1xb], axis=0)

    # slab B (7H + V, 3H): recurrent weights, dec x-proj, embedding folded into dec L0 x-proj
    emb_x = jnp.dot(params['embedding'], dec[0]['w_ih'])        # (V, 3H)
    slab_b = jnp.concatenate([
        enc[0]['fwd']['w_hh'], enc[0]['bwd']['w_hh'],
        enc[1]['fwd']['w_hh'], enc[1]['bwd']['w_hh'],
        dec[0]['w_hh'], dec[1]['w_hh'], dec[1]['w_ih'], emb_x], axis=0)

    # slab C (8, 4H): fused GRU bias rows
    slab_c = jnp.concatenate([
        _fuse_bias(enc[0]['fwd']['b_ih'], enc[0]['fwd']['b_hh']),
        _fuse_bias(enc[0]['bwd']['b_ih'], enc[0]['bwd']['b_hh']),
        _fuse_bias(enc[1]['fwd']['b_ih'], enc[1]['fwd']['b_hh']),
        _fuse_bias(enc[1]['bwd']['b_ih'], enc[1]['bwd']['b_hh']),
        _fuse_bias(dec[0]['b_ih'], dec[0]['b_hh']),
        _fuse_bias(dec[1]['b_ih'], dec[1]['b_hh']),
        jnp.zeros((2, 4 * H), jnp.float32)], axis=0)

    # slab D (V + 2H + 2, V): output head / concat halves, zero-padded to V lanes so the kernel
    # never lane-slices (padded lanes carry exact zeros through tanh and the output matmul).
    def pad_v(a):
        return jnp.pad(a, ((0, 0), (0, V - a.shape[1])))
    wo_pad = jnp.concatenate([params['w_out'], jnp.zeros((V - H, V), jnp.float32)], axis=0)
    slab_d = jnp.concatenate([
        wo_pad,
        pad_v(params['w_concat_r']),
        pad_v(params['w_concat_c']),
        params['b_out'],
        pad_v(params['b_concat'])], axis=0)

    return {'embedding': params['embedding'],
            'slab_a': slab_a, 'slab_b': slab_b, 'slab_c': slab_c, 'slab_d': slab_d}


if __name__ == "__main__":
    key = jax.random.PRNGKey(0)
    pkey, skey = jax.random.split(key)
    params = pack_params(init_params(pkey))

    input_seq = jax.random.randint(skey, (SEQ_LEN,), 0, VOCAB, dtype=jnp.int32)
    input_length = jnp.array([SEQ_LEN], dtype=jnp.int32)

    all_tokens, all_scores = greedy_search(params, input_seq, input_length, MAX_LENGTH)
    jax.block_until_ready((all_tokens, all_scores))

    assert all_tokens.shape == (MAX_LENGTH,) and all_tokens.dtype == jnp.int32
    assert all_scores.shape == (MAX_LENGTH,) and all_scores.dtype == jnp.float32
    assert bool(jnp.all((all_scores > 0.0) & (all_scores <= 1.0)))
    assert bool(jnp.all((all_tokens >= 0) & (all_tokens < VOCAB)))
    print("KERNEL_OK")
</pallas_src>

<mosaic_0001>
module attributes {stable_mosaic.version = 11 : i64} {
  func.func @_greedy_search_kernel(%arg0: memref<8x32xf32, #tpu.memory_space<vmem>>, %arg1: memref<96x192xf32, #tpu.memory_space<vmem>>, %arg2: memref<288x96xf32, #tpu.memory_space<vmem>>, %arg3: memref<8x128xf32, #tpu.memory_space<vmem>>, %arg4: memref<130x64xf32, #tpu.memory_space<vmem>>, %arg5: memref<1x6xi32, #tpu.memory_space<vmem>>, %arg6: memref<1x6xf32, #tpu.memory_space<vmem>>) attributes {dimension_semantics = [], scalar_prefetch = 0 : i64, scratch_operands = 0 : i64, tpu.core_type = #tpu.core_type<tc>} {
    %c0 = arith.constant 0 : index
    %c0_0 = arith.constant 0 : index
    %0 = vector.load %arg1[%c0, %c0_0] : memref<96x192xf32, #tpu.memory_space<vmem>>, vector<32x192xf32>
    %c32 = arith.constant 32 : index
    %c0_1 = arith.constant 0 : index
    %1 = vector.load %arg1[%c32, %c0_1] : memref<96x192xf32, #tpu.memory_space<vmem>>, vector<32x192xf32>
    %c64 = arith.constant 64 : index
    %c0_2 = arith.constant 0 : index
    %2 = vector.load %arg1[%c64, %c0_2] : memref<96x192xf32, #tpu.memory_space<vmem>>, vector<32x192xf32>
    %c0_3 = arith.constant 0 : index
    %c0_4 = arith.constant 0 : index
    %3 = vector.load %arg2[%c0_3, %c0_4] : memref<288x96xf32, #tpu.memory_space<vmem>>, vector<32x96xf32>
    %c32_5 = arith.constant 32 : index
    %c0_6 = arith.constant 0 : index
    %4 = vector.load %arg2[%c32_5, %c0_6] : memref<288x96xf32, #tpu.memory_space<vmem>>, vector<32x96xf32>
    %c64_7 = arith.constant 64 : index
    %c0_8 = arith.constant 0 : index
    %5 = vector.load %arg2[%c64_7, %c0_8] : memref<288x96xf32, #tpu.memory_space<vmem>>, vector<32x96xf32>
    %c96 = arith.constant 96 : index
    %c0_9 = arith.constant 0 : index
    %6 = vector.load %arg2[%c96, %c0_9] : memref<288x96xf32, #tpu.memory_space<vmem>>, vector<32x96xf32>
    %c128 = arith.constant 128 : index
    %c0_10 = arith.constant 0 : index
    %7 = vector.load %arg2[%c128, %c0_10] : memref<288x96xf32, #tpu.memory_space<vmem>>, vector<32x96xf32>
    %c160 = arith.constant 160 : index
    %c0_11 = arith.constant 0 : index
    %8 = vector.load %arg2[%c160, %c0_11] : memref<288x96xf32, #tpu.memory_space<vmem>>, vector<32x96xf32>
    %c192 = arith.constant 192 : index
    %c0_12 = arith.constant 0 : index
    %9 = vector.load %arg2[%c192, %c0_12] : memref<288x96xf32, #tpu.memory_space<vmem>>, vector<32x96xf32>
    %c224 = arith.constant 224 : index
    %c0_13 = arith.constant 0 : index
    %10 = vector.load %arg2[%c224, %c0_13] : memref<288x96xf32, #tpu.memory_space<vmem>>, vector<64x96xf32>
    %c0_14 = arith.constant 0 : index
    %c0_15 = arith.constant 0 : index
    %11 = vector.load %arg3[%c0_14, %c0_15] : memref<8x128xf32, #tpu.memory_space<vmem>>, vector<1x128xf32>
    %c1 = arith.constant 1 : index
    %c0_16 = arith.constant 0 : index
    %12 = vector.load %arg3[%c1, %c0_16] : memref<8x128xf32, #tpu.memory_space<vmem>>, vector<1x128xf32>
    %c2 = arith.constant 2 : index
    %c0_17 = arith.constant 0 : index
    %13 = vector.load %arg3[%c2, %c0_17] : memref<8x128xf32, #tpu.memory_space<vmem>>, vector<1x128xf32>
    %c3 = arith.constant 3 : index
    %c0_18 = arith.constant 0 : index
    %14 = vector.load %arg3[%c3, %c0_18] : memref<8x128xf32, #tpu.memory_space<vmem>>, vector<1x128xf32>
    %c4 = arith.constant 4 : index
    %c0_19 = arith.constant 0 : index
    %15 = vector.load %arg3[%c4, %c0_19] : memref<8x128xf32, #tpu.memory_space<vmem>>, vector<1x128xf32>
    %c5 = arith.constant 5 : index
    %c0_20 = arith.constant 0 : index
    %16 = vector.load %arg3[%c5, %c0_20] : memref<8x128xf32, #tpu.memory_space<vmem>>, vector<1x128xf32>
    %c0_21 = arith.constant 0 : index
    %c0_22 = arith.constant 0 : index
    %17 = vector.load %arg4[%c0_21, %c0_22] : memref<130x64xf32, #tpu.memory_space<vmem>>, vector<64x64xf32>
    %c64_23 = arith.constant 64 : index
    %c0_24 = arith.constant 0 : index
    %18 = vector.load %arg4[%c64_23, %c0_24] : memref<130x64xf32, #tpu.memory_space<vmem>>, vector<32x64xf32>
    %c96_25 = arith.constant 96 : index
    %c0_26 = arith.constant 0 : index
    %19 = vector.load %arg4[%c96_25, %c0_26] : memref<130x64xf32, #tpu.memory_space<vmem>>, vector<32x64xf32>
    %c128_27 = arith.constant 128 : index
    %c0_28 = arith.constant 0 : index
    %20 = vector.load %arg4[%c128_27, %c0_28] : memref<130x64xf32, #tpu.memory_space<vmem>>, vector<1x64xf32>
    %c129 = arith.constant 129 : index
    %c0_29 = arith.constant 0 : index
    %21 = vector.load %arg4[%c129, %c0_29] : memref<130x64xf32, #tpu.memory_space<vmem>>, vector<1x64xf32>
    %c0_30 = arith.constant 0 : index
    %c0_31 = arith.constant 0 : index
    %22 = vector.load %arg0[%c0_30, %c0_31] : memref<8x32xf32, #tpu.memory_space<vmem>>, vector<8x32xf32>
    %23 = tpu.iota {dimensions = array<i32: 0>} : vector<8x32xi32>
    %cst = arith.constant dense<0.000000e+00> : vector<8x192xf32>
    %24 = tpu.matmul %22, %0, %cst {dimension_numbers = #tpu.dot_dimension_numbers<[1], [0], [0], [1], [0, 0, 1, 1], [], []>} : vector<8x32xf32>, vector<32x192xf32>, vector<8x192xf32> -> vector<8x192xf32>
    %25 = vector.extract_strided_slice %24 {offsets = [0, 0], sizes = [8, 96], strides = [1, 1]} : vector<8x192xf32> to vector<8x96xf32>
    %26 = vector.extract_strided_slice %24 {offsets = [0, 96], sizes = [8, 96], strides = [1, 1]} : vector<8x192xf32> to vector<8x96xf32>
    %cst_32 = arith.constant 0.000000e+00 : f32
    %27 = vector.broadcast %cst_32 : f32 to vector<1x32xf32>
    %cst_33 = arith.constant 0.000000e+00 : f32
    %28 = vector.broadcast %cst_33 : f32 to vector<1x32xf32>
    %cst_34 = arith.constant 0.000000e+00 : f32
    %29 = vector.broadcast %cst_34 : f32 to vector<8x32xf32>
    %cst_35 = arith.constant 0.000000e+00 : f32
    %30 = vector.broadcast %cst_35 : f32 to vector<8x32xf32>
    %31 = vector.extract_strided_slice %25 {offsets = [0, 0], sizes = [1, 96], strides = [1, 1]} : vector<8x96xf32> to vector<1x96xf32>
    %cst_36 = arith.constant dense<0.000000e+00> : vector<1x96xf32>
    %32 = tpu.matmul %27, %3, %cst_36 {dimension_numbers = #tpu.dot_dimension_numbers<[1], [0], [0], [1], [0, 0, 1, 1], [], []>} : vector<1x32xf32>, vector<32x96xf32>, vector<1x96xf32> -> vector<1x96xf32>
    %33 = vector.extract_strided_slice %31 {offsets = [0, 0], sizes = [1, 64], strides = [1, 1]} : vector<1x96xf32> to vector<1x64xf32>
    %34 = vector.extract_strided_slice %32 {offsets = [0, 0], sizes = [1, 64], strides = [1, 1]} : vector<1x96xf32> to vector<1x64xf32>
    %35 = arith.addf %33, %34 : vector<1x64xf32>
    %36 = vector.extract_strided_slice %11 {offsets = [0, 0], sizes = [1, 64], strides = [1, 1]} : vector<1x128xf32> to vector<1x64xf32>
    %37 = arith.addf %35, %36 : vector<1x64xf32>
    %38 = arith.negf %37 : vector<1x64xf32>
    %39 = math.exp %38 : vector<1x64xf32>
    %cst_37 = arith.constant 1.000000e+00 : f32
    %40 = vector.broadcast %cst_37 : f32 to vector<1x64xf32>
    %41 = arith.addf %40, %39 : vector<1x64xf32>
    %42 = arith.divf %40, %41 : vector<1x64xf32>
    %43 = vector.extract_strided_slice %42 {offsets = [0, 0], sizes = [1, 32], strides = [1, 1]} : vector<1x64xf32> to vector<1x32xf32>
    %44 = vector.extract_strided_slice %42 {offsets = [0, 32], sizes = [1, 32], strides = [1, 1]} : vector<1x64xf32> to vector<1x32xf32>
    %45 = vector.extract_strided_slice %31 {offsets = [0, 64], sizes = [1, 32], strides = [1, 1]} : vector<1x96xf32> to vector<1x32xf32>
    %46 = vector.extract_strided_slice %11 {offsets = [0, 64], sizes = [1, 32], strides = [1, 1]} : vector<1x128xf32> to vector<1x32xf32>
    %47 = arith.addf %45, %46 : vector<1x32xf32>
    %48 = vector.extract_strided_slice %32 {offsets = [0, 64], sizes = [1, 32], strides = [1, 1]} : vector<1x96xf32> to vector<1x32xf32>
    %49 = vector.extract_strided_slice %11 {offsets = [0, 96], sizes = [1, 32], strides = [1, 1]} : vector<1x128xf32> to vector<1x32xf32>
    %50 = arith.addf %48, %49 : vector<1x32xf32>
    %51 = arith.mulf %43, %50 : vector<1x32xf32>
    %52 = arith.addf %47, %51 : vector<1x32xf32>
    %53 = math.tanh %52 : vector<1x32xf32>
    %cst_38 = arith.constant 1.000000e+00 : f32
    %54 = vector.broadcast %cst_38 : f32 to vector<1x32xf32>
    %55 = arith.subf %54, %44 : vector<1x32xf32>
    %56 = arith.mulf %55, %53 : vector<1x32xf32>
    %57 = arith.mulf %44, %27 : vector<1x32xf32>
    %58 = arith.addf %56, %57 : vector<1x32xf32>
    %59 = vector.extract_strided_slice %26 {offsets = [7, 0], sizes = [1, 96], strides = [1, 1]} : vector<8x96xf32> to vector<1x96xf32>
    %cst_39 = arith.constant dense<0.000000e+00> : vector<1x96xf32>
    %60 = tpu.matmul %28, %4, %cst_39 {dimension_numbers = #tpu.dot_dimension_numbers<[1], [0], [0], [1], [0, 0, 1, 1], [], []>} : vector<1x32xf32>, vector<32x96xf32>, vector<1x96xf32> -> vector<1x96xf32>
    %61 = vector.extract_strided_slice %59 {offsets = [0, 0], sizes = [1, 64], strides = [1, 1]} : vector<1x96xf32> to vector<1x64xf32>
    %62 = vector.extract_strided_slice %60 {offsets = [0, 0], sizes = [1, 64], strides = [1, 1]} : vector<1x96xf32> to vector<1x64xf32>
    %63 = arith.addf %61, %62 : vector<1x64xf32>
    %64 = vector.extract_strided_slice %12 {offsets = [0, 0], sizes = [1, 64], strides = [1, 1]} : vector<1x128xf32> to vector<1x64xf32>
    %65 = arith.addf %63, %64 : vector<1x64xf32>
    %66 = arith.negf %65 : vector<1x64xf32>
    %67 = math.exp %66 : vector<1x64xf32>
    %cst_40 = arith.constant 1.000000e+00 : f32
    %68 = vector.broadcast %cst_40 : f32 to vector<1x64xf32>
    %69 = arith.addf %68, %67 : vector<1x64xf32>
    %70 = arith.divf %68, %69 : vector<1x64xf32>
    %71 = vector.extract_strided_slice %70 {offsets = [0, 0], sizes = [1, 32], strides = [1, 1]} : vector<1x64xf32> to vector<1x32xf32>
    %72 = vector.extract_strided_slice %70 {offsets = [0, 32], sizes = [1, 32], strides = [1, 1]} : vector<1x64xf32> to vector<1x32xf32>
    %73 = vector.extract_strided_slice %59 {offsets = [0, 64], sizes = [1, 32], strides = [1, 1]} : vector<1x96xf32> to vector<1x32xf32>
    %74 = vector.extract_strided_slice %12 {offsets = [0, 64], sizes = [1, 32], strides = [1, 1]} : vector<1x128xf32> to vector<1x32xf32>
    %75 = arith.addf %73, %74 : vector<1x32xf32>
    %76 = vector.extract_strided_slice %60 {offsets = [0, 64], sizes = [1, 32], strides = [1, 1]} : vector<1x96xf32> to vector<1x32xf32>
    %77 = vector.extract_strided_slice %12 {offsets = [0, 96], sizes = [1, 32], strides = [1, 1]} : vector<1x128xf32> to vector<1x32xf32>
    %78 = arith.addf %76, %77 : vector<1x32xf32>
    %79 = arith.mulf %71, %78 : vector<1x32xf32>
    %80 = arith.addf %75, %79 : vector<1x32xf32>
    %81 = math.tanh %80 : vector<1x32xf32>
    %cst_41 = arith.constant 1.000000e+00 : f32
    %82 = vector.broadcast %cst_41 : f32 to vector<1x32xf32>
    %83 = arith.subf %82, %72 : vector<1x32xf32>
    %84 = arith.mulf %83, %81 : vector<1x32xf32>
    %85 = arith.mulf %72, %28 : vector<1x32xf32>
    %86 = arith.addf %84, %85 : vector<1x32xf32>
    %c0_i32 = arith.constant 0 : i32
    %87 = vector.broadcast %c0_i32 : i32 to vector<8x32xi32>
    %88 = arith.cmpi eq, %23, %87 : vector<8x32xi32>
    %89 = vector.shape_cast %58 : vector<1x32xf32> to vector<1x32xf32>
    %90 = vector.broadcast %89 : vector<1x32xf32> to vector<8x32xf32>
    %91 = arith.select %88, %90, %29 : vector<8x32xi1>, vector<8x32xf32>
    %c7_i32 = arith.constant 7 : i32
    %92 = vector.broadcast %c7_i32 : i32 to vector<8x32xi32>
    %93 = arith.cmpi eq, %23, %92 : vector<8x32xi32>
    %94 = vector.shape_cast %86 : vector<1x32xf32> to vector<1x32xf32>
    %95 = vector.broadcast %94 : vector<1x32xf32> to vector<8x32xf32>
    %96 = arith.select %93, %95, %30 : vector<8x32xi1>, vector<8x32xf32>
    %97 = vector.extract_strided_slice %25 {offsets = [1, 0], sizes = [1, 96], strides = [1, 1]} : vector<8x96xf32> to vector<1x96xf32>
    %cst_42 = arith.constant dense<0.000000e+00> : vector<1x96xf32>
    %98 = tpu.matmul %58, %3, %cst_42 {dimension_numbers = #tpu.dot_dimension_numbers<[1], [0], [0], [1], [0, 0, 1, 1], [], []>} : vector<1x32xf32>, vector<32x96xf32>, vector<1x96xf32> -> vector<1x96xf32>
    %99 = vector.extract_strided_slice %97 {offsets = [0, 0], sizes = [1, 64], strides = [1, 1]} : vector<1x96xf32> to vector<1x64xf32>
    %100 = vector.extract_strided_slice %98 {offsets = [0, 0], sizes = [1, 64], strides = [1, 1]} : vector<1x96xf32> to vector<1x64xf32>
    %101 = arith.addf %99, %100 : vector<1x64xf32>
    %102 = vector.extract_strided_slice %11 {offsets = [0, 0], sizes = [1, 64], strides = [1, 1]} : vector<1x128xf32> to vector<1x64xf32>
    %103 = arith.addf %101, %102 : vector<1x64xf32>
    %104 = arith.negf %103 : vector<1x64xf32>
    %105 = math.exp %104 : vector<1x64xf32>
    %cst_43 = arith.constant 1.000000e+00 : f32
    %106 = vector.broadcast %cst_43 : f32 to vector<1x64xf32>
    %107 = arith.addf %106, %105 : vector<1x64xf32>
    %108 = arith.divf %106, %107 : vector<1x64xf32>
    %109 = vector.extract_strided_slice %108 {offsets = [0, 0], sizes = [1, 32], strides = [1, 1]} : vector<1x64xf32> to vector<1x32xf32>
    %110 = vector.extract_strided_slice %108 {offsets = [0, 32], sizes = [1, 32], strides = [1, 1]} : vector<1x64xf32> to vector<1x32xf32>
    %111 = vector.extract_strided_slice %97 {offsets = [0, 64], sizes = [1, 32], strides = [1, 1]} : vector<1x96xf32> to vector<1x32xf32>
    %112 = vector.extract_strided_slice %11 {offsets = [0, 64], sizes = [1, 32], strides = [1, 1]} : vector<1x128xf32> to vector<1x32xf32>
    %113 = arith.addf %111, %112 : vector<1x32xf32>
    %114 = vector.extract_strided_slice %98 {offsets = [0, 64], sizes = [1, 32], strides = [1, 1]} : vector<1x96xf32> to vector<1x32xf32>
    %115 = vector.extract_strided_slice %11 {offsets = [0, 96], sizes = [1, 32], strides = [1, 1]} : vector<1x128xf32> to vector<1x32xf32>
    %116 = arith.addf %114, %115 : vector<1x32xf32>
    %117 = arith.mulf %109, %116 : vector<1x32xf32>
    %118 = arith.addf %113, %117 : vector<1x32xf32>
    %119 = math.tanh %118 : vector<1x32xf32>
    %cst_44 = arith.constant 1.000000e+00 : f32
    %120 = vector.broadcast %cst_44 : f32 to vector<1x32xf32>
    %121 = arith.subf %120, %110 : vector<1x32xf32>
    %122 = arith.mulf %121, %119 : vector<1x32xf32>
    %123 = arith.mulf %110, %58 : vector<1x32xf32>
    %124 = arith.addf %122, %123 : vector<1x32xf32>
    %125 = vector.extract_strided_slice %26 {offsets = [6, 0], sizes = [1, 96], strides = [1, 1]} : vector<8x96xf32> to vector<1x96xf32>
    %cst_45 = arith.constant dense<0.000000e+00> : vector<1x96xf32>
    %126 = tpu.matmul %86, %4, %cst_45 {dimension_numbers = #tpu.dot_dimension_numbers<[1], [0], [0], [1], [0, 0, 1, 1], [], []>} : vector<1x32xf32>, vector<32x96xf32>, vector<1x96xf32> -> vector<1x96xf32>
    %127 = vector.extract_strided_slice %125 {offsets = [0, 0], sizes = [1, 64], strides = [1, 1]} : vector<1x96xf32> to vector<1x64xf32>
    %128 = vector.extract_strided_slice %126 {offsets = [0, 0], sizes = [1, 64], strides = [1, 1]} : vector<1x96xf32> to vector<1x64xf32>
    %129 = arith.addf %127, %128 : vector<1x64xf32>
    %130 = vector.extract_strided_slice %12 {offsets = [0, 0], sizes = [1, 64], strides = [1, 1]} : vector<1x128xf32> to vector<1x64xf32>
    %131 = arith.addf %129, %130 : vector<1x64xf32>
    %132 = arith.negf %131 : vector<1x64xf32>
    %133 = math.exp %132 : vector<1x64xf32>
    %cst_46 = arith.constant 1.000000e+00 : f32
    %134 = vector.broadcast %cst_46 : f32 to vector<1x64xf32>
    %135 = arith.addf %134, %133 : vector<1x64xf32>
    %136 = arith.divf %134, %135 : vector<1x64xf32>
    %137 = vector.extract_strided_slice %136 {offsets = [0, 0], sizes = [1, 32], strides = [1, 1]} : vector<1x64xf32> to vector<1x32xf32>
    %138 = vector.extract_strided_slice %136 {offsets = [0, 32], sizes = [1, 32], strides = [1, 1]} : vector<1x64xf32> to vector<1x32xf32>
    %139 = vector.extract_strided_slice %125 {offsets = [0, 64], sizes = [1, 32], strides = [1, 1]} : vector<1x96xf32> to vector<1x32xf32>
    %140 = vector.extract_strided_slice %12 {offsets = [0, 64], sizes = [1, 32], strides = [1, 1]} : vector<1x128xf32> to vector<1x32xf32>
    %141 = arith.addf %139, %140 : vector<1x32xf32>
    %142 = vector.extract_strided_slice %126 {offsets = [0, 64], sizes = [1, 32], strides = [1, 1]} : vector<1x96xf32> to vector<1x32xf32>
    %143 = vector.extract_strided_slice %12 {offsets = [0, 96], sizes = [1, 32], strides = [1, 1]} : vector<1x128xf32> to vector<1x32xf32>
    %144 = arith.addf %142, %143 : vector<1x32xf32>
    %145 = arith.mulf %137, %144 : vector<1x32xf32>
    %146 = arith.addf %141, %145 : vector<1x32xf32>
    %147 = math.tanh %146 : vector<1x32xf32>
    %cst_47 = arith.constant 1.000000e+00 : f32
    %148 = vector.broadcast %cst_47 : f32 to vector<1x32xf32>
    %149 = arith.subf %148, %138 : vector<1x32xf32>
    %150 = arith.mulf %149, %147 : vector<1x32xf32>
    %151 = arith.mulf %138, %86 : vector<1x32xf32>
    %152 = arith.addf %150, %151 : vector<1x32xf32>
    %c1_i32 = arith.constant 1 : i32
    %153 = vector.broadcast %c1_i32 : i32 to vector<8x32xi32>
    %154 = arith.cmpi eq, %23, %153 : vector<8x32xi32>
    %155 = vector.shape_cast %124 : vector<1x32xf32> to vector<1x32xf32>
    %156 = vector.broadcast %155 : vector<1x32xf32> to vector<8x32xf32>
    %157 = arith.select %154, %156, %91 : vector<8x32xi1>, vector<8x32xf32>
    %c6_i32 = arith.constant 6 : i32
    %158 = vector.broadcast %c6_i32 : i32 to vector<8x32xi32>
    %159 = arith.cmpi eq, %23, %158 : vector<8x32xi32>
    %160 = vector.shape_cast %152 : vector<1x32xf32> to vector<1x32xf32>
    %161 = vector.broadcast %160 : vector<1x32xf32> to vector<8x32xf32>
    %162 = arith.select %159, %161, %96 : vector<8x32xi1>, vector<8x32xf32>
    %163 = vector.extract_strided_slice %25 {offsets = [2, 0], sizes = [1, 96], strides = [1, 1]} : vector<8x96xf32> to vector<1x96xf32>
    %cst_48 = arith.constant dense<0.000000e+00> : vector<1x96xf32>
    %164 = tpu.matmul %124, %3, %cst_48 {dimension_numbers = #tpu.dot_dimension_numbers<[1], [0], [0], [1], [0, 0, 1, 1], [], []>} : vector<1x32xf32>, vector<32x96xf32>, vector<1x96xf32> -> vector<1x96xf32>
    %165 = vector.extract_strided_slice %163 {offsets = [0, 0], sizes = [1, 64], strides = [1, 1]} : vector<1x96xf32> to vector<1x64xf32>
    %166 = vector.extract_strided_slice %164 {offsets = [0, 0], sizes = [1, 64], strides = [1, 1]} : vector<1x96xf32> to vector<1x64xf32>
    %167 = arith.addf %165, %166 : vector<1x64xf32>
    %168 = vector.extract_strided_slice %11 {offsets = [0, 0], sizes = [1, 64], strides = [1, 1]} : vector<1x128xf32> to vector<1x64xf32>
    %169 = arith.addf %167, %168 : vector<1x64xf32>
    %170 = arith.negf %169 : vector<1x64xf32>
    %171 = math.exp %170 : vector<1x64xf32>
    %cst_49 = arith.constant 1.000000e+00 : f32
    %172 = vector.broadcast %cst_49 : f32 to vector<1x64xf32>
    %173 = arith.addf %172, %171 : vector<1x64xf32>
    %174 = arith.divf %172, %173 : vector<1x64xf32>
    %175 = vector.extract_strided_slice %174 {offsets = [0, 0], sizes = [1, 32], strides = [1, 1]} : vector<1x64xf32> to vector<1x32xf32>
    %176 = vector.extract_strided_slice %174 {offsets = [0, 32], sizes = [1, 32], strides = [1, 1]} : vector<1x64xf32> to vector<1x32xf32>
    %177 = vector.extract_strided_slice %163 {offsets = [0, 64], sizes = [1, 32], strides = [1, 1]} : vector<1x96xf32> to vector<1x32xf32>
    %178 = vector.extract_strided_slice %11 {offsets = [0, 64], sizes = [1, 32], strides = [1, 1]} : vector<1x128xf32> to vector<1x32xf32>
    %179 = arith.addf %177, %178 : vector<1x32xf32>
    %180 = vector.extract_strided_slice %164 {offsets = [0, 64], sizes = [1, 32], strides = [1, 1]} : vector<1x96xf32> to vector<1x32xf32>
    %181 = vector.extract_strided_slice %11 {offsets = [0, 96], sizes = [1, 32], strides = [1, 1]} : vector<1x128xf32> to vector<1x32xf32>
    %182 = arith.addf %180, %181 : vector<1x32xf32>
    %183 = arith.mulf %175, %182 : vector<1x32xf32>
    %184 = arith.addf %179, %183 : vector<1x32xf32>
    %185 = math.tanh %184 : vector<1x32xf32>
    %cst_50 = arith.constant 1.000000e+00 : f32
    %186 = vector.broadcast %cst_50 : f32 to vector<1x32xf32>
    %187 = arith.subf %186, %176 : vector<1x32xf32>
    %188 = arith.mulf %187, %185 : vector<1x32xf32>
    %189 = arith.mulf %176, %124 : vector<1x32xf32>
    %190 = arith.addf %188, %189 : vector<1x32xf32>
    %191 = vector.extract_strided_slice %26 {offsets = [5, 0], sizes = [1, 96], strides = [1, 1]} : vector<8x96xf32> to vector<1x96xf32>
    %cst_51 = arith.constant dense<0.000000e+00> : vector<1x96xf32>
    %192 = tpu.matmul %152, %4, %cst_51 {dimension_numbers = #tpu.dot_dimension_numbers<[1], [0], [0], [1], [0, 0, 1, 1], [], []>} : vector<1x32xf32>, vector<32x96xf32>, vector<1x96xf32> -> vector<1x96xf32>
    %193 = vector.extract_strided_slice %191 {offsets = [0, 0], sizes = [1, 64], strides = [1, 1]} : vector<1x96xf32> to vector<1x64xf32>
    %194 = vector.extract_strided_slice %192 {offsets = [0, 0], sizes = [1, 64], strides = [1, 1]} : vector<1x96xf32> to vector<1x64xf32>
    %195 = arith.addf %193, %194 : vector<1x64xf32>
    %196 = vector.extract_strided_slice %12 {offsets = [0, 0], sizes = [1, 64], strides = [1, 1]} : vector<1x128xf32> to vector<1x64xf32>
    %197 = arith.addf %195, %196 : vector<1x64xf32>
    %198 = arith.negf %197 : vector<1x64xf32>
    %199 = math.exp %198 : vector<1x64xf32>
    %cst_52 = arith.constant 1.000000e+00 : f32
    %200 = vector.broadcast %cst_52 : f32 to vector<1x64xf32>
    %201 = arith.addf %200, %199 : vector<1x64xf32>
    %202 = arith.divf %200, %201 : vector<1x64xf32>
    %203 = vector.extract_strided_slice %202 {offsets = [0, 0], sizes = [1, 32], strides = [1, 1]} : vector<1x64xf32> to vector<1x32xf32>
    %204 = vector.extract_strided_slice %202 {offsets = [0, 32], sizes = [1, 32], strides = [1, 1]} : vector<1x64xf32> to vector<1x32xf32>
    %205 = vector.extract_strided_slice %191 {offsets = [0, 64], sizes = [1, 32], strides = [1, 1]} : vector<1x96xf32> to vector<1x32xf32>
    %206 = vector.extract_strided_slice %12 {offsets = [0, 64], sizes = [1, 32], strides = [1, 1]} : vector<1x128xf32> to vector<1x32xf32>
    %207 = arith.addf %205, %206 : vector<1x32xf32>
    %208 = vector.extract_strided_slice %192 {offsets = [0, 64], sizes = [1, 32], strides = [1, 1]} : vector<1x96xf32> to vector<1x32xf32>
    %209 = vector.extract_strided_slice %12 {offsets = [0, 96], sizes = [1, 32], strides = [1, 1]} : vector<1x128xf32> to vector<1x32xf32>
    %210 = arith.addf %208, %209 : vector<1x32xf32>
    %211 = arith.mulf %203, %210 : vector<1x32xf32>
    %212 = arith.addf %207, %211 : vector<1x32xf32>
    %213 = math.tanh %212 : vector<1x32xf32>
    %cst_53 = arith.constant 1.000000e+00 : f32
    %214 = vector.broadcast %cst_53 : f32 to vector<1x32xf32>
    %215 = arith.subf %214, %204 : vector<1x32xf32>
    %216 = arith.mulf %215, %213 : vector<1x32xf32>
    %217 = arith.mulf %204, %152 : vector<1x32xf32>
    %218 = arith.addf %216, %217 : vector<1x32xf32>
    %c2_i32 = arith.constant 2 : i32
    %219 = vector.broadcast %c2_i32 : i32 to vector<8x32xi32>
    %220 = arith.cmpi eq, %23, %219 : vector<8x32xi32>
    %221 = vector.shape_cast %190 : vector<1x32xf32> to vector<1x32xf32>
    %222 = vector.broadcast %221 : vector<1x32xf32> to vector<8x32xf32>
    %223 = arith.select %220, %222, %157 : vector<8x32xi1>, vector<8x32xf32>
    %c5_i32 = arith.constant 5 : i32
    %224 = vector.broadcast %c5_i32 : i32 to vector<8x32xi32>
    %225 = arith.cmpi eq, %23, %224 : vector<8x32xi32>
    %226 = vector.shape_cast %218 : vector<1x32xf32> to vector<1x32xf32>
    %227 = vector.broadcast %226 : vector<1x32xf32> to vector<8x32xf32>
    %228 = arith.select %225, %227, %162 : vector<8x32xi1>, vector<8x32xf32>
    %229 = vector.extract_strided_slice %25 {offsets = [3, 0], sizes = [1, 96], strides = [1, 1]} : vector<8x96xf32> to vector<1x96xf32>
    %cst_54 = arith.constant dense<0.000000e+00> : vector<1x96xf32>
    %230 = tpu.matmul %190, %3, %cst_54 {dimension_numbers = #tpu.dot_dimension_numbers<[1], [0], [0], [1], [0, 0, 1, 1], [], []>} : vector<1x32xf32>, vector<32x96xf32>, vector<1x96xf32> -> vector<1x96xf32>
    %231 = vector.extract_strided_slice %229 {offsets = [0, 0], sizes = [1, 64], strides = [1, 1]} : vector<1x96xf32> to vector<1x64xf32>
    %232 = vector.extract_strided_slice %230 {offsets = [0, 0], sizes = [1, 64], strides = [1, 1]} : vector<1x96xf32> to vector<1x64xf32>
    %233 = arith.addf %231, %232 : vector<1x64xf32>
    %234 = vector.extract_strided_slice %11 {offsets = [0, 0], sizes = [1, 64], strides = [1, 1]} : vector<1x128xf32> to vector<1x64xf32>
    %235 = arith.addf %233, %234 : vector<1x64xf32>
    %236 = arith.negf %235 : vector<1x64xf32>
    %237 = math.exp %236 : vector<1x64xf32>
    %cst_55 = arith.constant 1.000000e+00 : f32
    %238 = vector.broadcast %cst_55 : f32 to vector<1x64xf32>
    %239 = arith.addf %238, %237 : vector<1x64xf32>
    %240 = arith.divf %238, %239 : vector<1x64xf32>
    %241 = vector.extract_strided_slice %240 {offsets = [0, 0], sizes = [1, 32], strides = [1, 1]} : vector<1x64xf32> to vector<1x32xf32>
    %242 = vector.extract_strided_slice %240 {offsets = [0, 32], sizes = [1, 32], strides = [1, 1]} : vector<1x64xf32> to vector<1x32xf32>
    %243 = vector.extract_strided_slice %229 {offsets = [0, 64], sizes = [1, 32], strides = [1, 1]} : vector<1x96xf32> to vector<1x32xf32>
    %244 = vector.extract_strided_slice %11 {offsets = [0, 64], sizes = [1, 32], strides = [1, 1]} : vector<1x128xf32> to vector<1x32xf32>
    %245 = arith.addf %243, %244 : vector<1x32xf32>
    %246 = vector.extract_strided_slice %230 {offsets = [0, 64], sizes = [1, 32], strides = [1, 1]} : vector<1x96xf32> to vector<1x32xf32>
    %247 = vector.extract_strided_slice %11 {offsets = [0, 96], sizes = [1, 32], strides = [1, 1]} : vector<1x128xf32> to vector<1x32xf32>
    %248 = arith.addf %246, %247 : vector<1x32xf32>
    %249 = arith.mulf %241, %248 : vector<1x32xf32>
    %250 = arith.addf %245, %249 : vector<1x32xf32>
    %251 = math.tanh %250 : vector<1x32xf32>
    %cst_56 = arith.constant 1.000000e+00 : f32
    %252 = vector.broadcast %cst_56 : f32 to vector<1x32xf32>
    %253 = arith.subf %252, %242 : vector<1x32xf32>
    %254 = arith.mulf %253, %251 : vector<1x32xf32>
    %255 = arith.mulf %242, %190 : vector<1x32xf32>
    %256 = arith.addf %254, %255 : vector<1x32xf32>
    %257 = vector.extract_strided_slice %26 {offsets = [4, 0], sizes = [1, 96], strides = [1, 1]} : vector<8x96xf32> to vector<1x96xf32>
    %cst_57 = arith.constant dense<0.000000e+00> : vector<1x96xf32>
    %258 = tpu.matmul %218, %4, %cst_57 {dimension_numbers = #tpu.dot_dimension_numbers<[1], [0], [0], [1], [0, 0, 1, 1], [], []>} : vector<1x32xf32>, vector<32x96xf32>, vector<1x96xf32> -> vector<1x96xf32>
    %259 = vector.extract_strided_slice %257 {offsets = [0, 0], sizes = [1, 64], strides = [1, 1]} : vector<1x96xf32> to vector<1x64xf32>
    %260 = vector.extract_strided_slice %258 {offsets = [0, 0], sizes = [1, 64], strides = [1, 1]} : vector<1x96xf32> to vector<1x64xf32>
    %261 = arith.addf %259, %260 : vector<1x64xf32>
    %262 = vector.extract_strided_slice %12 {offsets = [0, 0], sizes = [1, 64], strides = [1, 1]} : vector<1x128xf32> to vector<1x64xf32>
    %263 = arith.addf %261, %262 : vector<1x64xf32>
    %264 = arith.negf %263 : vector<1x64xf32>
    %265 = math.exp %264 : vector<1x64xf32>
    %cst_58 = arith.constant 1.000000e+00 : f32
    %266 = vector.broadcast %cst_58 : f32 to vector<1x64xf32>
    %267 = arith.addf %266, %265 : vector<1x64xf32>
    %268 = arith.divf %266, %267 : vector<1x64xf32>
    %269 = vector.extract_strided_slice %268 {offsets = [0, 0], sizes = [1, 32], strides = [1, 1]} : vector<1x64xf32> to vector<1x32xf32>
    %270 = vector.extract_strided_slice %268 {offsets = [0, 32], sizes = [1, 32], strides = [1, 1]} : vector<1x64xf32> to vector<1x32xf32>
    %271 = vector.extract_strided_slice %257 {offsets = [0, 64], sizes = [1, 32], strides = [1, 1]} : vector<1x96xf32> to vector<1x32xf32>
    %272 = vector.extract_strided_slice %12 {offsets = [0, 64], sizes = [1, 32], strides = [1, 1]} : vector<1x128xf32> to vector<1x32xf32>
    %273 = arith.addf %271, %272 : vector<1x32xf32>
    %274 = vector.extract_strided_slice %258 {offsets = [0, 64], sizes = [1, 32], strides = [1, 1]} : vector<1x96xf32> to vector<1x32xf32>
    %275 = vector.extract_strided_slice %12 {offsets = [0, 96], sizes = [1, 32], strides = [1, 1]} : vector<1x128xf32> to vector<1x32xf32>
    %276 = arith.addf %274, %275 : vector<1x32xf32>
    %277 = arith.mulf %269, %276 : vector<1x32xf32>
    %278 = arith.addf %273, %277 : vector<1x32xf32>
    %279 = math.tanh %278 : vector<1x32xf32>
    %cst_59 = arith.constant 1.000000e+00 : f32
    %280 = vector.broadcast %cst_59 : f32 to vector<1x32xf32>
    %281 = arith.subf %280, %270 : vector<1x32xf32>
    %282 = arith.mulf %281, %279 : vector<1x32xf32>
    %283 = arith.mulf %270, %218 : vector<1x32xf32>
    %284 = arith.addf %282, %283 : vector<1x32xf32>
    %c3_i32 = arith.constant 3 : i32
    %285 = vector.broadcast %c3_i32 : i32 to vector<8x32xi32>
    %286 = arith.cmpi eq, %23, %285 : vector<8x32xi32>
    %287 = vector.shape_cast %256 : vector<1x32xf32> to vector<1x32xf32>
    %288 = vector.broadcast %287 : vector<1x32xf32> to vector<8x32xf32>
    %289 = arith.select %286, %288, %223 : vector<8x32xi1>, vector<8x32xf32>
    %c4_i32 = arith.constant 4 : i32
    %290 = vector.broadcast %c4_i32 : i32 to vector<8x32xi32>
    %291 = arith.cmpi eq, %23, %290 : vector<8x32xi32>
    %292 = vector.shape_cast %284 : vector<1x32xf32> to vector<1x32xf32>
    %293 = vector.broadcast %292 : vector<1x32xf32> to vector<8x32xf32>
    %294 = arith.select %291, %293, %228 : vector<8x32xi1>, vector<8x32xf32>
    %295 = vector.extract_strided_slice %25 {offsets = [4, 0], sizes = [1, 96], strides = [1, 1]} : vector<8x96xf32> to vector<1x96xf32>
    %cst_60 = arith.constant dense<0.000000e+00> : vector<1x96xf32>
    %296 = tpu.matmul %256, %3, %cst_60 {dimension_numbers = #tpu.dot_dimension_numbers<[1], [0], [0], [1], [0, 0, 1, 1], [], []>} : vector<1x32xf32>, vector<32x96xf32>, vector<1x96xf32> -> vector<1x96xf32>
    %297 = vector.extract_strided_slice %295 {offsets = [0, 0], sizes = [1, 64], strides = [1, 1]} : vector<1x96xf32> to vector<1x64xf32>
    %298 = vector.extract_strided_slice %296 {offsets = [0, 0], sizes = [1, 64], strides = [1, 1]} : vector<1x96xf32> to vector<1x64xf32>
    %299 = arith.addf %297, %298 : vector<1x64xf32>
    %300 = vector.extract_strided_slice %11 {offsets = [0, 0], sizes = [1, 64], strides = [1, 1]} : vector<1x128xf32> to vector<1x64xf32>
    %301 = arith.addf %299, %300 : vector<1x64xf32>
    %302 = arith.negf %301 : vector<1x64xf32>
    %303 = math.exp %302 : vector<1x64xf32>
    %cst_61 = arith.constant 1.000000e+00 : f32
    %304 = vector.broadcast %cst_61 : f32 to vector<1x64xf32>
    %305 = arith.addf %304, %303 : vector<1x64xf32>
    %306 = arith.divf %304, %305 : vector<1x64xf32>
    %307 = vector.extract_strided_slice %306 {offsets = [0, 0], sizes = [1, 32], strides = [1, 1]} : vector<1x64xf32> to vector<1x32xf32>
    %308 = vector.extract_strided_slice %306 {offsets = [0, 32], sizes = [1, 32], strides = [1, 1]} : vector<1x64xf32> to vector<1x32xf32>
    %309 = vector.extract_strided_slice %295 {offsets = [0, 64], sizes = [1, 32], strides = [1, 1]} : vector<1x96xf32> to vector<1x32xf32>
    %310 = vector.extract_strided_slice %11 {offsets = [0, 64], sizes = [1, 32], strides = [1, 1]} : vector<1x128xf32> to vector<1x32xf32>
    %311 = arith.addf %309, %310 : vector<1x32xf32>
    %312 = vector.extract_strided_slice %296 {offsets = [0, 64], sizes = [1, 32], strides = [1, 1]} : vector<1x96xf32> to vector<1x32xf32>
    %313 = vector.extract_strided_slice %11 {offsets = [0, 96], sizes = [1, 32], strides = [1, 1]} : vector<1x128xf32> to vector<1x32xf32>
    %314 = arith.addf %312, %313 : vector<1x32xf32>
    %315 = arith.mulf %307, %314 : vector<1x32xf32>
    %316 = arith.addf %311, %315 : vector<1x32xf32>
    %317 = math.tanh %316 : vector<1x32xf32>
    %cst_62 = arith.constant 1.000000e+00 : f32
    %318 = vector.broadcast %cst_62 : f32 to vector<1x32xf32>
    %319 = arith.subf %318, %308 : vector<1x32xf32>
    %320 = arith.mulf %319, %317 : vector<1x32xf32>
    %321 = arith.mulf %308, %256 : vector<1x32xf32>
    %322 = arith.addf %320, %321 : vector<1x32xf32>
    %323 = vector.extract_strided_slice %26 {offsets = [3, 0], sizes = [1, 96], strides = [1, 1]} : vector<8x96xf32> to vector<1x96xf32>
    %cst_63 = arith.constant dense<0.000000e+00> : vector<1x96xf32>
    %324 = tpu.matmul %284, %4, %cst_63 {dimension_numbers = #tpu.dot_dimension_numbers<[1], [0], [0], [1], [0, 0, 1, 1], [], []>} : vector<1x32xf32>, vector<32x96xf32>, vector<1x96xf32> -> vector<1x96xf32>
    %325 = vector.extract_strided_slice %323 {offsets = [0, 0], sizes = [1, 64], strides = [1, 1]} : vector<1x96xf32> to vector<1x64xf32>
    %326 = vector.extract_strided_slice %324 {offsets = [0, 0], sizes = [1, 64], strides = [1, 1]} : vector<1x96xf32> to vector<1x64xf32>
    %327 = arith.addf %325, %326 : vector<1x64xf32>
    %328 = vector.extract_strided_slice %12 {offsets = [0, 0], sizes = [1, 64], strides = [1, 1]} : vector<1x128xf32> to vector<1x64xf32>
    %329 = arith.addf %327, %328 : vector<1x64xf32>
    %330 = arith.negf %329 : vector<1x64xf32>
    %331 = math.exp %330 : vector<1x64xf32>
    %cst_64 = arith.constant 1.000000e+00 : f32
    %332 = vector.broadcast %cst_64 : f32 to vector<1x64xf32>
    %333 = arith.addf %332, %331 : vector<1x64xf32>
    %334 = arith.divf %332, %333 : vector<1x64xf32>
    %335 = vector.extract_strided_slice %334 {offsets = [0, 0], sizes = [1, 32], strides = [1, 1]} : vector<1x64xf32> to vector<1x32xf32>
    %336 = vector.extract_strided_slice %334 {offsets = [0, 32], sizes = [1, 32], strides = [1, 1]} : vector<1x64xf32> to vector<1x32xf32>
    %337 = vector.extract_strided_slice %323 {offsets = [0, 64], sizes = [1, 32], strides = [1, 1]} : vector<1x96xf32> to vector<1x32xf32>
    %338 = vector.extract_strided_slice %12 {offsets = [0, 64], sizes = [1, 32], strides = [1, 1]} : vector<1x128xf32> to vector<1x32xf32>
    %339 = arith.addf %337, %338 : vector<1x32xf32>
    %340 = vector.extract_strided_slice %324 {offsets = [0, 64], sizes = [1, 32], strides = [1, 1]} : vector<1x96xf32> to vector<1x32xf32>
    %341 = vector.extract_strided_slice %12 {offsets = [0, 96], sizes = [1, 32], strides = [1, 1]} : vector<1x128xf32> to vector<1x32xf32>
    %342 = arith.addf %340, %341 : vector<1x32xf32>
    %343 = arith.mulf %335, %342 : vector<1x32xf32>
    %344 = arith.addf %339, %343 : vector<1x32xf32>
    %345 = math.tanh %344 : vector<1x32xf32>
    %cst_65 = arith.constant 1.000000e+00 : f32
    %346 = vector.broadcast %cst_65 : f32 to vector<1x32xf32>
    %347 = arith.subf %346, %336 : vector<1x32xf32>
    %348 = arith.mulf %347, %345 : vector<1x32xf32>
    %349 = arith.mulf %336, %284 : vector<1x32xf32>
    %350 = arith.addf %348, %349 : vector<1x32xf32>
    %c4_i32_66 = arith.constant 4 : i32
    %351 = vector.broadcast %c4_i32_66 : i32 to vector<8x32xi32>
    %352 = arith.cmpi eq, %23, %351 : vector<8x32xi32>
    %353 = vector.shape_cast %322 : vector<1x32xf32> to vector<1x32xf32>
    %354 = vector.broadcast %353 : vector<1x32xf32> to vector<8x32xf32>
    %355 = arith.select %352, %354, %289 : vector<8x32xi1>, vector<8x32xf32>
    %c3_i32_67 = arith.constant 3 : i32
    %356 = vector.broadcast %c3_i32_67 : i32 to vector<8x32xi32>
    %357 = arith.cmpi eq, %23, %356 : vector<8x32xi32>
    %358 = vector.shape_cast %350 : vector<1x32xf32> to vector<1x32xf32>
    %359 = vector.broadcast %358 : vector<1x32xf32> to vector<8x32xf32>
    %360 = arith.select %357, %359, %294 : vector<8x32xi1>, vector<8x32xf32>
    %361 = vector.extract_strided_slice %25 {offsets = [5, 0], sizes = [1, 96], strides = [1, 1]} : vector<8x96xf32> to vector<1x96xf32>
    %cst_68 = arith.constant dense<0.000000e+00> : vector<1x96xf32>
    %362 = tpu.matmul %322, %3, %cst_68 {dimension_numbers = #tpu.dot_dimension_numbers<[1], [0], [0], [1], [0, 0, 1, 1], [], []>} : vector<1x32xf32>, vector<32x96xf32>, vector<1x96xf32> -> vector<1x96xf32>
    %363 = vector.extract_strided_slice %361 {offsets = [0, 0], sizes = [1, 64], strides = [1, 1]} : vector<1x96xf32> to vector<1x64xf32>
    %364 = vector.extract_strided_slice %362 {offsets = [0, 0], sizes = [1, 64], strides = [1, 1]} : vector<1x96xf32> to vector<1x64xf32>
    %365 = arith.addf %363, %364 : vector<1x64xf32>
    %366 = vector.extract_strided_slice %11 {offsets = [0, 0], sizes = [1, 64], strides = [1, 1]} : vector<1x128xf32> to vector<1x64xf32>
    %367 = arith.addf %365, %366 : vector<1x64xf32>
    %368 = arith.negf %367 : vector<1x64xf32>
    %369 = math.exp %368 : vector<1x64xf32>
    %cst_69 = arith.constant 1.000000e+00 : f32
    %370 = vector.broadcast %cst_69 : f32 to vector<1x64xf32>
    %371 = arith.addf %370, %369 : vector<1x64xf32>
    %372 = arith.divf %370, %371 : vector<1x64xf32>
    %373 = vector.extract_strided_slice %372 {offsets = [0, 0], sizes = [1, 32], strides = [1, 1]} : vector<1x64xf32> to vector<1x32xf32>
    %374 = vector.extract_strided_slice %372 {offsets = [0, 32], sizes = [1, 32], strides = [1, 1]} : vector<1x64xf32> to vector<1x32xf32>
    %375 = vector.extract_strided_slice %361 {offsets = [0, 64], sizes = [1, 32], strides = [1, 1]} : vector<1x96xf32> to vector<1x32xf32>
    %376 = vector.extract_strided_slice %11 {offsets = [0, 64], sizes = [1, 32], strides = [1, 1]} : vector<1x128xf32> to vector<1x32xf32>
    %377 = arith.addf %375, %376 : vector<1x32xf32>
    %378 = vector.extract_strided_slice %362 {offsets = [0, 64], sizes = [1, 32], strides = [1, 1]} : vector<1x96xf32> to vector<1x32xf32>
    %379 = vector.extract_strided_slice %11 {offsets = [0, 96], sizes = [1, 32], strides = [1, 1]} : vector<1x128xf32> to vector<1x32xf32>
    %380 = arith.addf %378, %379 : vector<1x32xf32>
    %381 = arith.mulf %373, %380 : vector<1x32xf32>
    %382 = arith.addf %377, %381 : vector<1x32xf32>
    %383 = math.tanh %382 : vector<1x32xf32>
    %cst_70 = arith.constant 1.000000e+00 : f32
    %384 = vector.broadcast %cst_70 : f32 to vector<1x32xf32>
    %385 = arith.subf %384, %374 : vector<1x32xf32>
    %386 = arith.mulf %385, %383 : vector<1x32xf32>
    %387 = arith.mulf %374, %322 : vector<1x32xf32>
    %388 = arith.addf %386, %387 : vector<1x32xf32>
    %389 = vector.extract_strided_slice %26 {offsets = [2, 0], sizes = [1, 96], strides = [1, 1]} : vector<8x96xf32> to vector<1x96xf32>
    %cst_71 = arith.constant dense<0.000000e+00> : vector<1x96xf32>
    %390 = tpu.matmul %350, %4, %cst_71 {dimension_numbers = #tpu.dot_dimension_numbers<[1], [0], [0], [1], [0, 0, 1, 1], [], []>} : vector<1x32xf32>, vector<32x96xf32>, vector<1x96xf32> -> vector<1x96xf32>
    %391 = vector.extract_strided_slice %389 {offsets = [0, 0], sizes = [1, 64], strides = [1, 1]} : vector<1x96xf32> to vector<1x64xf32>
    %392 = vector.extract_strided_slice %390 {offsets = [0, 0], sizes = [1, 64], strides = [1, 1]} : vector<1x96xf32> to vector<1x64xf32>
    %393 = arith.addf %391, %392 : vector<1x64xf32>
    %394 = vector.extract_strided_slice %12 {offsets = [0, 0], sizes = [1, 64], strides = [1, 1]} : vector<1x128xf32> to vector<1x64xf32>
    %395 = arith.addf %393, %394 : vector<1x64xf32>
    %396 = arith.negf %395 : vector<1x64xf32>
    %397 = math.exp %396 : vector<1x64xf32>
    %cst_72 = arith.constant 1.000000e+00 : f32
    %398 = vector.broadcast %cst_72 : f32 to vector<1x64xf32>
    %399 = arith.addf %398, %397 : vector<1x64xf32>
    %400 = arith.divf %398, %399 : vector<1x64xf32>
    %401 = vector.extract_strided_slice %400 {offsets = [0, 0], sizes = [1, 32], strides = [1, 1]} : vector<1x64xf32> to vector<1x32xf32>
    %402 = vector.extract_strided_slice %400 {offsets = [0, 32], sizes = [1, 32], strides = [1, 1]} : vector<1x64xf32> to vector<1x32xf32>
    %403 = vector.extract_strided_slice %389 {offsets = [0, 64], sizes = [1, 32], strides = [1, 1]} : vector<1x96xf32> to vector<1x32xf32>
    %404 = vector.extract_strided_slice %12 {offsets = [0, 64], sizes = [1, 32], strides = [1, 1]} : vector<1x128xf32> to vector<1x32xf32>
    %405 = arith.addf %403, %404 : vector<1x32xf32>
    %406 = vector.extract_strided_slice %390 {offsets = [0, 64], sizes = [1, 32], strides = [1, 1]} : vector<1x96xf32> to vector<1x32xf32>
    %407 = vector.extract_strided_slice %12 {offsets = [0, 96], sizes = [1, 32], strides = [1, 1]} : vector<1x128xf32> to vector<1x32xf32>
    %408 = arith.addf %406, %407 : vector<1x32xf32>
    %409 = arith.mulf %401, %408 : vector<1x32xf32>
    %410 = arith.addf %405, %409 : vector<1x32xf32>
    %411 = math.tanh %410 : vector<1x32xf32>
    %cst_73 = arith.constant 1.000000e+00 : f32
    %412 = vector.broadcast %cst_73 : f32 to vector<1x32xf32>
    %413 = arith.subf %412, %402 : vector<1x32xf32>
    %414 = arith.mulf %413, %411 : vector<1x32xf32>
    %415 = arith.mulf %402, %350 : vector<1x32xf32>
    %416 = arith.addf %414, %415 : vector<1x32xf32>
    %c5_i32_74 = arith.constant 5 : i32
    %417 = vector.broadcast %c5_i32_74 : i32 to vector<8x32xi32>
    %418 = arith.cmpi eq, %23, %417 : vector<8x32xi32>
    %419 = vector.shape_cast %388 : vector<1x32xf32> to vector<1x32xf32>
    %420 = vector.broadcast %419 : vector<1x32xf32> to vector<8x32xf32>
    %421 = arith.select %418, %420, %355 : vector<8x32xi1>, vector<8x32xf32>
    %c2_i32_75 = arith.constant 2 : i32
    %422 = vector.broadcast %c2_i32_75 : i32 to vector<8x32xi32>
    %423 = arith.cmpi eq, %23, %422 : vector<8x32xi32>
    %424 = vector.shape_cast %416 : vector<1x32xf32> to vector<1x32xf32>
    %425 = vector.broadcast %424 : vector<1x32xf32> to vector<8x32xf32>
    %426 = arith.select %423, %425, %360 : vector<8x32xi1>, vector<8x32xf32>
    %427 = vector.extract_strided_slice %25 {offsets = [6, 0], sizes = [1, 96], strides = [1, 1]} : vector<8x96xf32> to vector<1x96xf32>
    %cst_76 = arith.constant dense<0.000000e+00> : vector<1x96xf32>
    %428 = tpu.matmul %388, %3, %cst_76 {dimension_numbers = #tpu.dot_dimension_numbers<[1], [0], [0], [1], [0, 0, 1, 1], [], []>} : vector<1x32xf32>, vector<32x96xf32>, vector<1x96xf32> -> vector<1x96xf32>
    %429 = vector.extract_strided_slice %427 {offsets = [0, 0], sizes = [1, 64], strides = [1, 1]} : vector<1x96xf32> to vector<1x64xf32>
    %430 = vector.extract_strided_slice %428 {offsets = [0, 0], sizes = [1, 64], strides = [1, 1]} : vector<1x96xf32> to vector<1x64xf32>
    %431 = arith.addf %429, %430 : vector<1x64xf32>
    %432 = vector.extract_strided_slice %11 {offsets = [0, 0], sizes = [1, 64], strides = [1, 1]} : vector<1x128xf32> to vector<1x64xf32>
    %433 = arith.addf %431, %432 : vector<1x64xf32>
    %434 = arith.negf %433 : vector<1x64xf32>
    %435 = math.exp %434 : vector<1x64xf32>
    %cst_77 = arith.constant 1.000000e+00 : f32
    %436 = vector.broadcast %cst_77 : f32 to vector<1x64xf32>
    %437 = arith.addf %436, %435 : vector<1x64xf32>
    %438 = arith.divf %436, %437 : vector<1x64xf32>
    %439 = vector.extract_strided_slice %438 {offsets = [0, 0], sizes = [1, 32], strides = [1, 1]} : vector<1x64xf32> to vector<1x32xf32>
    %440 = vector.extract_strided_slice %438 {offsets = [0, 32], sizes = [1, 32], strides = [1, 1]} : vector<1x64xf32> to vector<1x32xf32>
    %441 = vector.extract_strided_slice %427 {offsets = [0, 64], sizes = [1, 32], strides = [1, 1]} : vector<1x96xf32> to vector<1x32xf32>
    %442 = vector.extract_strided_slice %11 {offsets = [0, 64], sizes = [1, 32], strides = [1, 1]} : vector<1x128xf32> to vector<1x32xf32>
    %443 = arith.addf %441, %442 : vector<1x32xf32>
    %444 = vector.extract_strided_slice %428 {offsets = [0, 64], sizes = [1, 32], strides = [1, 1]} : vector<1x96xf32> to vector<1x32xf32>
    %445 = vector.extract_strided_slice %11 {offsets = [0, 96], sizes = [1, 32], strides = [1, 1]} : vector<1x128xf32> to vector<1x32xf32>
    %446 = arith.addf %444, %445 : vector<1x32xf32>
    %447 = arith.mulf %439, %446 : vector<1x32xf32>
    %448 = arith.addf %443, %447 : vector<1x32xf32>
    %449 = math.tanh %448 : vector<1x32xf32>
    %cst_78 = arith.constant 1.000000e+00 : f32
    %450 = vector.broadcast %cst_78 : f32 to vector<1x32xf32>
    %451 = arith.subf %450, %440 : vector<1x32xf32>
    %452 = arith.mulf %451, %449 : vector<1x32xf32>
    %453 = arith.mulf %440, %388 : vector<1x32xf32>
    %454 = arith.addf %452, %453 : vector<1x32xf32>
    %455 = vector.extract_strided_slice %26 {offsets = [1, 0], sizes = [1, 96], strides = [1, 1]} : vector<8x96xf32> to vector<1x96xf32>
    %cst_79 = arith.constant dense<0.000000e+00> : vector<1x96xf32>
    %456 = tpu.matmul %416, %4, %cst_79 {dimension_numbers = #tpu.dot_dimension_numbers<[1], [0], [0], [1], [0, 0, 1, 1], [], []>} : vector<1x32xf32>, vector<32x96xf32>, vector<1x96xf32> -> vector<1x96xf32>
    %457 = vector.extract_strided_slice %455 {offsets = [0, 0], sizes = [1, 64], strides = [1, 1]} : vector<1x96xf32> to vector<1x64xf32>
    %458 = vector.extract_strided_slice %456 {offsets = [0, 0], sizes = [1, 64], strides = [1, 1]} : vector<1x96xf32> to vector<1x64xf32>
    %459 = arith.addf %457, %458 : vector<1x64xf32>
    %460 = vector.extract_strided_slice %12 {offsets = [0, 0], sizes = [1, 64], strides = [1, 1]} : vector<1x128xf32> to vector<1x64xf32>
    %461 = arith.addf %459, %460 : vector<1x64xf32>
    %462 = arith.negf %461 : vector<1x64xf32>
    %463 = math.exp %462 : vector<1x64xf32>
    %cst_80 = arith.constant 1.000000e+00 : f32
    %464 = vector.broadcast %cst_80 : f32 to vector<1x64xf32>
    %465 = arith.addf %464, %463 : vector<1x64xf32>
    %466 = arith.divf %464, %465 : vector<1x64xf32>
    %467 = vector.extract_strided_slice %466 {offsets = [0, 0], sizes = [1, 32], strides = [1, 1]} : vector<1x64xf32> to vector<1x32xf32>
    %468 = vector.extract_strided_slice %466 {offsets = [0, 32], sizes = [1, 32], strides = [1, 1]} : vector<1x64xf32> to vector<1x32xf32>
    %469 = vector.extract_strided_slice %455 {offsets = [0, 64], sizes = [1, 32], strides = [1, 1]} : vector<1x96xf32> to vector<1x32xf32>
    %470 = vector.extract_strided_slice %12 {offsets = [0, 64], sizes = [1, 32], strides = [1, 1]} : vector<1x128xf32> to vector<1x32xf32>
    %471 = arith.addf %469, %470 : vector<1x32xf32>
    %472 = vector.extract_strided_slice %456 {offsets = [0, 64], sizes = [1, 32], strides = [1, 1]} : vector<1x96xf32> to vector<1x32xf32>
    %473 = vector.extract_strided_slice %12 {offsets = [0, 96], sizes = [1, 32], strides = [1, 1]} : vector<1x128xf32> to vector<1x32xf32>
    %474 = arith.addf %472, %473 : vector<1x32xf32>
    %475 = arith.mulf %467, %474 : vector<1x32xf32>
    %476 = arith.addf %471, %475 : vector<1x32xf32>
    %477 = math.tanh %476 : vector<1x32xf32>
    %cst_81 = arith.constant 1.000000e+00 : f32
    %478 = vector.broadcast %cst_81 : f32 to vector<1x32xf32>
    %479 = arith.subf %478, %468 : vector<1x32xf32>
    %480 = arith.mulf %479, %477 : vector<1x32xf32>
    %481 = arith.mulf %468, %416 : vector<1x32xf32>
    %482 = arith.addf %480, %481 : vector<1x32xf32>
    %c6_i32_82 = arith.constant 6 : i32
    %483 = vector.broadcast %c6_i32_82 : i32 to vector<8x32xi32>
    %484 = arith.cmpi eq, %23, %483 : vector<8x32xi32>
    %485 = vector.shape_cast %454 : vector<1x32xf32> to vector<1x32xf32>
    %486 = vector.broadcast %485 : vector<1x32xf32> to vector<8x32xf32>
    %487 = arith.select %484, %486, %421 : vector<8x32xi1>, vector<8x32xf32>
    %c1_i32_83 = arith.constant 1 : i32
    %488 = vector.broadcast %c1_i32_83 : i32 to vector<8x32xi32>
    %489 = arith.cmpi eq, %23, %488 : vector<8x32xi32>
    %490 = vector.shape_cast %482 : vector<1x32xf32> to vector<1x32xf32>
    %491 = vector.broadcast %490 : vector<1x32xf32> to vector<8x32xf32>
    %492 = arith.select %489, %491, %426 : vector<8x32xi1>, vector<8x32xf32>
    %493 = vector.extract_strided_slice %25 {offsets = [7, 0], sizes = [1, 96], strides = [1, 1]} : vector<8x96xf32> to vector<1x96xf32>
    %cst_84 = arith.constant dense<0.000000e+00> : vector<1x96xf32>
    %494 = tpu.matmul %454, %3, %cst_84 {dimension_numbers = #tpu.dot_dimension_numbers<[1], [0], [0], [1], [0, 0, 1, 1], [], []>} : vector<1x32xf32>, vector<32x96xf32>, vector<1x96xf32> -> vector<1x96xf32>
    %495 = vector.extract_strided_slice %493 {offsets = [0, 0], sizes = [1, 64], strides = [1, 1]} : vector<1x96xf32> to vector<1x64xf32>
    %496 = vector.extract_strided_slice %494 {offsets = [0, 0], sizes = [1, 64], strides = [1, 1]} : vector<1x96xf32> to vector<1x64xf32>
    %497 = arith.addf %495, %496 : vector<1x64xf32>
    %498 = vector.extract_strided_slice %11 {offsets = [0, 0], sizes = [1, 64], strides = [1, 1]} : vector<1x128xf32> to vector<1x64xf32>
    %499 = arith.addf %497, %498 : vector<1x64xf32>
    %500 = arith.negf %499 : vector<1x64xf32>
    %501 = math.exp %500 : vector<1x64xf32>
    %cst_85 = arith.constant 1.000000e+00 : f32
    %502 = vector.broadcast %cst_85 : f32 to vector<1x64xf32>
    %503 = arith.addf %502, %501 : vector<1x64xf32>
    %504 = arith.divf %502, %503 : vector<1x64xf32>
    %505 = vector.extract_strided_slice %504 {offsets = [0, 0], sizes = [1, 32], strides = [1, 1]} : vector<1x64xf32> to vector<1x32xf32>
    %506 = vector.extract_strided_slice %504 {offsets = [0, 32], sizes = [1, 32], strides = [1, 1]} : vector<1x64xf32> to vector<1x32xf32>
    %507 = vector.extract_strided_slice %493 {offsets = [0, 64], sizes = [1, 32], strides = [1, 1]} : vector<1x96xf32> to vector<1x32xf32>
    %508 = vector.extract_strided_slice %11 {offsets = [0, 64], sizes = [1, 32], strides = [1, 1]} : vector<1x128xf32> to vector<1x32xf32>
    %509 = arith.addf %507, %508 : vector<1x32xf32>
    %510 = vector.extract_strided_slice %494 {offsets = [0, 64], sizes = [1, 32], strides = [1, 1]} : vector<1x96xf32> to vector<1x32xf32>
    %511 = vector.extract_strided_slice %11 {offsets = [0, 96], sizes = [1, 32], strides = [1, 1]} : vector<1x128xf32> to vector<1x32xf32>
    %512 = arith.addf %510, %511 : vector<1x32xf32>
    %513 = arith.mulf %505, %512 : vector<1x32xf32>
    %514 = arith.addf %509, %513 : vector<1x32xf32>
    %515 = math.tanh %514 : vector<1x32xf32>
    %cst_86 = arith.constant 1.000000e+00 : f32
    %516 = vector.broadcast %cst_86 : f32 to vector<1x32xf32>
    %517 = arith.subf %516, %506 : vector<1x32xf32>
    %518 = arith.mulf %517, %515 : vector<1x32xf32>
    %519 = arith.mulf %506, %454 : vector<1x32xf32>
    %520 = arith.addf %518, %519 : vector<1x32xf32>
    %521 = vector.extract_strided_slice %26 {offsets = [0, 0], sizes = [1, 96], strides = [1, 1]} : vector<8x96xf32> to vector<1x96xf32>
    %cst_87 = arith.constant dense<0.000000e+00> : vector<1x96xf32>
    %522 = tpu.matmul %482, %4, %cst_87 {dimension_numbers = #tpu.dot_dimension_numbers<[1], [0], [0], [1], [0, 0, 1, 1], [], []>} : vector<1x32xf32>, vector<32x96xf32>, vector<1x96xf32> -> vector<1x96xf32>
    %523 = vector.extract_strided_slice %521 {offsets = [0, 0], sizes = [1, 64], strides = [1, 1]} : vector<1x96xf32> to vector<1x64xf32>
    %524 = vector.extract_strided_slice %522 {offsets = [0, 0], sizes = [1, 64], strides = [1, 1]} : vector<1x96xf32> to vector<1x64xf32>
    %525 = arith.addf %523, %524 : vector<1x64xf32>
    %526 = vector.extract_strided_slice %12 {offsets = [0, 0], sizes = [1, 64], strides = [1, 1]} : vector<1x128xf32> to vector<1x64xf32>
    %527 = arith.addf %525, %526 : vector<1x64xf32>
    %528 = arith.negf %527 : vector<1x64xf32>
    %529 = math.exp %528 : vector<1x64xf32>
    %cst_88 = arith.constant 1.000000e+00 : f32
    %530 = vector.broadcast %cst_88 : f32 to vector<1x64xf32>
    %531 = arith.addf %530, %529 : vector<1x64xf32>
    %532 = arith.divf %530, %531 : vector<1x64xf32>
    %533 = vector.extract_strided_slice %532 {offsets = [0, 0], sizes = [1, 32], strides = [1, 1]} : vector<1x64xf32> to vector<1x32xf32>
    %534 = vector.extract_strided_slice %532 {offsets = [0, 32], sizes = [1, 32], strides = [1, 1]} : vector<1x64xf32> to vector<1x32xf32>
    %535 = vector.extract_strided_slice %521 {offsets = [0, 64], sizes = [1, 32], strides = [1, 1]} : vector<1x96xf32> to vector<1x32xf32>
    %536 = vector.extract_strided_slice %12 {offsets = [0, 64], sizes = [1, 32], strides = [1, 1]} : vector<1x128xf32> to vector<1x32xf32>
    %537 = arith.addf %535, %536 : vector<1x32xf32>
    %538 = vector.extract_strided_slice %522 {offsets = [0, 64], sizes = [1, 32], strides = [1, 1]} : vector<1x96xf32> to vector<1x32xf32>
    %539 = vector.extract_strided_slice %12 {offsets = [0, 96], sizes = [1, 32], strides = [1, 1]} : vector<1x128xf32> to vector<1x32xf32>
    %540 = arith.addf %538, %539 : vector<1x32xf32>
    %541 = arith.mulf %533, %540 : vector<1x32xf32>
    %542 = arith.addf %537, %541 : vector<1x32xf32>
    %543 = math.tanh %542 : vector<1x32xf32>
    %cst_89 = arith.constant 1.000000e+00 : f32
    %544 = vector.broadcast %cst_89 : f32 to vector<1x32xf32>
    %545 = arith.subf %544, %534 : vector<1x32xf32>
    %546 = arith.mulf %545, %543 : vector<1x32xf32>
    %547 = arith.mulf %534, %482 : vector<1x32xf32>
    %548 = arith.addf %546, %547 : vector<1x32xf32>
    %c7_i32_90 = arith.constant 7 : i32
    %549 = vector.broadcast %c7_i32_90 : i32 to vector<8x32xi32>
    %550 = arith.cmpi eq, %23, %549 : vector<8x32xi32>
    %551 = vector.shape_cast %520 : vector<1x32xf32> to vector<1x32xf32>
    %552 = vector.broadcast %551 : vector<1x32xf32> to vector<8x32xf32>
    %553 = arith.select %550, %552, %487 : vector<8x32xi1>, vector<8x32xf32>
    %c0_i32_91 = arith.constant 0 : i32
    %554 = vector.broadcast %c0_i32_91 : i32 to vector<8x32xi32>
    %555 = arith.cmpi eq, %23, %554 : vector<8x32xi32>
    %556 = vector.shape_cast %548 : vector<1x32xf32> to vector<1x32xf32>
    %557 = vector.broadcast %556 : vector<1x32xf32> to vector<8x32xf32>
    %558 = arith.select %555, %557, %492 : vector<8x32xi1>, vector<8x32xf32>
    %cst_92 = arith.constant dense<0.000000e+00> : vector<8x192xf32>
    %559 = tpu.matmul %553, %1, %cst_92 {dimension_numbers = #tpu.dot_dimension_numbers<[1], [0], [0], [1], [0, 0, 1, 1], [], []>} : vector<8x32xf32>, vector<32x192xf32>, vector<8x192xf32> -> vector<8x192xf32>
    %cst_93 = arith.constant dense<0.000000e+00> : vector<8x192xf32>
    %560 = tpu.matmul %558, %2, %cst_93 {dimension_numbers = #tpu.dot_dimension_numbers<[1], [0], [0], [1], [0, 0, 1, 1], [], []>} : vector<8x32xf32>, vector<32x192xf32>, vector<8x192xf32> -> vector<8x192xf32>
    %561 = arith.addf %559, %560 : vector<8x192xf32>
    %562 = vector.extract_strided_slice %561 {offsets = [0, 0], sizes = [8, 96], strides = [1, 1]} : vector<8x192xf32> to vector<8x96xf32>
    %563 = vector.extract_strided_slice %561 {offsets = [0, 96], sizes = [8, 96], strides = [1, 1]} : vector<8x192xf32> to vector<8x96xf32>
    %cst_94 = arith.constant 0.000000e+00 : f32
    %564 = vector.broadcast %cst_94 : f32 to vector<1x32xf32>
    %cst_95 = arith.constant 0.000000e+00 : f32
    %565 = vector.broadcast %cst_95 : f32 to vector<1x32xf32>
    %cst_96 = arith.constant 0.000000e+00 : f32
    %566 = vector.broadcast %cst_96 : f32 to vector<8x32xf32>
    %cst_97 = arith.constant 0.000000e+00 : f32
    %567 = vector.broadcast %cst_97 : f32 to vector<8x32xf32>
    %568 = vector.extract_strided_slice %562 {offsets = [0, 0], sizes = [1, 96], strides = [1, 1]} : vector<8x96xf32> to vector<1x96xf32>
    %cst_98 = arith.constant dense<0.000000e+00> : vector<1x96xf32>
    %569 = tpu.matmul %564, %5, %cst_98 {dimension_numbers = #tpu.dot_dimension_numbers<[1], [0], [0], [1], [0, 0, 1, 1], [], []>} : vector<1x32xf32>, vector<32x96xf32>, vector<1x96xf32> -> vector<1x96xf32>
    %570 = vector.extract_strided_slice %568 {offsets = [0, 0], sizes = [1, 64], strides = [1, 1]} : vector<1x96xf32> to vector<1x64xf32>
    %571 = vector.extract_strided_slice %569 {offsets = [0, 0], sizes = [1, 64], strides = [1, 1]} : vector<1x96xf32> to vector<1x64xf32>
    %572 = arith.addf %570, %571 : vector<1x64xf32>
    %573 = vector.extract_strided_slice %13 {offsets = [0, 0], sizes = [1, 64], strides = [1, 1]} : vector<1x128xf32> to vector<1x64xf32>
    %574 = arith.addf %572, %573 : vector<1x64xf32>
    %575 = arith.negf %574 : vector<1x64xf32>
    %576 = math.exp %575 : vector<1x64xf32>
    %cst_99 = arith.constant 1.000000e+00 : f32
    %577 = vector.broadcast %cst_99 : f32 to vector<1x64xf32>
    %578 = arith.addf %577, %576 : vector<1x64xf32>
    %579 = arith.divf %577, %578 : vector<1x64xf32>
    %580 = vector.extract_strided_slice %579 {offsets = [0, 0], sizes = [1, 32], strides = [1, 1]} : vector<1x64xf32> to vector<1x32xf32>
    %581 = vector.extract_strided_slice %579 {offsets = [0, 32], sizes = [1, 32], strides = [1, 1]} : vector<1x64xf32> to vector<1x32xf32>
    %582 = vector.extract_strided_slice %568 {offsets = [0, 64], sizes = [1, 32], strides = [1, 1]} : vector<1x96xf32> to vector<1x32xf32>
    %583 = vector.extract_strided_slice %13 {offsets = [0, 64], sizes = [1, 32], strides = [1, 1]} : vector<1x128xf32> to vector<1x32xf32>
    %584 = arith.addf %582, %583 : vector<1x32xf32>
    %585 = vector.extract_strided_slice %569 {offsets = [0, 64], sizes = [1, 32], strides = [1, 1]} : vector<1x96xf32> to vector<1x32xf32>
    %586 = vector.extract_strided_slice %13 {offsets = [0, 96], sizes = [1, 32], strides = [1, 1]} : vector<1x128xf32> to vector<1x32xf32>
    %587 = arith.addf %585, %586 : vector<1x32xf32>
    %588 = arith.mulf %580, %587 : vector<1x32xf32>
    %589 = arith.addf %584, %588 : vector<1x32xf32>
    %590 = math.tanh %589 : vector<1x32xf32>
    %cst_100 = arith.constant 1.000000e+00 : f32
    %591 = vector.broadcast %cst_100 : f32 to vector<1x32xf32>
    %592 = arith.subf %591, %581 : vector<1x32xf32>
    %593 = arith.mulf %592, %590 : vector<1x32xf32>
    %594 = arith.mulf %581, %564 : vector<1x32xf32>
    %595 = arith.addf %593, %594 : vector<1x32xf32>
    %596 = vector.extract_strided_slice %563 {offsets = [7, 0], sizes = [1, 96], strides = [1, 1]} : vector<8x96xf32> to vector<1x96xf32>
    %cst_101 = arith.constant dense<0.000000e+00> : vector<1x96xf32>
    %597 = tpu.matmul %565, %6, %cst_101 {dimension_numbers = #tpu.dot_dimension_numbers<[1], [0], [0], [1], [0, 0, 1, 1], [], []>} : vector<1x32xf32>, vector<32x96xf32>, vector<1x96xf32> -> vector<1x96xf32>
    %598 = vector.extract_strided_slice %596 {offsets = [0, 0], sizes = [1, 64], strides = [1, 1]} : vector<1x96xf32> to vector<1x64xf32>
    %599 = vector.extract_strided_slice %597 {offsets = [0, 0], sizes = [1, 64], strides = [1, 1]} : vector<1x96xf32> to vector<1x64xf32>
    %600 = arith.addf %598, %599 : vector<1x64xf32>
    %601 = vector.extract_strided_slice %14 {offsets = [0, 0], sizes = [1, 64], strides = [1, 1]} : vector<1x128xf32> to vector<1x64xf32>
    %602 = arith.addf %600, %601 : vector<1x64xf32>
    %603 = arith.negf %602 : vector<1x64xf32>
    %604 = math.exp %603 : vector<1x64xf32>
    %cst_102 = arith.constant 1.000000e+00 : f32
    %605 = vector.broadcast %cst_102 : f32 to vector<1x64xf32>
    %606 = arith.addf %605, %604 : vector<1x64xf32>
    %607 = arith.divf %605, %606 : vector<1x64xf32>
    %608 = vector.extract_strided_slice %607 {offsets = [0, 0], sizes = [1, 32], strides = [1, 1]} : vector<1x64xf32> to vector<1x32xf32>
    %609 = vector.extract_strided_slice %607 {offsets = [0, 32], sizes = [1, 32], strides = [1, 1]} : vector<1x64xf32> to vector<1x32xf32>
    %610 = vector.extract_strided_slice %596 {offsets = [0, 64], sizes = [1, 32], strides = [1, 1]} : vector<1x96xf32> to vector<1x32xf32>
    %611 = vector.extract_strided_slice %14 {offsets = [0, 64], sizes = [1, 32], strides = [1, 1]} : vector<1x128xf32> to vector<1x32xf32>
    %612 = arith.addf %610, %611 : vector<1x32xf32>
    %613 = vector.extract_strided_slice %597 {offsets = [0, 64], sizes = [1, 32], strides = [1, 1]} : vector<1x96xf32> to vector<1x32xf32>
    %614 = vector.extract_strided_slice %14 {offsets = [0, 96], sizes = [1, 32], strides = [1, 1]} : vector<1x128xf32> to vector<1x32xf32>
    %615 = arith.addf %613, %614 : vector<1x32xf32>
    %616 = arith.mulf %608, %615 : vector<1x32xf32>
    %617 = arith.addf %612, %616 : vector<1x32xf32>
    %618 = math.tanh %617 : vector<1x32xf32>
    %cst_103 = arith.constant 1.000000e+00 : f32
    %619 = vector.broadcast %cst_103 : f32 to vector<1x32xf32>
    %620 = arith.subf %619, %609 : vector<1x32xf32>
    %621 = arith.mulf %620, %618 : vector<1x32xf32>
    %622 = arith.mulf %609, %565 : vector<1x32xf32>
    %623 = arith.addf %621, %622 : vector<1x32xf32>
    %c0_i32_104 = arith.constant 0 : i32
    %624 = vector.broadcast %c0_i32_104 : i32 to vector<8x32xi32>
    %625 = arith.cmpi eq, %23, %624 : vector<8x32xi32>
    %626 = vector.shape_cast %595 : vector<1x32xf32> to vector<1x32xf32>
    %627 = vector.broadcast %626 : vector<1x32xf32> to vector<8x32xf32>
    %628 = arith.select %625, %627, %566 : vector<8x32xi1>, vector<8x32xf32>
    %c7_i32_105 = arith.constant 7 : i32
    %629 = vector.broadcast %c7_i32_105 : i32 to vector<8x32xi32>
    %630 = arith.cmpi eq, %23, %629 : vector<8x32xi32>
    %631 = vector.shape_cast %623 : vector<1x32xf32> to vector<1x32xf32>
    %632 = vector.broadcast %631 : vector<1x32xf32> to vector<8x32xf32>
    %633 = arith.select %630, %632, %567 : vector<8x32xi1>, vector<8x32xf32>
    %634 = vector.extract_strided_slice %562 {offsets = [1, 0], sizes = [1, 96], strides = [1, 1]} : vector<8x96xf32> to vector<1x96xf32>
    %cst_106 = arith.constant dense<0.000000e+00> : vector<1x96xf32>
    %635 = tpu.matmul %595, %5, %cst_106 {dimension_numbers = #tpu.dot_dimension_numbers<[1], [0], [0], [1], [0, 0, 1, 1], [], []>} : vector<1x32xf32>, vector<32x96xf32>, vector<1x96xf32> -> vector<1x96xf32>
    %636 = vector.extract_strided_slice %634 {offsets = [0, 0], sizes = [1, 64], strides = [1, 1]} : vector<1x96xf32> to vector<1x64xf32>
    %637 = vector.extract_strided_slice %635 {offsets = [0, 0], sizes = [1, 64], strides = [1, 1]} : vector<1x96xf32> to vector<1x64xf32>
    %638 = arith.addf %636, %637 : vector<1x64xf32>
    %639 = vector.extract_strided_slice %13 {offsets = [0, 0], sizes = [1, 64], strides = [1, 1]} : vector<1x128xf32> to vector<1x64xf32>
    %640 = arith.addf %638, %639 : vector<1x64xf32>
    %641 = arith.negf %640 : vector<1x64xf32>
    %642 = math.exp %641 : vector<1x64xf32>
    %cst_107 = arith.constant 1.000000e+00 : f32
    %643 = vector.broadcast %cst_107 : f32 to vector<1x64xf32>
    %644 = arith.addf %643, %642 : vector<1x64xf32>
    %645 = arith.divf %643, %644 : vector<1x64xf32>
    %646 = vector.extract_strided_slice %645 {offsets = [0, 0], sizes = [1, 32], strides = [1, 1]} : vector<1x64xf32> to vector<1x32xf32>
    %647 = vector.extract_strided_slice %645 {offsets = [0, 32], sizes = [1, 32], strides = [1, 1]} : vector<1x64xf32> to vector<1x32xf32>
    %648 = vector.extract_strided_slice %634 {offsets = [0, 64], sizes = [1, 32], strides = [1, 1]} : vector<1x96xf32> to vector<1x32xf32>
    %649 = vector.extract_strided_slice %13 {offsets = [0, 64], sizes = [1, 32], strides = [1, 1]} : vector<1x128xf32> to vector<1x32xf32>
    %650 = arith.addf %648, %649 : vector<1x32xf32>
    %651 = vector.extract_strided_slice %635 {offsets = [0, 64], sizes = [1, 32], strides = [1, 1]} : vector<1x96xf32> to vector<1x32xf32>
    %652 = vector.extract_strided_slice %13 {offsets = [0, 96], sizes = [1, 32], strides = [1, 1]} : vector<1x128xf32> to vector<1x32xf32>
    %653 = arith.addf %651, %652 : vector<1x32xf32>
    %654 = arith.mulf %646, %653 : vector<1x32xf32>
    %655 = arith.addf %650, %654 : vector<1x32xf32>
    %656 = math.tanh %655 : vector<1x32xf32>
    %cst_108 = arith.constant 1.000000e+00 : f32
    %657 = vector.broadcast %cst_108 : f32 to vector<1x32xf32>
    %658 = arith.subf %657, %647 : vector<1x32xf32>
    %659 = arith.mulf %658, %656 : vector<1x32xf32>
    %660 = arith.mulf %647, %595 : vector<1x32xf32>
    %661 = arith.addf %659, %660 : vector<1x32xf32>
    %662 = vector.extract_strided_slice %563 {offsets = [6, 0], sizes = [1, 96], strides = [1, 1]} : vector<8x96xf32> to vector<1x96xf32>
    %cst_109 = arith.constant dense<0.000000e+00> : vector<1x96xf32>
    %663 = tpu.matmul %623, %6, %cst_109 {dimension_numbers = #tpu.dot_dimension_numbers<[1], [0], [0], [1], [0, 0, 1, 1], [], []>} : vector<1x32xf32>, vector<32x96xf32>, vector<1x96xf32> -> vector<1x96xf32>
    %664 = vector.extract_strided_slice %662 {offsets = [0, 0], sizes = [1, 64], strides = [1, 1]} : vector<1x96xf32> to vector<1x64xf32>
    %665 = vector.extract_strided_slice %663 {offsets = [0, 0], sizes = [1, 64], strides = [1, 1]} : vector<1x96xf32> to vector<1x64xf32>
    %666 = arith.addf %664, %665 : vector<1x64xf32>
    %667 = vector.extract_strided_slice %14 {offsets = [0, 0], sizes = [1, 64], strides = [1, 1]} : vector<1x128xf32> to vector<1x64xf32>
    %668 = arith.addf %666, %667 : vector<1x64xf32>
    %669 = arith.negf %668 : vector<1x64xf32>
    %670 = math.exp %669 : vector<1x64xf32>
    %cst_110 = arith.constant 1.000000e+00 : f32
    %671 = vector.broadcast %cst_110 : f32 to vector<1x64xf32>
    %672 = arith.addf %671, %670 : vector<1x64xf32>
    %673 = arith.divf %671, %672 : vector<1x64xf32>
    %674 = vector.extract_strided_slice %673 {offsets = [0, 0], sizes = [1, 32], strides = [1, 1]} : vector<1x64xf32> to vector<1x32xf32>
    %675 = vector.extract_strided_slice %673 {offsets = [0, 32], sizes = [1, 32], strides = [1, 1]} : vector<1x64xf32> to vector<1x32xf32>
    %676 = vector.extract_strided_slice %662 {offsets = [0, 64], sizes = [1, 32], strides = [1, 1]} : vector<1x96xf32> to vector<1x32xf32>
    %677 = vector.extract_strided_slice %14 {offsets = [0, 64], sizes = [1, 32], strides = [1, 1]} : vector<1x128xf32> to vector<1x32xf32>
    %678 = arith.addf %676, %677 : vector<1x32xf32>
    %679 = vector.extract_strided_slice %663 {offsets = [0, 64], sizes = [1, 32], strides = [1, 1]} : vector<1x96xf32> to vector<1x32xf32>
    %680 = vector.extract_strided_slice %14 {offsets = [0, 96], sizes = [1, 32], strides = [1, 1]} : vector<1x128xf32> to vector<1x32xf32>
    %681 = arith.addf %679, %680 : vector<1x32xf32>
    %682 = arith.mulf %674, %681 : vector<1x32xf32>
    %683 = arith.addf %678, %682 : vector<1x32xf32>
    %684 = math.tanh %683 : vector<1x32xf32>
    %cst_111 = arith.constant 1.000000e+00 : f32
    %685 = vector.broadcast %cst_111 : f32 to vector<1x32xf32>
    %686 = arith.subf %685, %675 : vector<1x32xf32>
    %687 = arith.mulf %686, %684 : vector<1x32xf32>
    %688 = arith.mulf %675, %623 : vector<1x32xf32>
    %689 = arith.addf %687, %688 : vector<1x32xf32>
    %c1_i32_112 = arith.constant 1 : i32
    %690 = vector.broadcast %c1_i32_112 : i32 to vector<8x32xi32>
    %691 = arith.cmpi eq, %23, %690 : vector<8x32xi32>
    %692 = vector.shape_cast %661 : vector<1x32xf32> to vector<1x32xf32>
    %693 = vector.broadcast %692 : vector<1x32xf32> to vector<8x32xf32>
    %694 = arith.select %691, %693, %628 : vector<8x32xi1>, vector<8x32xf32>
    %c6_i32_113 = arith.constant 6 : i32
    %695 = vector.broadcast %c6_i32_113 : i32 to vector<8x32xi32>
    %696 = arith.cmpi eq, %23, %695 : vector<8x32xi32>
    %697 = vector.shape_cast %689 : vector<1x32xf32> to vector<1x32xf32>
    %698 = vector.broadcast %697 : vector<1x32xf32> to vector<8x32xf32>
    %699 = arith.select %696, %698, %633 : vector<8x32xi1>, vector<8x32xf32>
    %700 = vector.extract_strided_slice %562 {offsets = [2, 0], sizes = [1, 96], strides = [1, 1]} : vector<8x96xf32> to vector<1x96xf32>
    %cst_114 = arith.constant dense<0.000000e+00> : vector<1x96xf32>
    %701 = tpu.matmul %661, %5, %cst_114 {dimension_numbers = #tpu.dot_dimension_numbers<[1], [0], [0], [1], [0, 0, 1, 1], [], []>} : vector<1x32xf32>, vector<32x96xf32>, vector<1x96xf32> -> vector<1x96xf32>
    %702 = vector.extract_strided_slice %700 {offsets = [0, 0], sizes = [1, 64], strides = [1, 1]} : vector<1x96xf32> to vector<1x64xf32>
    %703 = vector.extract_strided_slice %701 {offsets = [0, 0], sizes = [1, 64], strides = [1, 1]} : vector<1x96xf32> to vector<1x64xf32>
    %704 = arith.addf %702, %703 : vector<1x64xf32>
    %705 = vector.extract_strided_slice %13 {offsets = [0, 0], sizes = [1, 64], strides = [1, 1]} : vector<1x128xf32> to vector<1x64xf32>
    %706 = arith.addf %704, %705 : vector<1x64xf32>
    %707 = arith.negf %706 : vector<1x64xf32>
    %708 = math.exp %707 : vector<1x64xf32>
    %cst_115 = arith.constant 1.000000e+00 : f32
    %709 = vector.broadcast %cst_115 : f32 to vector<1x64xf32>
    %710 = arith.addf %709, %708 : vector<1x64xf32>
    %711 = arith.divf %709, %710 : vector<1x64xf32>
    %712 = vector.extract_strided_slice %711 {offsets = [0, 0], sizes = [1, 32], strides = [1, 1]} : vector<1x64xf32> to vector<1x32xf32>
    %713 = vector.extract_strided_slice %711 {offsets = [0, 32], sizes = [1, 32], strides = [1, 1]} : vector<1x64xf32> to vector<1x32xf32>
    %714 = vector.extract_strided_slice %700 {offsets = [0, 64], sizes = [1, 32], strides = [1, 1]} : vector<1x96xf32> to vector<1x32xf32>
    %715 = vector.extract_strided_slice %13 {offsets = [0, 64], sizes = [1, 32], strides = [1, 1]} : vector<1x128xf32> to vector<1x32xf32>
    %716 = arith.addf %714, %715 : vector<1x32xf32>
    %717 = vector.extract_strided_slice %701 {offsets = [0, 64], sizes = [1, 32], strides = [1, 1]} : vector<1x96xf32> to vector<1x32xf32>
    %718 = vector.extract_strided_slice %13 {offsets = [0, 96], sizes = [1, 32], strides = [1, 1]} : vector<1x128xf32> to vector<1x32xf32>
    %719 = arith.addf %717, %718 : vector<1x32xf32>
    %720 = arith.mulf %712, %719 : vector<1x32xf32>
    %721 = arith.addf %716, %720 : vector<1x32xf32>
    %722 = math.tanh %721 : vector<1x32xf32>
    %cst_116 = arith.constant 1.000000e+00 : f32
    %723 = vector.broadcast %cst_116 : f32 to vector<1x32xf32>
    %724 = arith.subf %723, %713 : vector<1x32xf32>
    %725 = arith.mulf %724, %722 : vector<1x32xf32>
    %726 = arith.mulf %713, %661 : vector<1x32xf32>
    %727 = arith.addf %725, %726 : vector<1x32xf32>
    %728 = vector.extract_strided_slice %563 {offsets = [5, 0], sizes = [1, 96], strides = [1, 1]} : vector<8x96xf32> to vector<1x96xf32>
    %cst_117 = arith.constant dense<0.000000e+00> : vector<1x96xf32>
    %729 = tpu.matmul %689, %6, %cst_117 {dimension_numbers = #tpu.dot_dimension_numbers<[1], [0], [0], [1], [0, 0, 1, 1], [], []>} : vector<1x32xf32>, vector<32x96xf32>, vector<1x96xf32> -> vector<1x96xf32>
    %730 = vector.extract_strided_slice %728 {offsets = [0, 0], sizes = [1, 64], strides = [1, 1]} : vector<1x96xf32> to vector<1x64xf32>
    %731 = vector.extract_strided_slice %729 {offsets = [0, 0], sizes = [1, 64], strides = [1, 1]} : vector<1x96xf32> to vector<1x64xf32>
    %732 = arith.addf %730, %731 : vector<1x64xf32>
    %733 = vector.extract_strided_slice %14 {offsets = [0, 0], sizes = [1, 64], strides = [1, 1]} : vector<1x128xf32> to vector<1x64xf32>
    %734 = arith.addf %732, %733 : vector<1x64xf32>
    %735 = arith.negf %734 : vector<1x64xf32>
    %736 = math.exp %735 : vector<1x64xf32>
    %cst_118 = arith.constant 1.000000e+00 : f32
    %737 = vector.broadcast %cst_118 : f32 to vector<1x64xf32>
    %738 = arith.addf %737, %736 : vector<1x64xf32>
    %739 = arith.divf %737, %738 : vector<1x64xf32>
    %740 = vector.extract_strided_slice %739 {offsets = [0, 0], sizes = [1, 32], strides = [1, 1]} : vector<1x64xf32> to vector<1x32xf32>
    %741 = vector.extract_strided_slice %739 {offsets = [0, 32], sizes = [1, 32], strides = [1, 1]} : vector<1x64xf32> to vector<1x32xf32>
    %742 = vector.extract_strided_slice %728 {offsets = [0, 64], sizes = [1, 32], strides = [1, 1]} : vector<1x96xf32> to vector<1x32xf32>
    %743 = vector.extract_strided_slice %14 {offsets = [0, 64], sizes = [1, 32], strides = [1, 1]} : vector<1x128xf32> to vector<1x32xf32>
    %744 = arith.addf %742, %743 : vector<1x32xf32>
    %745 = vector.extract_strided_slice %729 {offsets = [0, 64], sizes = [1, 32], strides = [1, 1]} : vector<1x96xf32> to vector<1x32xf32>
    %746 = vector.extract_strided_slice %14 {offsets = [0, 96], sizes = [1, 32], strides = [1, 1]} : vector<1x128xf32> to vector<1x32xf32>
    %747 = arith.addf %745, %746 : vector<1x32xf32>
    %748 = arith.mulf %740, %747 : vector<1x32xf32>
    %749 = arith.addf %744, %748 : vector<1x32xf32>
    %750 = math.tanh %749 : vector<1x32xf32>
    %cst_119 = arith.constant 1.000000e+00 : f32
    %751 = vector.broadcast %cst_119 : f32 to vector<1x32xf32>
    %752 = arith.subf %751, %741 : vector<1x32xf32>
    %753 = arith.mulf %752, %750 : vector<1x32xf32>
    %754 = arith.mulf %741, %689 : vector<1x32xf32>
    %755 = arith.addf %753, %754 : vector<1x32xf32>
    %c2_i32_120 = arith.constant 2 : i32
    %756 = vector.broadcast %c2_i32_120 : i32 to vector<8x32xi32>
    %757 = arith.cmpi eq, %23, %756 : vector<8x32xi32>
    %758 = vector.shape_cast %727 : vector<1x32xf32> to vector<1x32xf32>
    %759 = vector.broadcast %758 : vector<1x32xf32> to vector<8x32xf32>
    %760 = arith.select %757, %759, %694 : vector<8x32xi1>, vector<8x32xf32>
    %c5_i32_121 = arith.constant 5 : i32
    %761 = vector.broadcast %c5_i32_121 : i32 to vector<8x32xi32>
    %762 = arith.cmpi eq, %23, %761 : vector<8x32xi32>
    %763 = vector.shape_cast %755 : vector<1x32xf32> to vector<1x32xf32>
    %764 = vector.broadcast %763 : vector<1x32xf32> to vector<8x32xf32>
    %765 = arith.select %762, %764, %699 : vector<8x32xi1>, vector<8x32xf32>
    %766 = vector.extract_strided_slice %562 {offsets = [3, 0], sizes = [1, 96], strides = [1, 1]} : vector<8x96xf32> to vector<1x96xf32>
    %cst_122 = arith.constant dense<0.000000e+00> : vector<1x96xf32>
    %767 = tpu.matmul %727, %5, %cst_122 {dimension_numbers = #tpu.dot_dimension_numbers<[1], [0], [0], [1], [0, 0, 1, 1], [], []>} : vector<1x32xf32>, vector<32x96xf32>, vector<1x96xf32> -> vector<1x96xf32>
    %768 = vector.extract_strided_slice %766 {offsets = [0, 0], sizes = [1, 64], strides = [1, 1]} : vector<1x96xf32> to vector<1x64xf32>
    %769 = vector.extract_strided_slice %767 {offsets = [0, 0], sizes = [1, 64], strides = [1, 1]} : vector<1x96xf32> to vector<1x64xf32>
    %770 = arith.addf %768, %769 : vector<1x64xf32>
    %771 = vector.extract_strided_slice %13 {offsets = [0, 0], sizes = [1, 64], strides = [1, 1]} : vector<1x128xf32> to vector<1x64xf32>
    %772 = arith.addf %770, %771 : vector<1x64xf32>
    %773 = arith.negf %772 : vector<1x64xf32>
    %774 = math.exp %773 : vector<1x64xf32>
    %cst_123 = arith.constant 1.000000e+00 : f32
    %775 = vector.broadcast %cst_123 : f32 to vector<1x64xf32>
    %776 = arith.addf %775, %774 : vector<1x64xf32>
    %777 = arith.divf %775, %776 : vector<1x64xf32>
    %778 = vector.extract_strided_slice %777 {offsets = [0, 0], sizes = [1, 32], strides = [1, 1]} : vector<1x64xf32> to vector<1x32xf32>
    %779 = vector.extract_strided_slice %777 {offsets = [0, 32], sizes = [1, 32], strides = [1, 1]} : vector<1x64xf32> to vector<1x32xf32>
    %780 = vector.extract_strided_slice %766 {offsets = [0, 64], sizes = [1, 32], strides = [1, 1]} : vector<1x96xf32> to vector<1x32xf32>
    %781 = vector.extract_strided_slice %13 {offsets = [0, 64], sizes = [1, 32], strides = [1, 1]} : vector<1x128xf32> to vector<1x32xf32>
    %782 = arith.addf %780, %781 : vector<1x32xf32>
    %783 = vector.extract_strided_slice %767 {offsets = [0, 64], sizes = [1, 32], strides = [1, 1]} : vector<1x96xf32> to vector<1x32xf32>
    %784 = vector.extract_strided_slice %13 {offsets = [0, 96], sizes = [1, 32], strides = [1, 1]} : vector<1x128xf32> to vector<1x32xf32>
    %785 = arith.addf %783, %784 : vector<1x32xf32>
    %786 = arith.mulf %778, %785 : vector<1x32xf32>
    %787 = arith.addf %782, %786 : vector<1x32xf32>
    %788 = math.tanh %787 : vector<1x32xf32>
    %cst_124 = arith.constant 1.000000e+00 : f32
    %789 = vector.broadcast %cst_124 : f32 to vector<1x32xf32>
    %790 = arith.subf %789, %779 : vector<1x32xf32>
    %791 = arith.mulf %790, %788 : vector<1x32xf32>
    %792 = arith.mulf %779, %727 : vector<1x32xf32>
    %793 = arith.addf %791, %792 : vector<1x32xf32>
    %794 = vector.extract_strided_slice %563 {offsets = [4, 0], sizes = [1, 96], strides = [1, 1]} : vector<8x96xf32> to vector<1x96xf32>
    %cst_125 = arith.constant dense<0.000000e+00> : vector<1x96xf32>
    %795 = tpu.matmul %755, %6, %cst_125 {dimension_numbers = #tpu.dot_dimension_numbers<[1], [0], [0], [1], [0, 0, 1, 1], [], []>} : vector<1x32xf32>, vector<32x96xf32>, vector<1x96xf32> -> vector<1x96xf32>
    %796 = vector.extract_strided_slice %794 {offsets = [0, 0], sizes = [1, 64], strides = [1, 1]} : vector<1x96xf32> to vector<1x64xf32>
    %797 = vector.extract_strided_slice %795 {offsets = [0, 0], sizes = [1, 64], strides = [1, 1]} : vector<1x96xf32> to vector<1x64xf32>
    %798 = arith.addf %796, %797 : vector<1x64xf32>
    %799 = vector.extract_strided_slice %14 {offsets = [0, 0], sizes = [1, 64], strides = [1, 1]} : vector<1x128xf32> to vector<1x64xf32>
    %800 = arith.addf %798, %799 : vector<1x64xf32>
    %801 = arith.negf %800 : vector<1x64xf32>
    %802 = math.exp %801 : vector<1x64xf32>
    %cst_126 = arith.constant 1.000000e+00 : f32
    %803 = vector.broadcast %cst_126 : f32 to vector<1x64xf32>
    %804 = arith.addf %803, %802 : vector<1x64xf32>
    %805 = arith.divf %803, %804 : vector<1x64xf32>
    %806 = vector.extract_strided_slice %805 {offsets = [0, 0], sizes = [1, 32], strides = [1, 1]} : vector<1x64xf32> to vector<1x32xf32>
    %807 = vector.extract_strided_slice %805 {offsets = [0, 32], sizes = [1, 32], strides = [1, 1]} : vector<1x64xf32> to vector<1x32xf32>
    %808 = vector.extract_strided_slice %794 {offsets = [0, 64], sizes = [1, 32], strides = [1, 1]} : vector<1x96xf32> to vector<1x32xf32>
    %809 = vector.extract_strided_slice %14 {offsets = [0, 64], sizes = [1, 32], strides = [1, 1]} : vector<1x128xf32> to vector<1x32xf32>
    %810 = arith.addf %808, %809 : vector<1x32xf32>
    %811 = vector.extract_strided_slice %795 {offsets = [0, 64], sizes = [1, 32], strides = [1, 1]} : vector<1x96xf32> to vector<1x32xf32>
    %812 = vector.extract_strided_slice %14 {offsets = [0, 96], sizes = [1, 32], strides = [1, 1]} : vector<1x128xf32> to vector<1x32xf32>
    %813 = arith.addf %811, %812 : vector<1x32xf32>
    %814 = arith.mulf %806, %813 : vector<1x32xf32>
    %815 = arith.addf %810, %814 : vector<1x32xf32>
    %816 = math.tanh %815 : vector<1x32xf32>
    %cst_127 = arith.constant 1.000000e+00 : f32
    %817 = vector.broadcast %cst_127 : f32 to vector<1x32xf32>
    %818 = arith.subf %817, %807 : vector<1x32xf32>
    %819 = arith.mulf %818, %816 : vector<1x32xf32>
    %820 = arith.mulf %807, %755 : vector<1x32xf32>
    %821 = arith.addf %819, %820 : vector<1x32xf32>
    %c3_i32_128 = arith.constant 3 : i32
    %822 = vector.broadcast %c3_i32_128 : i32 to vector<8x32xi32>
    %823 = arith.cmpi eq, %23, %822 : vector<8x32xi32>
    %824 = vector.shape_cast %793 : vector<1x32xf32> to vector<1x32xf32>
    %825 = vector.broadcast %824 : vector<1x32xf32> to vector<8x32xf32>
    %826 = arith.select %823, %825, %760 : vector<8x32xi1>, vector<8x32xf32>
    %c4_i32_129 = arith.constant 4 : i32
    %827 = vector.broadcast %c4_i32_129 : i32 to vector<8x32xi32>
    %828 = arith.cmpi eq, %23, %827 : vector<8x32xi32>
    %829 = vector.shape_cast %821 : vector<1x32xf32> to vector<1x32xf32>
    %830 = vector.broadcast %829 : vector<1x32xf32> to vector<8x32xf32>
    %831 = arith.select %828, %830, %765 : vector<8x32xi1>, vector<8x32xf32>
    %832 = vector.extract_strided_slice %562 {offsets = [4, 0], sizes = [1, 96], strides = [1, 1]} : vector<8x96xf32> to vector<1x96xf32>
    %cst_130 = arith.constant dense<0.000000e+00> : vector<1x96xf32>
    %833 = tpu.matmul %793, %5, %cst_130 {dimension_numbers = #tpu.dot_dimension_numbers<[1], [0], [0], [1], [0, 0, 1, 1], [], []>} : vector<1x32xf32>, vector<32x96xf32>, vector<1x96xf32> -> vector<1x96xf32>
    %834 = vector.extract_strided_slice %832 {offsets = [0, 0], sizes = [1, 64], strides = [1, 1]} : vector<1x96xf32> to vector<1x64xf32>
    %835 = vector.extract_strided_slice %833 {offsets = [0, 0], sizes = [1, 64], strides = [1, 1]} : vector<1x96xf32> to vector<1x64xf32>
    %836 = arith.addf %834, %835 : vector<1x64xf32>
    %837 = vector.extract_strided_slice %13 {offsets = [0, 0], sizes = [1, 64], strides = [1, 1]} : vector<1x128xf32> to vector<1x64xf32>
    %838 = arith.addf %836, %837 : vector<1x64xf32>
    %839 = arith.negf %838 : vector<1x64xf32>
    %840 = math.exp %839 : vector<1x64xf32>
    %cst_131 = arith.constant 1.000000e+00 : f32
    %841 = vector.broadcast %cst_131 : f32 to vector<1x64xf32>
    %842 = arith.addf %841, %840 : vector<1x64xf32>
    %843 = arith.divf %841, %842 : vector<1x64xf32>
    %844 = vector.extract_strided_slice %843 {offsets = [0, 0], sizes = [1, 32], strides = [1, 1]} : vector<1x64xf32> to vector<1x32xf32>
    %845 = vector.extract_strided_slice %843 {offsets = [0, 32], sizes = [1, 32], strides = [1, 1]} : vector<1x64xf32> to vector<1x32xf32>
    %846 = vector.extract_strided_slice %832 {offsets = [0, 64], sizes = [1, 32], strides = [1, 1]} : vector<1x96xf32> to vector<1x32xf32>
    %847 = vector.extract_strided_slice %13 {offsets = [0, 64], sizes = [1, 32], strides = [1, 1]} : vector<1x128xf32> to vector<1x32xf32>
    %848 = arith.addf %846, %847 : vector<1x32xf32>
    %849 = vector.extract_strided_slice %833 {offsets = [0, 64], sizes = [1, 32], strides = [1, 1]} : vector<1x96xf32> to vector<1x32xf32>
    %850 = vector.extract_strided_slice %13 {offsets = [0, 96], sizes = [1, 32], strides = [1, 1]} : vector<1x128xf32> to vector<1x32xf32>
    %851 = arith.addf %849, %850 : vector<1x32xf32>
    %852 = arith.mulf %844, %851 : vector<1x32xf32>
    %853 = arith.addf %848, %852 : vector<1x32xf32>
    %854 = math.tanh %853 : vector<1x32xf32>
    %cst_132 = arith.constant 1.000000e+00 : f32
    %855 = vector.broadcast %cst_132 : f32 to vector<1x32xf32>
    %856 = arith.subf %855, %845 : vector<1x32xf32>
    %857 = arith.mulf %856, %854 : vector<1x32xf32>
    %858 = arith.mulf %845, %793 : vector<1x32xf32>
    %859 = arith.addf %857, %858 : vector<1x32xf32>
    %860 = vector.extract_strided_slice %563 {offsets = [3, 0], sizes = [1, 96], strides = [1, 1]} : vector<8x96xf32> to vector<1x96xf32>
    %cst_133 = arith.constant dense<0.000000e+00> : vector<1x96xf32>
    %861 = tpu.matmul %821, %6, %cst_133 {dimension_numbers = #tpu.dot_dimension_numbers<[1], [0], [0], [1], [0, 0, 1, 1], [], []>} : vector<1x32xf32>, vector<32x96xf32>, vector<1x96xf32> -> vector<1x96xf32>
    %862 = vector.extract_strided_slice %860 {offsets = [0, 0], sizes = [1, 64], strides = [1, 1]} : vector<1x96xf32> to vector<1x64xf32>
    %863 = vector.extract_strided_slice %861 {offsets = [0, 0], sizes = [1, 64], strides = [1, 1]} : vector<1x96xf32> to vector<1x64xf32>
    %864 = arith.addf %862, %863 : vector<1x64xf32>
    %865 = vector.extract_strided_slice %14 {offsets = [0, 0], sizes = [1, 64], strides = [1, 1]} : vector<1x128xf32> to vector<1x64xf32>
    %866 = arith.addf %864, %865 : vector<1x64xf32>
    %867 = arith.negf %866 : vector<1x64xf32>
    %868 = math.exp %867 : vector<1x64xf32>
    %cst_134 = arith.constant 1.000000e+00 : f32
    %869 = vector.broadcast %cst_134 : f32 to vector<1x64xf32>
    %870 = arith.addf %869, %868 : vector<1x64xf32>
    %871 = arith.divf %869, %870 : vector<1x64xf32>
    %872 = vector.extract_strided_slice %871 {offsets = [0, 0], sizes = [1, 32], strides = [1, 1]} : vector<1x64xf32> to vector<1x32xf32>
    %873 = vector.extract_strided_slice %871 {offsets = [0, 32], sizes = [1, 32], strides = [1, 1]} : vector<1x64xf32> to vector<1x32xf32>
    %874 = vector.extract_strided_slice %860 {offsets = [0, 64], sizes = [1, 32], strides = [1, 1]} : vector<1x96xf32> to vector<1x32xf32>
    %875 = vector.extract_strided_slice %14 {offsets = [0, 64], sizes = [1, 32], strides = [1, 1]} : vector<1x128xf32> to vector<1x32xf32>
    %876 = arith.addf %874, %875 : vector<1x32xf32>
    %877 = vector.extract_strided_slice %861 {offsets = [0, 64], sizes = [1, 32], strides = [1, 1]} : vector<1x96xf32> to vector<1x32xf32>
    %878 = vector.extract_strided_slice %14 {offsets = [0, 96], sizes = [1, 32], strides = [1, 1]} : vector<1x128xf32> to vector<1x32xf32>
    %879 = arith.addf %877, %878 : vector<1x32xf32>
    %880 = arith.mulf %872, %879 : vector<1x32xf32>
    %881 = arith.addf %876, %880 : vector<1x32xf32>
    %882 = math.tanh %881 : vector<1x32xf32>
    %cst_135 = arith.constant 1.000000e+00 : f32
    %883 = vector.broadcast %cst_135 : f32 to vector<1x32xf32>
    %884 = arith.subf %883, %873 : vector<1x32xf32>
    %885 = arith.mulf %884, %882 : vector<1x32xf32>
    %886 = arith.mulf %873, %821 : vector<1x32xf32>
    %887 = arith.addf %885, %886 : vector<1x32xf32>
    %c4_i32_136 = arith.constant 4 : i32
    %888 = vector.broadcast %c4_i32_136 : i32 to vector<8x32xi32>
    %889 = arith.cmpi eq, %23, %888 : vector<8x32xi32>
    %890 = vector.shape_cast %859 : vector<1x32xf32> to vector<1x32xf32>
    %891 = vector.broadcast %890 : vector<1x32xf32> to vector<8x32xf32>
    %892 = arith.select %889, %891, %826 : vector<8x32xi1>, vector<8x32xf32>
    %c3_i32_137 = arith.constant 3 : i32
    %893 = vector.broadcast %c3_i32_137 : i32 to vector<8x32xi32>
    %894 = arith.cmpi eq, %23, %893 : vector<8x32xi32>
    %895 = vector.shape_cast %887 : vector<1x32xf32> to vector<1x32xf32>
    %896 = vector.broadcast %895 : vector<1x32xf32> to vector<8x32xf32>
    %897 = arith.select %894, %896, %831 : vector<8x32xi1>, vector<8x32xf32>
    %898 = vector.extract_strided_slice %562 {offsets = [5, 0], sizes = [1, 96], strides = [1, 1]} : vector<8x96xf32> to vector<1x96xf32>
    %cst_138 = arith.constant dense<0.000000e+00> : vector<1x96xf32>
    %899 = tpu.matmul %859, %5, %cst_138 {dimension_numbers = #tpu.dot_dimension_numbers<[1], [0], [0], [1], [0, 0, 1, 1], [], []>} : vector<1x32xf32>, vector<32x96xf32>, vector<1x96xf32> -> vector<1x96xf32>
    %900 = vector.extract_strided_slice %898 {offsets = [0, 0], sizes = [1, 64], strides = [1, 1]} : vector<1x96xf32> to vector<1x64xf32>
    %901 = vector.extract_strided_slice %899 {offsets = [0, 0], sizes = [1, 64], strides = [1, 1]} : vector<1x96xf32> to vector<1x64xf32>
    %902 = arith.addf %900, %901 : vector<1x64xf32>
    %903 = vector.extract_strided_slice %13 {offsets = [0, 0], sizes = [1, 64], strides = [1, 1]} : vector<1x128xf32> to vector<1x64xf32>
    %904 = arith.addf %902, %903 : vector<1x64xf32>
    %905 = arith.negf %904 : vector<1x64xf32>
    %906 = math.exp %905 : vector<1x64xf32>
    %cst_139 = arith.constant 1.000000e+00 : f32
    %907 = vector.broadcast %cst_139 : f32 to vector<1x64xf32>
    %908 = arith.addf %907, %906 : vector<1x64xf32>
    %909 = arith.divf %907, %908 : vector<1x64xf32>
    %910 = vector.extract_strided_slice %909 {offsets = [0, 0], sizes = [1, 32], strides = [1, 1]} : vector<1x64xf32> to vector<1x32xf32>
    %911 = vector.extract_strided_slice %909 {offsets = [0, 32], sizes = [1, 32], strides = [1, 1]} : vector<1x64xf32> to vector<1x32xf32>
    %912 = vector.extract_strided_slice %898 {offsets = [0, 64], sizes = [1, 32], strides = [1, 1]} : vector<1x96xf32> to vector<1x32xf32>
    %913 = vector.extract_strided_slice %13 {offsets = [0, 64], sizes = [1, 32], strides = [1, 1]} : vector<1x128xf32> to vector<1x32xf32>
    %914 = arith.addf %912, %913 : vector<1x32xf32>
    %915 = vector.extract_strided_slice %899 {offsets = [0, 64], sizes = [1, 32], strides = [1, 1]} : vector<1x96xf32> to vector<1x32xf32>
    %916 = vector.extract_strided_slice %13 {offsets = [0, 96], sizes = [1, 32], strides = [1, 1]} : vector<1x128xf32> to vector<1x32xf32>
    %917 = arith.addf %915, %916 : vector<1x32xf32>
    %918 = arith.mulf %910, %917 : vector<1x32xf32>
    %919 = arith.addf %914, %918 : vector<1x32xf32>
    %920 = math.tanh %919 : vector<1x32xf32>
    %cst_140 = arith.constant 1.000000e+00 : f32
    %921 = vector.broadcast %cst_140 : f32 to vector<1x32xf32>
    %922 = arith.subf %921, %911 : vector<1x32xf32>
    %923 = arith.mulf %922, %920 : vector<1x32xf32>
    %924 = arith.mulf %911, %859 : vector<1x32xf32>
    %925 = arith.addf %923, %924 : vector<1x32xf32>
    %926 = vector.extract_strided_slice %563 {offsets = [2, 0], sizes = [1, 96], strides = [1, 1]} : vector<8x96xf32> to vector<1x96xf32>
    %cst_141 = arith.constant dense<0.000000e+00> : vector<1x96xf32>
    %927 = tpu.matmul %887, %6, %cst_141 {dimension_numbers = #tpu.dot_dimension_numbers<[1], [0], [0], [1], [0, 0, 1, 1], [], []>} : vector<1x32xf32>, vector<32x96xf32>, vector<1x96xf32> -> vector<1x96xf32>
    %928 = vector.extract_strided_slice %926 {offsets = [0, 0], sizes = [1, 64], strides = [1, 1]} : vector<1x96xf32> to vector<1x64xf32>
    %929 = vector.extract_strided_slice %927 {offsets = [0, 0], sizes = [1, 64], strides = [1, 1]} : vector<1x96xf32> to vector<1x64xf32>
    %930 = arith.addf %928, %929 : vector<1x64xf32>
    %931 = vector.extract_strided_slice %14 {offsets = [0, 0], sizes = [1, 64], strides = [1, 1]} : vector<1x128xf32> to vector<1x64xf32>
    %932 = arith.addf %930, %931 : vector<1x64xf32>
    %933 = arith.negf %932 : vector<1x64xf32>
    %934 = math.exp %933 : vector<1x64xf32>
    %cst_142 = arith.constant 1.000000e+00 : f32
    %935 = vector.broadcast %cst_142 : f32 to vector<1x64xf32>
    %936 = arith.addf %935, %934 : vector<1x64xf32>
    %937 = arith.divf %935, %936 : vector<1x64xf32>
    %938 = vector.extract_strided_slice %937 {offsets = [0, 0], sizes = [1, 32], strides = [1, 1]} : vector<1x64xf32> to vector<1x32xf32>
    %939 = vector.extract_strided_slice %937 {offsets = [0, 32], sizes = [1, 32], strides = [1, 1]} : vector<1x64xf32> to vector<1x32xf32>
    %940 = vector.extract_strided_slice %926 {offsets = [0, 64], sizes = [1, 32], strides = [1, 1]} : vector<1x96xf32> to vector<1x32xf32>
    %941 = vector.extract_strided_slice %14 {offsets = [0, 64], sizes = [1, 32], strides = [1, 1]} : vector<1x128xf32> to vector<1x32xf32>
    %942 = arith.addf %940, %941 : vector<1x32xf32>
    %943 = vector.extract_strided_slice %927 {offsets = [0, 64], sizes = [1, 32], strides = [1, 1]} : vector<1x96xf32> to vector<1x32xf32>
    %944 = vector.extract_strided_slice %14 {offsets = [0, 96], sizes = [1, 32], strides = [1, 1]} : vector<1x128xf32> to vector<1x32xf32>
    %945 = arith.addf %943, %944 : vector<1x32xf32>
    %946 = arith.mulf %938, %945 : vector<1x32xf32>
    %947 = arith.addf %942, %946 : vector<1x32xf32>
    %948 = math.tanh %947 : vector<1x32xf32>
    %cst_143 = arith.constant 1.000000e+00 : f32
    %949 = vector.broadcast %cst_143 : f32 to vector<1x32xf32>
    %950 = arith.subf %949, %939 : vector<1x32xf32>
    %951 = arith.mulf %950, %948 : vector<1x32xf32>
    %952 = arith.mulf %939, %887 : vector<1x32xf32>
    %953 = arith.addf %951, %952 : vector<1x32xf32>
    %c5_i32_144 = arith.constant 5 : i32
    %954 = vector.broadcast %c5_i32_144 : i32 to vector<8x32xi32>
    %955 = arith.cmpi eq, %23, %954 : vector<8x32xi32>
    %956 = vector.shape_cast %925 : vector<1x32xf32> to vector<1x32xf32>
    %957 = vector.broadcast %956 : vector<1x32xf32> to vector<8x32xf32>
    %958 = arith.select %955, %957, %892 : vector<8x32xi1>, vector<8x32xf32>
    %c2_i32_145 = arith.constant 2 : i32
    %959 = vector.broadcast %c2_i32_145 : i32 to vector<8x32xi32>
    %960 = arith.cmpi eq, %23, %959 : vector<8x32xi32>
    %961 = vector.shape_cast %953 : vector<1x32xf32> to vector<1x32xf32>
    %962 = vector.broadcast %961 : vector<1x32xf32> to vector<8x32xf32>
    %963 = arith.select %960, %962, %897 : vector<8x32xi1>, vector<8x32xf32>
    %964 = vector.extract_strided_slice %562 {offsets = [6, 0], sizes = [1, 96], strides = [1, 1]} : vector<8x96xf32> to vector<1x96xf32>
    %cst_146 = arith.constant dense<0.000000e+00> : vector<1x96xf32>
    %965 = tpu.matmul %925, %5, %cst_146 {dimension_numbers = #tpu.dot_dimension_numbers<[1], [0], [0], [1], [0, 0, 1, 1], [], []>} : vector<1x32xf32>, vector<32x96xf32>, vector<1x96xf32> -> vector<1x96xf32>
    %966 = vector.extract_strided_slice %964 {offsets = [0, 0], sizes = [1, 64], strides = [1, 1]} : vector<1x96xf32> to vector<1x64xf32>
    %967 = vector.extract_strided_slice %965 {offsets = [0, 0], sizes = [1, 64], strides = [1, 1]} : vector<1x96xf32> to vector<1x64xf32>
    %968 = arith.addf %966, %967 : vector<1x64xf32>
    %969 = vector.extract_strided_slice %13 {offsets = [0, 0], sizes = [1, 64], strides = [1, 1]} : vector<1x128xf32> to vector<1x64xf32>
    %970 = arith.addf %968, %969 : vector<1x64xf32>
    %971 = arith.negf %970 : vector<1x64xf32>
    %972 = math.exp %971 : vector<1x64xf32>
    %cst_147 = arith.constant 1.000000e+00 : f32
    %973 = vector.broadcast %cst_147 : f32 to vector<1x64xf32>
    %974 = arith.addf %973, %972 : vector<1x64xf32>
    %975 = arith.divf %973, %974 : vector<1x64xf32>
    %976 = vector.extract_strided_slice %975 {offsets = [0, 0], sizes = [1, 32], strides = [1, 1]} : vector<1x64xf32> to vector<1x32xf32>
    %977 = vector.extract_strided_slice %975 {offsets = [0, 32], sizes = [1, 32], strides = [1, 1]} : vector<1x64xf32> to vector<1x32xf32>
    %978 = vector.extract_strided_slice %964 {offsets = [0, 64], sizes = [1, 32], strides = [1, 1]} : vector<1x96xf32> to vector<1x32xf32>
    %979 = vector.extract_strided_slice %13 {offsets = [0, 64], sizes = [1, 32], strides = [1, 1]} : vector<1x128xf32> to vector<1x32xf32>
    %980 = arith.addf %978, %979 : vector<1x32xf32>
    %981 = vector.extract_strided_slice %965 {offsets = [0, 64], sizes = [1, 32], strides = [1, 1]} : vector<1x96xf32> to vector<1x32xf32>
    %982 = vector.extract_strided_slice %13 {offsets = [0, 96], sizes = [1, 32], strides = [1, 1]} : vector<1x128xf32> to vector<1x32xf32>
    %983 = arith.addf %981, %982 : vector<1x32xf32>
    %984 = arith.mulf %976, %983 : vector<1x32xf32>
    %985 = arith.addf %980, %984 : vector<1x32xf32>
    %986 = math.tanh %985 : vector<1x32xf32>
    %cst_148 = arith.constant 1.000000e+00 : f32
    %987 = vector.broadcast %cst_148 : f32 to vector<1x32xf32>
    %988 = arith.subf %987, %977 : vector<1x32xf32>
    %989 = arith.mulf %988, %986 : vector<1x32xf32>
    %990 = arith.mulf %977, %925 : vector<1x32xf32>
    %991 = arith.addf %989, %990 : vector<1x32xf32>
    %992 = vector.extract_strided_slice %563 {offsets = [1, 0], sizes = [1, 96], strides = [1, 1]} : vector<8x96xf32> to vector<1x96xf32>
    %cst_149 = arith.constant dense<0.000000e+00> : vector<1x96xf32>
    %993 = tpu.matmul %953, %6, %cst_149 {dimension_numbers = #tpu.dot_dimension_numbers<[1], [0], [0], [1], [0, 0, 1, 1], [], []>} : vector<1x32xf32>, vector<32x96xf32>, vector<1x96xf32> -> vector<1x96xf32>
    %994 = vector.extract_strided_slice %992 {offsets = [0, 0], sizes = [1, 64], strides = [1, 1]} : vector<1x96xf32> to vector<1x64xf32>
    %995 = vector.extract_strided_slice %993 {offsets = [0, 0], sizes = [1, 64], strides = [1, 1]} : vector<1x96xf32> to vector<1x64xf32>
    %996 = arith.addf %994, %995 : vector<1x64xf32>
    %997 = vector.extract_strided_slice %14 {offsets = [0, 0], sizes = [1, 64], strides = [1, 1]} : vector<1x128xf32> to vector<1x64xf32>
    %998 = arith.addf %996, %997 : vector<1x64xf32>
    %999 = arith.negf %998 : vector<1x64xf32>
    %1000 = math.exp %999 : vector<1x64xf32>
    %cst_150 = arith.constant 1.000000e+00 : f32
    %1001 = vector.broadcast %cst_150 : f32 to vector<1x64xf32>
    %1002 = arith.addf %1001, %1000 : vector<1x64xf32>
    %1003 = arith.divf %1001, %1002 : vector<1x64xf32>
    %1004 = vector.extract_strided_slice %1003 {offsets = [0, 0], sizes = [1, 32], strides = [1, 1]} : vector<1x64xf32> to vector<1x32xf32>
    %1005 = vector.extract_strided_slice %1003 {offsets = [0, 32], sizes = [1, 32], strides = [1, 1]} : vector<1x64xf32> to vector<1x32xf32>
    %1006 = vector.extract_strided_slice %992 {offsets = [0, 64], sizes = [1, 32], strides = [1, 1]} : vector<1x96xf32> to vector<1x32xf32>
    %1007 = vector.extract_strided_slice %14 {offsets = [0, 64], sizes = [1, 32], strides = [1, 1]} : vector<1x128xf32> to vector<1x32xf32>
    %1008 = arith.addf %1006, %1007 : vector<1x32xf32>
    %1009 = vector.extract_strided_slice %993 {offsets = [0, 64], sizes = [1, 32], strides = [1, 1]} : vector<1x96xf32> to vector<1x32xf32>
    %1010 = vector.extract_strided_slice %14 {offsets = [0, 96], sizes = [1, 32], strides = [1, 1]} : vector<1x128xf32> to vector<1x32xf32>
    %1011 = arith.addf %1009, %1010 : vector<1x32xf32>
    %1012 = arith.mulf %1004, %1011 : vector<1x32xf32>
    %1013 = arith.addf %1008, %1012 : vector<1x32xf32>
    %1014 = math.tanh %1013 : vector<1x32xf32>
    %cst_151 = arith.constant 1.000000e+00 : f32
    %1015 = vector.broadcast %cst_151 : f32 to vector<1x32xf32>
    %1016 = arith.subf %1015, %1005 : vector<1x32xf32>
    %1017 = arith.mulf %1016, %1014 : vector<1x32xf32>
    %1018 = arith.mulf %1005, %953 : vector<1x32xf32>
    %1019 = arith.addf %1017, %1018 : vector<1x32xf32>
    %c6_i32_152 = arith.constant 6 : i32
    %1020 = vector.broadcast %c6_i32_152 : i32 to vector<8x32xi32>
    %1021 = arith.cmpi eq, %23, %1020 : vector<8x32xi32>
    %1022 = vector.shape_cast %991 : vector<1x32xf32> to vector<1x32xf32>
    %1023 = vector.broadcast %1022 : vector<1x32xf32> to vector<8x32xf32>
    %1024 = arith.select %1021, %1023, %958 : vector<8x32xi1>, vector<8x32xf32>
    %c1_i32_153 = arith.constant 1 : i32
    %1025 = vector.broadcast %c1_i32_153 : i32 to vector<8x32xi32>
    %1026 = arith.cmpi eq, %23, %1025 : vector<8x32xi32>
    %1027 = vector.shape_cast %1019 : vector<1x32xf32> to vector<1x32xf32>
    %1028 = vector.broadcast %1027 : vector<1x32xf32> to vector<8x32xf32>
    %1029 = arith.select %1026, %1028, %963 : vector<8x32xi1>, vector<8x32xf32>
    %1030 = vector.extract_strided_slice %562 {offsets = [7, 0], sizes = [1, 96], strides = [1, 1]} : vector<8x96xf32> to vector<1x96xf32>
    %cst_154 = arith.constant dense<0.000000e+00> : vector<1x96xf32>
    %1031 = tpu.matmul %991, %5, %cst_154 {dimension_numbers = #tpu.dot_dimension_numbers<[1], [0], [0], [1], [0, 0, 1, 1], [], []>} : vector<1x32xf32>, vector<32x96xf32>, vector<1x96xf32> -> vector<1x96xf32>
    %1032 = vector.extract_strided_slice %1030 {offsets = [0, 0], sizes = [1, 64], strides = [1, 1]} : vector<1x96xf32> to vector<1x64xf32>
    %1033 = vector.extract_strided_slice %1031 {offsets = [0, 0], sizes = [1, 64], strides = [1, 1]} : vector<1x96xf32> to vector<1x64xf32>
    %1034 = arith.addf %1032, %1033 : vector<1x64xf32>
    %1035 = vector.extract_strided_slice %13 {offsets = [0, 0], sizes = [1, 64], strides = [1, 1]} : vector<1x128xf32> to vector<1x64xf32>
    %1036 = arith.addf %1034, %1035 : vector<1x64xf32>
    %1037 = arith.negf %1036 : vector<1x64xf32>
    %1038 = math.exp %1037 : vector<1x64xf32>
    %cst_155 = arith.constant 1.000000e+00 : f32
    %1039 = vector.broadcast %cst_155 : f32 to vector<1x64xf32>
    %1040 = arith.addf %1039, %1038 : vector<1x64xf32>
    %1041 = arith.divf %1039, %1040 : vector<1x64xf32>
    %1042 = vector.extract_strided_slice %1041 {offsets = [0, 0], sizes = [1, 32], strides = [1, 1]} : vector<1x64xf32> to vector<1x32xf32>
    %1043 = vector.extract_strided_slice %1041 {offsets = [0, 32], sizes = [1, 32], strides = [1, 1]} : vector<1x64xf32> to vector<1x32xf32>
    %1044 = vector.extract_strided_slice %1030 {offsets = [0, 64], sizes = [1, 32], strides = [1, 1]} : vector<1x96xf32> to vector<1x32xf32>
    %1045 = vector.extract_strided_slice %13 {offsets = [0, 64], sizes = [1, 32], strides = [1, 1]} : vector<1x128xf32> to vector<1x32xf32>
    %1046 = arith.addf %1044, %1045 : vector<1x32xf32>
    %1047 = vector.extract_strided_slice %1031 {offsets = [0, 64], sizes = [1, 32], strides = [1, 1]} : vector<1x96xf32> to vector<1x32xf32>
    %1048 = vector.extract_strided_slice %13 {offsets = [0, 96], sizes = [1, 32], strides = [1, 1]} : vector<1x128xf32> to vector<1x32xf32>
    %1049 = arith.addf %1047, %1048 : vector<1x32xf32>
    %1050 = arith.mulf %1042, %1049 : vector<1x32xf32>
    %1051 = arith.addf %1046, %1050 : vector<1x32xf32>
    %1052 = math.tanh %1051 : vector<1x32xf32>
    %cst_156 = arith.constant 1.000000e+00 : f32
    %1053 = vector.broadcast %cst_156 : f32 to vector<1x32xf32>
    %1054 = arith.subf %1053, %1043 : vector<1x32xf32>
    %1055 = arith.mulf %1054, %1052 : vector<1x32xf32>
    %1056 = arith.mulf %1043, %991 : vector<1x32xf32>
    %1057 = arith.addf %1055, %1056 : vector<1x32xf32>
    %1058 = vector.extract_strided_slice %563 {offsets = [0, 0], sizes = [1, 96], strides = [1, 1]} : vector<8x96xf32> to vector<1x96xf32>
    %cst_157 = arith.constant dense<0.000000e+00> : vector<1x96xf32>
    %1059 = tpu.matmul %1019, %6, %cst_157 {dimension_numbers = #tpu.dot_dimension_numbers<[1], [0], [0], [1], [0, 0, 1, 1], [], []>} : vector<1x32xf32>, vector<32x96xf32>, vector<1x96xf32> -> vector<1x96xf32>
    %1060 = vector.extract_strided_slice %1058 {offsets = [0, 0], sizes = [1, 64], strides = [1, 1]} : vector<1x96xf32> to vector<1x64xf32>
    %1061 = vector.extract_strided_slice %1059 {offsets = [0, 0], sizes = [1, 64], strides = [1, 1]} : vector<1x96xf32> to vector<1x64xf32>
    %1062 = arith.addf %1060, %1061 : vector<1x64xf32>
    %1063 = vector.extract_strided_slice %14 {offsets = [0, 0], sizes = [1, 64], strides = [1, 1]} : vector<1x128xf32> to vector<1x64xf32>
    %1064 = arith.addf %1062, %1063 : vector<1x64xf32>
    %1065 = arith.negf %1064 : vector<1x64xf32>
    %1066 = math.exp %1065 : vector<1x64xf32>
    %cst_158 = arith.constant 1.000000e+00 : f32
    %1067 = vector.broadcast %cst_158 : f32 to vector<1x64xf32>
    %1068 = arith.addf %1067, %1066 : vector<1x64xf32>
    %1069 = arith.divf %1067, %1068 : vector<1x64xf32>
    %1070 = vector.extract_strided_slice %1069 {offsets = [0, 0], sizes = [1, 32], strides = [1, 1]} : vector<1x64xf32> to vector<1x32xf32>
    %1071 = vector.extract_strided_slice %1069 {offsets = [0, 32], sizes = [1, 32], strides = [1, 1]} : vector<1x64xf32> to vector<1x32xf32>
    %1072 = vector.extract_strided_slice %1058 {offsets = [0, 64], sizes = [1, 32], strides = [1, 1]} : vector<1x96xf32> to vector<1x32xf32>
    %1073 = vector.extract_strided_slice %14 {offsets = [0, 64], sizes = [1, 32], strides = [1, 1]} : vector<1x128xf32> to vector<1x32xf32>
    %1074 = arith.addf %1072, %1073 : vector<1x32xf32>
    %1075 = vector.extract_strided_slice %1059 {offsets = [0, 64], sizes = [1, 32], strides = [1, 1]} : vector<1x96xf32> to vector<1x32xf32>
    %1076 = vector.extract_strided_slice %14 {offsets = [0, 96], sizes = [1, 32], strides = [1, 1]} : vector<1x128xf32> to vector<1x32xf32>
    %1077 = arith.addf %1075, %1076 : vector<1x32xf32>
    %1078 = arith.mulf %1070, %1077 : vector<1x32xf32>
    %1079 = arith.addf %1074, %1078 : vector<1x32xf32>
    %1080 = math.tanh %1079 : vector<1x32xf32>
    %cst_159 = arith.constant 1.000000e+00 : f32
    %1081 = vector.broadcast %cst_159 : f32 to vector<1x32xf32>
    %1082 = arith.subf %1081, %1071 : vector<1x32xf32>
    %1083 = arith.mulf %1082, %1080 : vector<1x32xf32>
    %1084 = arith.mulf %1071, %1019 : vector<1x32xf32>
    %1085 = arith.addf %1083, %1084 : vector<1x32xf32>
    %c7_i32_160 = arith.constant 7 : i32
    %1086 = vector.broadcast %c7_i32_160 : i32 to vector<8x32xi32>
    %1087 = arith.cmpi eq, %23, %1086 : vector<8x32xi32>
    %1088 = vector.shape_cast %1057 : vector<1x32xf32> to vector<1x32xf32>
    %1089 = vector.broadcast %1088 : vector<1x32xf32> to vector<8x32xf32>
    %1090 = arith.select %1087, %1089, %1024 : vector<8x32xi1>, vector<8x32xf32>
    %c0_i32_161 = arith.constant 0 : i32
    %1091 = vector.broadcast %c0_i32_161 : i32 to vector<8x32xi32>
    %1092 = arith.cmpi eq, %23, %1091 : vector<8x32xi32>
    %1093 = vector.shape_cast %1085 : vector<1x32xf32> to vector<1x32xf32>
    %1094 = vector.broadcast %1093 : vector<1x32xf32> to vector<8x32xf32>
    %1095 = arith.select %1092, %1094, %1029 : vector<8x32xi1>, vector<8x32xf32>
    %1096 = arith.addf %1090, %1095 : vector<8x32xf32>
    %1097 = tpu.transpose %1096, [1, 0] : vector<8x32xf32> -> vector<32x8xf32>
    %cst_162 = arith.constant dense<0.000000e+00> : vector<8x64xf32>
    %1098 = tpu.matmul %1096, %19, %cst_162 {dimension_numbers = #tpu.dot_dimension_numbers<[1], [0], [0], [1], [0, 0, 1, 1], [], []>} : vector<8x32xf32>, vector<32x64xf32>, vector<8x64xf32> -> vector<8x64xf32>
    %1099 = tpu.iota {dimensions = array<i32: 1>} : vector<1x64xi32>
    %1100 = tpu.iota {dimensions = array<i32: 1>} : vector<1x6xi32>
    %c1_i32_163 = arith.constant 1 : i32
    %1101 = vector.broadcast %c1_i32_163 : i32 to vector<1x64xi32>
    %1102 = arith.cmpi eq, %1099, %1101 : vector<1x64xi32>
    %1103 = arith.extui %1102 : vector<1x64xi1> to vector<1x64xi32>
    %1104 = arith.sitofp %1103 : vector<1x64xi32> to vector<1x64xf32>
    %c0_i32_164 = arith.constant 0 : i32
    %1105 = vector.broadcast %c0_i32_164 : i32 to vector<1x6xi32>
    %cst_165 = arith.constant 0.000000e+00 : f32
    %1106 = vector.broadcast %cst_165 : f32 to vector<1x6xf32>
    %cst_166 = arith.constant dense<0.000000e+00> : vector<1x96xf32>
    %1107 = tpu.matmul %1104, %10, %cst_166 {dimension_numbers = #tpu.dot_dimension_numbers<[1], [0], [0], [1], [0, 0, 1, 1], [], []>} : vector<1x64xf32>, vector<64x96xf32>, vector<1x96xf32> -> vector<1x96xf32>
    %cst_167 = arith.constant dense<0.000000e+00> : vector<1x96xf32>
    %1108 = tpu.matmul %520, %7, %cst_167 {dimension_numbers = #tpu.dot_dimension_numbers<[1], [0], [0], [1], [0, 0, 1, 1], [], []>} : vector<1x32xf32>, vector<32x96xf32>, vector<1x96xf32> -> vector<1x96xf32>
    %1109 = vector.extract_strided_slice %1107 {offsets = [0, 0], sizes = [1, 64], strides = [1, 1]} : vector<1x96xf32> to vector<1x64xf32>
    %1110 = vector.extract_strided_slice %1108 {offsets = [0, 0], sizes = [1, 64], strides = [1, 1]} : vector<1x96xf32> to vector<1x64xf32>
    %1111 = arith.addf %1109, %1110 : vector<1x64xf32>
    %1112 = vector.extract_strided_slice %15 {offsets = [0, 0], sizes = [1, 64], strides = [1, 1]} : vector<1x128xf32> to vector<1x64xf32>
    %1113 = arith.addf %1111, %1112 : vector<1x64xf32>
    %1114 = arith.negf %1113 : vector<1x64xf32>
    %1115 = math.exp %1114 : vector<1x64xf32>
    %cst_168 = arith.constant 1.000000e+00 : f32
    %1116 = vector.broadcast %cst_168 : f32 to vector<1x64xf32>
    %1117 = arith.addf %1116, %1115 : vector<1x64xf32>
    %1118 = arith.divf %1116, %1117 : vector<1x64xf32>
    %1119 = vector.extract_strided_slice %1118 {offsets = [0, 0], sizes = [1, 32], strides = [1, 1]} : vector<1x64xf32> to vector<1x32xf32>
    %1120 = vector.extract_strided_slice %1118 {offsets = [0, 32], sizes = [1, 32], strides = [1, 1]} : vector<1x64xf32> to vector<1x32xf32>
    %1121 = vector.extract_strided_slice %1107 {offsets = [0, 64], sizes = [1, 32], strides = [1, 1]} : vector<1x96xf32> to vector<1x32xf32>
    %1122 = vector.extract_strided_slice %15 {offsets = [0, 64], sizes = [1, 32], strides = [1, 1]} : vector<1x128xf32> to vector<1x32xf32>
    %1123 = arith.addf %1121, %1122 : vector<1x32xf32>
    %1124 = vector.extract_strided_slice %1108 {offsets = [0, 64], sizes = [1, 32], strides = [1, 1]} : vector<1x96xf32> to vector<1x32xf32>
    %1125 = vector.extract_strided_slice %15 {offsets = [0, 96], sizes = [1, 32], strides = [1, 1]} : vector<1x128xf32> to vector<1x32xf32>
    %1126 = arith.addf %1124, %1125 : vector<1x32xf32>
    %1127 = arith.mulf %1119, %1126 : vector<1x32xf32>
    %1128 = arith.addf %1123, %1127 : vector<1x32xf32>
    %1129 = math.tanh %1128 : vector<1x32xf32>
    %cst_169 = arith.constant 1.000000e+00 : f32
    %1130 = vector.broadcast %cst_169 : f32 to vector<1x32xf32>
    %1131 = arith.subf %1130, %1120 : vector<1x32xf32>
    %1132 = arith.mulf %1131, %1129 : vector<1x32xf32>
    %1133 = arith.mulf %1120, %520 : vector<1x32xf32>
    %1134 = arith.addf %1132, %1133 : vector<1x32xf32>
    %cst_170 = arith.constant dense<0.000000e+00> : vector<1x96xf32>
    %1135 = tpu.matmul %1134, %9, %cst_170 {dimension_numbers = #tpu.dot_dimension_numbers<[1], [0], [0], [1], [0, 0, 1, 1], [], []>} : vector<1x32xf32>, vector<32x96xf32>, vector<1x96xf32> -> vector<1x96xf32>
    %cst_171 = arith.constant dense<0.000000e+00> : vector<1x96xf32>
    %1136 = tpu.matmul %548, %8, %cst_171 {dimension_numbers = #tpu.dot_dimension_numbers<[1], [0], [0], [1], [0, 0, 1, 1], [], []>} : vector<1x32xf32>, vector<32x96xf32>, vector<1x96xf32> -> vector<1x96xf32>
    %1137 = vector.extract_strided_slice %1135 {offsets = [0, 0], sizes = [1, 64], strides = [1, 1]} : vector<1x96xf32> to vector<1x64xf32>
    %1138 = vector.extract_strided_slice %1136 {offsets = [0, 0], sizes = [1, 64], strides = [1, 1]} : vector<1x96xf32> to vector<1x64xf32>
    %1139 = arith.addf %1137, %1138 : vector<1x64xf32>
    %1140 = vector.extract_strided_slice %16 {offsets = [0, 0], sizes = [1, 64], strides = [1, 1]} : vector<1x128xf32> to vector<1x64xf32>
    %1141 = arith.addf %1139, %1140 : vector<1x64xf32>
    %1142 = arith.negf %1141 : vector<1x64xf32>
    %1143 = math.exp %1142 : vector<1x64xf32>
    %cst_172 = arith.constant 1.000000e+00 : f32
    %1144 = vector.broadcast %cst_172 : f32 to vector<1x64xf32>
    %1145 = arith.addf %1144, %1143 : vector<1x64xf32>
    %1146 = arith.divf %1144, %1145 : vector<1x64xf32>
    %1147 = vector.extract_strided_slice %1146 {offsets = [0, 0], sizes = [1, 32], strides = [1, 1]} : vector<1x64xf32> to vector<1x32xf32>
    %1148 = vector.extract_strided_slice %1146 {offsets = [0, 32], sizes = [1, 32], strides = [1, 1]} : vector<1x64xf32> to vector<1x32xf32>
    %1149 = vector.extract_strided_slice %1135 {offsets = [0, 64], sizes = [1, 32], strides = [1, 1]} : vector<1x96xf32> to vector<1x32xf32>
    %1150 = vector.extract_strided_slice %16 {offsets = [0, 64], sizes = [1, 32], strides = [1, 1]} : vector<1x128xf32> to vector<1x32xf32>
    %1151 = arith.addf %1149, %1150 : vector<1x32xf32>
    %1152 = vector.extract_strided_slice %1136 {offsets = [0, 64], sizes = [1, 32], strides = [1, 1]} : vector<1x96xf32> to vector<1x32xf32>
    %1153 = vector.extract_strided_slice %16 {offsets = [0, 96], sizes = [1, 32], strides = [1, 1]} : vector<1x128xf32> to vector<1x32xf32>
    %1154 = arith.addf %1152, %1153 : vector<1x32xf32>
    %1155 = arith.mulf %1147, %1154 : vector<1x32xf32>
    %1156 = arith.addf %1151, %1155 : vector<1x32xf32>
    %1157 = math.tanh %1156 : vector<1x32xf32>
    %cst_173 = arith.constant 1.000000e+00 : f32
    %1158 = vector.broadcast %cst_173 : f32 to vector<1x32xf32>
    %1159 = arith.subf %1158, %1148 : vector<1x32xf32>
    %1160 = arith.mulf %1159, %1157 : vector<1x32xf32>
    %1161 = arith.mulf %1148, %548 : vector<1x32xf32>
    %1162 = arith.addf %1160, %1161 : vector<1x32xf32>
    %cst_174 = arith.constant dense<0.000000e+00> : vector<1x64xf32>
    %1163 = tpu.matmul %1162, %18, %cst_174 {dimension_numbers = #tpu.dot_dimension_numbers<[1], [0], [0], [1], [0, 0, 1, 1], [], []>} : vector<1x32xf32>, vector<32x64xf32>, vector<1x64xf32> -> vector<1x64xf32>
    %cst_175 = arith.constant dense<0.000000e+00> : vector<1x8xf32>
    %1164 = tpu.matmul %1162, %1097, %cst_175 {dimension_numbers = #tpu.dot_dimension_numbers<[1], [0], [0], [1], [0, 0, 1, 1], [], []>} : vector<1x32xf32>, vector<32x8xf32>, vector<1x8xf32> -> vector<1x8xf32>
    %cst_176 = arith.constant dense<0xFF800000> : vector<1xf32>
    %1165 = vector.multi_reduction <maximumf>, %1164, %cst_176 [1] : vector<1x8xf32> to vector<1xf32>
    %cst_177 = arith.constant 0xFF800000 : f32
    %1166 = vector.broadcast %cst_177 : f32 to vector<1xf32>
    %1167 = arith.maximumf %1166, %1165 : vector<1xf32>
    %1168 = vector.shape_cast %1167 : vector<1xf32> to vector<1x1xf32>
    %1169 = vector.broadcast %1168 : vector<1x1xf32> to vector<1x8xf32>
    %1170 = arith.subf %1164, %1169 : vector<1x8xf32>
    %1171 = math.exp %1170 : vector<1x8xf32>
    %cst_178 = arith.constant dense<0.000000e+00> : vector<1xf32>
    %1172 = vector.multi_reduction <add>, %1171, %cst_178 [1] : vector<1x8xf32> to vector<1xf32>
    %1173 = vector.shape_cast %1172 : vector<1xf32> to vector<1x1xf32>
    %1174 = vector.broadcast %1173 : vector<1x1xf32> to vector<1x8xf32>
    %1175 = arith.divf %1171, %1174 : vector<1x8xf32>
    %cst_179 = arith.constant dense<0.000000e+00> : vector<1x64xf32>
    %1176 = tpu.matmul %1175, %1098, %cst_179 {dimension_numbers = #tpu.dot_dimension_numbers<[1], [0], [0], [1], [0, 0, 1, 1], [], []>} : vector<1x8xf32>, vector<8x64xf32>, vector<1x64xf32> -> vector<1x64xf32>
    %1177 = arith.addf %1163, %1176 : vector<1x64xf32>
    %1178 = arith.addf %1177, %21 : vector<1x64xf32>
    %1179 = math.tanh %1178 : vector<1x64xf32>
    %cst_180 = arith.constant dense<0.000000e+00> : vector<1x64xf32>
    %1180 = tpu.matmul %1179, %17, %cst_180 {dimension_numbers = #tpu.dot_dimension_numbers<[1], [0], [0], [1], [0, 0, 1, 1], [], []>} : vector<1x64xf32>, vector<64x64xf32>, vector<1x64xf32> -> vector<1x64xf32>
    %1181 = arith.addf %1180, %20 : vector<1x64xf32>
    %cst_181 = arith.constant dense<0xFF800000> : vector<1xf32>
    %1182 = vector.multi_reduction <maximumf>, %1181, %cst_181 [1] : vector<1x64xf32> to vector<1xf32>
    %1183 = vector.shape_cast %1182 : vector<1xf32> to vector<1x1xf32>
    %1184 = vector.broadcast %1183 : vector<1x1xf32> to vector<1x64xf32>
    %1185 = arith.subf %1181, %1184 : vector<1x64xf32>
    %1186 = math.exp %1185 : vector<1x64xf32>
    %cst_182 = arith.constant dense<0.000000e+00> : vector<1xf32>
    %1187 = vector.multi_reduction <add>, %1186, %cst_182 [1] : vector<1x64xf32> to vector<1xf32>
    %1188 = vector.shape_cast %1187 : vector<1xf32> to vector<1x1xf32>
    %cst_183 = arith.constant 1.000000e+00 : f32
    %1189 = vector.broadcast %cst_183 : f32 to vector<1x1xf32>
    %1190 = arith.divf %1189, %1188 : vector<1x1xf32>
    %1191 = vector.broadcast %1183 : vector<1x1xf32> to vector<1x64xf32>
    %1192 = arith.cmpf oeq, %1181, %1191 : vector<1x64xf32>
    %c64_i32 = arith.constant 64 : i32
    %1193 = vector.broadcast %c64_i32 : i32 to vector<1x64xi32>
    %1194 = arith.select %1192, %1099, %1193 : vector<1x64xi1>, vector<1x64xi32>
    %cst_184 = arith.constant dense<2147483647> : vector<1xi32>
    %1195 = vector.multi_reduction <minsi>, %1194, %cst_184 [1] : vector<1x64xi32> to vector<1xi32>
    %1196 = vector.shape_cast %1195 : vector<1xi32> to vector<1x1xi32>
    %c0_i32_185 = arith.constant 0 : i32
    %1197 = vector.broadcast %c0_i32_185 : i32 to vector<1x6xi32>
    %1198 = arith.cmpi eq, %1100, %1197 : vector<1x6xi32>
    %1199 = vector.shape_cast %1196 : vector<1x1xi32> to vector<1x1xi32>
    %1200 = vector.broadcast %1199 : vector<1x1xi32> to vector<1x6xi32>
    %1201 = arith.select %1198, %1200, %1105 : vector<1x6xi1>, vector<1x6xi32>
    %c0_i32_186 = arith.constant 0 : i32
    %1202 = vector.broadcast %c0_i32_186 : i32 to vector<1x6xi32>
    %1203 = arith.cmpi eq, %1100, %1202 : vector<1x6xi32>
    %1204 = vector.shape_cast %1190 : vector<1x1xf32> to vector<1x1xf32>
    %1205 = vector.broadcast %1204 : vector<1x1xf32> to vector<1x6xf32>
    %1206 = arith.select %1203, %1205, %1106 : vector<1x6xi1>, vector<1x6xf32>
    %1207 = vector.broadcast %1196 : vector<1x1xi32> to vector<1x64xi32>
    %1208 = arith.cmpi eq, %1099, %1207 : vector<1x64xi32>
    %1209 = arith.extui %1208 : vector<1x64xi1> to vector<1x64xi32>
    %1210 = arith.sitofp %1209 : vector<1x64xi32> to vector<1x64xf32>
    %cst_187 = arith.constant dense<0.000000e+00> : vector<1x96xf32>
    %1211 = tpu.matmul %1210, %10, %cst_187 {dimension_numbers = #tpu.dot_dimension_numbers<[1], [0], [0], [1], [0, 0, 1, 1], [], []>} : vector<1x64xf32>, vector<64x96xf32>, vector<1x96xf32> -> vector<1x96xf32>
    %cst_188 = arith.constant dense<0.000000e+00> : vector<1x96xf32>
    %1212 = tpu.matmul %1134, %7, %cst_188 {dimension_numbers = #tpu.dot_dimension_numbers<[1], [0], [0], [1], [0, 0, 1, 1], [], []>} : vector<1x32xf32>, vector<32x96xf32>, vector<1x96xf32> -> vector<1x96xf32>
    %1213 = vector.extract_strided_slice %1211 {offsets = [0, 0], sizes = [1, 64], strides = [1, 1]} : vector<1x96xf32> to vector<1x64xf32>
    %1214 = vector.extract_strided_slice %1212 {offsets = [0, 0], sizes = [1, 64], strides = [1, 1]} : vector<1x96xf32> to vector<1x64xf32>
    %1215 = arith.addf %1213, %1214 : vector<1x64xf32>
    %1216 = vector.extract_strided_slice %15 {offsets = [0, 0], sizes = [1, 64], strides = [1, 1]} : vector<1x128xf32> to vector<1x64xf32>
    %1217 = arith.addf %1215, %1216 : vector<1x64xf32>
    %1218 = arith.negf %1217 : vector<1x64xf32>
    %1219 = math.exp %1218 : vector<1x64xf32>
    %cst_189 = arith.constant 1.000000e+00 : f32
    %1220 = vector.broadcast %cst_189 : f32 to vector<1x64xf32>
    %1221 = arith.addf %1220, %1219 : vector<1x64xf32>
    %1222 = arith.divf %1220, %1221 : vector<1x64xf32>
    %1223 = vector.extract_strided_slice %1222 {offsets = [0, 0], sizes = [1, 32], strides = [1, 1]} : vector<1x64xf32> to vector<1x32xf32>
    %1224 = vector.extract_strided_slice %1222 {offsets = [0, 32], sizes = [1, 32], strides = [1, 1]} : vector<1x64xf32> to vector<1x32xf32>
    %1225 = vector.extract_strided_slice %1211 {offsets = [0, 64], sizes = [1, 32], strides = [1, 1]} : vector<1x96xf32> to vector<1x32xf32>
    %1226 = vector.extract_strided_slice %15 {offsets = [0, 64], sizes = [1, 32], strides = [1, 1]} : vector<1x128xf32> to vector<1x32xf32>
    %1227 = arith.addf %1225, %1226 : vector<1x32xf32>
    %1228 = vector.extract_strided_slice %1212 {offsets = [0, 64], sizes = [1, 32], strides = [1, 1]} : vector<1x96xf32> to vector<1x32xf32>
    %1229 = vector.extract_strided_slice %15 {offsets = [0, 96], sizes = [1, 32], strides = [1, 1]} : vector<1x128xf32> to vector<1x32xf32>
    %1230 = arith.addf %1228, %1229 : vector<1x32xf32>
    %1231 = arith.mulf %1223, %1230 : vector<1x32xf32>
    %1232 = arith.addf %1227, %1231 : vector<1x32xf32>
    %1233 = math.tanh %1232 : vector<1x32xf32>
    %cst_190 = arith.constant 1.000000e+00 : f32
    %1234 = vector.broadcast %cst_190 : f32 to vector<1x32xf32>
    %1235 = arith.subf %1234, %1224 : vector<1x32xf32>
    %1236 = arith.mulf %1235, %1233 : vector<1x32xf32>
    %1237 = arith.mulf %1224, %1134 : vector<1x32xf32>
    %1238 = arith.addf %1236, %1237 : vector<1x32xf32>
    %cst_191 = arith.constant dense<0.000000e+00> : vector<1x96xf32>
    %1239 = tpu.matmul %1238, %9, %cst_191 {dimension_numbers = #tpu.dot_dimension_numbers<[1], [0], [0], [1], [0, 0, 1, 1], [], []>} : vector<1x32xf32>, vector<32x96xf32>, vector<1x96xf32> -> vector<1x96xf32>
    %cst_192 = arith.constant dense<0.000000e+00> : vector<1x96xf32>
    %1240 = tpu.matmul %1162, %8, %cst_192 {dimension_numbers = #tpu.dot_dimension_numbers<[1], [0], [0], [1], [0, 0, 1, 1], [], []>} : vector<1x32xf32>, vector<32x96xf32>, vector<1x96xf32> -> vector<1x96xf32>
    %1241 = vector.extract_strided_slice %1239 {offsets = [0, 0], sizes = [1, 64], strides = [1, 1]} : vector<1x96xf32> to vector<1x64xf32>
    %1242 = vector.extract_strided_slice %1240 {offsets = [0, 0], sizes = [1, 64], strides = [1, 1]} : vector<1x96xf32> to vector<1x64xf32>
    %1243 = arith.addf %1241, %1242 : vector<1x64xf32>
    %1244 = vector.extract_strided_slice %16 {offsets = [0, 0], sizes = [1, 64], strides = [1, 1]} : vector<1x128xf32> to vector<1x64xf32>
    %1245 = arith.addf %1243, %1244 : vector<1x64xf32>
    %1246 = arith.negf %1245 : vector<1x64xf32>
    %1247 = math.exp %1246 : vector<1x64xf32>
    %cst_193 = arith.constant 1.000000e+00 : f32
    %1248 = vector.broadcast %cst_193 : f32 to vector<1x64xf32>
    %1249 = arith.addf %1248, %1247 : vector<1x64xf32>
    %1250 = arith.divf %1248, %1249 : vector<1x64xf32>
    %1251 = vector.extract_strided_slice %1250 {offsets = [0, 0], sizes = [1, 32], strides = [1, 1]} : vector<1x64xf32> to vector<1x32xf32>
    %1252 = vector.extract_strided_slice %1250 {offsets = [0, 32], sizes = [1, 32], strides = [1, 1]} : vector<1x64xf32> to vector<1x32xf32>
    %1253 = vector.extract_strided_slice %1239 {offsets = [0, 64], sizes = [1, 32], strides = [1, 1]} : vector<1x96xf32> to vector<1x32xf32>
    %1254 = vector.extract_strided_slice %16 {offsets = [0, 64], sizes = [1, 32], strides = [1, 1]} : vector<1x128xf32> to vector<1x32xf32>
    %1255 = arith.addf %1253, %1254 : vector<1x32xf32>
    %1256 = vector.extract_strided_slice %1240 {offsets = [0, 64], sizes = [1, 32], strides = [1, 1]} : vector<1x96xf32> to vector<1x32xf32>
    %1257 = vector.extract_strided_slice %16 {offsets = [0, 96], sizes = [1, 32], strides = [1, 1]} : vector<1x128xf32> to vector<1x32xf32>
    %1258 = arith.addf %1256, %1257 : vector<1x32xf32>
    %1259 = arith.mulf %1251, %1258 : vector<1x32xf32>
    %1260 = arith.addf %1255, %1259 : vector<1x32xf32>
    %1261 = math.tanh %1260 : vector<1x32xf32>
    %cst_194 = arith.constant 1.000000e+00 : f32
    %1262 = vector.broadcast %cst_194 : f32 to vector<1x32xf32>
    %1263 = arith.subf %1262, %1252 : vector<1x32xf32>
    %1264 = arith.mulf %1263, %1261 : vector<1x32xf32>
    %1265 = arith.mulf %1252, %1162 : vector<1x32xf32>
    %1266 = arith.addf %1264, %1265 : vector<1x32xf32>
    %cst_195 = arith.constant dense<0.000000e+00> : vector<1x64xf32>
    %1267 = tpu.matmul %1266, %18, %cst_195 {dimension_numbers = #tpu.dot_dimension_numbers<[1], [0], [0], [1], [0, 0, 1, 1], [], []>} : vector<1x32xf32>, vector<32x64xf32>, vector<1x64xf32> -> vector<1x64xf32>
    %cst_196 = arith.constant dense<0.000000e+00> : vector<1x8xf32>
    %1268 = tpu.matmul %1266, %1097, %cst_196 {dimension_numbers = #tpu.dot_dimension_numbers<[1], [0], [0], [1], [0, 0, 1, 1], [], []>} : vector<1x32xf32>, vector<32x8xf32>, vector<1x8xf32> -> vector<1x8xf32>
    %cst_197 = arith.constant dense<0xFF800000> : vector<1xf32>
    %1269 = vector.multi_reduction <maximumf>, %1268, %cst_197 [1] : vector<1x8xf32> to vector<1xf32>
    %cst_198 = arith.constant 0xFF800000 : f32
    %1270 = vector.broadcast %cst_198 : f32 to vector<1xf32>
    %1271 = arith.maximumf %1270, %1269 : vector<1xf32>
    %1272 = vector.shape_cast %1271 : vector<1xf32> to vector<1x1xf32>
    %1273 = vector.broadcast %1272 : vector<1x1xf32> to vector<1x8xf32>
    %1274 = arith.subf %1268, %1273 : vector<1x8xf32>
    %1275 = math.exp %1274 : vector<1x8xf32>
    %cst_199 = arith.constant dense<0.000000e+00> : vector<1xf32>
    %1276 = vector.multi_reduction <add>, %1275, %cst_199 [1] : vector<1x8xf32> to vector<1xf32>
    %1277 = vector.shape_cast %1276 : vector<1xf32> to vector<1x1xf32>
    %1278 = vector.broadcast %1277 : vector<1x1xf32> to vector<1x8xf32>
    %1279 = arith.divf %1275, %1278 : vector<1x8xf32>
    %cst_200 = arith.constant dense<0.000000e+00> : vector<1x64xf32>
    %1280 = tpu.matmul %1279, %1098, %cst_200 {dimension_numbers = #tpu.dot_dimension_numbers<[1], [0], [0], [1], [0, 0, 1, 1], [], []>} : vector<1x8xf32>, vector<8x64xf32>, vector<1x64xf32> -> vector<1x64xf32>
    %1281 = arith.addf %1267, %1280 : vector<1x64xf32>
    %1282 = arith.addf %1281, %21 : vector<1x64xf32>
    %1283 = math.tanh %1282 : vector<1x64xf32>
    %cst_201 = arith.constant dense<0.000000e+00> : vector<1x64xf32>
    %1284 = tpu.matmul %1283, %17, %cst_201 {dimension_numbers = #tpu.dot_dimension_numbers<[1], [0], [0], [1], [0, 0, 1, 1], [], []>} : vector<1x64xf32>, vector<64x64xf32>, vector<1x64xf32> -> vector<1x64xf32>
    %1285 = arith.addf %1284, %20 : vector<1x64xf32>
    %cst_202 = arith.constant dense<0xFF800000> : vector<1xf32>
    %1286 = vector.multi_reduction <maximumf>, %1285, %cst_202 [1] : vector<1x64xf32> to vector<1xf32>
    %1287 = vector.shape_cast %1286 : vector<1xf32> to vector<1x1xf32>
    %1288 = vector.broadcast %1287 : vector<1x1xf32> to vector<1x64xf32>
    %1289 = arith.subf %1285, %1288 : vector<1x64xf32>
    %1290 = math.exp %1289 : vector<1x64xf32>
    %cst_203 = arith.constant dense<0.000000e+00> : vector<1xf32>
    %1291 = vector.multi_reduction <add>, %1290, %cst_203 [1] : vector<1x64xf32> to vector<1xf32>
    %1292 = vector.shape_cast %1291 : vector<1xf32> to vector<1x1xf32>
    %cst_204 = arith.constant 1.000000e+00 : f32
    %1293 = vector.broadcast %cst_204 : f32 to vector<1x1xf32>
    %1294 = arith.divf %1293, %1292 : vector<1x1xf32>
    %1295 = vector.broadcast %1287 : vector<1x1xf32> to vector<1x64xf32>
    %1296 = arith.cmpf oeq, %1285, %1295 : vector<1x64xf32>
    %c64_i32_205 = arith.constant 64 : i32
    %1297 = vector.broadcast %c64_i32_205 : i32 to vector<1x64xi32>
    %1298 = arith.select %1296, %1099, %1297 : vector<1x64xi1>, vector<1x64xi32>
    %cst_206 = arith.constant dense<2147483647> : vector<1xi32>
    %1299 = vector.multi_reduction <minsi>, %1298, %cst_206 [1] : vector<1x64xi32> to vector<1xi32>
    %1300 = vector.shape_cast %1299 : vector<1xi32> to vector<1x1xi32>
    %c1_i32_207 = arith.constant 1 : i32
    %1301 = vector.broadcast %c1_i32_207 : i32 to vector<1x6xi32>
    %1302 = arith.cmpi eq, %1100, %1301 : vector<1x6xi32>
    %1303 = vector.shape_cast %1300 : vector<1x1xi32> to vector<1x1xi32>
    %1304 = vector.broadcast %1303 : vector<1x1xi32> to vector<1x6xi32>
    %1305 = arith.select %1302, %1304, %1201 : vector<1x6xi1>, vector<1x6xi32>
    %c1_i32_208 = arith.constant 1 : i32
    %1306 = vector.broadcast %c1_i32_208 : i32 to vector<1x6xi32>
    %1307 = arith.cmpi eq, %1100, %1306 : vector<1x6xi32>
    %1308 = vector.shape_cast %1294 : vector<1x1xf32> to vector<1x1xf32>
    %1309 = vector.broadcast %1308 : vector<1x1xf32> to vector<1x6xf32>
    %1310 = arith.select %1307, %1309, %1206 : vector<1x6xi1>, vector<1x6xf32>
    %1311 = vector.broadcast %1300 : vector<1x1xi32> to vector<1x64xi32>
    %1312 = arith.cmpi eq, %1099, %1311 : vector<1x64xi32>
    %1313 = arith.extui %1312 : vector<1x64xi1> to vector<1x64xi32>
    %1314 = arith.sitofp %1313 : vector<1x64xi32> to vector<1x64xf32>
    %cst_209 = arith.constant dense<0.000000e+00> : vector<1x96xf32>
    %1315 = tpu.matmul %1314, %10, %cst_209 {dimension_numbers = #tpu.dot_dimension_numbers<[1], [0], [0], [1], [0, 0, 1, 1], [], []>} : vector<1x64xf32>, vector<64x96xf32>, vector<1x96xf32> -> vector<1x96xf32>
    %cst_210 = arith.constant dense<0.000000e+00> : vector<1x96xf32>
    %1316 = tpu.matmul %1238, %7, %cst_210 {dimension_numbers = #tpu.dot_dimension_numbers<[1], [0], [0], [1], [0, 0, 1, 1], [], []>} : vector<1x32xf32>, vector<32x96xf32>, vector<1x96xf32> -> vector<1x96xf32>
    %1317 = vector.extract_strided_slice %1315 {offsets = [0, 0], sizes = [1, 64], strides = [1, 1]} : vector<1x96xf32> to vector<1x64xf32>
    %1318 = vector.extract_strided_slice %1316 {offsets = [0, 0], sizes = [1, 64], strides = [1, 1]} : vector<1x96xf32> to vector<1x64xf32>
    %1319 = arith.addf %1317, %1318 : vector<1x64xf32>
    %1320 = vector.extract_strided_slice %15 {offsets = [0, 0], sizes = [1, 64], strides = [1, 1]} : vector<1x128xf32> to vector<1x64xf32>
    %1321 = arith.addf %1319, %1320 : vector<1x64xf32>
    %1322 = arith.negf %1321 : vector<1x64xf32>
    %1323 = math.exp %1322 : vector<1x64xf32>
    %cst_211 = arith.constant 1.000000e+00 : f32
    %1324 = vector.broadcast %cst_211 : f32 to vector<1x64xf32>
    %1325 = arith.addf %1324, %1323 : vector<1x64xf32>
    %1326 = arith.divf %1324, %1325 : vector<1x64xf32>
    %1327 = vector.extract_strided_slice %1326 {offsets = [0, 0], sizes = [1, 32], strides = [1, 1]} : vector<1x64xf32> to vector<1x32xf32>
    %1328 = vector.extract_strided_slice %1326 {offsets = [0, 32], sizes = [1, 32], strides = [1, 1]} : vector<1x64xf32> to vector<1x32xf32>
    %1329 = vector.extract_strided_slice %1315 {offsets = [0, 64], sizes = [1, 32], strides = [1, 1]} : vector<1x96xf32> to vector<1x32xf32>
    %1330 = vector.extract_strided_slice %15 {offsets = [0, 64], sizes = [1, 32], strides = [1, 1]} : vector<1x128xf32> to vector<1x32xf32>
    %1331 = arith.addf %1329, %1330 : vector<1x32xf32>
    %1332 = vector.extract_strided_slice %1316 {offsets = [0, 64], sizes = [1, 32], strides = [1, 1]} : vector<1x96xf32> to vector<1x32xf32>
    %1333 = vector.extract_strided_slice %15 {offsets = [0, 96], sizes = [1, 32], strides = [1, 1]} : vector<1x128xf32> to vector<1x32xf32>
    %1334 = arith.addf %1332, %1333 : vector<1x32xf32>
    %1335 = arith.mulf %1327, %1334 : vector<1x32xf32>
    %1336 = arith.addf %1331, %1335 : vector<1x32xf32>
    %1337 = math.tanh %1336 : vector<1x32xf32>
    %cst_212 = arith.constant 1.000000e+00 : f32
    %1338 = vector.broadcast %cst_212 : f32 to vector<1x32xf32>
    %1339 = arith.subf %1338, %1328 : vector<1x32xf32>
    %1340 = arith.mulf %1339, %1337 : vector<1x32xf32>
    %1341 = arith.mulf %1328, %1238 : vector<1x32xf32>
    %1342 = arith.addf %1340, %1341 : vector<1x32xf32>
    %cst_213 = arith.constant dense<0.000000e+00> : vector<1x96xf32>
    %1343 = tpu.matmul %1342, %9, %cst_213 {dimension_numbers = #tpu.dot_dimension_numbers<[1], [0], [0], [1], [0, 0, 1, 1], [], []>} : vector<1x32xf32>, vector<32x96xf32>, vector<1x96xf32> -> vector<1x96xf32>
    %cst_214 = arith.constant dense<0.000000e+00> : vector<1x96xf32>
    %1344 = tpu.matmul %1266, %8, %cst_214 {dimension_numbers = #tpu.dot_dimension_numbers<[1], [0], [0], [1], [0, 0, 1, 1], [], []>} : vector<1x32xf32>, vector<32x96xf32>, vector<1x96xf32> -> vector<1x96xf32>
    %1345 = vector.extract_strided_slice %1343 {offsets = [0, 0], sizes = [1, 64], strides = [1, 1]} : vector<1x96xf32> to vector<1x64xf32>
    %1346 = vector.extract_strided_slice %1344 {offsets = [0, 0], sizes = [1, 64], strides = [1, 1]} : vector<1x96xf32> to vector<1x64xf32>
    %1347 = arith.addf %1345, %1346 : vector<1x64xf32>
    %1348 = vector.extract_strided_slice %16 {offsets = [0, 0], sizes = [1, 64], strides = [1, 1]} : vector<1x128xf32> to vector<1x64xf32>
    %1349 = arith.addf %1347, %1348 : vector<1x64xf32>
    %1350 = arith.negf %1349 : vector<1x64xf32>
    %1351 = math.exp %1350 : vector<1x64xf32>
    %cst_215 = arith.constant 1.000000e+00 : f32
    %1352 = vector.broadcast %cst_215 : f32 to vector<1x64xf32>
    %1353 = arith.addf %1352, %1351 : vector<1x64xf32>
    %1354 = arith.divf %1352, %1353 : vector<1x64xf32>
    %1355 = vector.extract_strided_slice %1354 {offsets = [0, 0], sizes = [1, 32], strides = [1, 1]} : vector<1x64xf32> to vector<1x32xf32>
    %1356 = vector.extract_strided_slice %1354 {offsets = [0, 32], sizes = [1, 32], strides = [1, 1]} : vector<1x64xf32> to vector<1x32xf32>
    %1357 = vector.extract_strided_slice %1343 {offsets = [0, 64], sizes = [1, 32], strides = [1, 1]} : vector<1x96xf32> to vector<1x32xf32>
    %1358 = vector.extract_strided_slice %16 {offsets = [0, 64], sizes = [1, 32], strides = [1, 1]} : vector<1x128xf32> to vector<1x32xf32>
    %1359 = arith.addf %1357, %1358 : vector<1x32xf32>
    %1360 = vector.extract_strided_slice %1344 {offsets = [0, 64], sizes = [1, 32], strides = [1, 1]} : vector<1x96xf32> to vector<1x32xf32>
    %1361 = vector.extract_strided_slice %16 {offsets = [0, 96], sizes = [1, 32], strides = [1, 1]} : vector<1x128xf32> to vector<1x32xf32>
    %1362 = arith.addf %1360, %1361 : vector<1x32xf32>
    %1363 = arith.mulf %1355, %1362 : vector<1x32xf32>
    %1364 = arith.addf %1359, %1363 : vector<1x32xf32>
    %1365 = math.tanh %1364 : vector<1x32xf32>
    %cst_216 = arith.constant 1.000000e+00 : f32
    %1366 = vector.broadcast %cst_216 : f32 to vector<1x32xf32>
    %1367 = arith.subf %1366, %1356 : vector<1x32xf32>
    %1368 = arith.mulf %1367, %1365 : vector<1x32xf32>
    %1369 = arith.mulf %1356, %1266 : vector<1x32xf32>
    %1370 = arith.addf %1368, %1369 : vector<1x32xf32>
    %cst_217 = arith.constant dense<0.000000e+00> : vector<1x64xf32>
    %1371 = tpu.matmul %1370, %18, %cst_217 {dimension_numbers = #tpu.dot_dimension_numbers<[1], [0], [0], [1], [0, 0, 1, 1], [], []>} : vector<1x32xf32>, vector<32x64xf32>, vector<1x64xf32> -> vector<1x64xf32>
    %cst_218 = arith.constant dense<0.000000e+00> : vector<1x8xf32>
    %1372 = tpu.matmul %1370, %1097, %cst_218 {dimension_numbers = #tpu.dot_dimension_numbers<[1], [0], [0], [1], [0, 0, 1, 1], [], []>} : vector<1x32xf32>, vector<32x8xf32>, vector<1x8xf32> -> vector<1x8xf32>
    %cst_219 = arith.constant dense<0xFF800000> : vector<1xf32>
    %1373 = vector.multi_reduction <maximumf>, %1372, %cst_219 [1] : vector<1x8xf32> to vector<1xf32>
    %cst_220 = arith.constant 0xFF800000 : f32
    %1374 = vector.broadcast %cst_220 : f32 to vector<1xf32>
    %1375 = arith.maximumf %1374, %1373 : vector<1xf32>
    %1376 = vector.shape_cast %1375 : vector<1xf32> to vector<1x1xf32>
    %1377 = vector.broadcast %1376 : vector<1x1xf32> to vector<1x8xf32>
    %1378 = arith.subf %1372, %1377 : vector<1x8xf32>
    %1379 = math.exp %1378 : vector<1x8xf32>
    %cst_221 = arith.constant dense<0.000000e+00> : vector<1xf32>
    %1380 = vector.multi_reduction <add>, %1379, %cst_221 [1] : vector<1x8xf32> to vector<1xf32>
    %1381 = vector.shape_cast %1380 : vector<1xf32> to vector<1x1xf32>
    %1382 = vector.broadcast %1381 : vector<1x1xf32> to vector<1x8xf32>
    %1383 = arith.divf %1379, %1382 : vector<1x8xf32>
    %cst_222 = arith.constant dense<0.000000e+00> : vector<1x64xf32>
    %1384 = tpu.matmul %1383, %1098, %cst_222 {dimension_numbers = #tpu.dot_dimension_numbers<[1], [0], [0], [1], [0, 0, 1, 1], [], []>} : vector<1x8xf32>, vector<8x64xf32>, vector<1x64xf32> -> vector<1x64xf32>
    %1385 = arith.addf %1371, %1384 : vector<1x64xf32>
    %1386 = arith.addf %1385, %21 : vector<1x64xf32>
    %1387 = math.tanh %1386 : vector<1x64xf32>
    %cst_223 = arith.constant dense<0.000000e+00> : vector<1x64xf32>
    %1388 = tpu.matmul %1387, %17, %cst_223 {dimension_numbers = #tpu.dot_dimension_numbers<[1], [0], [0], [1], [0, 0, 1, 1], [], []>} : vector<1x64xf32>, vector<64x64xf32>, vector<1x64xf32> -> vector<1x64xf32>
    %1389 = arith.addf %1388, %20 : vector<1x64xf32>
    %cst_224 = arith.constant dense<0xFF800000> : vector<1xf32>
    %1390 = vector.multi_reduction <maximumf>, %1389, %cst_224 [1] : vector<1x64xf32> to vector<1xf32>
    %1391 = vector.shape_cast %1390 : vector<1xf32> to vector<1x1xf32>
    %1392 = vector.broadcast %1391 : vector<1x1xf32> to vector<1x64xf32>
    %1393 = arith.subf %1389, %1392 : vector<1x64xf32>
    %1394 = math.exp %1393 : vector<1x64xf32>
    %cst_225 = arith.constant dense<0.000000e+00> : vector<1xf32>
    %1395 = vector.multi_reduction <add>, %1394, %cst_225 [1] : vector<1x64xf32> to vector<1xf32>
    %1396 = vector.shape_cast %1395 : vector<1xf32> to vector<1x1xf32>
    %cst_226 = arith.constant 1.000000e+00 : f32
    %1397 = vector.broadcast %cst_226 : f32 to vector<1x1xf32>
    %1398 = arith.divf %1397, %1396 : vector<1x1xf32>
    %1399 = vector.broadcast %1391 : vector<1x1xf32> to vector<1x64xf32>
    %1400 = arith.cmpf oeq, %1389, %1399 : vector<1x64xf32>
    %c64_i32_227 = arith.constant 64 : i32
    %1401 = vector.broadcast %c64_i32_227 : i32 to vector<1x64xi32>
    %1402 = arith.select %1400, %1099, %1401 : vector<1x64xi1>, vector<1x64xi32>
    %cst_228 = arith.constant dense<2147483647> : vector<1xi32>
    %1403 = vector.multi_reduction <minsi>, %1402, %cst_228 [1] : vector<1x64xi32> to vector<1xi32>
    %1404 = vector.shape_cast %1403 : vector<1xi32> to vector<1x1xi32>
    %c2_i32_229 = arith.constant 2 : i32
    %1405 = vector.broadcast %c2_i32_229 : i32 to vector<1x6xi32>
    %1406 = arith.cmpi eq, %1100, %1405 : vector<1x6xi32>
    %1407 = vector.shape_cast %1404 : vector<1x1xi32> to vector<1x1xi32>
    %1408 = vector.broadcast %1407 : vector<1x1xi32> to vector<1x6xi32>
    %1409 = arith.select %1406, %1408, %1305 : vector<1x6xi1>, vector<1x6xi32>
    %c2_i32_230 = arith.constant 2 : i32
    %1410 = vector.broadcast %c2_i32_230 : i32 to vector<1x6xi32>
    %1411 = arith.cmpi eq, %1100, %1410 : vector<1x6xi32>
    %1412 = vector.shape_cast %1398 : vector<1x1xf32> to vector<1x1xf32>
    %1413 = vector.broadcast %1412 : vector<1x1xf32> to vector<1x6xf32>
    %1414 = arith.select %1411, %1413, %1310 : vector<1x6xi1>, vector<1x6xf32>
    %1415 = vector.broadcast %1404 : vector<1x1xi32> to vector<1x64xi32>
    %1416 = arith.cmpi eq, %1099, %1415 : vector<1x64xi32>
    %1417 = arith.extui %1416 : vector<1x64xi1> to vector<1x64xi32>
    %1418 = arith.sitofp %1417 : vector<1x64xi32> to vector<1x64xf32>
    %cst_231 = arith.constant dense<0.000000e+00> : vector<1x96xf32>
    %1419 = tpu.matmul %1418, %10, %cst_231 {dimension_numbers = #tpu.dot_dimension_numbers<[1], [0], [0], [1], [0, 0, 1, 1], [], []>} : vector<1x64xf32>, vector<64x96xf32>, vector<1x96xf32> -> vector<1x96xf32>
    %cst_232 = arith.constant dense<0.000000e+00> : vector<1x96xf32>
    %1420 = tpu.matmul %1342, %7, %cst_232 {dimension_numbers = #tpu.dot_dimension_numbers<[1], [0], [0], [1], [0, 0, 1, 1], [], []>} : vector<1x32xf32>, vector<32x96xf32>, vector<1x96xf32> -> vector<1x96xf32>
    %1421 = vector.extract_strided_slice %1419 {offsets = [0, 0], sizes = [1, 64], strides = [1, 1]} : vector<1x96xf32> to vector<1x64xf32>
    %1422 = vector.extract_strided_slice %1420 {offsets = [0, 0], sizes = [1, 64], strides = [1, 1]} : vector<1x96xf32> to vector<1x64xf32>
    %1423 = arith.addf %1421, %1422 : vector<1x64xf32>
    %1424 = vector.extract_strided_slice %15 {offsets = [0, 0], sizes = [1, 64], strides = [1, 1]} : vector<1x128xf32> to vector<1x64xf32>
    %1425 = arith.addf %1423, %1424 : vector<1x64xf32>
    %1426 = arith.negf %1425 : vector<1x64xf32>
    %1427 = math.exp %1426 : vector<1x64xf32>
    %cst_233 = arith.constant 1.000000e+00 : f32
    %1428 = vector.broadcast %cst_233 : f32 to vector<1x64xf32>
    %1429 = arith.addf %1428, %1427 : vector<1x64xf32>
    %1430 = arith.divf %1428, %1429 : vector<1x64xf32>
    %1431 = vector.extract_strided_slice %1430 {offsets = [0, 0], sizes = [1, 32], strides = [1, 1]} : vector<1x64xf32> to vector<1x32xf32>
    %1432 = vector.extract_strided_slice %1430 {offsets = [0, 32], sizes = [1, 32], strides = [1, 1]} : vector<1x64xf32> to vector<1x32xf32>
    %1433 = vector.extract_strided_slice %1419 {offsets = [0, 64], sizes = [1, 32], strides = [1, 1]} : vector<1x96xf32> to vector<1x32xf32>
    %1434 = vector.extract_strided_slice %15 {offsets = [0, 64], sizes = [1, 32], strides = [1, 1]} : vector<1x128xf32> to vector<1x32xf32>
    %1435 = arith.addf %1433, %1434 : vector<1x32xf32>
    %1436 = vector.extract_strided_slice %1420 {offsets = [0, 64], sizes = [1, 32], strides = [1, 1]} : vector<1x96xf32> to vector<1x32xf32>
    %1437 = vector.extract_strided_slice %15 {offsets = [0, 96], sizes = [1, 32], strides = [1, 1]} : vector<1x128xf32> to vector<1x32xf32>
    %1438 = arith.addf %1436, %1437 : vector<1x32xf32>
    %1439 = arith.mulf %1431, %1438 : vector<1x32xf32>
    %1440 = arith.addf %1435, %1439 : vector<1x32xf32>
    %1441 = math.tanh %1440 : vector<1x32xf32>
    %cst_234 = arith.constant 1.000000e+00 : f32
    %1442 = vector.broadcast %cst_234 : f32 to vector<1x32xf32>
    %1443 = arith.subf %1442, %1432 : vector<1x32xf32>
    %1444 = arith.mulf %1443, %1441 : vector<1x32xf32>
    %1445 = arith.mulf %1432, %1342 : vector<1x32xf32>
    %1446 = arith.addf %1444, %1445 : vector<1x32xf32>
    %cst_235 = arith.constant dense<0.000000e+00> : vector<1x96xf32>
    %1447 = tpu.matmul %1446, %9, %cst_235 {dimension_numbers = #tpu.dot_dimension_numbers<[1], [0], [0], [1], [0, 0, 1, 1], [], []>} : vector<1x32xf32>, vector<32x96xf32>, vector<1x96xf32> -> vector<1x96xf32>
    %cst_236 = arith.constant dense<0.000000e+00> : vector<1x96xf32>
    %1448 = tpu.matmul %1370, %8, %cst_236 {dimension_numbers = #tpu.dot_dimension_numbers<[1], [0], [0], [1], [0, 0, 1, 1], [], []>} : vector<1x32xf32>, vector<32x96xf32>, vector<1x96xf32> -> vector<1x96xf32>
    %1449 = vector.extract_strided_slice %1447 {offsets = [0, 0], sizes = [1, 64], strides = [1, 1]} : vector<1x96xf32> to vector<1x64xf32>
    %1450 = vector.extract_strided_slice %1448 {offsets = [0, 0], sizes = [1, 64], strides = [1, 1]} : vector<1x96xf32> to vector<1x64xf32>
    %1451 = arith.addf %1449, %1450 : vector<1x64xf32>
    %1452 = vector.extract_strided_slice %16 {offsets = [0, 0], sizes = [1, 64], strides = [1, 1]} : vector<1x128xf32> to vector<1x64xf32>
    %1453 = arith.addf %1451, %1452 : vector<1x64xf32>
    %1454 = arith.negf %1453 : vector<1x64xf32>
    %1455 = math.exp %1454 : vector<1x64xf32>
    %cst_237 = arith.constant 1.000000e+00 : f32
    %1456 = vector.broadcast %cst_237 : f32 to vector<1x64xf32>
    %1457 = arith.addf %1456, %1455 : vector<1x64xf32>
    %1458 = arith.divf %1456, %1457 : vector<1x64xf32>
    %1459 = vector.extract_strided_slice %1458 {offsets = [0, 0], sizes = [1, 32], strides = [1, 1]} : vector<1x64xf32> to vector<1x32xf32>
    %1460 = vector.extract_strided_slice %1458 {offsets = [0, 32], sizes = [1, 32], strides = [1, 1]} : vector<1x64xf32> to vector<1x32xf32>
    %1461 = vector.extract_strided_slice %1447 {offsets = [0, 64], sizes = [1, 32], strides = [1, 1]} : vector<1x96xf32> to vector<1x32xf32>
    %1462 = vector.extract_strided_slice %16 {offsets = [0, 64], sizes = [1, 32], strides = [1, 1]} : vector<1x128xf32> to vector<1x32xf32>
    %1463 = arith.addf %1461, %1462 : vector<1x32xf32>
    %1464 = vector.extract_strided_slice %1448 {offsets = [0, 64], sizes = [1, 32], strides = [1, 1]} : vector<1x96xf32> to vector<1x32xf32>
    %1465 = vector.extract_strided_slice %16 {offsets = [0, 96], sizes = [1, 32], strides = [1, 1]} : vector<1x128xf32> to vector<1x32xf32>
    %1466 = arith.addf %1464, %1465 : vector<1x32xf32>
    %1467 = arith.mulf %1459, %1466 : vector<1x32xf32>
    %1468 = arith.addf %1463, %1467 : vector<1x32xf32>
    %1469 = math.tanh %1468 : vector<1x32xf32>
    %cst_238 = arith.constant 1.000000e+00 : f32
    %1470 = vector.broadcast %cst_238 : f32 to vector<1x32xf32>
    %1471 = arith.subf %1470, %1460 : vector<1x32xf32>
    %1472 = arith.mulf %1471, %1469 : vector<1x32xf32>
    %1473 = arith.mulf %1460, %1370 : vector<1x32xf32>
    %1474 = arith.addf %1472, %1473 : vector<1x32xf32>
    %cst_239 = arith.constant dense<0.000000e+00> : vector<1x64xf32>
    %1475 = tpu.matmul %1474, %18, %cst_239 {dimension_numbers = #tpu.dot_dimension_numbers<[1], [0], [0], [1], [0, 0, 1, 1], [], []>} : vector<1x32xf32>, vector<32x64xf32>, vector<1x64xf32> -> vector<1x64xf32>
    %cst_240 = arith.constant dense<0.000000e+00> : vector<1x8xf32>
    %1476 = tpu.matmul %1474, %1097, %cst_240 {dimension_numbers = #tpu.dot_dimension_numbers<[1], [0], [0], [1], [0, 0, 1, 1], [], []>} : vector<1x32xf32>, vector<32x8xf32>, vector<1x8xf32> -> vector<1x8xf32>
    %cst_241 = arith.constant dense<0xFF800000> : vector<1xf32>
    %1477 = vector.multi_reduction <maximumf>, %1476, %cst_241 [1] : vector<1x8xf32> to vector<1xf32>
    %cst_242 = arith.constant 0xFF800000 : f32
    %1478 = vector.broadcast %cst_242 : f32 to vector<1xf32>
    %1479 = arith.maximumf %1478, %1477 : vector<1xf32>
    %1480 = vector.shape_cast %1479 : vector<1xf32> to vector<1x1xf32>
    %1481 = vector.broadcast %1480 : vector<1x1xf32> to vector<1x8xf32>
    %1482 = arith.subf %1476, %1481 : vector<1x8xf32>
    %1483 = math.exp %1482 : vector<1x8xf32>
    %cst_243 = arith.constant dense<0.000000e+00> : vector<1xf32>
    %1484 = vector.multi_reduction <add>, %1483, %cst_243 [1] : vector<1x8xf32> to vector<1xf32>
    %1485 = vector.shape_cast %1484 : vector<1xf32> to vector<1x1xf32>
    %1486 = vector.broadcast %1485 : vector<1x1xf32> to vector<1x8xf32>
    %1487 = arith.divf %1483, %1486 : vector<1x8xf32>
    %cst_244 = arith.constant dense<0.000000e+00> : vector<1x64xf32>
    %1488 = tpu.matmul %1487, %1098, %cst_244 {dimension_numbers = #tpu.dot_dimension_numbers<[1], [0], [0], [1], [0, 0, 1, 1], [], []>} : vector<1x8xf32>, vector<8x64xf32>, vector<1x64xf32> -> vector<1x64xf32>
    %1489 = arith.addf %1475, %1488 : vector<1x64xf32>
    %1490 = arith.addf %1489, %21 : vector<1x64xf32>
    %1491 = math.tanh %1490 : vector<1x64xf32>
    %cst_245 = arith.constant dense<0.000000e+00> : vector<1x64xf32>
    %1492 = tpu.matmul %1491, %17, %cst_245 {dimension_numbers = #tpu.dot_dimension_numbers<[1], [0], [0], [1], [0, 0, 1, 1], [], []>} : vector<1x64xf32>, vector<64x64xf32>, vector<1x64xf32> -> vector<1x64xf32>
    %1493 = arith.addf %1492, %20 : vector<1x64xf32>
    %cst_246 = arith.constant dense<0xFF800000> : vector<1xf32>
    %1494 = vector.multi_reduction <maximumf>, %1493, %cst_246 [1] : vector<1x64xf32> to vector<1xf32>
    %1495 = vector.shape_cast %1494 : vector<1xf32> to vector<1x1xf32>
    %1496 = vector.broadcast %1495 : vector<1x1xf32> to vector<1x64xf32>
    %1497 = arith.subf %1493, %1496 : vector<1x64xf32>
    %1498 = math.exp %1497 : vector<1x64xf32>
    %cst_247 = arith.constant dense<0.000000e+00> : vector<1xf32>
    %1499 = vector.multi_reduction <add>, %1498, %cst_247 [1] : vector<1x64xf32> to vector<1xf32>
    %1500 = vector.shape_cast %1499 : vector<1xf32> to vector<1x1xf32>
    %cst_248 = arith.constant 1.000000e+00 : f32
    %1501 = vector.broadcast %cst_248 : f32 to vector<1x1xf32>
    %1502 = arith.divf %1501, %1500 : vector<1x1xf32>
    %1503 = vector.broadcast %1495 : vector<1x1xf32> to vector<1x64xf32>
    %1504 = arith.cmpf oeq, %1493, %1503 : vector<1x64xf32>
    %c64_i32_249 = arith.constant 64 : i32
    %1505 = vector.broadcast %c64_i32_249 : i32 to vector<1x64xi32>
    %1506 = arith.select %1504, %1099, %1505 : vector<1x64xi1>, vector<1x64xi32>
    %cst_250 = arith.constant dense<2147483647> : vector<1xi32>
    %1507 = vector.multi_reduction <minsi>, %1506, %cst_250 [1] : vector<1x64xi32> to vector<1xi32>
    %1508 = vector.shape_cast %1507 : vector<1xi32> to vector<1x1xi32>
    %c3_i32_251 = arith.constant 3 : i32
    %1509 = vector.broadcast %c3_i32_251 : i32 to vector<1x6xi32>
    %1510 = arith.cmpi eq, %1100, %1509 : vector<1x6xi32>
    %1511 = vector.shape_cast %1508 : vector<1x1xi32> to vector<1x1xi32>
    %1512 = vector.broadcast %1511 : vector<1x1xi32> to vector<1x6xi32>
    %1513 = arith.select %1510, %1512, %1409 : vector<1x6xi1>, vector<1x6xi32>
    %c3_i32_252 = arith.constant 3 : i32
    %1514 = vector.broadcast %c3_i32_252 : i32 to vector<1x6xi32>
    %1515 = arith.cmpi eq, %1100, %1514 : vector<1x6xi32>
    %1516 = vector.shape_cast %1502 : vector<1x1xf32> to vector<1x1xf32>
    %1517 = vector.broadcast %1516 : vector<1x1xf32> to vector<1x6xf32>
    %1518 = arith.select %1515, %1517, %1414 : vector<1x6xi1>, vector<1x6xf32>
    %1519 = vector.broadcast %1508 : vector<1x1xi32> to vector<1x64xi32>
    %1520 = arith.cmpi eq, %1099, %1519 : vector<1x64xi32>
    %1521 = arith.extui %1520 : vector<1x64xi1> to vector<1x64xi32>
    %1522 = arith.sitofp %1521 : vector<1x64xi32> to vector<1x64xf32>
    %cst_253 = arith.constant dense<0.000000e+00> : vector<1x96xf32>
    %1523 = tpu.matmul %1522, %10, %cst_253 {dimension_numbers = #tpu.dot_dimension_numbers<[1], [0], [0], [1], [0, 0, 1, 1], [], []>} : vector<1x64xf32>, vector<64x96xf32>, vector<1x96xf32> -> vector<1x96xf32>
    %cst_254 = arith.constant dense<0.000000e+00> : vector<1x96xf32>
    %1524 = tpu.matmul %1446, %7, %cst_254 {dimension_numbers = #tpu.dot_dimension_numbers<[1], [0], [0], [1], [0, 0, 1, 1], [], []>} : vector<1x32xf32>, vector<32x96xf32>, vector<1x96xf32> -> vector<1x96xf32>
    %1525 = vector.extract_strided_slice %1523 {offsets = [0, 0], sizes = [1, 64], strides = [1, 1]} : vector<1x96xf32> to vector<1x64xf32>
    %1526 = vector.extract_strided_slice %1524 {offsets = [0, 0], sizes = [1, 64], strides = [1, 1]} : vector<1x96xf32> to vector<1x64xf32>
    %1527 = arith.addf %1525, %1526 : vector<1x64xf32>
    %1528 = vector.extract_strided_slice %15 {offsets = [0, 0], sizes = [1, 64], strides = [1, 1]} : vector<1x128xf32> to vector<1x64xf32>
    %1529 = arith.addf %1527, %1528 : vector<1x64xf32>
    %1530 = arith.negf %1529 : vector<1x64xf32>
    %1531 = math.exp %1530 : vector<1x64xf32>
    %cst_255 = arith.constant 1.000000e+00 : f32
    %1532 = vector.broadcast %cst_255 : f32 to vector<1x64xf32>
    %1533 = arith.addf %1532, %1531 : vector<1x64xf32>
    %1534 = arith.divf %1532, %1533 : vector<1x64xf32>
    %1535 = vector.extract_strided_slice %1534 {offsets = [0, 0], sizes = [1, 32], strides = [1, 1]} : vector<1x64xf32> to vector<1x32xf32>
    %1536 = vector.extract_strided_slice %1534 {offsets = [0, 32], sizes = [1, 32], strides = [1, 1]} : vector<1x64xf32> to vector<1x32xf32>
    %1537 = vector.extract_strided_slice %1523 {offsets = [0, 64], sizes = [1, 32], strides = [1, 1]} : vector<1x96xf32> to vector<1x32xf32>
    %1538 = vector.extract_strided_slice %15 {offsets = [0, 64], sizes = [1, 32], strides = [1, 1]} : vector<1x128xf32> to vector<1x32xf32>
    %1539 = arith.addf %1537, %1538 : vector<1x32xf32>
    %1540 = vector.extract_strided_slice %1524 {offsets = [0, 64], sizes = [1, 32], strides = [1, 1]} : vector<1x96xf32> to vector<1x32xf32>
    %1541 = vector.extract_strided_slice %15 {offsets = [0, 96], sizes = [1, 32], strides = [1, 1]} : vector<1x128xf32> to vector<1x32xf32>
    %1542 = arith.addf %1540, %1541 : vector<1x32xf32>
    %1543 = arith.mulf %1535, %1542 : vector<1x32xf32>
    %1544 = arith.addf %1539, %1543 : vector<1x32xf32>
    %1545 = math.tanh %1544 : vector<1x32xf32>
    %cst_256 = arith.constant 1.000000e+00 : f32
    %1546 = vector.broadcast %cst_256 : f32 to vector<1x32xf32>
    %1547 = arith.subf %1546, %1536 : vector<1x32xf32>
    %1548 = arith.mulf %1547, %1545 : vector<1x32xf32>
    %1549 = arith.mulf %1536, %1446 : vector<1x32xf32>
    %1550 = arith.addf %1548, %1549 : vector<1x32xf32>
    %cst_257 = arith.constant dense<0.000000e+00> : vector<1x96xf32>
    %1551 = tpu.matmul %1550, %9, %cst_257 {dimension_numbers = #tpu.dot_dimension_numbers<[1], [0], [0], [1], [0, 0, 1, 1], [], []>} : vector<1x32xf32>, vector<32x96xf32>, vector<1x96xf32> -> vector<1x96xf32>
    %cst_258 = arith.constant dense<0.000000e+00> : vector<1x96xf32>
    %1552 = tpu.matmul %1474, %8, %cst_258 {dimension_numbers = #tpu.dot_dimension_numbers<[1], [0], [0], [1], [0, 0, 1, 1], [], []>} : vector<1x32xf32>, vector<32x96xf32>, vector<1x96xf32> -> vector<1x96xf32>
    %1553 = vector.extract_strided_slice %1551 {offsets = [0, 0], sizes = [1, 64], strides = [1, 1]} : vector<1x96xf32> to vector<1x64xf32>
    %1554 = vector.extract_strided_slice %1552 {offsets = [0, 0], sizes = [1, 64], strides = [1, 1]} : vector<1x96xf32> to vector<1x64xf32>
    %1555 = arith.addf %1553, %1554 : vector<1x64xf32>
    %1556 = vector.extract_strided_slice %16 {offsets = [0, 0], sizes = [1, 64], strides = [1, 1]} : vector<1x128xf32> to vector<1x64xf32>
    %1557 = arith.addf %1555, %1556 : vector<1x64xf32>
    %1558 = arith.negf %1557 : vector<1x64xf32>
    %1559 = math.exp %1558 : vector<1x64xf32>
    %cst_259 = arith.constant 1.000000e+00 : f32
    %1560 = vector.broadcast %cst_259 : f32 to vector<1x64xf32>
    %1561 = arith.addf %1560, %1559 : vector<1x64xf32>
    %1562 = arith.divf %1560, %1561 : vector<1x64xf32>
    %1563 = vector.extract_strided_slice %1562 {offsets = [0, 0], sizes = [1, 32], strides = [1, 1]} : vector<1x64xf32> to vector<1x32xf32>
    %1564 = vector.extract_strided_slice %1562 {offsets = [0, 32], sizes = [1, 32], strides = [1, 1]} : vector<1x64xf32> to vector<1x32xf32>
    %1565 = vector.extract_strided_slice %1551 {offsets = [0, 64], sizes = [1, 32], strides = [1, 1]} : vector<1x96xf32> to vector<1x32xf32>
    %1566 = vector.extract_strided_slice %16 {offsets = [0, 64], sizes = [1, 32], strides = [1, 1]} : vector<1x128xf32> to vector<1x32xf32>
    %1567 = arith.addf %1565, %1566 : vector<1x32xf32>
    %1568 = vector.extract_strided_slice %1552 {offsets = [0, 64], sizes = [1, 32], strides = [1, 1]} : vector<1x96xf32> to vector<1x32xf32>
    %1569 = vector.extract_strided_slice %16 {offsets = [0, 96], sizes = [1, 32], strides = [1, 1]} : vector<1x128xf32> to vector<1x32xf32>
    %1570 = arith.addf %1568, %1569 : vector<1x32xf32>
    %1571 = arith.mulf %1563, %1570 : vector<1x32xf32>
    %1572 = arith.addf %1567, %1571 : vector<1x32xf32>
    %1573 = math.tanh %1572 : vector<1x32xf32>
    %cst_260 = arith.constant 1.000000e+00 : f32
    %1574 = vector.broadcast %cst_260 : f32 to vector<1x32xf32>
    %1575 = arith.subf %1574, %1564 : vector<1x32xf32>
    %1576 = arith.mulf %1575, %1573 : vector<1x32xf32>
    %1577 = arith.mulf %1564, %1474 : vector<1x32xf32>
    %1578 = arith.addf %1576, %1577 : vector<1x32xf32>
    %cst_261 = arith.constant dense<0.000000e+00> : vector<1x64xf32>
    %1579 = tpu.matmul %1578, %18, %cst_261 {dimension_numbers = #tpu.dot_dimension_numbers<[1], [0], [0], [1], [0, 0, 1, 1], [], []>} : vector<1x32xf32>, vector<32x64xf32>, vector<1x64xf32> -> vector<1x64xf32>
    %cst_262 = arith.constant dense<0.000000e+00> : vector<1x8xf32>
    %1580 = tpu.matmul %1578, %1097, %cst_262 {dimension_numbers = #tpu.dot_dimension_numbers<[1], [0], [0], [1], [0, 0, 1, 1], [], []>} : vector<1x32xf32>, vector<32x8xf32>, vector<1x8xf32> -> vector<1x8xf32>
    %cst_263 = arith.constant dense<0xFF800000> : vector<1xf32>
    %1581 = vector.multi_reduction <maximumf>, %1580, %cst_263 [1] : vector<1x8xf32> to vector<1xf32>
    %cst_264 = arith.constant 0xFF800000 : f32
    %1582 = vector.broadcast %cst_264 : f32 to vector<1xf32>
    %1583 = arith.maximumf %1582, %1581 : vector<1xf32>
    %1584 = vector.shape_cast %1583 : vector<1xf32> to vector<1x1xf32>
    %1585 = vector.broadcast %1584 : vector<1x1xf32> to vector<1x8xf32>
    %1586 = arith.subf %1580, %1585 : vector<1x8xf32>
    %1587 = math.exp %1586 : vector<1x8xf32>
    %cst_265 = arith.constant dense<0.000000e+00> : vector<1xf32>
    %1588 = vector.multi_reduction <add>, %1587, %cst_265 [1] : vector<1x8xf32> to vector<1xf32>
    %1589 = vector.shape_cast %1588 : vector<1xf32> to vector<1x1xf32>
    %1590 = vector.broadcast %1589 : vector<1x1xf32> to vector<1x8xf32>
    %1591 = arith.divf %1587, %1590 : vector<1x8xf32>
    %cst_266 = arith.constant dense<0.000000e+00> : vector<1x64xf32>
    %1592 = tpu.matmul %1591, %1098, %cst_266 {dimension_numbers = #tpu.dot_dimension_numbers<[1], [0], [0], [1], [0, 0, 1, 1], [], []>} : vector<1x8xf32>, vector<8x64xf32>, vector<1x64xf32> -> vector<1x64xf32>
    %1593 = arith.addf %1579, %1592 : vector<1x64xf32>
    %1594 = arith.addf %1593, %21 : vector<1x64xf32>
    %1595 = math.tanh %1594 : vector<1x64xf32>
    %cst_267 = arith.constant dense<0.000000e+00> : vector<1x64xf32>
    %1596 = tpu.matmul %1595, %17, %cst_267 {dimension_numbers = #tpu.dot_dimension_numbers<[1], [0], [0], [1], [0, 0, 1, 1], [], []>} : vector<1x64xf32>, vector<64x64xf32>, vector<1x64xf32> -> vector<1x64xf32>
    %1597 = arith.addf %1596, %20 : vector<1x64xf32>
    %cst_268 = arith.constant dense<0xFF800000> : vector<1xf32>
    %1598 = vector.multi_reduction <maximumf>, %1597, %cst_268 [1] : vector<1x64xf32> to vector<1xf32>
    %1599 = vector.shape_cast %1598 : vector<1xf32> to vector<1x1xf32>
    %1600 = vector.broadcast %1599 : vector<1x1xf32> to vector<1x64xf32>
    %1601 = arith.subf %1597, %1600 : vector<1x64xf32>
    %1602 = math.exp %1601 : vector<1x64xf32>
    %cst_269 = arith.constant dense<0.000000e+00> : vector<1xf32>
    %1603 = vector.multi_reduction <add>, %1602, %cst_269 [1] : vector<1x64xf32> to vector<1xf32>
    %1604 = vector.shape_cast %1603 : vector<1xf32> to vector<1x1xf32>
    %cst_270 = arith.constant 1.000000e+00 : f32
    %1605 = vector.broadcast %cst_270 : f32 to vector<1x1xf32>
    %1606 = arith.divf %1605, %1604 : vector<1x1xf32>
    %1607 = vector.broadcast %1599 : vector<1x1xf32> to vector<1x64xf32>
    %1608 = arith.cmpf oeq, %1597, %1607 : vector<1x64xf32>
    %c64_i32_271 = arith.constant 64 : i32
    %1609 = vector.broadcast %c64_i32_271 : i32 to vector<1x64xi32>
    %1610 = arith.select %1608, %1099, %1609 : vector<1x64xi1>, vector<1x64xi32>
    %cst_272 = arith.constant dense<2147483647> : vector<1xi32>
    %1611 = vector.multi_reduction <minsi>, %1610, %cst_272 [1] : vector<1x64xi32> to vector<1xi32>
    %1612 = vector.shape_cast %1611 : vector<1xi32> to vector<1x1xi32>
    %c4_i32_273 = arith.constant 4 : i32
    %1613 = vector.broadcast %c4_i32_273 : i32 to vector<1x6xi32>
    %1614 = arith.cmpi eq, %1100, %1613 : vector<1x6xi32>
    %1615 = vector.shape_cast %1612 : vector<1x1xi32> to vector<1x1xi32>
    %1616 = vector.broadcast %1615 : vector<1x1xi32> to vector<1x6xi32>
    %1617 = arith.select %1614, %1616, %1513 : vector<1x6xi1>, vector<1x6xi32>
    %c4_i32_274 = arith.constant 4 : i32
    %1618 = vector.broadcast %c4_i32_274 : i32 to vector<1x6xi32>
    %1619 = arith.cmpi eq, %1100, %1618 : vector<1x6xi32>
    %1620 = vector.shape_cast %1606 : vector<1x1xf32> to vector<1x1xf32>
    %1621 = vector.broadcast %1620 : vector<1x1xf32> to vector<1x6xf32>
    %1622 = arith.select %1619, %1621, %1518 : vector<1x6xi1>, vector<1x6xf32>
    %1623 = vector.broadcast %1612 : vector<1x1xi32> to vector<1x64xi32>
    %1624 = arith.cmpi eq, %1099, %1623 : vector<1x64xi32>
    %1625 = arith.extui %1624 : vector<1x64xi1> to vector<1x64xi32>
    %1626 = arith.sitofp %1625 : vector<1x64xi32> to vector<1x64xf32>
    %cst_275 = arith.constant dense<0.000000e+00> : vector<1x96xf32>
    %1627 = tpu.matmul %1626, %10, %cst_275 {dimension_numbers = #tpu.dot_dimension_numbers<[1], [0], [0], [1], [0, 0, 1, 1], [], []>} : vector<1x64xf32>, vector<64x96xf32>, vector<1x96xf32> -> vector<1x96xf32>
    %cst_276 = arith.constant dense<0.000000e+00> : vector<1x96xf32>
    %1628 = tpu.matmul %1550, %7, %cst_276 {dimension_numbers = #tpu.dot_dimension_numbers<[1], [0], [0], [1], [0, 0, 1, 1], [], []>} : vector<1x32xf32>, vector<32x96xf32>, vector<1x96xf32> -> vector<1x96xf32>
    %1629 = vector.extract_strided_slice %1627 {offsets = [0, 0], sizes = [1, 64], strides = [1, 1]} : vector<1x96xf32> to vector<1x64xf32>
    %1630 = vector.extract_strided_slice %1628 {offsets = [0, 0], sizes = [1, 64], strides = [1, 1]} : vector<1x96xf32> to vector<1x64xf32>
    %1631 = arith.addf %1629, %1630 : vector<1x64xf32>
    %1632 = vector.extract_strided_slice %15 {offsets = [0, 0], sizes = [1, 64], strides = [1, 1]} : vector<1x128xf32> to vector<1x64xf32>
    %1633 = arith.addf %1631, %1632 : vector<1x64xf32>
    %1634 = arith.negf %1633 : vector<1x64xf32>
    %1635 = math.exp %1634 : vector<1x64xf32>
    %cst_277 = arith.constant 1.000000e+00 : f32
    %1636 = vector.broadcast %cst_277 : f32 to vector<1x64xf32>
    %1637 = arith.addf %1636, %1635 : vector<1x64xf32>
    %1638 = arith.divf %1636, %1637 : vector<1x64xf32>
    %1639 = vector.extract_strided_slice %1638 {offsets = [0, 0], sizes = [1, 32], strides = [1, 1]} : vector<1x64xf32> to vector<1x32xf32>
    %1640 = vector.extract_strided_slice %1638 {offsets = [0, 32], sizes = [1, 32], strides = [1, 1]} : vector<1x64xf32> to vector<1x32xf32>
    %1641 = vector.extract_strided_slice %1627 {offsets = [0, 64], sizes = [1, 32], strides = [1, 1]} : vector<1x96xf32> to vector<1x32xf32>
    %1642 = vector.extract_strided_slice %15 {offsets = [0, 64], sizes = [1, 32], strides = [1, 1]} : vector<1x128xf32> to vector<1x32xf32>
    %1643 = arith.addf %1641, %1642 : vector<1x32xf32>
    %1644 = vector.extract_strided_slice %1628 {offsets = [0, 64], sizes = [1, 32], strides = [1, 1]} : vector<1x96xf32> to vector<1x32xf32>
    %1645 = vector.extract_strided_slice %15 {offsets = [0, 96], sizes = [1, 32], strides = [1, 1]} : vector<1x128xf32> to vector<1x32xf32>
    %1646 = arith.addf %1644, %1645 : vector<1x32xf32>
    %1647 = arith.mulf %1639, %1646 : vector<1x32xf32>
    %1648 = arith.addf %1643, %1647 : vector<1x32xf32>
    %1649 = math.tanh %1648 : vector<1x32xf32>
    %cst_278 = arith.constant 1.000000e+00 : f32
    %1650 = vector.broadcast %cst_278 : f32 to vector<1x32xf32>
    %1651 = arith.subf %1650, %1640 : vector<1x32xf32>
    %1652 = arith.mulf %1651, %1649 : vector<1x32xf32>
    %1653 = arith.mulf %1640, %1550 : vector<1x32xf32>
    %1654 = arith.addf %1652, %1653 : vector<1x32xf32>
    %cst_279 = arith.constant dense<0.000000e+00> : vector<1x96xf32>
    %1655 = tpu.matmul %1654, %9, %cst_279 {dimension_numbers = #tpu.dot_dimension_numbers<[1], [0], [0], [1], [0, 0, 1, 1], [], []>} : vector<1x32xf32>, vector<32x96xf32>, vector<1x96xf32> -> vector<1x96xf32>
    %cst_280 = arith.constant dense<0.000000e+00> : vector<1x96xf32>
    %1656 = tpu.matmul %1578, %8, %cst_280 {dimension_numbers = #tpu.dot_dimension_numbers<[1], [0], [0], [1], [0, 0, 1, 1], [], []>} : vector<1x32xf32>, vector<32x96xf32>, vector<1x96xf32> -> vector<1x96xf32>
    %1657 = vector.extract_strided_slice %1655 {offsets = [0, 0], sizes = [1, 64], strides = [1, 1]} : vector<1x96xf32> to vector<1x64xf32>
    %1658 = vector.extract_strided_slice %1656 {offsets = [0, 0], sizes = [1, 64], strides = [1, 1]} : vector<1x96xf32> to vector<1x64xf32>
    %1659 = arith.addf %1657, %1658 : vector<1x64xf32>
    %1660 = vector.extract_strided_slice %16 {offsets = [0, 0], sizes = [1, 64], strides = [1, 1]} : vector<1x128xf32> to vector<1x64xf32>
    %1661 = arith.addf %1659, %1660 : vector<1x64xf32>
    %1662 = arith.negf %1661 : vector<1x64xf32>
    %1663 = math.exp %1662 : vector<1x64xf32>
    %cst_281 = arith.constant 1.000000e+00 : f32
    %1664 = vector.broadcast %cst_281 : f32 to vector<1x64xf32>
    %1665 = arith.addf %1664, %1663 : vector<1x64xf32>
    %1666 = arith.divf %1664, %1665 : vector<1x64xf32>
    %1667 = vector.extract_strided_slice %1666 {offsets = [0, 0], sizes = [1, 32], strides = [1, 1]} : vector<1x64xf32> to vector<1x32xf32>
    %1668 = vector.extract_strided_slice %1666 {offsets = [0, 32], sizes = [1, 32], strides = [1, 1]} : vector<1x64xf32> to vector<1x32xf32>
    %1669 = vector.extract_strided_slice %1655 {offsets = [0, 64], sizes = [1, 32], strides = [1, 1]} : vector<1x96xf32> to vector<1x32xf32>
    %1670 = vector.extract_strided_slice %16 {offsets = [0, 64], sizes = [1, 32], strides = [1, 1]} : vector<1x128xf32> to vector<1x32xf32>
    %1671 = arith.addf %1669, %1670 : vector<1x32xf32>
    %1672 = vector.extract_strided_slice %1656 {offsets = [0, 64], sizes = [1, 32], strides = [1, 1]} : vector<1x96xf32> to vector<1x32xf32>
    %1673 = vector.extract_strided_slice %16 {offsets = [0, 96], sizes = [1, 32], strides = [1, 1]} : vector<1x128xf32> to vector<1x32xf32>
    %1674 = arith.addf %1672, %1673 : vector<1x32xf32>
    %1675 = arith.mulf %1667, %1674 : vector<1x32xf32>
    %1676 = arith.addf %1671, %1675 : vector<1x32xf32>
    %1677 = math.tanh %1676 : vector<1x32xf32>
    %cst_282 = arith.constant 1.000000e+00 : f32
    %1678 = vector.broadcast %cst_282 : f32 to vector<1x32xf32>
    %1679 = arith.subf %1678, %1668 : vector<1x32xf32>
    %1680 = arith.mulf %1679, %1677 : vector<1x32xf32>
    %1681 = arith.mulf %1668, %1578 : vector<1x32xf32>
    %1682 = arith.addf %1680, %1681 : vector<1x32xf32>
    %cst_283 = arith.constant dense<0.000000e+00> : vector<1x64xf32>
    %1683 = tpu.matmul %1682, %18, %cst_283 {dimension_numbers = #tpu.dot_dimension_numbers<[1], [0], [0], [1], [0, 0, 1, 1], [], []>} : vector<1x32xf32>, vector<32x64xf32>, vector<1x64xf32> -> vector<1x64xf32>
    %cst_284 = arith.constant dense<0.000000e+00> : vector<1x8xf32>
    %1684 = tpu.matmul %1682, %1097, %cst_284 {dimension_numbers = #tpu.dot_dimension_numbers<[1], [0], [0], [1], [0, 0, 1, 1], [], []>} : vector<1x32xf32>, vector<32x8xf32>, vector<1x8xf32> -> vector<1x8xf32>
    %cst_285 = arith.constant dense<0xFF800000> : vector<1xf32>
    %1685 = vector.multi_reduction <maximumf>, %1684, %cst_285 [1] : vector<1x8xf32> to vector<1xf32>
    %cst_286 = arith.constant 0xFF800000 : f32
    %1686 = vector.broadcast %cst_286 : f32 to vector<1xf32>
    %1687 = arith.maximumf %1686, %1685 : vector<1xf32>
    %1688 = vector.shape_cast %1687 : vector<1xf32> to vector<1x1xf32>
    %1689 = vector.broadcast %1688 : vector<1x1xf32> to vector<1x8xf32>
    %1690 = arith.subf %1684, %1689 : vector<1x8xf32>
    %1691 = math.exp %1690 : vector<1x8xf32>
    %cst_287 = arith.constant dense<0.000000e+00> : vector<1xf32>
    %1692 = vector.multi_reduction <add>, %1691, %cst_287 [1] : vector<1x8xf32> to vector<1xf32>
    %1693 = vector.shape_cast %1692 : vector<1xf32> to vector<1x1xf32>
    %1694 = vector.broadcast %1693 : vector<1x1xf32> to vector<1x8xf32>
    %1695 = arith.divf %1691, %1694 : vector<1x8xf32>
    %cst_288 = arith.constant dense<0.000000e+00> : vector<1x64xf32>
    %1696 = tpu.matmul %1695, %1098, %cst_288 {dimension_numbers = #tpu.dot_dimension_numbers<[1], [0], [0], [1], [0, 0, 1, 1], [], []>} : vector<1x8xf32>, vector<8x64xf32>, vector<1x64xf32> -> vector<1x64xf32>
    %1697 = arith.addf %1683, %1696 : vector<1x64xf32>
    %1698 = arith.addf %1697, %21 : vector<1x64xf32>
    %1699 = math.tanh %1698 : vector<1x64xf32>
    %cst_289 = arith.constant dense<0.000000e+00> : vector<1x64xf32>
    %1700 = tpu.matmul %1699, %17, %cst_289 {dimension_numbers = #tpu.dot_dimension_numbers<[1], [0], [0], [1], [0, 0, 1, 1], [], []>} : vector<1x64xf32>, vector<64x64xf32>, vector<1x64xf32> -> vector<1x64xf32>
    %1701 = arith.addf %1700, %20 : vector<1x64xf32>
    %cst_290 = arith.constant dense<0xFF800000> : vector<1xf32>
    %1702 = vector.multi_reduction <maximumf>, %1701, %cst_290 [1] : vector<1x64xf32> to vector<1xf32>
    %1703 = vector.shape_cast %1702 : vector<1xf32> to vector<1x1xf32>
    %1704 = vector.broadcast %1703 : vector<1x1xf32> to vector<1x64xf32>
    %1705 = arith.subf %1701, %1704 : vector<1x64xf32>
    %1706 = math.exp %1705 : vector<1x64xf32>
    %cst_291 = arith.constant dense<0.000000e+00> : vector<1xf32>
    %1707 = vector.multi_reduction <add>, %1706, %cst_291 [1] : vector<1x64xf32> to vector<1xf32>
    %1708 = vector.shape_cast %1707 : vector<1xf32> to vector<1x1xf32>
    %cst_292 = arith.constant 1.000000e+00 : f32
    %1709 = vector.broadcast %cst_292 : f32 to vector<1x1xf32>
    %1710 = arith.divf %1709, %1708 : vector<1x1xf32>
    %1711 = vector.broadcast %1703 : vector<1x1xf32> to vector<1x64xf32>
    %1712 = arith.cmpf oeq, %1701, %1711 : vector<1x64xf32>
    %c64_i32_293 = arith.constant 64 : i32
    %1713 = vector.broadcast %c64_i32_293 : i32 to vector<1x64xi32>
    %1714 = arith.select %1712, %1099, %1713 : vector<1x64xi1>, vector<1x64xi32>
    %cst_294 = arith.constant dense<2147483647> : vector<1xi32>
    %1715 = vector.multi_reduction <minsi>, %1714, %cst_294 [1] : vector<1x64xi32> to vector<1xi32>
    %1716 = vector.shape_cast %1715 : vector<1xi32> to vector<1x1xi32>
    %c5_i32_295 = arith.constant 5 : i32
    %1717 = vector.broadcast %c5_i32_295 : i32 to vector<1x6xi32>
    %1718 = arith.cmpi eq, %1100, %1717 : vector<1x6xi32>
    %1719 = vector.shape_cast %1716 : vector<1x1xi32> to vector<1x1xi32>
    %1720 = vector.broadcast %1719 : vector<1x1xi32> to vector<1x6xi32>
    %1721 = arith.select %1718, %1720, %1617 : vector<1x6xi1>, vector<1x6xi32>
    %c5_i32_296 = arith.constant 5 : i32
    %1722 = vector.broadcast %c5_i32_296 : i32 to vector<1x6xi32>
    %1723 = arith.cmpi eq, %1100, %1722 : vector<1x6xi32>
    %1724 = vector.shape_cast %1710 : vector<1x1xf32> to vector<1x1xf32>
    %1725 = vector.broadcast %1724 : vector<1x1xf32> to vector<1x6xf32>
    %1726 = arith.select %1723, %1725, %1622 : vector<1x6xi1>, vector<1x6xf32>
    %c0_297 = arith.constant 0 : index
    %c0_298 = arith.constant 0 : index
    %1727 = vector.load %arg5[%c0_297, %c0_298] : memref<1x6xi32, #tpu.memory_space<vmem>>, vector<1x6xi32>
    tpu.vector_store %arg5[%c0_297, %c0_298], %1721 {strides = array<i32>} : memref<1x6xi32, #tpu.memory_space<vmem>>, vector<1x6xi32>,
    %c0_299 = arith.constant 0 : index
    %c0_300 = arith.constant 0 : index
    %1728 = vector.load %arg6[%c0_299, %c0_300] : memref<1x6xf32, #tpu.memory_space<vmem>>, vector<1x6xf32>
    tpu.vector_store %arg6[%c0_299, %c0_300], %1726 {strides = array<i32>} : memref<1x6xf32, #tpu.memory_space<vmem>>, vector<1x6xf32>,
    return
  }
}

</mosaic_0001>

<llo_original>
// kernel: greedy_search.1
$region0: #{greedy_search.1}
  #allocation0 [shape = 'u32[]', space=smem, size = 0x4, offset = 0x4, fixed_abs, tag = 'smem constant byte address 0x4 - core index']
  #allocation1 [shape = 'u32[144,128]{1,0:T(1,128)}', space=vmem, size = 0x12000, scoped, tag = 'internal scratch']
  %s0 = inlined_call_operand.vmem [shape: f32[8,32], index: 0, kind: input, shape index: {}]
  %s1 = inlined_call_operand.hbm [shape: f32[96,192], index: 1, kind: input, shape index: {}]
  %s2 = inlined_call_operand.vmem [shape: f32[288,96], index: 2, kind: input, shape index: {}]
  %s3 = inlined_call_operand.vmem [shape: f32[8,128], index: 3, kind: input, shape index: {}]
  %s4 = inlined_call_operand.vmem [shape: f32[130,64], index: 4, kind: input, shape index: {}]
  %s5 = inlined_call_operand.hbm [shape: s32[1,6], index: 5, kind: output, shape index: {0}]
  %s6 = inlined_call_operand.hbm [shape: f32[1,6], index: 6, kind: output, shape index: {1}]
  %7 = xla_tuple %s5, %s6
  %s8 = sld [smem:[#allocation0]]
  $region42: #{greedy_search.1} parent=0
    _
  %s10 = ssub.s32 1, %s8
  %s11 = scalar_select 0, %s10, %s8
  $region1: #{greedy_search.1} parent=0
    #allocation2 [shape = 'u8[98304]{0}', space=vmem, size = 0x18000, scoped, tag = 'input window, operand 1, single buffered']
    #allocation3 [shape = 's32[1]{0}', space=sflag, size = 0x4, scoped, tag = 'scoped memory for greedy_search.1']
    #allocation4 [shape = 's32[1]{0}', space=sflag, size = 0x4, scoped, tag = 'scoped memory for greedy_search.1']
    #allocation5 [shape = 'u8[512]{0}', space=vmem, size = 0x400, scoped, tag = 'output window, operand 0, single buffered']
    #allocation6 [shape = 'u8[512]{0}', space=vmem, size = 0x400, scoped, tag = 'output window, operand 1, single buffered']
    #allocation7 [shape = 's32[1]{0}', space=sflag, size = 0x4, scoped, tag = 'scoped memory for greedy_search.1']
    %12 = vsyncpa [#allocation3], 0
    %13 = vsyncpa [#allocation4], 0
    %14 = vsyncpa [#allocation7], 0
    // Predicated region
    $region2: #{greedy_search.1} parent=1 // pred_check
      _
    $region3: #{greedy_search.1} parent=1 // pred_check_branch
      %16 = sbr.rel (0) target = $region5
    $region4: #{greedy_search.1} parent=1 // pred_region
      _
    $region5: #{greedy_search.1} parent=1 // pred_fallthru
      _
    // Predicated region
    $region6: #{greedy_search.1} parent=1 // pred_check
      _
    $region7: #{greedy_search.1} parent=1 // pred_check_branch
      %18 = sbr.rel (0) target = $region9
    $region8: #{greedy_search.1} parent=1 // pred_region
      %s20 = ssub.s32 3072, 3072
      %21 = vsyncadd [#allocation3], %s20
      %s22 = sshll.u32 [#allocation2], 4
      %s23 = int_to_ptr.vmem [resolvable:$true] %s22
      %28 = dma.hbm_to_vmem [thread:$0]  %s1, 3072, %s23, [#allocation3], 256, 256, 16
    $region9: #{greedy_search.1} parent=1 // pred_fallthru
      _
    // Predicated region
    $region10: #{greedy_search.1} parent=1 // pred_check
      _
    $region11: #{greedy_search.1} parent=1 // pred_check_branch
      %30 = sbr.rel (0) target = $region13
    $region12: #{greedy_search.1} parent=1 // pred_region
      _
    $region13: #{greedy_search.1} parent=1 // pred_fallthru
      _
    // Predicated region
    $region14: #{greedy_search.1} parent=1 // pred_check
      _
    $region15: #{greedy_search.1} parent=1 // pred_check_branch
      %32 = sbr.rel (0) target = $region17
    $region16: #{greedy_search.1} parent=1 // pred_region
      _
    $region17: #{greedy_search.1} parent=1 // pred_fallthru
      _
    // Predicated region
    $region18: #{greedy_search.1} parent=1 // pred_check
      _
    $region19: #{greedy_search.1} parent=1 // pred_check_branch
      %34 = sbr.rel (0) target = $region21
    $region20: #{greedy_search.1} parent=1 // pred_region
      _
    $region21: #{greedy_search.1} parent=1 // pred_fallthru
      _
    // Predicated region
    $region22: #{greedy_search.1} parent=1 // pred_check
      _
    $region23: #{greedy_search.1} parent=1 // pred_check_branch
      %36 = sbr.rel (0) target = $region25
    $region24: #{greedy_search.1} parent=1 // pred_region
      %37 = dma.done [#allocation3], 3072
    $region25: #{greedy_search.1} parent=1 // pred_fallthru
      _
    %v38 = vld [vmem:[#allocation2] sm:$0xff]
    %v39 = vld [vmem:[#allocation2 + $0x8] sm:$0xff]
    %v40 = vld [vmem:[#allocation2 + $0x10] sm:$0xff]
    %v41 = vld [vmem:[#allocation2 + $0x18] sm:$0xff]
    %v42 = vld [vmem:[#allocation2 + $0x20] sm:$0xff]
    %v43 = vld [vmem:[#allocation2 + $0x28] sm:$0xff]
    %v44 = vld [vmem:[#allocation2 + $0x30] sm:$0xff]
    %v45 = vld [vmem:[#allocation2 + $0x38] sm:$0xff]
    %v46 = vld [vmem:[#allocation2 + $0x40] sm:$0xff]
    %v47 = vld [vmem:[#allocation2 + $0x48] sm:$0xff]
    %v48 = vld [vmem:[#allocation2 + $0x50] sm:$0xff]
    %v49 = vld [vmem:[#allocation2 + $0x58] sm:$0xff]
    %v50 = vld [vmem:[#allocation2 + $0x60] sm:$0xff]
    %v51 = vld [vmem:[#allocation2 + $0x68] sm:$0xff]
    %v52 = vld [vmem:[#allocation2 + $0x70] sm:$0xff]
    %v53 = vld [vmem:[#allocation2 + $0x78] sm:$0xff]
    %v54 = vld [vmem:[#allocation2 + $0x80] sm:$0xff]
    %v55 = vld [vmem:[#allocation2 + $0x88] sm:$0xff]
    %v56 = vld [vmem:[#allocation2 + $0x90] sm:$0xff]
    %v57 = vld [vmem:[#allocation2 + $0x98] sm:$0xff]
    %v58 = vld [vmem:[#allocation2 + $0xa0] sm:$0xff]
    %v59 = vld [vmem:[#allocation2 + $0xa8] sm:$0xff]
    %v60 = vld [vmem:[#allocation2 + $0xb0] sm:$0xff]
    %v61 = vld [vmem:[#allocation2 + $0xb8] sm:$0xff]
    %v62 = vld [vmem:[%s2] sm:$0xff]
    %v63 = vld [vmem:[%s2 + $0x8] sm:$0xff]
    %v64 = vld [vmem:[%s2 + $0x10] sm:$0xff]
    %v65 = vld [vmem:[%s2 + $0x18] sm:$0xff]
    %v66 = vld [vmem:[%s2 + $0x20] sm:$0xff]
    %v67 = vld [vmem:[%s2 + $0x28] sm:$0xff]
    %v68 = vld [vmem:[%s2 + $0x30] sm:$0xff]
    %v69 = vld [vmem:[%s2 + $0x38] sm:$0xff]
    %v70 = vld [vmem:[%s2 + $0x40] sm:$0xff]
    %v71 = vld [vmem:[%s2 + $0x48] sm:$0xff]
    %v72 = vld [vmem:[%s2 + $0x50] sm:$0xff]
    %v73 = vld [vmem:[%s2 + $0x58] sm:$0xff]
    %v74 = vld [vmem:[%s2 + $0x60] sm:$0xff]
    %v75 = vld [vmem:[%s2 + $0x68] sm:$0xff]
    %v76 = vld [vmem:[%s2 + $0x70] sm:$0xff]
    %v77 = vld [vmem:[%s2 + $0x78] sm:$0xff]
    %v78 = vld [vmem:[%s2 + $0x80] sm:$0xff]
    %v79 = vld [vmem:[%s2 + $0x88] sm:$0xff]
    %v80 = vld [vmem:[%s2 + $0x90] sm:$0xff]
    %v81 = vld [vmem:[%s2 + $0x98] sm:$0xff]
    %v82 = vld [vmem:[%s2 + $0xa0] sm:$0xff]
    %v83 = vld [vmem:[%s2 + $0xa8] sm:$0xff]
    %v84 = vld [vmem:[%s2 + $0xb0] sm:$0xff]
    %v85 = vld [vmem:[%s2 + $0xb8] sm:$0xff]
    %v86 = vld [vmem:[%s2 + $0xc0] sm:$0xff]
    %v87 = vld [vmem:[%s2 + $0xc8] sm:$0xff]
    %v88 = vld [vmem:[%s2 + $0xd0] sm:$0xff]
    %v89 = vld [vmem:[%s2 + $0xd8] sm:$0xff]
    %v90 = vld [vmem:[%s2 + $0xe0] sm:$0xff]
    %v91 = vld [vmem:[%s2 + $0xe8] sm:$0xff]
    %v92 = vld [vmem:[%s2 + $0xf0] sm:$0xff]
    %v93 = vld [vmem:[%s2 + $0xf8] sm:$0xff]
    %v94 = vld [vmem:[%s2 + $0x100] sm:$0xff]
    %v95 = vld [vmem:[%s2 + $0x108] sm:$0xff]
    %v96 = vld [vmem:[%s2 + $0x110] sm:$0xff]
    %v97 = vld [vmem:[%s2 + $0x118] sm:$0xff]
    %v98 = vld [vmem:[%s3] sm:$0x1]
    %v99 = vld [vmem:[%s3 + $0x1] sm:$0x1]
    %v100 = vld [vmem:[%s3 + $0x2] sm:$0x1]
    %v101 = vld [vmem:[%s3 + $0x3] sm:$0x1]
    %v102 = vld [vmem:[%s3 + $0x4] sm:$0x1]
    %v103 = vld [vmem:[%s3 + $0x5] sm:$0x1]
    %v104 = vld [vmem:[%s4] sm:$0xff]
    %v105 = vld [vmem:[%s4 + $0x8] sm:$0xff]
    %v106 = vld [vmem:[%s4 + $0x10] sm:$0xff]
    %v107 = vld [vmem:[%s4 + $0x18] sm:$0xff]
    %v108 = vld [vmem:[%s4 + $0x20] sm:$0xff]
    %v109 = vld [vmem:[%s4 + $0x28] sm:$0xff]
    %v110 = vld [vmem:[%s4 + $0x30] sm:$0xff]
    %v111 = vld [vmem:[%s4 + $0x38] sm:$0xff]
    %v112 = vld [vmem:[%s4 + $0x40] sm:$0xff]
    %v113 = vld [vmem:[%s4 + $0x48] sm:$0xff]
    %v114 = vld [vmem:[%s4 + $0x50] sm:$0xff]
    %v115 = vld [vmem:[%s4 + $0x58] sm:$0xff]
    %v116 = vld [vmem:[%s4 + $0x60] sm:$0xff]
    %v117 = vld [vmem:[%s4 + $0x68] sm:$0xff]
    %v118 = vld [vmem:[%s4 + $0x70] sm:$0xff]
    %v119 = vld [vmem:[%s4 + $0x78] sm:$0xff]
    %v120 = vld [vmem:[%s4 + $0x80] sm:$0x1]
    %v121 = vld [vmem:[%s4 + $0x81] sm:$0x1]
    %v122 = vld [vmem:[%s0] sm:$0xff]
    %v123 = vlaneseq
    %v124 = vshrl.u32 %v123, 7
    %vm125 = vcmask 261120
    %v127 = vsel %vm125, %v122, 0
    %129 = vmatprep.subr.mxu0 %v39
    %130 = vmatpush1.msra.mxu0 %v38
    %131 = vmatprep.subr.mxu0 %v41
    %132 = vmatpush1.msra.mxu0 %v40
    %133 = vmatprep.subr.mxu0 %v43
    %134 = vmatpush1.msra.mxu0 %v42
    %135 = vmatprep.subr.mxu0 %v45
    %136 = vmatpush1.msra.mxu0 %v44
    %137 = vmatprep.subr.mxu0 0.0
    %138 = vmatpush1.msra.mxu0 0.0
    %139 = vmatprep.subr.mxu0 0.0
    %140 = vmatpush1.msra.mxu0 0.0
    %141 = vmatprep.subr.mxu0 0.0
    %142 = vmatpush1.msra.mxu0 0.0
    %143 = vmatprep.subr.mxu0 0.0
    %144 = vmatpush1.msra.mxu0 0.0
    %145 = vmatprep.subr.mxu0 0.0
    %146 = vmatpush1.msra.mxu0 0.0
    %147 = vmatprep.subr.mxu0 0.0
    %148 = vmatpush1.msra.mxu0 0.0
    %149 = vmatprep.subr.mxu0 0.0
    %150 = vmatpush1.msra.mxu0 0.0
    %151 = vmatprep.subr.mxu0 0.0
    %152 = vmatpush1.msra.mxu0 0.0
    %153 = vmatprep.subr.mxu0 0.0
    %154 = vmatpush1.msra.mxu0 0.0
    %155 = vmatprep.subr.mxu0 0.0
    %156 = vmatpush1.msra.mxu0 0.0
    %157 = vmatprep.subr.mxu0 0.0
    %158 = vmatpush1.msra.mxu0 0.0
    %159 = vmatprep.subr.mxu0 0.0
    %160 = vmatpush1.msra.mxu0 0.0
    %161 = vmatprep.subr.mxu0 0.0
    %162 = vmatpush1.msra.mxu0 0.0
    %163 = vmatprep.subr.mxu0 0.0
    %164 = vmatpush1.msra.mxu0 0.0
    %165 = vmatprep.subr.mxu0 0.0
    %166 = vmatpush1.msra.mxu0 0.0
    %167 = vmatprep.subr.mxu0 0.0
    %168 = vmatpush1.msra.mxu0 0.0
    %169 = vmatprep.subr.mxu0 0.0
    %170 = vmatpush1.msra.mxu0 0.0
    %171 = vmatprep.subr.mxu0 0.0
    %172 = vmatpush1.msra.mxu0 0.0
    %173 = vmatprep.subr.mxu0 0.0
    %174 = vmatpush1.msra.mxu0 0.0
    %175 = vmatprep.subr.mxu0 0.0
    %176 = vmatpush1.msra.mxu0 0.0
    %177 = vmatprep.subr.mxu0 0.0
    %178 = vmatpush1.msra.mxu0 0.0
    %179 = vmatprep.subr.mxu0 0.0
    %180 = vmatpush1.msra.mxu0 0.0
    %181 = vmatprep.subr.mxu0 0.0
    %182 = vmatpush1.msra.mxu0 0.0
    %183 = vmatprep.subr.mxu0 0.0
    %184 = vmatpush1.msra.mxu0 0.0
    %185 = vmatprep.subr.mxu0 0.0
    %186 = vmatpush1.msra.mxu0 0.0
    %187 = vmatprep.subr.mxu0 0.0
    %188 = vmatpush1.msra.mxu0 0.0
    %189 = vmatprep.subr.mxu0 0.0
    %190 = vmatpush1.msra.mxu0 0.0
    %191 = vmatprep.subr.mxu0 0.0
    %192 = vmatpush1.msra.mxu0 0.0
    %193 = vmatprep.mubr.f32.mxu0 0.0
    %194 = vmatmul.mubr.f32.gmra.mrb[0].mxu0 %v127
    %v195 = vpop.f32.mrb[0].mxu0
    %v196 = vadd.f32 0.0, %v195
    %v197 = vpop.f32.mrb[0].mxu0
    %v198 = vadd.f32 0.0, %v197
    %199 = vdwg.mxu0
    %v201 = vsel %vm125, 0.0, 0
    %203 = vmatprep.subr.mxu0 0.0
    %204 = vmatpush1.msra.mxu0 %v62
    %205 = vmatprep.subr.mxu0 0.0
    %206 = vmatpush1.msra.mxu0 %v63
    %207 = vmatprep.subr.mxu0 0.0
    %208 = vmatpush1.msra.mxu0 %v64
    %209 = vmatprep.subr.mxu0 0.0
    %210 = vmatpush1.msra.mxu0 %v65
    %211 = vmatprep.subr.mxu0 0.0
    %212 = vmatpush1.msra.mxu0 0.0
    %213 = vmatprep.subr.mxu0 0.0
    %214 = vmatpush1.msra.mxu0 0.0
    %215 = vmatprep.subr.mxu0 0.0
    %216 = vmatpush1.msra.mxu0 0.0
    %217 = vmatprep.subr.mxu0 0.0
    %218 = vmatpush1.msra.mxu0 0.0
    %219 = vmatprep.subr.mxu0 0.0
    %220 = vmatpush1.msra.mxu0 0.0
    %221 = vmatprep.subr.mxu0 0.0
    %222 = vmatpush1.msra.mxu0 0.0
    %223 = vmatprep.subr.mxu0 0.0
    %224 = vmatpush1.msra.mxu0 0.0
    %225 = vmatprep.subr.mxu0 0.0
    %226 = vmatpush1.msra.mxu0 0.0
    %227 = vmatprep.subr.mxu0 0.0
    %228 = vmatpush1.msra.mxu0 0.0
    %229 = vmatprep.subr.mxu0 0.0
    %230 = vmatpush1.msra.mxu0 0.0
    %231 = vmatprep.subr.mxu0 0.0
    %232 = vmatpush1.msra.mxu0 0.0
    %233 = vmatprep.subr.mxu0 0.0
    %234 = vmatpush1.msra.mxu0 0.0
    %235 = vmatprep.subr.mxu0 0.0
    %236 = vmatpush1.msra.mxu0 0.0
    %237 = vmatprep.subr.mxu0 0.0
    %238 = vmatpush1.msra.mxu0 0.0
    %239 = vmatprep.subr.mxu0 0.0
    %240 = vmatpush1.msra.mxu0 0.0
    %241 = vmatprep.subr.mxu0 0.0
    %242 = vmatpush1.msra.mxu0 0.0
    %243 = vmatprep.subr.mxu0 0.0
    %244 = vmatpush1.msra.mxu0 0.0
    %245 = vmatprep.subr.mxu0 0.0
    %246 = vmatpush1.msra.mxu0 0.0
    %247 = vmatprep.subr.mxu0 0.0
    %248 = vmatpush1.msra.mxu0 0.0
    %249 = vmatprep.subr.mxu0 0.0
    %250 = vmatpush1.msra.mxu0 0.0
    %251 = vmatprep.subr.mxu0 0.0
    %252 = vmatpush1.msra.mxu0 0.0
    %253 = vmatprep.subr.mxu0 0.0
    %254 = vmatpush1.msra.mxu0 0.0
    %255 = vmatprep.subr.mxu0 0.0
    %256 = vmatpush1.msra.mxu0 0.0
    %257 = vmatprep.subr.mxu0 0.0
    %258 = vmatpush1.msra.mxu0 0.0
    %259 = vmatprep.subr.mxu0 0.0
    %260 = vmatpush1.msra.mxu0 0.0
    %261 = vmatprep.subr.mxu0 0.0
    %262 = vmatpush1.msra.mxu0 0.0
    %263 = vmatprep.subr.mxu0 0.0
    %264 = vmatpush1.msra.mxu0 0.0
    %265 = vmatprep.subr.mxu0 0.0
    %266 = vmatpush1.msra.mxu0 0.0
    %267 = vmatprep.mubr.f32.mxu0 0.0
    %268 = vmatmul.mubr.f32.gmra.mrb[0].mxu0 %v201
    %v269 = vpop.f32.mrb[0].mxu0
    %v270 = vadd.f32 0.0, %v269
    %v271 = vpop.f32.mrb[0].mxu0
    %272 = vdwg.mxu0
    %v273 = vadd.f32 %v196, %v270
    %v274 = vadd.f32 %v273, %v98
    %v275 = vxor.u32 %v274, 2147483648
    %v276 = vmul.f32 %v275, 1.442695
    %v277 = vpow.pop %v276
    %v278 = vadd.f32 %v277, 1.0
    %v279 = vrcp.pop %v278
    %v280 = vmul.f32 1.0, %v279
    %v281 = vadd.f32 %v196, %v98
    %283 = vrot.lane.b32.xlu0 %v98, 96
    %v284 = vpop.permute.xlu0 %283
    %v286 = vadd.f32 %v270, %v284
    %288 = vrot.lane.b32.xlu0 %v286, 64
    %v289 = vpop.permute.xlu0 %288
    %v291 = vmul.f32 %v280, %v289
    %293 = vrot.lane.b32.xlu0 %v291, 64
    %v294 = vpop.permute.xlu0 %293
    %v296 = vadd.f32 %v281, %v294
    %v297 = vtanh.pop %v296
    %v298 = vsub.f32 1.0, %v280
    %300 = vrot.lane.b32.xlu0 %v297, 96
    %v301 = vpop.permute.xlu0 %300
    %v303 = vmul.f32 %v298, %v301
    %v304 = vmul.f32 %v280, 0.0
    %v305 = vadd.f32 %v303, %v304
    %306 = vmatprep.subr.mxu0 0.0
    %307 = vmatpush1.msra.mxu0 %v66
    %308 = vmatprep.subr.mxu0 0.0
    %309 = vmatpush1.msra.mxu0 %v67
    %310 = vmatprep.subr.mxu0 0.0
    %311 = vmatpush1.msra.mxu0 %v68
    %312 = vmatprep.subr.mxu0 0.0
    %313 = vmatpush1.msra.mxu0 %v69
    %314 = vmatprep.subr.mxu0 0.0
    %315 = vmatpush1.msra.mxu0 0.0
    %316 = vmatprep.subr.mxu0 0.0
    %317 = vmatpush1.msra.mxu0 0.0
    %318 = vmatprep.subr.mxu0 0.0
    %319 = vmatpush1.msra.mxu0 0.0
    %320 = vmatprep.subr.mxu0 0.0
    %321 = vmatpush1.msra.mxu0 0.0
    %322 = vmatprep.subr.mxu0 0.0
    %323 = vmatpush1.msra.mxu0 0.0
    %324 = vmatprep.subr.mxu0 0.0
    %325 = vmatpush1.msra.mxu0 0.0
    %326 = vmatprep.subr.mxu0 0.0
    %327 = vmatpush1.msra.mxu0 0.0
    %328 = vmatprep.subr.mxu0 0.0
    %329 = vmatpush1.msra.mxu0 0.0
    %330 = vmatprep.subr.mxu0 0.0
    %331 = vmatpush1.msra.mxu0 0.0
    %332 = vmatprep.subr.mxu0 0.0
    %333 = vmatpush1.msra.mxu0 0.0
    %334 = vmatprep.subr.mxu0 0.0
    %335 = vmatpush1.msra.mxu0 0.0
    %336 = vmatprep.subr.mxu0 0.0
    %337 = vmatpush1.msra.mxu0 0.0
    %338 = vmatprep.subr.mxu0 0.0
    %339 = vmatpush1.msra.mxu0 0.0
    %340 = vmatprep.subr.mxu0 0.0
    %341 = vmatpush1.msra.mxu0 0.0
    %342 = vmatprep.subr.mxu0 0.0
    %343 = vmatpush1.msra.mxu0 0.0
    %344 = vmatprep.subr.mxu0 0.0
    %345 = vmatpush1.msra.mxu0 0.0
    %346 = vmatprep.subr.mxu0 0.0
    %347 = vmatpush1.msra.mxu0 0.0
    %348 = vmatprep.subr.mxu0 0.0
    %349 = vmatpush1.msra.mxu0 0.0
    %350 = vmatprep.subr.mxu0 0.0
    %351 = vmatpush1.msra.mxu0 0.0
    %352 = vmatprep.subr.mxu0 0.0
    %353 = vmatpush1.msra.mxu0 0.0
    %354 = vmatprep.subr.mxu0 0.0
    %355 = vmatpush1.msra.mxu0 0.0
    %356 = vmatprep.subr.mxu0 0.0
    %357 = vmatpush1.msra.mxu0 0.0
    %358 = vmatprep.subr.mxu0 0.0
    %359 = vmatpush1.msra.mxu0 0.0
    %360 = vmatprep.subr.mxu0 0.0
    %361 = vmatpush1.msra.mxu0 0.0
    %362 = vmatprep.subr.mxu0 0.0
    %363 = vmatpush1.msra.mxu0 0.0
    %364 = vmatprep.subr.mxu0 0.0
    %365 = vmatpush1.msra.mxu0 0.0
    %366 = vmatprep.subr.mxu0 0.0
    %367 = vmatpush1.msra.mxu0 0.0
    %368 = vmatprep.subr.mxu0 0.0
    %369 = vmatpush1.msra.mxu0 0.0
    %370 = vmatprep.mubr.f32.mxu0 0.0
    %371 = vmatmul.mubr.f32.gmra.mrb[0].mxu0 %v201
    %v372 = vpop.f32.mrb[0].mxu0
    %v373 = vadd.f32 0.0, %v372
    %v374 = vpop.f32.mrb[0].mxu0
    %375 = vdwg.mxu0
    %v377 = vrot.slane %v373, 1
    %378 = vrot.lane.b32.xlu0 %v377, 96
    %v379 = vpop.permute.xlu0 %378
    %v381 = vadd.f32 %v196, %v379
    %v382 = vadd.f32 %v198, %v379
    %v384 = vrot.slane %v99, 1
    %385 = vrot.lane.b32.xlu0 %v384, 96
    %v386 = vpop.permute.xlu0 %385
    %v388 = vadd.f32 %v381, %v386
    %v389 = vadd.f32 %v382, %v386
    %v390 = vxor.u32 %v388, 2147483648
    %v391 = vxor.u32 %v389, 2147483648
    %v392 = vmul.f32 %v390, 1.442695
    %v393 = vpow.pop %v392
    %v394 = vmul.f32 %v391, 1.442695
    %v395 = vpow.pop %v394
    %v396 = vadd.f32 %v393, 1.0
    %v397 = vadd.f32 %v395, 1.0
    %v398 = vrcp.pop %v396
    %v399 = vmul.f32 1.0, %v398
    %v400 = vrcp.pop %v397
    %v401 = vmul.f32 1.0, %v400
    %v402 = vadd.f32 %v198, %v386
    %403 = vrot.lane.b32.xlu0 %v99, 96
    %v404 = vpop.permute.xlu0 %403
    %v406 = vadd.f32 %v373, %v404
    %v408 = vrot.slane %v406, 1
    %409 = vrot.lane.b32.xlu0 %v408, 32
    %v410 = vpop.permute.xlu0 %409
    %v412 = vmul.f32 %v399, %v410
    %414 = vrot.lane.b32.xlu0 %v412, 64
    %v415 = vpop.permute.xlu0 %414
    %v417 = vadd.f32 %v402, %v415
    %v418 = vtanh.pop %v417
    %v419 = vsub.f32 1.0, %v401
    %421 = vrot.lane.b32.xlu0 %v418, 96
    %v422 = vpop.permute.xlu0 %421
    %v424 = vmul.f32 %v419, %v422
    %v425 = vmul.f32 %v401, 0.0
    %v426 = vadd.f32 %v424, %v425
    %vm427 = vcmp.eq.s32.totalorder %v124, 0
    %v428 = vlaneseq
    %v429 = vshrl.u32 %v428, 7
    %v430 = vsub.s32 0, %v429
    %v431 = vrot.slane %v305, %v430
    %v432 = vsel %vm427, %v431, 0.0
    %vm433 = vcmp.eq.s32.totalorder %v124, 7
    %v434 = vlaneseq
    %v435 = vshrl.u32 %v434, 7
    %v436 = vsub.s32 7, %v435
    %v437 = vrot.slane %v426, %v436
    %v438 = vsel %vm433, %v437, 0.0
    %440 = vrot.lane.b32.xlu0 %v305, 96
    %v441 = vpop.permute.xlu0 %440
    %v442 = vsel %vm125, %v441, 0
    %444 = vmatprep.subr.mxu0 0.0
    %445 = vmatpush1.msra.mxu0 %v62
    %446 = vmatprep.subr.mxu0 0.0
    %447 = vmatpush1.msra.mxu0 %v63
    %448 = vmatprep.subr.mxu0 0.0
    %449 = vmatpush1.msra.mxu0 %v64
    %450 = vmatprep.subr.mxu0 0.0
    %451 = vmatpush1.msra.mxu0 %v65
    %452 = vmatprep.subr.mxu0 0.0
    %453 = vmatpush1.msra.mxu0 0.0
    %454 = vmatprep.subr.mxu0 0.0
    %455 = vmatpush1.msra.mxu0 0.0
    %456 = vmatprep.subr.mxu0 0.0
    %457 = vmatpush1.msra.mxu0 0.0
    %458 = vmatprep.subr.mxu0 0.0
    %459 = vmatpush1.msra.mxu0 0.0
    %460 = vmatprep.subr.mxu0 0.0
    %461 = vmatpush1.msra.mxu0 0.0
    %462 = vmatprep.subr.mxu0 0.0
    %463 = vmatpush1.msra.mxu0 0.0
    %464 = vmatprep.subr.mxu0 0.0
    %465 = vmatpush1.msra.mxu0 0.0
    %466 = vmatprep.subr.mxu0 0.0
    %467 = vmatpush1.msra.mxu0 0.0
    %468 = vmatprep.subr.mxu0 0.0
    %469 = vmatpush1.msra.mxu0 0.0
    %470 = vmatprep.subr.mxu0 0.0
    %471 = vmatpush1.msra.mxu0 0.0
    %472 = vmatprep.subr.mxu0 0.0
    %473 = vmatpush1.msra.mxu0 0.0
    %474 = vmatprep.subr.mxu0 0.0
    %475 = vmatpush1.msra.mxu0 0.0
    %476 = vmatprep.subr.mxu0 0.0
    %477 = vmatpush1.msra.mxu0 0.0
    %478 = vmatprep.subr.mxu0 0.0
    %479 = vmatpush1.msra.mxu0 0.0
    %480 = vmatprep.subr.mxu0 0.0
    %481 = vmatpush1.msra.mxu0 0.0
    %482 = vmatprep.subr.mxu0 0.0
    %483 = vmatpush1.msra.mxu0 0.0
    %484 = vmatprep.subr.mxu0 0.0
    %485 = vmatpush1.msra.mxu0 0.0
    %486 = vmatprep.subr.mxu0 0.0
    %487 = vmatpush1.msra.mxu0 0.0
    %488 = vmatprep.subr.mxu0 0.0
    %489 = vmatpush1.msra.mxu0 0.0
    %490 = vmatprep.subr.mxu0 0.0
    %491 = vmatpush1.msra.mxu0 0.0
    %492 = vmatprep.subr.mxu0 0.0
    %493 = vmatpush1.msra.mxu0 0.0
    %494 = vmatprep.subr.mxu0 0.0
    %495 = vmatpush1.msra.mxu0 0.0
    %496 = vmatprep.subr.mxu0 0.0
    %497 = vmatpush1.msra.mxu0 0.0
    %498 = vmatprep.subr.mxu0 0.0
    %499 = vmatpush1.msra.mxu0 0.0
    %500 = vmatprep.subr.mxu0 0.0
    %501 = vmatpush1.msra.mxu0 0.0
    %502 = vmatprep.subr.mxu0 0.0
    %503 = vmatpush1.msra.mxu0 0.0
    %504 = vmatprep.subr.mxu0 0.0
    %505 = vmatpush1.msra.mxu0 0.0
    %506 = vmatprep.subr.mxu0 0.0
    %507 = vmatpush1.msra.mxu0 0.0
    %508 = vmatprep.mubr.f32.mxu0 0.0
    %509 = vmatmul.mubr.f32.gmra.mrb[0].mxu0 %v442
    %v510 = vpop.f32.mrb[0].mxu0
    %v511 = vadd.f32 0.0, %v510
    %v512 = vpop.f32.mrb[0].mxu0
    %513 = vdwg.mxu0
    %v515 = vrot.slane %v511, 7
    %v517 = vadd.f32 %v196, %v515
    %v518 = vrot.slane %v98, 7
    %v520 = vadd.f32 %v517, %v518
    %v521 = vxor.u32 %v520, 2147483648
    %v522 = vmul.f32 %v521, 1.442695
    %v523 = vpow.pop %v522
    %v524 = vadd.f32 %v523, 1.0
    %v525 = vrcp.pop %v524
    %v526 = vmul.f32 1.0, %v525
    %v527 = vadd.f32 %v196, %v518
    %v528 = vadd.f32 %v511, %v284
    %v530 = vrot.slane %v528, 7
    %531 = vrot.lane.b32.xlu0 %v530, 64
    %v532 = vpop.permute.xlu0 %531
    %v534 = vmul.f32 %v526, %v532
    %536 = vrot.lane.b32.xlu0 %v534, 64
    %v537 = vpop.permute.xlu0 %536
    %v539 = vadd.f32 %v527, %v537
    %v540 = vtanh.pop %v539
    %v541 = vsub.f32 1.0, %v526
    %543 = vrot.lane.b32.xlu0 %v540, 96
    %v544 = vpop.permute.xlu0 %543
    %v546 = vmul.f32 %v541, %v544
    %v547 = vrot.slane %v305, 7
    %v549 = vmul.f32 %v526, %v547
    %v550 = vadd.f32 %v546, %v549
    %v552 = vrot.slane %v426, 7
    %v553 = vsel %vm125, %v552, 0
    %555 = vmatprep.subr.mxu0 0.0
    %556 = vmatpush1.msra.mxu0 %v66
    %557 = vmatprep.subr.mxu0 0.0
    %558 = vmatpush1.msra.mxu0 %v67
    %559 = vmatprep.subr.mxu0 0.0
    %560 = vmatpush1.msra.mxu0 %v68
    %561 = vmatprep.subr.mxu0 0.0
    %562 = vmatpush1.msra.mxu0 %v69
    %563 = vmatprep.subr.mxu0 0.0
    %564 = vmatpush1.msra.mxu0 0.0
    %565 = vmatprep.subr.mxu0 0.0
    %566 = vmatpush1.msra.mxu0 0.0
    %567 = vmatprep.subr.mxu0 0.0
    %568 = vmatpush1.msra.mxu0 0.0
    %569 = vmatprep.subr.mxu0 0.0
    %570 = vmatpush1.msra.mxu0 0.0
    %571 = vmatprep.subr.mxu0 0.0
    %572 = vmatpush1.msra.mxu0 0.0
    %573 = vmatprep.subr.mxu0 0.0
    %574 = vmatpush1.msra.mxu0 0.0
    %575 = vmatprep.subr.mxu0 0.0
    %576 = vmatpush1.msra.mxu0 0.0
    %577 = vmatprep.subr.mxu0 0.0
    %578 = vmatpush1.msra.mxu0 0.0
    %579 = vmatprep.subr.mxu0 0.0
    %580 = vmatpush1.msra.mxu0 0.0
    %581 = vmatprep.subr.mxu0 0.0
    %582 = vmatpush1.msra.mxu0 0.0
    %583 = vmatprep.subr.mxu0 0.0
    %584 = vmatpush1.msra.mxu0 0.0
    %585 = vmatprep.subr.mxu0 0.0
    %586 = vmatpush1.msra.mxu0 0.0
    %587 = vmatprep.subr.mxu0 0.0
    %588 = vmatpush1.msra.mxu0 0.0
    %589 = vmatprep.subr.mxu0 0.0
    %590 = vmatpush1.msra.mxu0 0.0
    %591 = vmatprep.subr.mxu0 0.0
    %592 = vmatpush1.msra.mxu0 0.0
    %593 = vmatprep.subr.mxu0 0.0
    %594 = vmatpush1.msra.mxu0 0.0
    %595 = vmatprep.subr.mxu0 0.0
    %596 = vmatpush1.msra.mxu0 0.0
    %597 = vmatprep.subr.mxu0 0.0
    %598 = vmatpush1.msra.mxu0 0.0
    %599 = vmatprep.subr.mxu0 0.0
    %600 = vmatpush1.msra.mxu0 0.0
    %601 = vmatprep.subr.mxu0 0.0
    %602 = vmatpush1.msra.mxu0 0.0
    %603 = vmatprep.subr.mxu0 0.0
    %604 = vmatpush1.msra.mxu0 0.0
    %605 = vmatprep.subr.mxu0 0.0
    %606 = vmatpush1.msra.mxu0 0.0
    %607 = vmatprep.subr.mxu0 0.0
    %608 = vmatpush1.msra.mxu0 0.0
    %609 = vmatprep.subr.mxu0 0.0
    %610 = vmatpush1.msra.mxu0 0.0
    %611 = vmatprep.subr.mxu0 0.0
    %612 = vmatpush1.msra.mxu0 0.0
    %613 = vmatprep.subr.mxu0 0.0
    %614 = vmatpush1.msra.mxu0 0.0
    %615 = vmatprep.subr.mxu0 0.0
    %616 = vmatpush1.msra.mxu0 0.0
    %617 = vmatprep.subr.mxu0 0.0
    %618 = vmatpush1.msra.mxu0 0.0
    %619 = vmatprep.mubr.f32.mxu0 0.0
    %620 = vmatmul.mubr.f32.gmra.mrb[0].mxu0 %v553
    %v621 = vpop.f32.mrb[0].mxu0
    %v622 = vadd.f32 0.0, %v621
    %v623 = vpop.f32.mrb[0].mxu0
    %624 = vdwg.mxu0
    %v626 = vrot.slane %v622, 2
    %627 = vrot.lane.b32.xlu0 %v626, 96
    %v628 = vpop.permute.xlu0 %627
    %v630 = vadd.f32 %v196, %v628
    %v631 = vadd.f32 %v198, %v628
    %v632 = vrot.slane %v99, 2
    %633 = vrot.lane.b32.xlu0 %v632, 96
    %v634 = vpop.permute.xlu0 %633
    %v636 = vadd.f32 %v630, %v634
    %v637 = vadd.f32 %v631, %v634
    %v638 = vxor.u32 %v636, 2147483648
    %v639 = vxor.u32 %v637, 2147483648
    %v640 = vmul.f32 %v638, 1.442695
    %v641 = vpow.pop %v640
    %v642 = vmul.f32 %v639, 1.442695
    %v643 = vpow.pop %v642
    %v644 = vadd.f32 %v641, 1.0
    %v645 = vadd.f32 %v643, 1.0
    %v646 = vrcp.pop %v644
    %v647 = vmul.f32 1.0, %v646
    %v648 = vrcp.pop %v645
    %v649 = vmul.f32 1.0, %v648
    %v650 = vadd.f32 %v198, %v634
    %v651 = vadd.f32 %v622, %v404
    %v653 = vrot.slane %v651, 2
    %654 = vrot.lane.b32.xlu0 %v653, 32
    %v655 = vpop.permute.xlu0 %654
    %v657 = vmul.f32 %v647, %v655
    %659 = vrot.lane.b32.xlu0 %v657, 64
    %v660 = vpop.permute.xlu0 %659
    %v662 = vadd.f32 %v650, %v660
    %v663 = vtanh.pop %v662
    %v664 = vsub.f32 1.0, %v649
    %666 = vrot.lane.b32.xlu0 %v663, 96
    %v667 = vpop.permute.xlu0 %666
    %v669 = vmul.f32 %v664, %v667
    %v670 = vrot.slane %v426, 1
    %v672 = vmul.f32 %v649, %v670
    %v673 = vadd.f32 %v669, %v672
    %vm674 = vcmp.eq.s32.totalorder %v124, 1
    %v675 = vlaneseq
    %v676 = vshrl.u32 %v675, 7
    %v677 = vsub.s32 1, %v676
    %v678 = vrot.slane %v550, %v677
    %v679 = vsel %vm674, %v678, %v432
    %vm680 = vcmp.eq.s32.totalorder %v124, 6
    %v681 = vlaneseq
    %v682 = vshrl.u32 %v681, 7
    %v683 = vsub.s32 6, %v682
    %v684 = vrot.slane %v673, %v683
    %v685 = vsel %vm680, %v684, %v438
    %v687 = vrot.slane %v550, 1
    %688 = vrot.lane.b32.xlu0 %v687, 96
    %v689 = vpop.permute.xlu0 %688
    %v690 = vsel %vm125, %v689, 0
    %692 = vmatprep.subr.mxu0 0.0
    %693 = vmatpush1.msra.mxu0 %v62
    %694 = vmatprep.subr.mxu0 0.0
    %695 = vmatpush1.msra.mxu0 %v63
    %696 = vmatprep.subr.mxu0 0.0
    %697 = vmatpush1.msra.mxu0 %v64
    %698 = vmatprep.subr.mxu0 0.0
    %699 = vmatpush1.msra.mxu0 %v65
    %700 = vmatprep.subr.mxu0 0.0
    %701 = vmatpush1.msra.mxu0 0.0
    %702 = vmatprep.subr.mxu0 0.0
    %703 = vmatpush1.msra.mxu0 0.0
    %704 = vmatprep.subr.mxu0 0.0
    %705 = vmatpush1.msra.mxu0 0.0
    %706 = vmatprep.subr.mxu0 0.0
    %707 = vmatpush1.msra.mxu0 0.0
    %708 = vmatprep.subr.mxu0 0.0
    %709 = vmatpush1.msra.mxu0 0.0
    %710 = vmatprep.subr.mxu0 0.0
    %711 = vmatpush1.msra.mxu0 0.0
    %712 = vmatprep.subr.mxu0 0.0
    %713 = vmatpush1.msra.mxu0 0.0
    %714 = vmatprep.subr.mxu0 0.0
    %715 = vmatpush1.msra.mxu0 0.0
    %716 = vmatprep.subr.mxu0 0.0
    %717 = vmatpush1.msra.mxu0 0.0
    %718 = vmatprep.subr.mxu0 0.0
    %719 = vmatpush1.msra.mxu0 0.0
    %720 = vmatprep.subr.mxu0 0.0
    %721 = vmatpush1.msra.mxu0 0.0
    %722 = vmatprep.subr.mxu0 0.0
    %723 = vmatpush1.msra.mxu0 0.0
    %724 = vmatprep.subr.mxu0 0.0
    %725 = vmatpush1.msra.mxu0 0.0
    %726 = vmatprep.subr.mxu0 0.0
    %727 = vmatpush1.msra.mxu0 0.0
    %728 = vmatprep.subr.mxu0 0.0
    %729 = vmatpush1.msra.mxu0 0.0
    %730 = vmatprep.subr.mxu0 0.0
    %731 = vmatpush1.msra.mxu0 0.0
    %732 = vmatprep.subr.mxu0 0.0
    %733 = vmatpush1.msra.mxu0 0.0
    %734 = vmatprep.subr.mxu0 0.0
    %735 = vmatpush1.msra.mxu0 0.0
    %736 = vmatprep.subr.mxu0 0.0
    %737 = vmatpush1.msra.mxu0 0.0
    %738 = vmatprep.subr.mxu0 0.0
    %739 = vmatpush1.msra.mxu0 0.0
    %740 = vmatprep.subr.mxu0 0.0
    %741 = vmatpush1.msra.mxu0 0.0
    %742 = vmatprep.subr.mxu0 0.0
    %743 = vmatpush1.msra.mxu0 0.0
    %744 = vmatprep.subr.mxu0 0.0
    %745 = vmatpush1.msra.mxu0 0.0
    %746 = vmatprep.subr.mxu0 0.0
    %747 = vmatpush1.msra.mxu0 0.0
    %748 = vmatprep.subr.mxu0 0.0
    %749 = vmatpush1.msra.mxu0 0.0
    %750 = vmatprep.subr.mxu0 0.0
    %751 = vmatpush1.msra.mxu0 0.0
    %752 = vmatprep.subr.mxu0 0.0
    %753 = vmatpush1.msra.mxu0 0.0
    %754 = vmatprep.subr.mxu0 0.0
    %755 = vmatpush1.msra.mxu0 0.0
    %756 = vmatprep.mubr.f32.mxu0 0.0
    %757 = vmatmul.mubr.f32.gmra.mrb[0].mxu0 %v690
    %v758 = vpop.f32.mrb[0].mxu0
    %v759 = vadd.f32 0.0, %v758
    %v760 = vpop.f32.mrb[0].mxu0
    %761 = vdwg.mxu0
    %v763 = vrot.slane %v759, 6
    %v765 = vadd.f32 %v196, %v763
    %v766 = vrot.slane %v98, 6
    %v768 = vadd.f32 %v765, %v766
    %v769 = vxor.u32 %v768, 2147483648
    %v770 = vmul.f32 %v769, 1.442695
    %v771 = vpow.pop %v770
    %v772 = vadd.f32 %v771, 1.0
    %v773 = vrcp.pop %v772
    %v774 = vmul.f32 1.0, %v773
    %v775 = vadd.f32 %v196, %v766
    %v776 = vadd.f32 %v759, %v284
    %v778 = vrot.slane %v776, 6
    %779 = vrot.lane.b32.xlu0 %v778, 64
    %v780 = vpop.permute.xlu0 %779
    %v782 = vmul.f32 %v774, %v780
    %784 = vrot.lane.b32.xlu0 %v782, 64
    %v785 = vpop.permute.xlu0 %784
    %v787 = vadd.f32 %v775, %v785
    %v788 = vtanh.pop %v787
    %v789 = vsub.f32 1.0, %v774
    %791 = vrot.lane.b32.xlu0 %v788, 96
    %v792 = vpop.permute.xlu0 %791
    %v794 = vmul.f32 %v789, %v792
    %v795 = vrot.slane %v550, 7
    %v797 = vmul.f32 %v774, %v795
    %v798 = vadd.f32 %v794, %v797
    %v800 = vrot.slane %v673, 6
    %v801 = vsel %vm125, %v800, 0
    %803 = vmatprep.subr.mxu0 0.0
    %804 = vmatpush1.msra.mxu0 %v66
    %805 = vmatprep.subr.mxu0 0.0
    %806 = vmatpush1.msra.mxu0 %v67
    %807 = vmatprep.subr.mxu0 0.0
    %808 = vmatpush1.msra.mxu0 %v68
    %809 = vmatprep.subr.mxu0 0.0
    %810 = vmatpush1.msra.mxu0 %v69
    %811 = vmatprep.subr.mxu0 0.0
    %812 = vmatpush1.msra.mxu0 0.0
    %813 = vmatprep.subr.mxu0 0.0
    %814 = vmatpush1.msra.mxu0 0.0
    %815 = vmatprep.subr.mxu0 0.0
    %816 = vmatpush1.msra.mxu0 0.0
    %817 = vmatprep.subr.mxu0 0.0
    %818 = vmatpush1.msra.mxu0 0.0
    %819 = vmatprep.subr.mxu0 0.0
    %820 = vmatpush1.msra.mxu0 0.0
    %821 = vmatprep.subr.mxu0 0.0
    %822 = vmatpush1.msra.mxu0 0.0
    %823 = vmatprep.subr.mxu0 0.0
    %824 = vmatpush1.msra.mxu0 0.0
    %825 = vmatprep.subr.mxu0 0.0
    %826 = vmatpush1.msra.mxu0 0.0
    %827 = vmatprep.subr.mxu0 0.0
    %828 = vmatpush1.msra.mxu0 0.0
    %829 = vmatprep.subr.mxu0 0.0
    %830 = vmatpush1.msra.mxu0 0.0
    %831 = vmatprep.subr.mxu0 0.0
    %832 = vmatpush1.msra.mxu0 0.0
    %833 = vmatprep.subr.mxu0 0.0
    %834 = vmatpush1.msra.mxu0 0.0
    %835 = vmatprep.subr.mxu0 0.0
    %836 = vmatpush1.msra.mxu0 0.0
    %837 = vmatprep.subr.mxu0 0.0
    %838 = vmatpush1.msra.mxu0 0.0
    %839 = vmatprep.subr.mxu0 0.0
    %840 = vmatpush1.msra.mxu0 0.0
    %841 = vmatprep.subr.mxu0 0.0
    %842 = vmatpush1.msra.mxu0 0.0
    %843 = vmatprep.subr.mxu0 0.0
    %844 = vmatpush1.msra.mxu0 0.0
    %845 = vmatprep.subr.mxu0 0.0
    %846 = vmatpush1.msra.mxu0 0.0
    %847 = vmatprep.subr.mxu0 0.0
    %848 = vmatpush1.msra.mxu0 0.0
    %849 = vmatprep.subr.mxu0 0.0
    %850 = vmatpush1.msra.mxu0 0.0
    %851 = vmatprep.subr.mxu0 0.0
    %852 = vmatpush1.msra.mxu0 0.0
    %853 = vmatprep.subr.mxu0 0.0
    %854 = vmatpush1.msra.mxu0 0.0
    %855 = vmatprep.subr.mxu0 0.0
    %856 = vmatpush1.msra.mxu0 0.0
    %857 = vmatprep.subr.mxu0 0.0
    %858 = vmatpush1.msra.mxu0 0.0
    %859 = vmatprep.subr.mxu0 0.0
    %860 = vmatpush1.msra.mxu0 0.0
    %861 = vmatprep.subr.mxu0 0.0
    %862 = vmatpush1.msra.mxu0 0.0
    %863 = vmatprep.subr.mxu0 0.0
    %864 = vmatpush1.msra.mxu0 0.0
    %865 = vmatprep.subr.mxu0 0.0
    %866 = vmatpush1.msra.mxu0 0.0
    %867 = vmatprep.mubr.f32.mxu0 0.0
    %868 = vmatmul.mubr.f32.gmra.mrb[0].mxu0 %v801
    %v869 = vpop.f32.mrb[0].mxu0
    %v870 = vadd.f32 0.0, %v869
    %v871 = vpop.f32.mrb[0].mxu0
    %872 = vdwg.mxu0
    %v874 = vrot.slane %v870, 3
    %875 = vrot.lane.b32.xlu0 %v874, 96
    %v876 = vpop.permute.xlu0 %875
    %v878 = vadd.f32 %v196, %v876
    %v879 = vadd.f32 %v198, %v876
    %v880 = vrot.slane %v99, 3
    %881 = vrot.lane.b32.xlu0 %v880, 96
    %v882 = vpop.permute.xlu0 %881
    %v884 = vadd.f32 %v878, %v882
    %v885 = vadd.f32 %v879, %v882
    %v886 = vxor.u32 %v884, 2147483648
    %v887 = vxor.u32 %v885, 2147483648
    %v888 = vmul.f32 %v886, 1.442695
    %v889 = vpow.pop %v888
    %v890 = vmul.f32 %v887, 1.442695
    %v891 = vpow.pop %v890
    %v892 = vadd.f32 %v889, 1.0
    %v893 = vadd.f32 %v891, 1.0
    %v894 = vrcp.pop %v892
    %v895 = vmul.f32 1.0, %v894
    %v896 = vrcp.pop %v893
    %v897 = vmul.f32 1.0, %v896
    %v898 = vadd.f32 %v198, %v882
    %v899 = vadd.f32 %v870, %v404
    %v901 = vrot.slane %v899, 3
    %902 = vrot.lane.b32.xlu0 %v901, 32
    %v903 = vpop.permute.xlu0 %902
    %v905 = vmul.f32 %v895, %v903
    %907 = vrot.lane.b32.xlu0 %v905, 64
    %v908 = vpop.permute.xlu0 %907
    %v910 = vadd.f32 %v898, %v908
    %v911 = vtanh.pop %v910
    %v912 = vsub.f32 1.0, %v897
    %914 = vrot.lane.b32.xlu0 %v911, 96
    %v915 = vpop.permute.xlu0 %914
    %v917 = vmul.f32 %v912, %v915
    %v918 = vrot.slane %v673, 1
    %v920 = vmul.f32 %v897, %v918
    %v921 = vadd.f32 %v917, %v920
    %vm922 = vcmp.eq.s32.totalorder %v124, 2
    %v923 = vlaneseq
    %v924 = vshrl.u32 %v923, 7
    %v925 = vsub.s32 2, %v924
    %v926 = vrot.slane %v798, %v925
    %v927 = vsel %vm922, %v926, %v679
    %vm928 = vcmp.eq.s32.totalorder %v124, 5
    %v929 = vlaneseq
    %v930 = vshrl.u32 %v929, 7
    %v931 = vsub.s32 5, %v930
    %v932 = vrot.slane %v921, %v931
    %v933 = vsel %vm928, %v932, %v685
    %v935 = vrot.slane %v798, 2
    %936 = vrot.lane.b32.xlu0 %v935, 96
    %v937 = vpop.permute.xlu0 %936
    %v938 = vsel %vm125, %v937, 0
    %940 = vmatprep.subr.mxu0 0.0
    %941 = vmatpush1.msra.mxu0 %v62
    %942 = vmatprep.subr.mxu0 0.0
    %943 = vmatpush1.msra.mxu0 %v63
    %944 = vmatprep.subr.mxu0 0.0
    %945 = vmatpush1.msra.mxu0 %v64
    %946 = vmatprep.subr.mxu0 0.0
    %947 = vmatpush1.msra.mxu0 %v65
    %948 = vmatprep.subr.mxu0 0.0
    %949 = vmatpush1.msra.mxu0 0.0
    %950 = vmatprep.subr.mxu0 0.0
    %951 = vmatpush1.msra.mxu0 0.0
    %952 = vmatprep.subr.mxu0 0.0
    %953 = vmatpush1.msra.mxu0 0.0
    %954 = vmatprep.subr.mxu0 0.0
    %955 = vmatpush1.msra.mxu0 0.0
    %956 = vmatprep.subr.mxu0 0.0
    %957 = vmatpush1.msra.mxu0 0.0
    %958 = vmatprep.subr.mxu0 0.0
    %959 = vmatpush1.msra.mxu0 0.0
    %960 = vmatprep.subr.mxu0 0.0
    %961 = vmatpush1.msra.mxu0 0.0
    %962 = vmatprep.subr.mxu0 0.0
    %963 = vmatpush1.msra.mxu0 0.0
    %964 = vmatprep.subr.mxu0 0.0
    %965 = vmatpush1.msra.mxu0 0.0
    %966 = vmatprep.subr.mxu0 0.0
    %967 = vmatpush1.msra.mxu0 0.0
    %968 = vmatprep.subr.mxu0 0.0
    %969 = vmatpush1.msra.mxu0 0.0
    %970 = vmatprep.subr.mxu0 0.0
    %971 = vmatpush1.msra.mxu0 0.0
    %972 = vmatprep.subr.mxu0 0.0
    %973 = vmatpush1.msra.mxu0 0.0
    %974 = vmatprep.subr.mxu0 0.0
    %975 = vmatpush1.msra.mxu0 0.0
    %976 = vmatprep.subr.mxu0 0.0
    %977 = vmatpush1.msra.mxu0 0.0
    %978 = vmatprep.subr.mxu0 0.0
    %979 = vmatpush1.msra.mxu0 0.0
    %980 = vmatprep.subr.mxu0 0.0
    %981 = vmatpush1.msra.mxu0 0.0
    %982 = vmatprep.subr.mxu0 0.0
    %983 = vmatpush1.msra.mxu0 0.0
    %984 = vmatprep.subr.mxu0 0.0
    %985 = vmatpush1.msra.mxu0 0.0
    %986 = vmatprep.subr.mxu0 0.0
    %987 = vmatpush1.msra.mxu0 0.0
    %988 = vmatprep.subr.mxu0 0.0
    %989 = vmatpush1.msra.mxu0 0.0
    %990 = vmatprep.subr.mxu0 0.0
    %991 = vmatpush1.msra.mxu0 0.0
    %992 = vmatprep.subr.mxu0 0.0
    %993 = vmatpush1.msra.mxu0 0.0
    %994 = vmatprep.subr.mxu0 0.0
    %995 = vmatpush1.msra.mxu0 0.0
    %996 = vmatprep.subr.mxu0 0.0
    %997 = vmatpush1.msra.mxu0 0.0
    %998 = vmatprep.subr.mxu0 0.0
    %999 = vmatpush1.msra.mxu0 0.0
    %1000 = vmatprep.subr.mxu0 0.0
    %1001 = vmatpush1.msra.mxu0 0.0
    %1002 = vmatprep.subr.mxu0 0.0
    %1003 = vmatpush1.msra.mxu0 0.0
    %1004 = vmatprep.mubr.f32.mxu0 0.0
    %1005 = vmatmul.mubr.f32.gmra.mrb[0].mxu0 %v938
    %v1006 = vpop.f32.mrb[0].mxu0
    %v1007 = vadd.f32 0.0, %v1006
    %v1008 = vpop.f32.mrb[0].mxu0
    %1009 = vdwg.mxu0
    %v1011 = vrot.slane %v1007, 5
    %v1013 = vadd.f32 %v196, %v1011
    %v1014 = vrot.slane %v98, 5
    %v1016 = vadd.f32 %v1013, %v1014
    %v1017 = vxor.u32 %v1016, 2147483648
    %v1018 = vmul.f32 %v1017, 1.442695
    %v1019 = vpow.pop %v1018
    %v1020 = vadd.f32 %v1019, 1.0
    %v1021 = vrcp.pop %v1020
    %v1022 = vmul.f32 1.0, %v1021
    %v1023 = vadd.f32 %v196, %v1014
    %v1024 = vadd.f32 %v1007, %v284
    %v1026 = vrot.slane %v1024, 5
    %1027 = vrot.lane.b32.xlu0 %v1026, 64
    %v1028 = vpop.permute.xlu0 %1027
    %v1030 = vmul.f32 %v1022, %v1028
    %1032 = vrot.lane.b32.xlu0 %v1030, 64
    %v1033 = vpop.permute.xlu0 %1032
    %v1035 = vadd.f32 %v1023, %v1033
    %v1036 = vtanh.pop %v1035
    %v1037 = vsub.f32 1.0, %v1022
    %1039 = vrot.lane.b32.xlu0 %v1036, 96
    %v1040 = vpop.permute.xlu0 %1039
    %v1042 = vmul.f32 %v1037, %v1040
    %v1043 = vrot.slane %v798, 7
    %v1045 = vmul.f32 %v1022, %v1043
    %v1046 = vadd.f32 %v1042, %v1045
    %v1048 = vrot.slane %v921, 5
    %v1049 = vsel %vm125, %v1048, 0
    %1051 = vmatprep.subr.mxu0 0.0
    %1052 = vmatpush1.msra.mxu0 %v66
    %1053 = vmatprep.subr.mxu0 0.0
    %1054 = vmatpush1.msra.mxu0 %v67
    %1055 = vmatprep.subr.mxu0 0.0
    %1056 = vmatpush1.msra.mxu0 %v68
    %1057 = vmatprep.subr.mxu0 0.0
    %1058 = vmatpush1.msra.mxu0 %v69
    %1059 = vmatprep.subr.mxu0 0.0
    %1060 = vmatpush1.msra.mxu0 0.0
    %1061 = vmatprep.subr.mxu0 0.0
    %1062 = vmatpush1.msra.mxu0 0.0
    %1063 = vmatprep.subr.mxu0 0.0
    %1064 = vmatpush1.msra.mxu0 0.0
    %1065 = vmatprep.subr.mxu0 0.0
    %1066 = vmatpush1.msra.mxu0 0.0
    %1067 = vmatprep.subr.mxu0 0.0
    %1068 = vmatpush1.msra.mxu0 0.0
    %1069 = vmatprep.subr.mxu0 0.0
    %1070 = vmatpush1.msra.mxu0 0.0
    %1071 = vmatprep.subr.mxu0 0.0
    %1072 = vmatpush1.msra.mxu0 0.0
    %1073 = vmatprep.subr.mxu0 0.0
    %1074 = vmatpush1.msra.mxu0 0.0
    %1075 = vmatprep.subr.mxu0 0.0
    %1076 = vmatpush1.msra.mxu0 0.0
    %1077 = vmatprep.subr.mxu0 0.0
    %1078 = vmatpush1.msra.mxu0 0.0
    %1079 = vmatprep.subr.mxu0 0.0
    %1080 = vmatpush1.msra.mxu0 0.0
    %1081 = vmatprep.subr.mxu0 0.0
    %1082 = vmatpush1.msra.mxu0 0.0
    %1083 = vmatprep.subr.mxu0 0.0
    %1084 = vmatpush1.msra.mxu0 0.0
    %1085 = vmatprep.subr.mxu0 0.0
    %1086 = vmatpush1.msra.mxu0 0.0
    %1087 = vmatprep.subr.mxu0 0.0
    %1088 = vmatpush1.msra.mxu0 0.0
    %1089 = vmatprep.subr.mxu0 0.0
    %1090 = vmatpush1.msra.mxu0 0.0
    %1091 = vmatprep.subr.mxu0 0.0
    %1092 = vmatpush1.msra.mxu0 0.0
    %1093 = vmatprep.subr.mxu0 0.0
    %1094 = vmatpush1.msra.mxu0 0.0
    %1095 = vmatprep.subr.mxu0 0.0
    %1096 = vmatpush1.msra.mxu0 0.0
    %1097 = vmatprep.subr.mxu0 0.0
    %1098 = vmatpush1.msra.mxu0 0.0
    %1099 = vmatprep.subr.mxu0 0.0
    %1100 = vmatpush1.msra.mxu0 0.0
    %1101 = vmatprep.subr.mxu0 0.0
    %1102 = vmatpush1.msra.mxu0 0.0
    %1103 = vmatprep.subr.mxu0 0.0
    %1104 = vmatpush1.msra.mxu0 0.0
    %1105 = vmatprep.subr.mxu0 0.0
    %1106 = vmatpush1.msra.mxu0 0.0
    %1107 = vmatprep.subr.mxu0 0.0
    %1108 = vmatpush1.msra.mxu0 0.0
    %1109 = vmatprep.subr.mxu0 0.0
    %1110 = vmatpush1.msra.mxu0 0.0
    %1111 = vmatprep.subr.mxu0 0.0
    %1112 = vmatpush1.msra.mxu0 0.0
    %1113 = vmatprep.subr.mxu0 0.0
    %1114 = vmatpush1.msra.mxu0 0.0
    %1115 = vmatprep.mubr.f32.mxu0 0.0
    %1116 = vmatmul.mubr.f32.gmra.mrb[0].mxu0 %v1049
    %v1117 = vpop.f32.mrb[0].mxu0
    %v1118 = vadd.f32 0.0, %v1117
    %v1119 = vpop.f32.mrb[0].mxu0
    %1120 = vdwg.mxu0
    %v1122 = vrot.slane %v1118, 4
    %1123 = vrot.lane.b32.xlu0 %v1122, 96
    %v1124 = vpop.permute.xlu0 %1123
    %v1126 = vadd.f32 %v196, %v1124
    %v1127 = vadd.f32 %v198, %v1124
    %v1128 = vrot.slane %v99, 4
    %1129 = vrot.lane.b32.xlu0 %v1128, 96
    %v1130 = vpop.permute.xlu0 %1129
    %v1132 = vadd.f32 %v1126, %v1130
    %v1133 = vadd.f32 %v1127, %v1130
    %v1134 = vxor.u32 %v1132, 2147483648
    %v1135 = vxor.u32 %v1133, 2147483648
    %v1136 = vmul.f32 %v1134, 1.442695
    %v1137 = vpow.pop %v1136
    %v1138 = vmul.f32 %v1135, 1.442695
    %v1139 = vpow.pop %v1138
    %v1140 = vadd.f32 %v1137, 1.0
    %v1141 = vadd.f32 %v1139, 1.0
    %v1142 = vrcp.pop %v1140
    %v1143 = vmul.f32 1.0, %v1142
    %v1144 = vrcp.pop %v1141
    %v1145 = vmul.f32 1.0, %v1144
    %v1146 = vadd.f32 %v198, %v1130
    %v1147 = vadd.f32 %v1118, %v404
    %v1149 = vrot.slane %v1147, 4
    %1150 = vrot.lane.b32.xlu0 %v1149, 32
    %v1151 = vpop.permute.xlu0 %1150
    %v1153 = vmul.f32 %v1143, %v1151
    %1155 = vrot.lane.b32.xlu0 %v1153, 64
    %v1156 = vpop.permute.xlu0 %1155
    %v1158 = vadd.f32 %v1146, %v1156
    %v1159 = vtanh.pop %v1158
    %v1160 = vsub.f32 1.0, %v1145
    %1162 = vrot.lane.b32.xlu0 %v1159, 96
    %v1163 = vpop.permute.xlu0 %1162
    %v1165 = vmul.f32 %v1160, %v1163
    %v1166 = vrot.slane %v921, 1
    %v1168 = vmul.f32 %v1145, %v1166
    %v1169 = vadd.f32 %v1165, %v1168
    %vm1170 = vcmp.eq.s32.totalorder %v124, 3
    %v1171 = vlaneseq
    %v1172 = vshrl.u32 %v1171, 7
    %v1173 = vsub.s32 3, %v1172
    %v1174 = vrot.slane %v1046, %v1173
    %v1175 = vsel %vm1170, %v1174, %v927
    %vm1176 = vcmp.eq.s32.totalorder %v124, 4
    %v1177 = vlaneseq
    %v1178 = vshrl.u32 %v1177, 7
    %v1179 = vsub.s32 4, %v1178
    %v1180 = vrot.slane %v1169, %v1179
    %v1181 = vsel %vm1176, %v1180, %v933
    %v1183 = vrot.slane %v1046, 3
    %1184 = vrot.lane.b32.xlu0 %v1183, 96
    %v1185 = vpop.permute.xlu0 %1184
    %v1186 = vsel %vm125, %v1185, 0
    %1188 = vmatprep.subr.mxu0 0.0
    %1189 = vmatpush1.msra.mxu0 %v62
    %1190 = vmatprep.subr.mxu0 0.0
    %1191 = vmatpush1.msra.mxu0 %v63
    %1192 = vmatprep.subr.mxu0 0.0
    %1193 = vmatpush1.msra.mxu0 %v64
    %1194 = vmatprep.subr.mxu0 0.0
    %1195 = vmatpush1.msra.mxu0 %v65
    %1196 = vmatprep.subr.mxu0 0.0
    %1197 = vmatpush1.msra.mxu0 0.0
    %1198 = vmatprep.subr.mxu0 0.0
    %1199 = vmatpush1.msra.mxu0 0.0
    %1200 = vmatprep.subr.mxu0 0.0
    %1201 = vmatpush1.msra.mxu0 0.0
    %1202 = vmatprep.subr.mxu0 0.0
    %1203 = vmatpush1.msra.mxu0 0.0
    %1204 = vmatprep.subr.mxu0 0.0
    %1205 = vmatpush1.msra.mxu0 0.0
    %1206 = vmatprep.subr.mxu0 0.0
    %1207 = vmatpush1.msra.mxu0 0.0
    %1208 = vmatprep.subr.mxu0 0.0
    %1209 = vmatpush1.msra.mxu0 0.0
    %1210 = vmatprep.subr.mxu0 0.0
    %1211 = vmatpush1.msra.mxu0 0.0
    %1212 = vmatprep.subr.mxu0 0.0
    %1213 = vmatpush1.msra.mxu0 0.0
    %1214 = vmatprep.subr.mxu0 0.0
    %1215 = vmatpush1.msra.mxu0 0.0
    %1216 = vmatprep.subr.mxu0 0.0
    %1217 = vmatpush1.msra.mxu0 0.0
    %1218 = vmatprep.subr.mxu0 0.0
    %1219 = vmatpush1.msra.mxu0 0.0
    %1220 = vmatprep.subr.mxu0 0.0
    %1221 = vmatpush1.msra.mxu0 0.0
    %1222 = vmatprep.subr.mxu0 0.0
    %1223 = vmatpush1.msra.mxu0 0.0
    %1224 = vmatprep.subr.mxu0 0.0
    %1225 = vmatpush1.msra.mxu0 0.0
    %1226 = vmatprep.subr.mxu0 0.0
    %1227 = vmatpush1.msra.mxu0 0.0
    %1228 = vmatprep.subr.mxu0 0.0
    %1229 = vmatpush1.msra.mxu0 0.0
    %1230 = vmatprep.subr.mxu0 0.0
    %1231 = vmatpush1.msra.mxu0 0.0
    %1232 = vmatprep.subr.mxu0 0.0
    %1233 = vmatpush1.msra.mxu0 0.0
    %1234 = vmatprep.subr.mxu0 0.0
    %1235 = vmatpush1.msra.mxu0 0.0
    %1236 = vmatprep.subr.mxu0 0.0
    %1237 = vmatpush1.msra.mxu0 0.0
    %1238 = vmatprep.subr.mxu0 0.0
    %1239 = vmatpush1.msra.mxu0 0.0
    %1240 = vmatprep.subr.mxu0 0.0
    %1241 = vmatpush1.msra.mxu0 0.0
    %1242 = vmatprep.subr.mxu0 0.0
    %1243 = vmatpush1.msra.mxu0 0.0
    %1244 = vmatprep.subr.mxu0 0.0
    %1245 = vmatpush1.msra.mxu0 0.0
    %1246 = vmatprep.subr.mxu0 0.0
    %1247 = vmatpush1.msra.mxu0 0.0
    %1248 = vmatprep.subr.mxu0 0.0
    %1249 = vmatpush1.msra.mxu0 0.0
    %1250 = vmatprep.subr.mxu0 0.0
    %1251 = vmatpush1.msra.mxu0 0.0
    %1252 = vmatprep.mubr.f32.mxu0 0.0
    %1253 = vmatmul.mubr.f32.gmra.mrb[0].mxu0 %v1186
    %v1254 = vpop.f32.mrb[0].mxu0
    %v1255 = vadd.f32 0.0, %v1254
    %v1256 = vpop.f32.mrb[0].mxu0
    %1257 = vdwg.mxu0
    %v1259 = vrot.slane %v1255, 4
    %v1261 = vadd.f32 %v196, %v1259
    %v1262 = vrot.slane %v98, 4
    %v1264 = vadd.f32 %v1261, %v1262
    %v1265 = vxor.u32 %v1264, 2147483648
    %v1266 = vmul.f32 %v1265, 1.442695
    %v1267 = vpow.pop %v1266
    %v1268 = vadd.f32 %v1267, 1.0
    %v1269 = vrcp.pop %v1268
    %v1270 = vmul.f32 1.0, %v1269
    %v1271 = vadd.f32 %v196, %v1262
    %v1272 = vadd.f32 %v1255, %v284
    %v1274 = vrot.slane %v1272, 4
    %1275 = vrot.lane.b32.xlu0 %v1274, 64
    %v1276 = vpop.permute.xlu0 %1275
    %v1278 = vmul.f32 %v1270, %v1276
    %1280 = vrot.lane.b32.xlu0 %v1278, 64
    %v1281 = vpop.permute.xlu0 %1280
    %v1283 = vadd.f32 %v1271, %v1281
    %v1284 = vtanh.pop %v1283
    %v1285 = vsub.f32 1.0, %v1270
    %1287 = vrot.lane.b32.xlu0 %v1284, 96
    %v1288 = vpop.permute.xlu0 %1287
    %v1290 = vmul.f32 %v1285, %v1288
    %v1291 = vrot.slane %v1046, 7
    %v1293 = vmul.f32 %v1270, %v1291
    %v1294 = vadd.f32 %v1290, %v1293
    %v1296 = vrot.slane %v1169, 4
    %v1297 = vsel %vm125, %v1296, 0
    %1299 = vmatprep.subr.mxu0 0.0
    %1300 = vmatpush1.msra.mxu0 %v66
    %1301 = vmatprep.subr.mxu0 0.0
    %1302 = vmatpush1.msra.mxu0 %v67
    %1303 = vmatprep.subr.mxu0 0.0
    %1304 = vmatpush1.msra.mxu0 %v68
    %1305 = vmatprep.subr.mxu0 0.0
    %1306 = vmatpush1.msra.mxu0 %v69
    %1307 = vmatprep.subr.mxu0 0.0
    %1308 = vmatpush1.msra.mxu0 0.0
    %1309 = vmatprep.subr.mxu0 0.0
    %1310 = vmatpush1.msra.mxu0 0.0
    %1311 = vmatprep.subr.mxu0 0.0
    %1312 = vmatpush1.msra.mxu0 0.0
    %1313 = vmatprep.subr.mxu0 0.0
    %1314 = vmatpush1.msra.mxu0 0.0
    %1315 = vmatprep.subr.mxu0 0.0
    %1316 = vmatpush1.msra.mxu0 0.0
    %1317 = vmatprep.subr.mxu0 0.0
    %1318 = vmatpush1.msra.mxu0 0.0
    %1319 = vmatprep.subr.mxu0 0.0
    %1320 = vmatpush1.msra.mxu0 0.0
    %1321 = vmatprep.subr.mxu0 0.0
    %1322 = vmatpush1.msra.mxu0 0.0
    %1323 = vmatprep.subr.mxu0 0.0
    %1324 = vmatpush1.msra.mxu0 0.0
    %1325 = vmatprep.subr.mxu0 0.0
    %1326 = vmatpush1.msra.mxu0 0.0
    %1327 = vmatprep.subr.mxu0 0.0
    %1328 = vmatpush1.msra.mxu0 0.0
    %1329 = vmatprep.subr.mxu0 0.0
    %1330 = vmatpush1.msra.mxu0 0.0
    %1331 = vmatprep.subr.mxu0 0.0
    %1332 = vmatpush1.msra.mxu0 0.0
    %1333 = vmatprep.subr.mxu0 0.0
    %1334 = vmatpush1.msra.mxu0 0.0
    %1335 = vmatprep.subr.mxu0 0.0
    %1336 = vmatpush1.msra.mxu0 0.0
    %1337 = vmatprep.subr.mxu0 0.0
    %1338 = vmatpush1.msra.mxu0 0.0
    %1339 = vmatprep.subr.mxu0 0.0
    %1340 = vmatpush1.msra.mxu0 0.0
    %1341 = vmatprep.subr.mxu0 0.0
    %1342 = vmatpush1.msra.mxu0 0.0
    %1343 = vmatprep.subr.mxu0 0.0
    %1344 = vmatpush1.msra.mxu0 0.0
    %1345 = vmatprep.subr.mxu0 0.0
    %1346 = vmatpush1.msra.mxu0 0.0
    %1347 = vmatprep.subr.mxu0 0.0
    %1348 = vmatpush1.msra.mxu0 0.0
    %1349 = vmatprep.subr.mxu0 0.0
    %1350 = vmatpush1.msra.mxu0 0.0
    %1351 = vmatprep.subr.mxu0 0.0
    %1352 = vmatpush1.msra.mxu0 0.0
    %1353 = vmatprep.subr.mxu0 0.0
    %1354 = vmatpush1.msra.mxu0 0.0
    %1355 = vmatprep.subr.mxu0 0.0
    %1356 = vmatpush1.msra.mxu0 0.0
    %1357 = vmatprep.subr.mxu0 0.0
    %1358 = vmatpush1.msra.mxu0 0.0
    %1359 = vmatprep.subr.mxu0 0.0
    %1360 = vmatpush1.msra.mxu0 0.0
    %1361 = vmatprep.subr.mxu0 0.0
    %1362 = vmatpush1.msra.mxu0 0.0
    %1363 = vmatprep.mubr.f32.mxu0 0.0
    %1364 = vmatmul.mubr.f32.gmra.mrb[0].mxu0 %v1297
    %v1365 = vpop.f32.mrb[0].mxu0
    %v1366 = vadd.f32 0.0, %v1365
    %v1367 = vpop.f32.mrb[0].mxu0
    %1368 = vdwg.mxu0
    %v1370 = vrot.slane %v1366, 5
    %1371 = vrot.lane.b32.xlu0 %v1370, 96
    %v1372 = vpop.permute.xlu0 %1371
    %v1374 = vadd.f32 %v196, %v1372
    %v1375 = vadd.f32 %v198, %v1372
    %v1376 = vrot.slane %v99, 5
    %1377 = vrot.lane.b32.xlu0 %v1376, 96
    %v1378 = vpop.permute.xlu0 %1377
    %v1380 = vadd.f32 %v1374, %v1378
    %v1381 = vadd.f32 %v1375, %v1378
    %v1382 = vxor.u32 %v1380, 2147483648
    %v1383 = vxor.u32 %v1381, 2147483648
    %v1384 = vmul.f32 %v1382, 1.442695
    %v1385 = vpow.pop %v1384
    %v1386 = vmul.f32 %v1383, 1.442695
    %v1387 = vpow.pop %v1386
    %v1388 = vadd.f32 %v1385, 1.0
    %v1389 = vadd.f32 %v1387, 1.0
    %v1390 = vrcp.pop %v1388
    %v1391 = vmul.f32 1.0, %v1390
    %v1392 = vrcp.pop %v1389
    %v1393 = vmul.f32 1.0, %v1392
    %v1394 = vadd.f32 %v198, %v1378
    %v1395 = vadd.f32 %v1366, %v404
    %v1397 = vrot.slane %v1395, 5
    %1398 = vrot.lane.b32.xlu0 %v1397, 32
    %v1399 = vpop.permute.xlu0 %1398
    %v1401 = vmul.f32 %v1391, %v1399
    %1403 = vrot.lane.b32.xlu0 %v1401, 64
    %v1404 = vpop.permute.xlu0 %1403
    %v1406 = vadd.f32 %v1394, %v1404
    %v1407 = vtanh.pop %v1406
    %v1408 = vsub.f32 1.0, %v1393
    %1410 = vrot.lane.b32.xlu0 %v1407, 96
    %v1411 = vpop.permute.xlu0 %1410
    %v1413 = vmul.f32 %v1408, %v1411
    %v1414 = vrot.slane %v1169, 1
    %v1416 = vmul.f32 %v1393, %v1414
    %v1417 = vadd.f32 %v1413, %v1416
    %v1418 = vlaneseq
    %v1419 = vshrl.u32 %v1418, 7
    %v1420 = vsub.s32 4, %v1419
    %v1421 = vrot.slane %v1294, %v1420
    %v1422 = vsel %vm1176, %v1421, %v1175
    %v1423 = vlaneseq
    %v1424 = vshrl.u32 %v1423, 7
    %v1425 = vsub.s32 3, %v1424
    %v1426 = vrot.slane %v1417, %v1425
    %v1427 = vsel %vm1170, %v1426, %v1181
    %v1429 = vrot.slane %v1294, 4
    %1430 = vrot.lane.b32.xlu0 %v1429, 96
    %v1431 = vpop.permute.xlu0 %1430
    %v1432 = vsel %vm125, %v1431, 0
    %1434 = vmatprep.subr.mxu0 0.0
    %1435 = vmatpush1.msra.mxu0 %v62
    %1436 = vmatprep.subr.mxu0 0.0
    %1437 = vmatpush1.msra.mxu0 %v63
    %1438 = vmatprep.subr.mxu0 0.0
    %1439 = vmatpush1.msra.mxu0 %v64
    %1440 = vmatprep.subr.mxu0 0.0
    %1441 = vmatpush1.msra.mxu0 %v65
    %1442 = vmatprep.subr.mxu0 0.0
    %1443 = vmatpush1.msra.mxu0 0.0
    %1444 = vmatprep.subr.mxu0 0.0
    %1445 = vmatpush1.msra.mxu0 0.0
    %1446 = vmatprep.subr.mxu0 0.0
    %1447 = vmatpush1.msra.mxu0 0.0
    %1448 = vmatprep.subr.mxu0 0.0
    %1449 = vmatpush1.msra.mxu0 0.0
    %1450 = vmatprep.subr.mxu0 0.0
    %1451 = vmatpush1.msra.mxu0 0.0
    %1452 = vmatprep.subr.mxu0 0.0
    %1453 = vmatpush1.msra.mxu0 0.0
    %1454 = vmatprep.subr.mxu0 0.0
    %1455 = vmatpush1.msra.mxu0 0.0
    %1456 = vmatprep.subr.mxu0 0.0
    %1457 = vmatpush1.msra.mxu0 0.0
    %1458 = vmatprep.subr.mxu0 0.0
    %1459 = vmatpush1.msra.mxu0 0.0
    %1460 = vmatprep.subr.mxu0 0.0
    %1461 = vmatpush1.msra.mxu0 0.0
    %1462 = vmatprep.subr.mxu0 0.0
    %1463 = vmatpush1.msra.mxu0 0.0
    %1464 = vmatprep.subr.mxu0 0.0
    %1465 = vmatpush1.msra.mxu0 0.0
    %1466 = vmatprep.subr.mxu0 0.0
    %1467 = vmatpush1.msra.mxu0 0.0
    %1468 = vmatprep.subr.mxu0 0.0
    %1469 = vmatpush1.msra.mxu0 0.0
    %1470 = vmatprep.subr.mxu0 0.0
    %1471 = vmatpush1.msra.mxu0 0.0
    %1472 = vmatprep.subr.mxu0 0.0
    %1473 = vmatpush1.msra.mxu0 0.0
    %1474 = vmatprep.subr.mxu0 0.0
    %1475 = vmatpush1.msra.mxu0 0.0
    %1476 = vmatprep.subr.mxu0 0.0
    %1477 = vmatpush1.msra.mxu0 0.0
    %1478 = vmatprep.subr.mxu0 0.0
    %1479 = vmatpush1.msra.mxu0 0.0
    %1480 = vmatprep.subr.mxu0 0.0
    %1481 = vmatpush1.msra.mxu0 0.0
    %1482 = vmatprep.subr.mxu0 0.0
    %1483 = vmatpush1.msra.mxu0 0.0
    %1484 = vmatprep.subr.mxu0 0.0
    %1485 = vmatpush1.msra.mxu0 0.0
    %1486 = vmatprep.subr.mxu0 0.0
    %1487 = vmatpush1.msra.mxu0 0.0
    %1488 = vmatprep.subr.mxu0 0.0
    %1489 = vmatpush1.msra.mxu0 0.0
    %1490 = vmatprep.subr.mxu0 0.0
    %1491 = vmatpush1.msra.mxu0 0.0
    %1492 = vmatprep.subr.mxu0 0.0
    %1493 = vmatpush1.msra.mxu0 0.0
    %1494 = vmatprep.subr.mxu0 0.0
    %1495 = vmatpush1.msra.mxu0 0.0
    %1496 = vmatprep.subr.mxu0 0.0
    %1497 = vmatpush1.msra.mxu0 0.0
    %1498 = vmatprep.mubr.f32.mxu0 0.0
    %1499 = vmatmul.mubr.f32.gmra.mrb[0].mxu0 %v1432
    %v1500 = vpop.f32.mrb[0].mxu0
    %v1501 = vadd.f32 0.0, %v1500
    %v1502 = vpop.f32.mrb[0].mxu0
    %1503 = vdwg.mxu0
    %v1505 = vrot.slane %v1501, 3
    %v1507 = vadd.f32 %v196, %v1505
    %v1508 = vrot.slane %v98, 3
    %v1510 = vadd.f32 %v1507, %v1508
    %v1511 = vxor.u32 %v1510, 2147483648
    %v1512 = vmul.f32 %v1511, 1.442695
    %v1513 = vpow.pop %v1512
    %v1514 = vadd.f32 %v1513, 1.0
    %v1515 = vrcp.pop %v1514
    %v1516 = vmul.f32 1.0, %v1515
    %v1517 = vadd.f32 %v196, %v1508
    %v1518 = vadd.f32 %v1501, %v284
    %v1520 = vrot.slane %v1518, 3
    %1521 = vrot.lane.b32.xlu0 %v1520, 64
    %v1522 = vpop.permute.xlu0 %1521
    %v1524 = vmul.f32 %v1516, %v1522
    %1526 = vrot.lane.b32.xlu0 %v1524, 64
    %v1527 = vpop.permute.xlu0 %1526
    %v1529 = vadd.f32 %v1517, %v1527
    %v1530 = vtanh.pop %v1529
    %v1531 = vsub.f32 1.0, %v1516
    %1533 = vrot.lane.b32.xlu0 %v1530, 96
    %v1534 = vpop.permute.xlu0 %1533
    %v1536 = vmul.f32 %v1531, %v1534
    %v1537 = vrot.slane %v1294, 7
    %v1539 = vmul.f32 %v1516, %v1537
    %v1540 = vadd.f32 %v1536, %v1539
    %v1542 = vrot.slane %v1417, 3
    %v1543 = vsel %vm125, %v1542, 0
    %1545 = vmatprep.subr.mxu0 0.0
    %1546 = vmatpush1.msra.mxu0 %v66
    %1547 = vmatprep.subr.mxu0 0.0
    %1548 = vmatpush1.msra.mxu0 %v67
    %1549 = vmatprep.subr.mxu0 0.0
    %1550 = vmatpush1.msra.mxu0 %v68
    %1551 = vmatprep.subr.mxu0 0.0
    %1552 = vmatpush1.msra.mxu0 %v69
    %1553 = vmatprep.subr.mxu0 0.0
    %1554 = vmatpush1.msra.mxu0 0.0
    %1555 = vmatprep.subr.mxu0 0.0
    %1556 = vmatpush1.msra.mxu0 0.0
    %1557 = vmatprep.subr.mxu0 0.0
    %1558 = vmatpush1.msra.mxu0 0.0
    %1559 = vmatprep.subr.mxu0 0.0
    %1560 = vmatpush1.msra.mxu0 0.0
    %1561 = vmatprep.subr.mxu0 0.0
    %1562 = vmatpush1.msra.mxu0 0.0
    %1563 = vmatprep.subr.mxu0 0.0
    %1564 = vmatpush1.msra.mxu0 0.0
    %1565 = vmatprep.subr.mxu0 0.0
    %1566 = vmatpush1.msra.mxu0 0.0
    %1567 = vmatprep.subr.mxu0 0.0
    %1568 = vmatpush1.msra.mxu0 0.0
    %1569 = vmatprep.subr.mxu0 0.0
    %1570 = vmatpush1.msra.mxu0 0.0
    %1571 = vmatprep.subr.mxu0 0.0
    %1572 = vmatpush1.msra.mxu0 0.0
    %1573 = vmatprep.subr.mxu0 0.0
    %1574 = vmatpush1.msra.mxu0 0.0
    %1575 = vmatprep.subr.mxu0 0.0
    %1576 = vmatpush1.msra.mxu0 0.0
    %1577 = vmatprep.subr.mxu0 0.0
    %1578 = vmatpush1.msra.mxu0 0.0
    %1579 = vmatprep.subr.mxu0 0.0
    %1580 = vmatpush1.msra.mxu0 0.0
    %1581 = vmatprep.subr.mxu0 0.0
    %1582 = vmatpush1.msra.mxu0 0.0
    %1583 = vmatprep.subr.mxu0 0.0
    %1584 = vmatpush1.msra.mxu0 0.0
    %1585 = vmatprep.subr.mxu0 0.0
    %1586 = vmatpush1.msra.mxu0 0.0
    %1587 = vmatprep.subr.mxu0 0.0
    %1588 = vmatpush1.msra.mxu0 0.0
    %1589 = vmatprep.subr.mxu0 0.0
    %1590 = vmatpush1.msra.mxu0 0.0
    %1591 = vmatprep.subr.mxu0 0.0
    %1592 = vmatpush1.msra.mxu0 0.0
    %1593 = vmatprep.subr.mxu0 0.0
    %1594 = vmatpush1.msra.mxu0 0.0
    %1595 = vmatprep.subr.mxu0 0.0
    %1596 = vmatpush1.msra.mxu0 0.0
    %1597 = vmatprep.subr.mxu0 0.0
    %1598 = vmatpush1.msra.mxu0 0.0
    %1599 = vmatprep.subr.mxu0 0.0
    %1600 = vmatpush1.msra.mxu0 0.0
    %1601 = vmatprep.subr.mxu0 0.0
    %1602 = vmatpush1.msra.mxu0 0.0
    %1603 = vmatprep.subr.mxu0 0.0
    %1604 = vmatpush1.msra.mxu0 0.0
    %1605 = vmatprep.subr.mxu0 0.0
    %1606 = vmatpush1.msra.mxu0 0.0
    %1607 = vmatprep.subr.mxu0 0.0
    %1608 = vmatpush1.msra.mxu0 0.0
    %1609 = vmatprep.mubr.f32.mxu0 0.0
    %1610 = vmatmul.mubr.f32.gmra.mrb[0].mxu0 %v1543
    %v1611 = vpop.f32.mrb[0].mxu0
    %v1612 = vadd.f32 0.0, %v1611
    %v1613 = vpop.f32.mrb[0].mxu0
    %1614 = vdwg.mxu0
    %v1616 = vrot.slane %v1612, 6
    %1617 = vrot.lane.b32.xlu0 %v1616, 96
    %v1618 = vpop.permute.xlu0 %1617
    %v1620 = vadd.f32 %v196, %v1618
    %v1621 = vadd.f32 %v198, %v1618
    %v1622 = vrot.slane %v99, 6
    %1623 = vrot.lane.b32.xlu0 %v1622, 96
    %v1624 = vpop.permute.xlu0 %1623
    %v1626 = vadd.f32 %v1620, %v1624
    %v1627 = vadd.f32 %v1621, %v1624
    %v1628 = vxor.u32 %v1626, 2147483648
    %v1629 = vxor.u32 %v1627, 2147483648
    %v1630 = vmul.f32 %v1628, 1.442695
    %v1631 = vpow.pop %v1630
    %v1632 = vmul.f32 %v1629, 1.442695
    %v1633 = vpow.pop %v1632
    %v1634 = vadd.f32 %v1631, 1.0
    %v1635 = vadd.f32 %v1633, 1.0
    %v1636 = vrcp.pop %v1634
    %v1637 = vmul.f32 1.0, %v1636
    %v1638 = vrcp.pop %v1635
    %v1639 = vmul.f32 1.0, %v1638
    %v1640 = vadd.f32 %v198, %v1624
    %v1641 = vadd.f32 %v1612, %v404
    %v1643 = vrot.slane %v1641, 6
    %1644 = vrot.lane.b32.xlu0 %v1643, 32
    %v1645 = vpop.permute.xlu0 %1644
    %v1647 = vmul.f32 %v1637, %v1645
    %1649 = vrot.lane.b32.xlu0 %v1647, 64
    %v1650 = vpop.permute.xlu0 %1649
    %v1652 = vadd.f32 %v1640, %v1650
    %v1653 = vtanh.pop %v1652
    %v1654 = vsub.f32 1.0, %v1639
    %1656 = vrot.lane.b32.xlu0 %v1653, 96
    %v1657 = vpop.permute.xlu0 %1656
    %v1659 = vmul.f32 %v1654, %v1657
    %v1660 = vrot.slane %v1417, 1
    %v1662 = vmul.f32 %v1639, %v1660
    %v1663 = vadd.f32 %v1659, %v1662
    %v1664 = vlaneseq
    %v1665 = vshrl.u32 %v1664, 7
    %v1666 = vsub.s32 5, %v1665
    %v1667 = vrot.slane %v1540, %v1666
    %v1668 = vsel %vm928, %v1667, %v1422
    %v1669 = vlaneseq
    %v1670 = vshrl.u32 %v1669, 7
    %v1671 = vsub.s32 2, %v1670
    %v1672 = vrot.slane %v1663, %v1671
    %v1673 = vsel %vm922, %v1672, %v1427
    %v1675 = vrot.slane %v1540, 5
    %1676 = vrot.lane.b32.xlu0 %v1675, 96
    %v1677 = vpop.permute.xlu0 %1676
    %v1678 = vsel %vm125, %v1677, 0
    %1680 = vmatprep.subr.mxu0 0.0
    %1681 = vmatpush1.msra.mxu0 %v62
    %1682 = vmatprep.subr.mxu0 0.0
    %1683 = vmatpush1.msra.mxu0 %v63
    %1684 = vmatprep.subr.mxu0 0.0
    %1685 = vmatpush1.msra.mxu0 %v64
    %1686 = vmatprep.subr.mxu0 0.0
    %1687 = vmatpush1.msra.mxu0 %v65
    %1688 = vmatprep.subr.mxu0 0.0
    %1689 = vmatpush1.msra.mxu0 0.0
    %1690 = vmatprep.subr.mxu0 0.0
    %1691 = vmatpush1.msra.mxu0 0.0
    %1692 = vmatprep.subr.mxu0 0.0
    %1693 = vmatpush1.msra.mxu0 0.0
    %1694 = vmatprep.subr.mxu0 0.0
    %1695 = vmatpush1.msra.mxu0 0.0
    %1696 = vmatprep.subr.mxu0 0.0
    %1697 = vmatpush1.msra.mxu0 0.0
    %1698 = vmatprep.subr.mxu0 0.0
    %1699 = vmatpush1.msra.mxu0 0.0
    %1700 = vmatprep.subr.mxu0 0.0
    %1701 = vmatpush1.msra.mxu0 0.0
    %1702 = vmatprep.subr.mxu0 0.0
    %1703 = vmatpush1.msra.mxu0 0.0
    %1704 = vmatprep.subr.mxu0 0.0
    %1705 = vmatpush1.msra.mxu0 0.0
    %1706 = vmatprep.subr.mxu0 0.0
    %1707 = vmatpush1.msra.mxu0 0.0
    %1708 = vmatprep.subr.mxu0 0.0
    %1709 = vmatpush1.msra.mxu0 0.0
    %1710 = vmatprep.subr.mxu0 0.0
    %1711 = vmatpush1.msra.mxu0 0.0
    %1712 = vmatprep.subr.mxu0 0.0
    %1713 = vmatpush1.msra.mxu0 0.0
    %1714 = vmatprep.subr.mxu0 0.0
    %1715 = vmatpush1.msra.mxu0 0.0
    %1716 = vmatprep.subr.mxu0 0.0
    %1717 = vmatpush1.msra.mxu0 0.0
    %1718 = vmatprep.subr.mxu0 0.0
    %1719 = vmatpush1.msra.mxu0 0.0
    %1720 = vmatprep.subr.mxu0 0.0
    %1721 = vmatpush1.msra.mxu0 0.0
    %1722 = vmatprep.subr.mxu0 0.0
    %1723 = vmatpush1.msra.mxu0 0.0
    %1724 = vmatprep.subr.mxu0 0.0
    %1725 = vmatpush1.msra.mxu0 0.0
    %1726 = vmatprep.subr.mxu0 0.0
    %1727 = vmatpush1.msra.mxu0 0.0
    %1728 = vmatprep.subr.mxu0 0.0
    %1729 = vmatpush1.msra.mxu0 0.0
    %1730 = vmatprep.subr.mxu0 0.0
    %1731 = vmatpush1.msra.mxu0 0.0
    %1732 = vmatprep.subr.mxu0 0.0
    %1733 = vmatpush1.msra.mxu0 0.0
    %1734 = vmatprep.subr.mxu0 0.0
    %1735 = vmatpush1.msra.mxu0 0.0
    %1736 = vmatprep.subr.mxu0 0.0
    %1737 = vmatpush1.msra.mxu0 0.0
    %1738 = vmatprep.subr.mxu0 0.0
    %1739 = vmatpush1.msra.mxu0 0.0
    %1740 = vmatprep.subr.mxu0 0.0
    %1741 = vmatpush1.msra.mxu0 0.0
    %1742 = vmatprep.subr.mxu0 0.0
    %1743 = vmatpush1.msra.mxu0 0.0
    %1744 = vmatprep.mubr.f32.mxu0 0.0
    %1745 = vmatmul.mubr.f32.gmra.mrb[0].mxu0 %v1678
    %v1746 = vpop.f32.mrb[0].mxu0
    %v1747 = vadd.f32 0.0, %v1746
    %v1748 = vpop.f32.mrb[0].mxu0
    %1749 = vdwg.mxu0
    %v1751 = vrot.slane %v1747, 2
    %v1753 = vadd.f32 %v196, %v1751
    %v1754 = vrot.slane %v98, 2
    %v1756 = vadd.f32 %v1753, %v1754
    %v1757 = vxor.u32 %v1756, 2147483648
    %v1758 = vmul.f32 %v1757, 1.442695
    %v1759 = vpow.pop %v1758
    %v1760 = vadd.f32 %v1759, 1.0
    %v1761 = vrcp.pop %v1760
    %v1762 = vmul.f32 1.0, %v1761
    %v1763 = vadd.f32 %v196, %v1754
    %v1764 = vadd.f32 %v1747, %v284
    %v1766 = vrot.slane %v1764, 2
    %1767 = vrot.lane.b32.xlu0 %v1766, 64
    %v1768 = vpop.permute.xlu0 %1767
    %v1770 = vmul.f32 %v1762, %v1768
    %1772 = vrot.lane.b32.xlu0 %v1770, 64
    %v1773 = vpop.permute.xlu0 %1772
    %v1775 = vadd.f32 %v1763, %v1773
    %v1776 = vtanh.pop %v1775
    %v1777 = vsub.f32 1.0, %v1762
    %1779 = vrot.lane.b32.xlu0 %v1776, 96
    %v1780 = vpop.permute.xlu0 %1779
    %v1782 = vmul.f32 %v1777, %v1780
    %v1783 = vrot.slane %v1540, 7
    %v1785 = vmul.f32 %v1762, %v1783
    %v1786 = vadd.f32 %v1782, %v1785
    %v1788 = vrot.slane %v1663, 2
    %v1789 = vsel %vm125, %v1788, 0
    %1791 = vmatprep.subr.mxu0 0.0
    %1792 = vmatpush1.msra.mxu0 %v66
    %1793 = vmatprep.subr.mxu0 0.0
    %1794 = vmatpush1.msra.mxu0 %v67
    %1795 = vmatprep.subr.mxu0 0.0
    %1796 = vmatpush1.msra.mxu0 %v68
    %1797 = vmatprep.subr.mxu0 0.0
    %1798 = vmatpush1.msra.mxu0 %v69
    %1799 = vmatprep.subr.mxu0 0.0
    %1800 = vmatpush1.msra.mxu0 0.0
    %1801 = vmatprep.subr.mxu0 0.0
    %1802 = vmatpush1.msra.mxu0 0.0
    %1803 = vmatprep.subr.mxu0 0.0
    %1804 = vmatpush1.msra.mxu0 0.0
    %1805 = vmatprep.subr.mxu0 0.0
    %1806 = vmatpush1.msra.mxu0 0.0
    %1807 = vmatprep.subr.mxu0 0.0
    %1808 = vmatpush1.msra.mxu0 0.0
    %1809 = vmatprep.subr.mxu0 0.0
    %1810 = vmatpush1.msra.mxu0 0.0
    %1811 = vmatprep.subr.mxu0 0.0
    %1812 = vmatpush1.msra.mxu0 0.0
    %1813 = vmatprep.subr.mxu0 0.0
    %1814 = vmatpush1.msra.mxu0 0.0
    %1815 = vmatprep.subr.mxu0 0.0
    %1816 = vmatpush1.msra.mxu0 0.0
    %1817 = vmatprep.subr.mxu0 0.0
    %1818 = vmatpush1.msra.mxu0 0.0
    %1819 = vmatprep.subr.mxu0 0.0
    %1820 = vmatpush1.msra.mxu0 0.0
    %1821 = vmatprep.subr.mxu0 0.0
    %1822 = vmatpush1.msra.mxu0 0.0
    %1823 = vmatprep.subr.mxu0 0.0
    %1824 = vmatpush1.msra.mxu0 0.0
    %1825 = vmatprep.subr.mxu0 0.0
    %1826 = vmatpush1.msra.mxu0 0.0
    %1827 = vmatprep.subr.mxu0 0.0
    %1828 = vmatpush1.msra.mxu0 0.0
    %1829 = vmatprep.subr.mxu0 0.0
    %1830 = vmatpush1.msra.mxu0 0.0
    %1831 = vmatprep.subr.mxu0 0.0
    %1832 = vmatpush1.msra.mxu0 0.0
    %1833 = vmatprep.subr.mxu0 0.0
    %1834 = vmatpush1.msra.mxu0 0.0
    %1835 = vmatprep.subr.mxu0 0.0
    %1836 = vmatpush1.msra.mxu0 0.0
    %1837 = vmatprep.subr.mxu0 0.0
    %1838 = vmatpush1.msra.mxu0 0.0
    %1839 = vmatprep.subr.mxu0 0.0
    %1840 = vmatpush1.msra.mxu0 0.0
    %1841 = vmatprep.subr.mxu0 0.0
    %1842 = vmatpush1.msra.mxu0 0.0
    %1843 = vmatprep.subr.mxu0 0.0
    %1844 = vmatpush1.msra.mxu0 0.0
    %1845 = vmatprep.subr.mxu0 0.0
    %1846 = vmatpush1.msra.mxu0 0.0
    %1847 = vmatprep.subr.mxu0 0.0
    %1848 = vmatpush1.msra.mxu0 0.0
    %1849 = vmatprep.subr.mxu0 0.0
    %1850 = vmatpush1.msra.mxu0 0.0
    %1851 = vmatprep.subr.mxu0 0.0
    %1852 = vmatpush1.msra.mxu0 0.0
    %1853 = vmatprep.subr.mxu0 0.0
    %1854 = vmatpush1.msra.mxu0 0.0
    %1855 = vmatprep.mubr.f32.mxu0 0.0
    %1856 = vmatmul.mubr.f32.gmra.mrb[0].mxu0 %v1789
    %v1857 = vpop.f32.mrb[0].mxu0
    %v1858 = vadd.f32 0.0, %v1857
    %v1859 = vpop.f32.mrb[0].mxu0
    %1860 = vdwg.mxu0
    %v1862 = vrot.slane %v1858, 7
    %1863 = vrot.lane.b32.xlu0 %v1862, 96
    %v1864 = vpop.permute.xlu0 %1863
    %v1866 = vadd.f32 %v196, %v1864
    %v1867 = vadd.f32 %v198, %v1864
    %v1868 = vrot.slane %v99, 7
    %1869 = vrot.lane.b32.xlu0 %v1868, 96
    %v1870 = vpop.permute.xlu0 %1869
    %v1872 = vadd.f32 %v1866, %v1870
    %v1873 = vadd.f32 %v1867, %v1870
    %v1874 = vxor.u32 %v1872, 2147483648
    %v1875 = vxor.u32 %v1873, 2147483648
    %v1876 = vmul.f32 %v1874, 1.442695
    %v1877 = vpow.pop %v1876
    %v1878 = vmul.f32 %v1875, 1.442695
    %v1879 = vpow.pop %v1878
    %v1880 = vadd.f32 %v1877, 1.0
    %v1881 = vadd.f32 %v1879, 1.0
    %v1882 = vrcp.pop %v1880
    %v1883 = vmul.f32 1.0, %v1882
    %v1884 = vrcp.pop %v1881
    %v1885 = vmul.f32 1.0, %v1884
    %v1886 = vadd.f32 %v198, %v1870
    %v1887 = vadd.f32 %v1858, %v404
    %v1889 = vrot.slane %v1887, 7
    %1890 = vrot.lane.b32.xlu0 %v1889, 32
    %v1891 = vpop.permute.xlu0 %1890
    %v1893 = vmul.f32 %v1883, %v1891
    %1895 = vrot.lane.b32.xlu0 %v1893, 64
    %v1896 = vpop.permute.xlu0 %1895
    %v1898 = vadd.f32 %v1886, %v1896
    %v1899 = vtanh.pop %v1898
    %v1900 = vsub.f32 1.0, %v1885
    %1902 = vrot.lane.b32.xlu0 %v1899, 96
    %v1903 = vpop.permute.xlu0 %1902
    %v1905 = vmul.f32 %v1900, %v1903
    %v1906 = vrot.slane %v1663, 1
    %v1908 = vmul.f32 %v1885, %v1906
    %v1909 = vadd.f32 %v1905, %v1908
    %v1910 = vlaneseq
    %v1911 = vshrl.u32 %v1910, 7
    %v1912 = vsub.s32 6, %v1911
    %v1913 = vrot.slane %v1786, %v1912
    %v1914 = vsel %vm680, %v1913, %v1668
    %v1915 = vlaneseq
    %v1916 = vshrl.u32 %v1915, 7
    %v1917 = vsub.s32 1, %v1916
    %v1918 = vrot.slane %v1909, %v1917
    %v1919 = vsel %vm674, %v1918, %v1673
    %v1921 = vrot.slane %v1786, 6
    %1922 = vrot.lane.b32.xlu0 %v1921, 96
    %v1923 = vpop.permute.xlu0 %1922
    %v1924 = vsel %vm125, %v1923, 0
    %1926 = vmatprep.subr.mxu0 0.0
    %1927 = vmatpush1.msra.mxu0 %v62
    %1928 = vmatprep.subr.mxu0 0.0
    %1929 = vmatpush1.msra.mxu0 %v63
    %1930 = vmatprep.subr.mxu0 0.0
    %1931 = vmatpush1.msra.mxu0 %v64
    %1932 = vmatprep.subr.mxu0 0.0
    %1933 = vmatpush1.msra.mxu0 %v65
    %1934 = vmatprep.subr.mxu0 0.0
    %1935 = vmatpush1.msra.mxu0 0.0
    %1936 = vmatprep.subr.mxu0 0.0
    %1937 = vmatpush1.msra.mxu0 0.0
    %1938 = vmatprep.subr.mxu0 0.0
    %1939 = vmatpush1.msra.mxu0 0.0
    %1940 = vmatprep.subr.mxu0 0.0
    %1941 = vmatpush1.msra.mxu0 0.0
    %1942 = vmatprep.subr.mxu0 0.0
    %1943 = vmatpush1.msra.mxu0 0.0
    %1944 = vmatprep.subr.mxu0 0.0
    %1945 = vmatpush1.msra.mxu0 0.0
    %1946 = vmatprep.subr.mxu0 0.0
    %1947 = vmatpush1.msra.mxu0 0.0
    %1948 = vmatprep.subr.mxu0 0.0
    %1949 = vmatpush1.msra.mxu0 0.0
    %1950 = vmatprep.subr.mxu0 0.0
    %1951 = vmatpush1.msra.mxu0 0.0
    %1952 = vmatprep.subr.mxu0 0.0
    %1953 = vmatpush1.msra.mxu0 0.0
    %1954 = vmatprep.subr.mxu0 0.0
    %1955 = vmatpush1.msra.mxu0 0.0
    %1956 = vmatprep.subr.mxu0 0.0
    %1957 = vmatpush1.msra.mxu0 0.0
    %1958 = vmatprep.subr.mxu0 0.0
    %1959 = vmatpush1.msra.mxu0 0.0
    %1960 = vmatprep.subr.mxu0 0.0
    %1961 = vmatpush1.msra.mxu0 0.0
    %1962 = vmatprep.subr.mxu0 0.0
    %1963 = vmatpush1.msra.mxu0 0.0
    %1964 = vmatprep.subr.mxu0 0.0
    %1965 = vmatpush1.msra.mxu0 0.0
    %1966 = vmatprep.subr.mxu0 0.0
    %1967 = vmatpush1.msra.mxu0 0.0
    %1968 = vmatprep.subr.mxu0 0.0
    %1969 = vmatpush1.msra.mxu0 0.0
    %1970 = vmatprep.subr.mxu0 0.0
    %1971 = vmatpush1.msra.mxu0 0.0
    %1972 = vmatprep.subr.mxu0 0.0
    %1973 = vmatpush1.msra.mxu0 0.0
    %1974 = vmatprep.subr.mxu0 0.0
    %1975 = vmatpush1.msra.mxu0 0.0
    %1976 = vmatprep.subr.mxu0 0.0
    %1977 = vmatpush1.msra.mxu0 0.0
    %1978 = vmatprep.subr.mxu0 0.0
    %1979 = vmatpush1.msra.mxu0 0.0
    %1980 = vmatprep.subr.mxu0 0.0
    %1981 = vmatpush1.msra.mxu0 0.0
    %1982 = vmatprep.subr.mxu0 0.0
    %1983 = vmatpush1.msra.mxu0 0.0
    %1984 = vmatprep.subr.mxu0 0.0
    %1985 = vmatpush1.msra.mxu0 0.0
    %1986 = vmatprep.subr.mxu0 0.0
    %1987 = vmatpush1.msra.mxu0 0.0
    %1988 = vmatprep.subr.mxu0 0.0
    %1989 = vmatpush1.msra.mxu0 0.0
    %1990 = vmatprep.mubr.f32.mxu0 0.0
    %1991 = vmatmul.mubr.f32.gmra.mrb[0].mxu0 %v1924
    %v1992 = vpop.f32.mrb[0].mxu0
    %v1993 = vadd.f32 0.0, %v1992
    %v1994 = vpop.f32.mrb[0].mxu0
    %1995 = vdwg.mxu0
    %v1997 = vrot.slane %v1993, 1
    %v1999 = vadd.f32 %v196, %v1997
    %v2000 = vrot.slane %v98, 1
    %v2002 = vadd.f32 %v1999, %v2000
    %v2003 = vxor.u32 %v2002, 2147483648
    %v2004 = vmul.f32 %v2003, 1.442695
    %v2005 = vpow.pop %v2004
    %v2006 = vadd.f32 %v2005, 1.0
    %v2007 = vrcp.pop %v2006
    %v2008 = vmul.f32 1.0, %v2007
    %v2009 = vadd.f32 %v196, %v2000
    %v2010 = vadd.f32 %v1993, %v284
    %v2012 = vrot.slane %v2010, 1
    %2013 = vrot.lane.b32.xlu0 %v2012, 64
    %v2014 = vpop.permute.xlu0 %2013
    %v2016 = vmul.f32 %v2008, %v2014
    %2018 = vrot.lane.b32.xlu0 %v2016, 64
    %v2019 = vpop.permute.xlu0 %2018
    %v2021 = vadd.f32 %v2009, %v2019
    %v2022 = vtanh.pop %v2021
    %v2023 = vsub.f32 1.0, %v2008
    %2025 = vrot.lane.b32.xlu0 %v2022, 96
    %v2026 = vpop.permute.xlu0 %2025
    %v2028 = vmul.f32 %v2023, %v2026
    %v2029 = vrot.slane %v1786, 7
    %v2031 = vmul.f32 %v2008, %v2029
    %v2032 = vadd.f32 %v2028, %v2031
    %v2034 = vrot.slane %v1909, 1
    %v2035 = vsel %vm125, %v2034, 0
    %2037 = vmatprep.subr.mxu0 0.0
    %2038 = vmatpush1.msra.mxu0 %v66
    %2039 = vmatprep.subr.mxu0 0.0
    %2040 = vmatpush1.msra.mxu0 %v67
    %2041 = vmatprep.subr.mxu0 0.0
    %2042 = vmatpush1.msra.mxu0 %v68
    %2043 = vmatprep.subr.mxu0 0.0
    %2044 = vmatpush1.msra.mxu0 %v69
    %2045 = vmatprep.subr.mxu0 0.0
    %2046 = vmatpush1.msra.mxu0 0.0
    %2047 = vmatprep.subr.mxu0 0.0
    %2048 = vmatpush1.msra.mxu0 0.0
    %2049 = vmatprep.subr.mxu0 0.0
    %2050 = vmatpush1.msra.mxu0 0.0
    %2051 = vmatprep.subr.mxu0 0.0
    %2052 = vmatpush1.msra.mxu0 0.0
    %2053 = vmatprep.subr.mxu0 0.0
    %2054 = vmatpush1.msra.mxu0 0.0
    %2055 = vmatprep.subr.mxu0 0.0
    %2056 = vmatpush1.msra.mxu0 0.0
    %2057 = vmatprep.subr.mxu0 0.0
    %2058 = vmatpush1.msra.mxu0 0.0
    %2059 = vmatprep.subr.mxu0 0.0
    %2060 = vmatpush1.msra.mxu0 0.0
    %2061 = vmatprep.subr.mxu0 0.0
    %2062 = vmatpush1.msra.mxu0 0.0
    %2063 = vmatprep.subr.mxu0 0.0
    %2064 = vmatpush1.msra.mxu0 0.0
    %2065 = vmatprep.subr.mxu0 0.0
    %2066 = vmatpush1.msra.mxu0 0.0
    %2067 = vmatprep.subr.mxu0 0.0
    %2068 = vmatpush1.msra.mxu0 0.0
    %2069 = vmatprep.subr.mxu0 0.0
    %2070 = vmatpush1.msra.mxu0 0.0
    %2071 = vmatprep.subr.mxu0 0.0
    %2072 = vmatpush1.msra.mxu0 0.0
    %2073 = vmatprep.subr.mxu0 0.0
    %2074 = vmatpush1.msra.mxu0 0.0
    %2075 = vmatprep.subr.mxu0 0.0
    %2076 = vmatpush1.msra.mxu0 0.0
    %2077 = vmatprep.subr.mxu0 0.0
    %2078 = vmatpush1.msra.mxu0 0.0
    %2079 = vmatprep.subr.mxu0 0.0
    %2080 = vmatpush1.msra.mxu0 0.0
    %2081 = vmatprep.subr.mxu0 0.0
    %2082 = vmatpush1.msra.mxu0 0.0
    %2083 = vmatprep.subr.mxu0 0.0
    %2084 = vmatpush1.msra.mxu0 0.0
    %2085 = vmatprep.subr.mxu0 0.0
    %2086 = vmatpush1.msra.mxu0 0.0
    %2087 = vmatprep.subr.mxu0 0.0
    %2088 = vmatpush1.msra.mxu0 0.0
    %2089 = vmatprep.subr.mxu0 0.0
    %2090 = vmatpush1.msra.mxu0 0.0
    %2091 = vmatprep.subr.mxu0 0.0
    %2092 = vmatpush1.msra.mxu0 0.0
    %2093 = vmatprep.subr.mxu0 0.0
    %2094 = vmatpush1.msra.mxu0 0.0
    %2095 = vmatprep.subr.mxu0 0.0
    %2096 = vmatpush1.msra.mxu0 0.0
    %2097 = vmatprep.subr.mxu0 0.0
    %2098 = vmatpush1.msra.mxu0 0.0
    %2099 = vmatprep.subr.mxu0 0.0
    %2100 = vmatpush1.msra.mxu0 0.0
    %2101 = vmatprep.mubr.f32.mxu0 0.0
    %2102 = vmatmul.mubr.f32.gmra.mrb[0].mxu0 %v2035
    %v2103 = vpop.f32.mrb[0].mxu0
    %v2104 = vadd.f32 0.0, %v2103
    %v2105 = vpop.f32.mrb[0].mxu0
    %2106 = vdwg.mxu0
    %2108 = vrot.lane.b32.xlu0 %v2104, 96
    %v2109 = vpop.permute.xlu0 %2108
    %v2111 = vadd.f32 %v196, %v2109
    %v2112 = vadd.f32 %v198, %v2109
    %v2113 = vadd.f32 %v2111, %v404
    %v2114 = vadd.f32 %v2112, %v404
    %v2115 = vxor.u32 %v2113, 2147483648
    %v2116 = vxor.u32 %v2114, 2147483648
    %v2117 = vmul.f32 %v2115, 1.442695
    %v2118 = vpow.pop %v2117
    %v2119 = vmul.f32 %v2116, 1.442695
    %v2120 = vpow.pop %v2119
    %v2121 = vadd.f32 %v2118, 1.0
    %v2122 = vadd.f32 %v2120, 1.0
    %v2123 = vrcp.pop %v2121
    %v2124 = vmul.f32 1.0, %v2123
    %v2125 = vrcp.pop %v2122
    %v2126 = vmul.f32 1.0, %v2125
    %v2127 = vadd.f32 %v198, %v404
    %v2128 = vadd.f32 %v2104, %v404
    %2130 = vrot.lane.b32.xlu0 %v2128, 32
    %v2131 = vpop.permute.xlu0 %2130
    %v2133 = vmul.f32 %v2124, %v2131
    %2135 = vrot.lane.b32.xlu0 %v2133, 64
    %v2136 = vpop.permute.xlu0 %2135
    %v2138 = vadd.f32 %v2127, %v2136
    %v2139 = vtanh.pop %v2138
    %v2140 = vsub.f32 1.0, %v2126
    %2142 = vrot.lane.b32.xlu0 %v2139, 96
    %v2143 = vpop.permute.xlu0 %2142
    %v2145 = vmul.f32 %v2140, %v2143
    %v2147 = vmul.f32 %v2126, %v2034
    %v2148 = vadd.f32 %v2145, %v2147
    %v2149 = vlaneseq
    %v2150 = vshrl.u32 %v2149, 7
    %v2151 = vsub.s32 7, %v2150
    %v2152 = vrot.slane %v2032, %v2151
    %v2153 = vsel %vm433, %v2152, %v1914
    %v2154 = vlaneseq
    %v2155 = vshrl.u32 %v2154, 7
    %v2156 = vsub.s32 0, %v2155
    %v2157 = vrot.slane %v2148, %v2156
    %v2158 = vsel %vm427, %v2157, %v1919
    %v2160 = vsel %vm125, %v2158, 0
    %2162 = vmatprep.subr.mxu0 %v55
    %2163 = vmatpush1.msra.mxu0 %v54
    %2164 = vmatprep.subr.mxu0 %v57
    %2165 = vmatpush1.msra.mxu0 %v56
    %2166 = vmatprep.subr.mxu0 %v59
    %2167 = vmatpush1.msra.mxu0 %v58
    %2168 = vmatprep.subr.mxu0 %v61
    %2169 = vmatpush1.msra.mxu0 %v60
    %2170 = vmatprep.subr.mxu0 0.0
    %2171 = vmatpush1.msra.mxu0 0.0
    %2172 = vmatprep.subr.mxu0 0.0
    %2173 = vmatpush1.msra.mxu0 0.0
    %2174 = vmatprep.subr.mxu0 0.0
    %2175 = vmatpush1.msra.mxu0 0.0
    %2176 = vmatprep.subr.mxu0 0.0
    %2177 = vmatpush1.msra.mxu0 0.0
    %2178 = vmatprep.subr.mxu0 0.0
    %2179 = vmatpush1.msra.mxu0 0.0
    %2180 = vmatprep.subr.mxu0 0.0
    %2181 = vmatpush1.msra.mxu0 0.0
    %2182 = vmatprep.subr.mxu0 0.0
    %2183 = vmatpush1.msra.mxu0 0.0
    %2184 = vmatprep.subr.mxu0 0.0
    %2185 = vmatpush1.msra.mxu0 0.0
    %2186 = vmatprep.subr.mxu0 0.0
    %2187 = vmatpush1.msra.mxu0 0.0
    %2188 = vmatprep.subr.mxu0 0.0
    %2189 = vmatpush1.msra.mxu0 0.0
    %2190 = vmatprep.subr.mxu0 0.0
    %2191 = vmatpush1.msra.mxu0 0.0
    %2192 = vmatprep.subr.mxu0 0.0
    %2193 = vmatpush1.msra.mxu0 0.0
    %2194 = vmatprep.subr.mxu0 0.0
    %2195 = vmatpush1.msra.mxu0 0.0
    %2196 = vmatprep.subr.mxu0 0.0
    %2197 = vmatpush1.msra.mxu0 0.0
    %2198 = vmatprep.subr.mxu0 0.0
    %2199 = vmatpush1.msra.mxu0 0.0
    %2200 = vmatprep.subr.mxu0 0.0
    %2201 = vmatpush1.msra.mxu0 0.0
    %2202 = vmatprep.subr.mxu0 0.0
    %2203 = vmatpush1.msra.mxu0 0.0
    %2204 = vmatprep.subr.mxu0 0.0
    %2205 = vmatpush1.msra.mxu0 0.0
    %2206 = vmatprep.subr.mxu0 0.0
    %2207 = vmatpush1.msra.mxu0 0.0
    %2208 = vmatprep.subr.mxu0 0.0
    %2209 = vmatpush1.msra.mxu0 0.0
    %2210 = vmatprep.subr.mxu0 0.0
    %2211 = vmatpush1.msra.mxu0 0.0
    %2212 = vmatprep.subr.mxu0 0.0
    %2213 = vmatpush1.msra.mxu0 0.0
    %2214 = vmatprep.subr.mxu0 0.0
    %2215 = vmatpush1.msra.mxu0 0.0
    %2216 = vmatprep.subr.mxu0 0.0
    %2217 = vmatpush1.msra.mxu0 0.0
    %2218 = vmatprep.subr.mxu0 0.0
    %2219 = vmatpush1.msra.mxu0 0.0
    %2220 = vmatprep.subr.mxu0 0.0
    %2221 = vmatpush1.msra.mxu0 0.0
    %2222 = vmatprep.subr.mxu0 0.0
    %2223 = vmatpush1.msra.mxu0 0.0
    %2224 = vmatprep.subr.mxu0 0.0
    %2225 = vmatpush1.msra.mxu0 0.0
    %2226 = vmatprep.mubr.f32.mxu0 0.0
    %2227 = vmatmul.mubr.f32.gmra.mrb[0].mxu0 %v2160
    %v2228 = vpop.f32.mrb[0].mxu0
    %v2229 = vadd.f32 0.0, %v2228
    %v2230 = vpop.f32.mrb[0].mxu0
    %v2231 = vadd.f32 0.0, %v2230
    %2232 = vdwg.mxu0
    %2234 = vrot.lane.b32.xlu0 %v2153, 96
    %v2235 = vpop.permute.xlu0 %2234
    %v2236 = vsel %vm125, %v2235, 0
    %2238 = vmatprep.subr.mxu0 %v47
    %2239 = vmatpush1.msra.mxu0 %v46
    %2240 = vmatprep.subr.mxu0 %v49
    %2241 = vmatpush1.msra.mxu0 %v48
    %2242 = vmatprep.subr.mxu0 %v51
    %2243 = vmatpush1.msra.mxu0 %v50
    %2244 = vmatprep.subr.mxu0 %v53
    %2245 = vmatpush1.msra.mxu0 %v52
    %2246 = vmatprep.subr.mxu0 0.0
    %2247 = vmatpush1.msra.mxu0 0.0
    %2248 = vmatprep.subr.mxu0 0.0
    %2249 = vmatpush1.msra.mxu0 0.0
    %2250 = vmatprep.subr.mxu0 0.0
    %2251 = vmatpush1.msra.mxu0 0.0
    %2252 = vmatprep.subr.mxu0 0.0
    %2253 = vmatpush1.msra.mxu0 0.0
    %2254 = vmatprep.subr.mxu0 0.0
    %2255 = vmatpush1.msra.mxu0 0.0
    %2256 = vmatprep.subr.mxu0 0.0
    %2257 = vmatpush1.msra.mxu0 0.0
    %2258 = vmatprep.subr.mxu0 0.0
    %2259 = vmatpush1.msra.mxu0 0.0
    %2260 = vmatprep.subr.mxu0 0.0
    %2261 = vmatpush1.msra.mxu0 0.0
    %2262 = vmatprep.subr.mxu0 0.0
    %2263 = vmatpush1.msra.mxu0 0.0
    %2264 = vmatprep.subr.mxu0 0.0
    %2265 = vmatpush1.msra.mxu0 0.0
    %2266 = vmatprep.subr.mxu0 0.0
    %2267 = vmatpush1.msra.mxu0 0.0
    %2268 = vmatprep.subr.mxu0 0.0
    %2269 = vmatpush1.msra.mxu0 0.0
    %2270 = vmatprep.subr.mxu0 0.0
    %2271 = vmatpush1.msra.mxu0 0.0
    %2272 = vmatprep.subr.mxu0 0.0
    %2273 = vmatpush1.msra.mxu0 0.0
    %2274 = vmatprep.subr.mxu0 0.0
    %2275 = vmatpush1.msra.mxu0 0.0
    %2276 = vmatprep.subr.mxu0 0.0
    %2277 = vmatpush1.msra.mxu0 0.0
    %2278 = vmatprep.subr.mxu0 0.0
    %2279 = vmatpush1.msra.mxu0 0.0
    %2280 = vmatprep.subr.mxu0 0.0
    %2281 = vmatpush1.msra.mxu0 0.0
    %2282 = vmatprep.subr.mxu0 0.0
    %2283 = vmatpush1.msra.mxu0 0.0
    %2284 = vmatprep.subr.mxu0 0.0
    %2285 = vmatpush1.msra.mxu0 0.0
    %2286 = vmatprep.subr.mxu0 0.0
    %2287 = vmatpush1.msra.mxu0 0.0
    %2288 = vmatprep.subr.mxu0 0.0
    %2289 = vmatpush1.msra.mxu0 0.0
    %2290 = vmatprep.subr.mxu0 0.0
    %2291 = vmatpush1.msra.mxu0 0.0
    %2292 = vmatprep.subr.mxu0 0.0
    %2293 = vmatpush1.msra.mxu0 0.0
    %2294 = vmatprep.subr.mxu0 0.0
    %2295 = vmatpush1.msra.mxu0 0.0
    %2296 = vmatprep.subr.mxu0 0.0
    %2297 = vmatpush1.msra.mxu0 0.0
    %2298 = vmatprep.subr.mxu0 0.0
    %2299 = vmatpush1.msra.mxu0 0.0
    %2300 = vmatprep.subr.mxu0 0.0
    %2301 = vmatpush1.msra.mxu0 0.0
    %2302 = vmatprep.mubr.f32.mxu0 0.0
    %2303 = vmatmul.mubr.f32.gmra.mrb[0].mxu0 %v2236
    %v2304 = vpop.f32.mrb[0].mxu0
    %v2305 = vadd.f32 %v2229, %v2304
    %v2306 = vpop.f32.mrb[0].mxu0
    %v2307 = vadd.f32 %v2231, %v2306
    %2308 = vdwg.mxu0
    %2309 = vmatprep.subr.mxu0 0.0
    %2310 = vmatpush1.msra.mxu0 %v70
    %2311 = vmatprep.subr.mxu0 0.0
    %2312 = vmatpush1.msra.mxu0 %v71
    %2313 = vmatprep.subr.mxu0 0.0
    %2314 = vmatpush1.msra.mxu0 %v72
    %2315 = vmatprep.subr.mxu0 0.0
    %2316 = vmatpush1.msra.mxu0 %v73
    %2317 = vmatprep.subr.mxu0 0.0
    %2318 = vmatpush1.msra.mxu0 0.0
    %2319 = vmatprep.subr.mxu0 0.0
    %2320 = vmatpush1.msra.mxu0 0.0
    %2321 = vmatprep.subr.mxu0 0.0
    %2322 = vmatpush1.msra.mxu0 0.0
    %2323 = vmatprep.subr.mxu0 0.0
    %2324 = vmatpush1.msra.mxu0 0.0
    %2325 = vmatprep.subr.mxu0 0.0
    %2326 = vmatpush1.msra.mxu0 0.0
    %2327 = vmatprep.subr.mxu0 0.0
    %2328 = vmatpush1.msra.mxu0 0.0
    %2329 = vmatprep.subr.mxu0 0.0
    %2330 = vmatpush1.msra.mxu0 0.0
    %2331 = vmatprep.subr.mxu0 0.0
    %2332 = vmatpush1.msra.mxu0 0.0
    %2333 = vmatprep.subr.mxu0 0.0
    %2334 = vmatpush1.msra.mxu0 0.0
    %2335 = vmatprep.subr.mxu0 0.0
    %2336 = vmatpush1.msra.mxu0 0.0
    %2337 = vmatprep.subr.mxu0 0.0
    %2338 = vmatpush1.msra.mxu0 0.0
    %2339 = vmatprep.subr.mxu0 0.0
    %2340 = vmatpush1.msra.mxu0 0.0
    %2341 = vmatprep.subr.mxu0 0.0
    %2342 = vmatpush1.msra.mxu0 0.0
    %2343 = vmatprep.subr.mxu0 0.0
    %2344 = vmatpush1.msra.mxu0 0.0
    %2345 = vmatprep.subr.mxu0 0.0
    %2346 = vmatpush1.msra.mxu0 0.0
    %2347 = vmatprep.subr.mxu0 0.0
    %2348 = vmatpush1.msra.mxu0 0.0
    %2349 = vmatprep.subr.mxu0 0.0
    %2350 = vmatpush1.msra.mxu0 0.0
    %2351 = vmatprep.subr.mxu0 0.0
    %2352 = vmatpush1.msra.mxu0 0.0
    %2353 = vmatprep.subr.mxu0 0.0
    %2354 = vmatpush1.msra.mxu0 0.0
    %2355 = vmatprep.subr.mxu0 0.0
    %2356 = vmatpush1.msra.mxu0 0.0
    %2357 = vmatprep.subr.mxu0 0.0
    %2358 = vmatpush1.msra.mxu0 0.0
    %2359 = vmatprep.subr.mxu0 0.0
    %2360 = vmatpush1.msra.mxu0 0.0
    %2361 = vmatprep.subr.mxu0 0.0
    %2362 = vmatpush1.msra.mxu0 0.0
    %2363 = vmatprep.subr.mxu0 0.0
    %2364 = vmatpush1.msra.mxu0 0.0
    %2365 = vmatprep.subr.mxu0 0.0
    %2366 = vmatpush1.msra.mxu0 0.0
    %2367 = vmatprep.subr.mxu0 0.0
    %2368 = vmatpush1.msra.mxu0 0.0
    %2369 = vmatprep.subr.mxu0 0.0
    %2370 = vmatpush1.msra.mxu0 0.0
    %2371 = vmatprep.subr.mxu0 0.0
    %2372 = vmatpush1.msra.mxu0 0.0
    %2373 = vmatprep.mubr.f32.mxu0 0.0
    %2374 = vmatmul.mubr.f32.gmra.mrb[0].mxu0 %v201
    %v2375 = vpop.f32.mrb[0].mxu0
    %v2376 = vadd.f32 0.0, %v2375
    %v2377 = vpop.f32.mrb[0].mxu0
    %2378 = vdwg.mxu0
    %v2379 = vadd.f32 %v2305, %v2376
    %v2380 = vadd.f32 %v2379, %v100
    %v2381 = vxor.u32 %v2380, 2147483648
    %v2382 = vmul.f32 %v2381, 1.442695
    %v2383 = vpow.pop %v2382
    %v2384 = vadd.f32 %v2383, 1.0
    %v2385 = vrcp.pop %v2384
    %v2386 = vmul.f32 1.0, %v2385
    %v2387 = vadd.f32 %v2305, %v100
    %2389 = vrot.lane.b32.xlu0 %v100, 96
    %v2390 = vpop.permute.xlu0 %2389
    %v2392 = vadd.f32 %v2376, %v2390
    %2394 = vrot.lane.b32.xlu0 %v2392, 64
    %v2395 = vpop.permute.xlu0 %2394
    %v2397 = vmul.f32 %v2386, %v2395
    %2399 = vrot.lane.b32.xlu0 %v2397, 64
    %v2400 = vpop.permute.xlu0 %2399
    %v2402 = vadd.f32 %v2387, %v2400
    %v2403 = vtanh.pop %v2402
    %v2404 = vsub.f32 1.0, %v2386
    %2406 = vrot.lane.b32.xlu0 %v2403, 96
    %v2407 = vpop.permute.xlu0 %2406
    %v2409 = vmul.f32 %v2404, %v2407
    %v2410 = vmul.f32 %v2386, 0.0
    %v2411 = vadd.f32 %v2409, %v2410
    %2412 = vmatprep.subr.mxu0 0.0
    %2413 = vmatpush1.msra.mxu0 %v74
    %2414 = vmatprep.subr.mxu0 0.0
    %2415 = vmatpush1.msra.mxu0 %v75
    %2416 = vmatprep.subr.mxu0 0.0
    %2417 = vmatpush1.msra.mxu0 %v76
    %2418 = vmatprep.subr.mxu0 0.0
    %2419 = vmatpush1.msra.mxu0 %v77
    %2420 = vmatprep.subr.mxu0 0.0
    %2421 = vmatpush1.msra.mxu0 0.0
    %2422 = vmatprep.subr.mxu0 0.0
    %2423 = vmatpush1.msra.mxu0 0.0
    %2424 = vmatprep.subr.mxu0 0.0
    %2425 = vmatpush1.msra.mxu0 0.0
    %2426 = vmatprep.subr.mxu0 0.0
    %2427 = vmatpush1.msra.mxu0 0.0
    %2428 = vmatprep.subr.mxu0 0.0
    %2429 = vmatpush1.msra.mxu0 0.0
    %2430 = vmatprep.subr.mxu0 0.0
    %2431 = vmatpush1.msra.mxu0 0.0
    %2432 = vmatprep.subr.mxu0 0.0
    %2433 = vmatpush1.msra.mxu0 0.0
    %2434 = vmatprep.subr.mxu0 0.0
    %2435 = vmatpush1.msra.mxu0 0.0
    %2436 = vmatprep.subr.mxu0 0.0
    %2437 = vmatpush1.msra.mxu0 0.0
    %2438 = vmatprep.subr.mxu0 0.0
    %2439 = vmatpush1.msra.mxu0 0.0
    %2440 = vmatprep.subr.mxu0 0.0
    %2441 = vmatpush1.msra.mxu0 0.0
    %2442 = vmatprep.subr.mxu0 0.0
    %2443 = vmatpush1.msra.mxu0 0.0
    %2444 = vmatprep.subr.mxu0 0.0
    %2445 = vmatpush1.msra.mxu0 0.0
    %2446 = vmatprep.subr.mxu0 0.0
    %2447 = vmatpush1.msra.mxu0 0.0
    %2448 = vmatprep.subr.mxu0 0.0
    %2449 = vmatpush1.msra.mxu0 0.0
    %2450 = vmatprep.subr.mxu0 0.0
    %2451 = vmatpush1.msra.mxu0 0.0
    %2452 = vmatprep.subr.mxu0 0.0
    %2453 = vmatpush1.msra.mxu0 0.0
    %2454 = vmatprep.subr.mxu0 0.0
    %2455 = vmatpush1.msra.mxu0 0.0
    %2456 = vmatprep.subr.mxu0 0.0
    %2457 = vmatpush1.msra.mxu0 0.0
    %2458 = vmatprep.subr.mxu0 0.0
    %2459 = vmatpush1.msra.mxu0 0.0
    %2460 = vmatprep.subr.mxu0 0.0
    %2461 = vmatpush1.msra.mxu0 0.0
    %2462 = vmatprep.subr.mxu0 0.0
    %2463 = vmatpush1.msra.mxu0 0.0
    %2464 = vmatprep.subr.mxu0 0.0
    %2465 = vmatpush1.msra.mxu0 0.0
    %2466 = vmatprep.subr.mxu0 0.0
    %2467 = vmatpush1.msra.mxu0 0.0
    %2468 = vmatprep.subr.mxu0 0.0
    %2469 = vmatpush1.msra.mxu0 0.0
    %2470 = vmatprep.subr.mxu0 0.0
    %2471 = vmatpush1.msra.mxu0 0.0
    %2472 = vmatprep.subr.mxu0 0.0
    %2473 = vmatpush1.msra.mxu0 0.0
    %2474 = vmatprep.subr.mxu0 0.0
    %2475 = vmatpush1.msra.mxu0 0.0
    %2476 = vmatprep.mubr.f32.mxu0 0.0
    %2477 = vmatmul.mubr.f32.gmra.mrb[0].mxu0 %v201
    %v2478 = vpop.f32.mrb[0].mxu0
    %v2479 = vadd.f32 0.0, %v2478
    %v2480 = vpop.f32.mrb[0].mxu0
    %2481 = vdwg.mxu0
    %v2483 = vrot.slane %v2479, 1
    %2484 = vrot.lane.b32.xlu0 %v2483, 96
    %v2485 = vpop.permute.xlu0 %2484
    %v2487 = vadd.f32 %v2305, %v2485
    %v2488 = vadd.f32 %v2307, %v2485
    %v2490 = vrot.slane %v101, 1
    %2491 = vrot.lane.b32.xlu0 %v2490, 96
    %v2492 = vpop.permute.xlu0 %2491
    %v2494 = vadd.f32 %v2487, %v2492
    %v2495 = vadd.f32 %v2488, %v2492
    %v2496 = vxor.u32 %v2494, 2147483648
    %v2497 = vxor.u32 %v2495, 2147483648
    %v2498 = vmul.f32 %v2496, 1.442695
    %v2499 = vpow.pop %v2498
    %v2500 = vmul.f32 %v2497, 1.442695
    %v2501 = vpow.pop %v2500
    %v2502 = vadd.f32 %v2499, 1.0
    %v2503 = vadd.f32 %v2501, 1.0
    %v2504 = vrcp.pop %v2502
    %v2505 = vmul.f32 1.0, %v2504
    %v2506 = vrcp.pop %v2503
    %v2507 = vmul.f32 1.0, %v2506
    %v2508 = vadd.f32 %v2307, %v2492
    %2509 = vrot.lane.b32.xlu0 %v101, 96
    %v2510 = vpop.permute.xlu0 %2509
    %v2512 = vadd.f32 %v2479, %v2510
    %v2514 = vrot.slane %v2512, 1
    %2515 = vrot.lane.b32.xlu0 %v2514, 32
    %v2516 = vpop.permute.xlu0 %2515
    %v2518 = vmul.f32 %v2505, %v2516
    %2520 = vrot.lane.b32.xlu0 %v2518, 64
    %v2521 = vpop.permute.xlu0 %2520
    %v2523 = vadd.f32 %v2508, %v2521
    %v2524 = vtanh.pop %v2523
    %v2525 = vsub.f32 1.0, %v2507
    %2527 = vrot.lane.b32.xlu0 %v2524, 96
    %v2528 = vpop.permute.xlu0 %2527
    %v2530 = vmul.f32 %v2525, %v2528
    %v2531 = vmul.f32 %v2507, 0.0
    %v2532 = vadd.f32 %v2530, %v2531
    %v2533 = vlaneseq
    %v2534 = vshrl.u32 %v2533, 7
    %v2535 = vsub.s32 0, %v2534
    %v2536 = vrot.slane %v2411, %v2535
    %v2537 = vsel %vm427, %v2536, 0.0
    %v2538 = vlaneseq
    %v2539 = vshrl.u32 %v2538, 7
    %v2540 = vsub.s32 7, %v2539
    %v2541 = vrot.slane %v2532, %v2540
    %v2542 = vsel %vm433, %v2541, 0.0
    %2544 = vrot.lane.b32.xlu0 %v2411, 96
    %v2545 = vpop.permute.xlu0 %2544
    %v2546 = vsel %vm125, %v2545, 0
    %2548 = vmatprep.subr.mxu0 0.0
    %2549 = vmatpush1.msra.mxu0 %v70
    %2550 = vmatprep.subr.mxu0 0.0
    %2551 = vmatpush1.msra.mxu0 %v71
    %2552 = vmatprep.subr.mxu0 0.0
    %2553 = vmatpush1.msra.mxu0 %v72
    %2554 = vmatprep.subr.mxu0 0.0
    %2555 = vmatpush1.msra.mxu0 %v73
    %2556 = vmatprep.subr.mxu0 0.0
    %2557 = vmatpush1.msra.mxu0 0.0
    %2558 = vmatprep.subr.mxu0 0.0
    %2559 = vmatpush1.msra.mxu0 0.0
    %2560 = vmatprep.subr.mxu0 0.0
    %2561 = vmatpush1.msra.mxu0 0.0
    %2562 = vmatprep.subr.mxu0 0.0
    %2563 = vmatpush1.msra.mxu0 0.0
    %2564 = vmatprep.subr.mxu0 0.0
    %2565 = vmatpush1.msra.mxu0 0.0
    %2566 = vmatprep.subr.mxu0 0.0
    %2567 = vmatpush1.msra.mxu0 0.0
    %2568 = vmatprep.subr.mxu0 0.0
    %2569 = vmatpush1.msra.mxu0 0.0
    %2570 = vmatprep.subr.mxu0 0.0
    %2571 = vmatpush1.msra.mxu0 0.0
    %2572 = vmatprep.subr.mxu0 0.0
    %2573 = vmatpush1.msra.mxu0 0.0
    %2574 = vmatprep.subr.mxu0 0.0
    %2575 = vmatpush1.msra.mxu0 0.0
    %2576 = vmatprep.subr.mxu0 0.0
    %2577 = vmatpush1.msra.mxu0 0.0
    %2578 = vmatprep.subr.mxu0 0.0
    %2579 = vmatpush1.msra.mxu0 0.0
    %2580 = vmatprep.subr.mxu0 0.0
    %2581 = vmatpush1.msra.mxu0 0.0
    %2582 = vmatprep.subr.mxu0 0.0
    %2583 = vmatpush1.msra.mxu0 0.0
    %2584 = vmatprep.subr.mxu0 0.0
    %2585 = vmatpush1.msra.mxu0 0.0
    %2586 = vmatprep.subr.mxu0 0.0
    %2587 = vmatpush1.msra.mxu0 0.0
    %2588 = vmatprep.subr.mxu0 0.0
    %2589 = vmatpush1.msra.mxu0 0.0
    %2590 = vmatprep.subr.mxu0 0.0
    %2591 = vmatpush1.msra.mxu0 0.0
    %2592 = vmatprep.subr.mxu0 0.0
    %2593 = vmatpush1.msra.mxu0 0.0
    %2594 = vmatprep.subr.mxu0 0.0
    %2595 = vmatpush1.msra.mxu0 0.0
    %2596 = vmatprep.subr.mxu0 0.0
    %2597 = vmatpush1.msra.mxu0 0.0
    %2598 = vmatprep.subr.mxu0 0.0
    %2599 = vmatpush1.msra.mxu0 0.0
    %2600 = vmatprep.subr.mxu0 0.0
    %2601 = vmatpush1.msra.mxu0 0.0
    %2602 = vmatprep.subr.mxu0 0.0
    %2603 = vmatpush1.msra.mxu0 0.0
    %2604 = vmatprep.subr.mxu0 0.0
    %2605 = vmatpush1.msra.mxu0 0.0
    %2606 = vmatprep.subr.mxu0 0.0
    %2607 = vmatpush1.msra.mxu0 0.0
    %2608 = vmatprep.subr.mxu0 0.0
    %2609 = vmatpush1.msra.mxu0 0.0
    %2610 = vmatprep.subr.mxu0 0.0
    %2611 = vmatpush1.msra.mxu0 0.0
    %2612 = vmatprep.mubr.f32.mxu0 0.0
    %2613 = vmatmul.mubr.f32.gmra.mrb[0].mxu0 %v2546
    %v2614 = vpop.f32.mrb[0].mxu0
    %v2615 = vadd.f32 0.0, %v2614
    %v2616 = vpop.f32.mrb[0].mxu0
    %2617 = vdwg.mxu0
    %v2619 = vrot.slane %v2615, 7
    %v2621 = vadd.f32 %v2305, %v2619
    %v2622 = vrot.slane %v100, 7
    %v2624 = vadd.f32 %v2621, %v2622
    %v2625 = vxor.u32 %v2624, 2147483648
    %v2626 = vmul.f32 %v2625, 1.442695
    %v2627 = vpow.pop %v2626
    %v2628 = vadd.f32 %v2627, 1.0
    %v2629 = vrcp.pop %v2628
    %v2630 = vmul.f32 1.0, %v2629
    %v2631 = vadd.f32 %v2305, %v2622
    %v2632 = vadd.f32 %v2615, %v2390
    %v2634 = vrot.slane %v2632, 7
    %2635 = vrot.lane.b32.xlu0 %v2634, 64
    %v2636 = vpop.permute.xlu0 %2635
    %v2638 = vmul.f32 %v2630, %v2636
    %2640 = vrot.lane.b32.xlu0 %v2638, 64
    %v2641 = vpop.permute.xlu0 %2640
    %v2643 = vadd.f32 %v2631, %v2641
    %v2644 = vtanh.pop %v2643
    %v2645 = vsub.f32 1.0, %v2630
    %2647 = vrot.lane.b32.xlu0 %v2644, 96
    %v2648 = vpop.permute.xlu0 %2647
    %v2650 = vmul.f32 %v2645, %v2648
    %v2651 = vrot.slane %v2411, 7
    %v2653 = vmul.f32 %v2630, %v2651
    %v2654 = vadd.f32 %v2650, %v2653
    %v2656 = vrot.slane %v2532, 7
    %v2657 = vsel %vm125, %v2656, 0
    %2659 = vmatprep.subr.mxu0 0.0
    %2660 = vmatpush1.msra.mxu0 %v74
    %2661 = vmatprep.subr.mxu0 0.0
    %2662 = vmatpush1.msra.mxu0 %v75
    %2663 = vmatprep.subr.mxu0 0.0
    %2664 = vmatpush1.msra.mxu0 %v76
    %2665 = vmatprep.subr.mxu0 0.0
    %2666 = vmatpush1.msra.mxu0 %v77
    %2667 = vmatprep.subr.mxu0 0.0
    %2668 = vmatpush1.msra.mxu0 0.0
    %2669 = vmatprep.subr.mxu0 0.0
    %2670 = vmatpush1.msra.mxu0 0.0
    %2671 = vmatprep.subr.mxu0 0.0
    %2672 = vmatpush1.msra.mxu0 0.0
    %2673 = vmatprep.subr.mxu0 0.0
    %2674 = vmatpush1.msra.mxu0 0.0
    %2675 = vmatprep.subr.mxu0 0.0
    %2676 = vmatpush1.msra.mxu0 0.0
    %2677 = vmatprep.subr.mxu0 0.0
    %2678 = vmatpush1.msra.mxu0 0.0
    %2679 = vmatprep.subr.mxu0 0.0
    %2680 = vmatpush1.msra.mxu0 0.0
    %2681 = vmatprep.subr.mxu0 0.0
    %2682 = vmatpush1.msra.mxu0 0.0
    %2683 = vmatprep.subr.mxu0 0.0
    %2684 = vmatpush1.msra.mxu0 0.0
    %2685 = vmatprep.subr.mxu0 0.0
    %2686 = vmatpush1.msra.mxu0 0.0
    %2687 = vmatprep.subr.mxu0 0.0
    %2688 = vmatpush1.msra.mxu0 0.0
    %2689 = vmatprep.subr.mxu0 0.0
    %2690 = vmatpush1.msra.mxu0 0.0
    %2691 = vmatprep.subr.mxu0 0.0
    %2692 = vmatpush1.msra.mxu0 0.0
    %2693 = vmatprep.subr.mxu0 0.0
    %2694 = vmatpush1.msra.mxu0 0.0
    %2695 = vmatprep.subr.mxu0 0.0
    %2696 = vmatpush1.msra.mxu0 0.0
    %2697 = vmatprep.subr.mxu0 0.0
    %2698 = vmatpush1.msra.mxu0 0.0
    %2699 = vmatprep.subr.mxu0 0.0
    %2700 = vmatpush1.msra.mxu0 0.0
    %2701 = vmatprep.subr.mxu0 0.0
    %2702 = vmatpush1.msra.mxu0 0.0
    %2703 = vmatprep.subr.mxu0 0.0
    %2704 = vmatpush1.msra.mxu0 0.0
    %2705 = vmatprep.subr.mxu0 0.0
    %2706 = vmatpush1.msra.mxu0 0.0
    %2707 = vmatprep.subr.mxu0 0.0
    %2708 = vmatpush1.msra.mxu0 0.0
    %2709 = vmatprep.subr.mxu0 0.0
    %2710 = vmatpush1.msra.mxu0 0.0
    %2711 = vmatprep.subr.mxu0 0.0
    %2712 = vmatpush1.msra.mxu0 0.0
    %2713 = vmatprep.subr.mxu0 0.0
    %2714 = vmatpush1.msra.mxu0 0.0
    %2715 = vmatprep.subr.mxu0 0.0
    %2716 = vmatpush1.msra.mxu0 0.0
    %2717 = vmatprep.subr.mxu0 0.0
    %2718 = vmatpush1.msra.mxu0 0.0
    %2719 = vmatprep.subr.mxu0 0.0
    %2720 = vmatpush1.msra.mxu0 0.0
    %2721 = vmatprep.subr.mxu0 0.0
    %2722 = vmatpush1.msra.mxu0 0.0
    %2723 = vmatprep.mubr.f32.mxu0 0.0
    %2724 = vmatmul.mubr.f32.gmra.mrb[0].mxu0 %v2657
    %v2725 = vpop.f32.mrb[0].mxu0
    %v2726 = vadd.f32 0.0, %v2725
    %v2727 = vpop.f32.mrb[0].mxu0
    %2728 = vdwg.mxu0
    %v2730 = vrot.slane %v2726, 2
    %2731 = vrot.lane.b32.xlu0 %v2730, 96
    %v2732 = vpop.permute.xlu0 %2731
    %v2734 = vadd.f32 %v2305, %v2732
    %v2735 = vadd.f32 %v2307, %v2732
    %v2736 = vrot.slane %v101, 2
    %2737 = vrot.lane.b32.xlu0 %v2736, 96
    %v2738 = vpop.permute.xlu0 %2737
    %v2740 = vadd.f32 %v2734, %v2738
    %v2741 = vadd.f32 %v2735, %v2738
    %v2742 = vxor.u32 %v2740, 2147483648
    %v2743 = vxor.u32 %v2741, 2147483648
    %v2744 = vmul.f32 %v2742, 1.442695
    %v2745 = vpow.pop %v2744
    %v2746 = vmul.f32 %v2743, 1.442695
    %v2747 = vpow.pop %v2746
    %v2748 = vadd.f32 %v2745, 1.0
    %v2749 = vadd.f32 %v2747, 1.0
    %v2750 = vrcp.pop %v2748
    %v2751 = vmul.f32 1.0, %v2750
    %v2752 = vrcp.pop %v2749
    %v2753 = vmul.f32 1.0, %v2752
    %v2754 = vadd.f32 %v2307, %v2738
    %v2755 = vadd.f32 %v2726, %v2510
    %v2757 = vrot.slane %v2755, 2
    %2758 = vrot.lane.b32.xlu0 %v2757, 32
    %v2759 = vpop.permute.xlu0 %2758
    %v2761 = vmul.f32 %v2751, %v2759
    %2763 = vrot.lane.b32.xlu0 %v2761, 64
    %v2764 = vpop.permute.xlu0 %2763
    %v2766 = vadd.f32 %v2754, %v2764
    %v2767 = vtanh.pop %v2766
    %v2768 = vsub.f32 1.0, %v2753
    %2770 = vrot.lane.b32.xlu0 %v2767, 96
    %v2771 = vpop.permute.xlu0 %2770
    %v2773 = vmul.f32 %v2768, %v2771
    %v2774 = vrot.slane %v2532, 1
    %v2776 = vmul.f32 %v2753, %v2774
    %v2777 = vadd.f32 %v2773, %v2776
    %v2778 = vlaneseq
    %v2779 = vshrl.u32 %v2778, 7
    %v2780 = vsub.s32 1, %v2779
    %v2781 = vrot.slane %v2654, %v2780
    %v2782 = vsel %vm674, %v2781, %v2537
    %v2783 = vlaneseq
    %v2784 = vshrl.u32 %v2783, 7
    %v2785 = vsub.s32 6, %v2784
    %v2786 = vrot.slane %v2777, %v2785
    %v2787 = vsel %vm680, %v2786, %v2542
    %v2789 = vrot.slane %v2654, 1
    %2790 = vrot.lane.b32.xlu0 %v2789, 96
    %v2791 = vpop.permute.xlu0 %2790
    %v2792 = vsel %vm125, %v2791, 0
    %2794 = vmatprep.subr.mxu0 0.0
    %2795 = vmatpush1.msra.mxu0 %v70
    %2796 = vmatprep.subr.mxu0 0.0
    %2797 = vmatpush1.msra.mxu0 %v71
    %2798 = vmatprep.subr.mxu0 0.0
    %2799 = vmatpush1.msra.mxu0 %v72
    %2800 = vmatprep.subr.mxu0 0.0
    %2801 = vmatpush1.msra.mxu0 %v73
    %2802 = vmatprep.subr.mxu0 0.0
    %2803 = vmatpush1.msra.mxu0 0.0
    %2804 = vmatprep.subr.mxu0 0.0
    %2805 = vmatpush1.msra.mxu0 0.0
    %2806 = vmatprep.subr.mxu0 0.0
    %2807 = vmatpush1.msra.mxu0 0.0
    %2808 = vmatprep.subr.mxu0 0.0
    %2809 = vmatpush1.msra.mxu0 0.0
    %2810 = vmatprep.subr.mxu0 0.0
    %2811 = vmatpush1.msra.mxu0 0.0
    %2812 = vmatprep.subr.mxu0 0.0
    %2813 = vmatpush1.msra.mxu0 0.0
    %2814 = vmatprep.subr.mxu0 0.0
    %2815 = vmatpush1.msra.mxu0 0.0
    %2816 = vmatprep.subr.mxu0 0.0
    %2817 = vmatpush1.msra.mxu0 0.0
    %2818 = vmatprep.subr.mxu0 0.0
    %2819 = vmatpush1.msra.mxu0 0.0
    %2820 = vmatprep.subr.mxu0 0.0
    %2821 = vmatpush1.msra.mxu0 0.0
    %2822 = vmatprep.subr.mxu0 0.0
    %2823 = vmatpush1.msra.mxu0 0.0
    %2824 = vmatprep.subr.mxu0 0.0
    %2825 = vmatpush1.msra.mxu0 0.0
    %2826 = vmatprep.subr.mxu0 0.0
    %2827 = vmatpush1.msra.mxu0 0.0
    %2828 = vmatprep.subr.mxu0 0.0
    %2829 = vmatpush1.msra.mxu0 0.0
    %2830 = vmatprep.subr.mxu0 0.0
    %2831 = vmatpush1.msra.mxu0 0.0
    %2832 = vmatprep.subr.mxu0 0.0
    %2833 = vmatpush1.msra.mxu0 0.0
    %2834 = vmatprep.subr.mxu0 0.0
    %2835 = vmatpush1.msra.mxu0 0.0
    %2836 = vmatprep.subr.mxu0 0.0
    %2837 = vmatpush1.msra.mxu0 0.0
    %2838 = vmatprep.subr.mxu0 0.0
    %2839 = vmatpush1.msra.mxu0 0.0
    %2840 = vmatprep.subr.mxu0 0.0
    %2841 = vmatpush1.msra.mxu0 0.0
    %2842 = vmatprep.subr.mxu0 0.0
    %2843 = vmatpush1.msra.mxu0 0.0
    %2844 = vmatprep.subr.mxu0 0.0
    %2845 = vmatpush1.msra.mxu0 0.0
    %2846 = vmatprep.subr.mxu0 0.0
    %2847 = vmatpush1.msra.mxu0 0.0
    %2848 = vmatprep.subr.mxu0 0.0
    %2849 = vmatpush1.msra.mxu0 0.0
    %2850 = vmatprep.subr.mxu0 0.0
    %2851 = vmatpush1.msra.mxu0 0.0
    %2852 = vmatprep.subr.mxu0 0.0
    %2853 = vmatpush1.msra.mxu0 0.0
    %2854 = vmatprep.subr.mxu0 0.0
    %2855 = vmatpush1.msra.mxu0 0.0
    %2856 = vmatprep.subr.mxu0 0.0
    %2857 = vmatpush1.msra.mxu0 0.0
    %2858 = vmatprep.mubr.f32.mxu0 0.0
    %2859 = vmatmul.mubr.f32.gmra.mrb[0].mxu0 %v2792
    %v2860 = vpop.f32.mrb[0].mxu0
    %v2861 = vadd.f32 0.0, %v2860
    %v2862 = vpop.f32.mrb[0].mxu0
    %2863 = vdwg.mxu0
    %v2865 = vrot.slane %v2861, 6
    %v2867 = vadd.f32 %v2305, %v2865
    %v2868 = vrot.slane %v100, 6
    %v2870 = vadd.f32 %v2867, %v2868
    %v2871 = vxor.u32 %v2870, 2147483648
    %v2872 = vmul.f32 %v2871, 1.442695
    %v2873 = vpow.pop %v2872
    %v2874 = vadd.f32 %v2873, 1.0
    %v2875 = vrcp.pop %v2874
    %v2876 = vmul.f32 1.0, %v2875
    %v2877 = vadd.f32 %v2305, %v2868
    %v2878 = vadd.f32 %v2861, %v2390
    %v2880 = vrot.slane %v2878, 6
    %2881 = vrot.lane.b32.xlu0 %v2880, 64
    %v2882 = vpop.permute.xlu0 %2881
    %v2884 = vmul.f32 %v2876, %v2882
    %2886 = vrot.lane.b32.xlu0 %v2884, 64
    %v2887 = vpop.permute.xlu0 %2886
    %v2889 = vadd.f32 %v2877, %v2887
    %v2890 = vtanh.pop %v2889
    %v2891 = vsub.f32 1.0, %v2876
    %2893 = vrot.lane.b32.xlu0 %v2890, 96
    %v2894 = vpop.permute.xlu0 %2893
    %v2896 = vmul.f32 %v2891, %v2894
    %v2897 = vrot.slane %v2654, 7
    %v2899 = vmul.f32 %v2876, %v2897
    %v2900 = vadd.f32 %v2896, %v2899
    %v2902 = vrot.slane %v2777, 6
    %v2903 = vsel %vm125, %v2902, 0
    %2905 = vmatprep.subr.mxu0 0.0
    %2906 = vmatpush1.msra.mxu0 %v74
    %2907 = vmatprep.subr.mxu0 0.0
    %2908 = vmatpush1.msra.mxu0 %v75
    %2909 = vmatprep.subr.mxu0 0.0
    %2910 = vmatpush1.msra.mxu0 %v76
    %2911 = vmatprep.subr.mxu0 0.0
    %2912 = vmatpush1.msra.mxu0 %v77
    %2913 = vmatprep.subr.mxu0 0.0
    %2914 = vmatpush1.msra.mxu0 0.0
    %2915 = vmatprep.subr.mxu0 0.0
    %2916 = vmatpush1.msra.mxu0 0.0
    %2917 = vmatprep.subr.mxu0 0.0
    %2918 = vmatpush1.msra.mxu0 0.0
    %2919 = vmatprep.subr.mxu0 0.0
    %2920 = vmatpush1.msra.mxu0 0.0
    %2921 = vmatprep.subr.mxu0 0.0
    %2922 = vmatpush1.msra.mxu0 0.0
    %2923 = vmatprep.subr.mxu0 0.0
    %2924 = vmatpush1.msra.mxu0 0.0
    %2925 = vmatprep.subr.mxu0 0.0
    %2926 = vmatpush1.msra.mxu0 0.0
    %2927 = vmatprep.subr.mxu0 0.0
    %2928 = vmatpush1.msra.mxu0 0.0
    %2929 = vmatprep.subr.mxu0 0.0
    %2930 = vmatpush1.msra.mxu0 0.0
    %2931 = vmatprep.subr.mxu0 0.0
    %2932 = vmatpush1.msra.mxu0 0.0
    %2933 = vmatprep.subr.mxu0 0.0
    %2934 = vmatpush1.msra.mxu0 0.0
    %2935 = vmatprep.subr.mxu0 0.0
    %2936 = vmatpush1.msra.mxu0 0.0
    %2937 = vmatprep.subr.mxu0 0.0
    %2938 = vmatpush1.msra.mxu0 0.0
    %2939 = vmatprep.subr.mxu0 0.0
    %2940 = vmatpush1.msra.mxu0 0.0
    %2941 = vmatprep.subr.mxu0 0.0
    %2942 = vmatpush1.msra.mxu0 0.0
    %2943 = vmatprep.subr.mxu0 0.0
    %2944 = vmatpush1.msra.mxu0 0.0
    %2945 = vmatprep.subr.mxu0 0.0
    %2946 = vmatpush1.msra.mxu0 0.0
    %2947 = vmatprep.subr.mxu0 0.0
    %2948 = vmatpush1.msra.mxu0 0.0
    %2949 = vmatprep.subr.mxu0 0.0
    %2950 = vmatpush1.msra.mxu0 0.0
    %2951 = vmatprep.subr.mxu0 0.0
    %2952 = vmatpush1.msra.mxu0 0.0
    %2953 = vmatprep.subr.mxu0 0.0
    %2954 = vmatpush1.msra.mxu0 0.0
    %2955 = vmatprep.subr.mxu0 0.0
    %2956 = vmatpush1.msra.mxu0 0.0
    %2957 = vmatprep.subr.mxu0 0.0
    %2958 = vmatpush1.msra.mxu0 0.0
    %2959 = vmatprep.subr.mxu0 0.0
    %2960 = vmatpush1.msra.mxu0 0.0
    %2961 = vmatprep.subr.mxu0 0.0
    %2962 = vmatpush1.msra.mxu0 0.0
    %2963 = vmatprep.subr.mxu0 0.0
    %2964 = vmatpush1.msra.mxu0 0.0
    %2965 = vmatprep.subr.mxu0 0.0
    %2966 = vmatpush1.msra.mxu0 0.0
    %2967 = vmatprep.subr.mxu0 0.0
    %2968 = vmatpush1.msra.mxu0 0.0
    %2969 = vmatprep.mubr.f32.mxu0 0.0
    %2970 = vmatmul.mubr.f32.gmra.mrb[0].mxu0 %v2903
    %v2971 = vpop.f32.mrb[0].mxu0
    %v2972 = vadd.f32 0.0, %v2971
    %v2973 = vpop.f32.mrb[0].mxu0
    %2974 = vdwg.mxu0
    %v2976 = vrot.slane %v2972, 3
    %2977 = vrot.lane.b32.xlu0 %v2976, 96
    %v2978 = vpop.permute.xlu0 %2977
    %v2980 = vadd.f32 %v2305, %v2978
    %v2981 = vadd.f32 %v2307, %v2978
    %v2982 = vrot.slane %v101, 3
    %2983 = vrot.lane.b32.xlu0 %v2982, 96
    %v2984 = vpop.permute.xlu0 %2983
    %v2986 = vadd.f32 %v2980, %v2984
    %v2987 = vadd.f32 %v2981, %v2984
    %v2988 = vxor.u32 %v2986, 2147483648
    %v2989 = vxor.u32 %v2987, 2147483648
    %v2990 = vmul.f32 %v2988, 1.442695
    %v2991 = vpow.pop %v2990
    %v2992 = vmul.f32 %v2989, 1.442695
    %v2993 = vpow.pop %v2992
    %v2994 = vadd.f32 %v2991, 1.0
    %v2995 = vadd.f32 %v2993, 1.0
    %v2996 = vrcp.pop %v2994
    %v2997 = vmul.f32 1.0, %v2996
    %v2998 = vrcp.pop %v2995
    %v2999 = vmul.f32 1.0, %v2998
    %v3000 = vadd.f32 %v2307, %v2984
    %v3001 = vadd.f32 %v2972, %v2510
    %v3003 = vrot.slane %v3001, 3
    %3004 = vrot.lane.b32.xlu0 %v3003, 32
    %v3005 = vpop.permute.xlu0 %3004
    %v3007 = vmul.f32 %v2997, %v3005
    %3009 = vrot.lane.b32.xlu0 %v3007, 64
    %v3010 = vpop.permute.xlu0 %3009
    %v3012 = vadd.f32 %v3000, %v3010
    %v3013 = vtanh.pop %v3012
    %v3014 = vsub.f32 1.0, %v2999
    %3016 = vrot.lane.b32.xlu0 %v3013, 96
    %v3017 = vpop.permute.xlu0 %3016
    %v3019 = vmul.f32 %v3014, %v3017
    %v3020 = vrot.slane %v2777, 1
    %v3022 = vmul.f32 %v2999, %v3020
    %v3023 = vadd.f32 %v3019, %v3022
    %v3024 = vlaneseq
    %v3025 = vshrl.u32 %v3024, 7
    %v3026 = vsub.s32 2, %v3025
    %v3027 = vrot.slane %v2900, %v3026
    %v3028 = vsel %vm922, %v3027, %v2782
    %v3029 = vlaneseq
    %v3030 = vshrl.u32 %v3029, 7
    %v3031 = vsub.s32 5, %v3030
    %v3032 = vrot.slane %v3023, %v3031
    %v3033 = vsel %vm928, %v3032, %v2787
    %v3035 = vrot.slane %v2900, 2
    %3036 = vrot.lane.b32.xlu0 %v3035, 96
    %v3037 = vpop.permute.xlu0 %3036
    %v3038 = vsel %vm125, %v3037, 0
    %3040 = vmatprep.subr.mxu0 0.0
    %3041 = vmatpush1.msra.mxu0 %v70
    %3042 = vmatprep.subr.mxu0 0.0
    %3043 = vmatpush1.msra.mxu0 %v71
    %3044 = vmatprep.subr.mxu0 0.0
    %3045 = vmatpush1.msra.mxu0 %v72
    %3046 = vmatprep.subr.mxu0 0.0
    %3047 = vmatpush1.msra.mxu0 %v73
    %3048 = vmatprep.subr.mxu0 0.0
    %3049 = vmatpush1.msra.mxu0 0.0
    %3050 = vmatprep.subr.mxu0 0.0
    %3051 = vmatpush1.msra.mxu0 0.0
    %3052 = vmatprep.subr.mxu0 0.0
    %3053 = vmatpush1.msra.mxu0 0.0
    %3054 = vmatprep.subr.mxu0 0.0
    %3055 = vmatpush1.msra.mxu0 0.0
    %3056 = vmatprep.subr.mxu0 0.0
    %3057 = vmatpush1.msra.mxu0 0.0
    %3058 = vmatprep.subr.mxu0 0.0
    %3059 = vmatpush1.msra.mxu0 0.0
    %3060 = vmatprep.subr.mxu0 0.0
    %3061 = vmatpush1.msra.mxu0 0.0
    %3062 = vmatprep.subr.mxu0 0.0
    %3063 = vmatpush1.msra.mxu0 0.0
    %3064 = vmatprep.subr.mxu0 0.0
    %3065 = vmatpush1.msra.mxu0 0.0
    %3066 = vmatprep.subr.mxu0 0.0
    %3067 = vmatpush1.msra.mxu0 0.0
    %3068 = vmatprep.subr.mxu0 0.0
    %3069 = vmatpush1.msra.mxu0 0.0
    %3070 = vmatprep.subr.mxu0 0.0
    %3071 = vmatpush1.msra.mxu0 0.0
    %3072 = vmatprep.subr.mxu0 0.0
    %3073 = vmatpush1.msra.mxu0 0.0
    %3074 = vmatprep.subr.mxu0 0.0
    %3075 = vmatpush1.msra.mxu0 0.0
    %3076 = vmatprep.subr.mxu0 0.0
    %3077 = vmatpush1.msra.mxu0 0.0
    %3078 = vmatprep.subr.mxu0 0.0
    %3079 = vmatpush1.msra.mxu0 0.0
    %3080 = vmatprep.subr.mxu0 0.0
    %3081 = vmatpush1.msra.mxu0 0.0
    %3082 = vmatprep.subr.mxu0 0.0
    %3083 = vmatpush1.msra.mxu0 0.0
    %3084 = vmatprep.subr.mxu0 0.0
    %3085 = vmatpush1.msra.mxu0 0.0
    %3086 = vmatprep.subr.mxu0 0.0
    %3087 = vmatpush1.msra.mxu0 0.0
    %3088 = vmatprep.subr.mxu0 0.0
    %3089 = vmatpush1.msra.mxu0 0.0
    %3090 = vmatprep.subr.mxu0 0.0
    %3091 = vmatpush1.msra.mxu0 0.0
    %3092 = vmatprep.subr.mxu0 0.0
    %3093 = vmatpush1.msra.mxu0 0.0
    %3094 = vmatprep.subr.mxu0 0.0
    %3095 = vmatpush1.msra.mxu0 0.0
    %3096 = vmatprep.subr.mxu0 0.0
    %3097 = vmatpush1.msra.mxu0 0.0
    %3098 = vmatprep.subr.mxu0 0.0
    %3099 = vmatpush1.msra.mxu0 0.0
    %3100 = vmatprep.subr.mxu0 0.0
    %3101 = vmatpush1.msra.mxu0 0.0
    %3102 = vmatprep.subr.mxu0 0.0
    %3103 = vmatpush1.msra.mxu0 0.0
    %3104 = vmatprep.mubr.f32.mxu0 0.0
    %3105 = vmatmul.mubr.f32.gmra.mrb[0].mxu0 %v3038
    %v3106 = vpop.f32.mrb[0].mxu0
    %v3107 = vadd.f32 0.0, %v3106
    %v3108 = vpop.f32.mrb[0].mxu0
    %3109 = vdwg.mxu0
    %v3111 = vrot.slane %v3107, 5
    %v3113 = vadd.f32 %v2305, %v3111
    %v3114 = vrot.slane %v100, 5
    %v3116 = vadd.f32 %v3113, %v3114
    %v3117 = vxor.u32 %v3116, 2147483648
    %v3118 = vmul.f32 %v3117, 1.442695
    %v3119 = vpow.pop %v3118
    %v3120 = vadd.f32 %v3119, 1.0
    %v3121 = vrcp.pop %v3120
    %v3122 = vmul.f32 1.0, %v3121
    %v3123 = vadd.f32 %v2305, %v3114
    %v3124 = vadd.f32 %v3107, %v2390
    %v3126 = vrot.slane %v3124, 5
    %3127 = vrot.lane.b32.xlu0 %v3126, 64
    %v3128 = vpop.permute.xlu0 %3127
    %v3130 = vmul.f32 %v3122, %v3128
    %3132 = vrot.lane.b32.xlu0 %v3130, 64
    %v3133 = vpop.permute.xlu0 %3132
    %v3135 = vadd.f32 %v3123, %v3133
    %v3136 = vtanh.pop %v3135
    %v3137 = vsub.f32 1.0, %v3122
    %3139 = vrot.lane.b32.xlu0 %v3136, 96
    %v3140 = vpop.permute.xlu0 %3139
    %v3142 = vmul.f32 %v3137, %v3140
    %v3143 = vrot.slane %v2900, 7
    %v3145 = vmul.f32 %v3122, %v3143
    %v3146 = vadd.f32 %v3142, %v3145
    %v3148 = vrot.slane %v3023, 5
    %v3149 = vsel %vm125, %v3148, 0
    %3151 = vmatprep.subr.mxu0 0.0
    %3152 = vmatpush1.msra.mxu0 %v74
    %3153 = vmatprep.subr.mxu0 0.0
    %3154 = vmatpush1.msra.mxu0 %v75
    %3155 = vmatprep.subr.mxu0 0.0
    %3156 = vmatpush1.msra.mxu0 %v76
    %3157 = vmatprep.subr.mxu0 0.0
    %3158 = vmatpush1.msra.mxu0 %v77
    %3159 = vmatprep.subr.mxu0 0.0
    %3160 = vmatpush1.msra.mxu0 0.0
    %3161 = vmatprep.subr.mxu0 0.0
    %3162 = vmatpush1.msra.mxu0 0.0
    %3163 = vmatprep.subr.mxu0 0.0
    %3164 = vmatpush1.msra.mxu0 0.0
    %3165 = vmatprep.subr.mxu0 0.0
    %3166 = vmatpush1.msra.mxu0 0.0
    %3167 = vmatprep.subr.mxu0 0.0
    %3168 = vmatpush1.msra.mxu0 0.0
    %3169 = vmatprep.subr.mxu0 0.0
    %3170 = vmatpush1.msra.mxu0 0.0
    %3171 = vmatprep.subr.mxu0 0.0
    %3172 = vmatpush1.msra.mxu0 0.0
    %3173 = vmatprep.subr.mxu0 0.0
    %3174 = vmatpush1.msra.mxu0 0.0
    %3175 = vmatprep.subr.mxu0 0.0
    %3176 = vmatpush1.msra.mxu0 0.0
    %3177 = vmatprep.subr.mxu0 0.0
    %3178 = vmatpush1.msra.mxu0 0.0
    %3179 = vmatprep.subr.mxu0 0.0
    %3180 = vmatpush1.msra.mxu0 0.0
    %3181 = vmatprep.subr.mxu0 0.0
    %3182 = vmatpush1.msra.mxu0 0.0
    %3183 = vmatprep.subr.mxu0 0.0
    %3184 = vmatpush1.msra.mxu0 0.0
    %3185 = vmatprep.subr.mxu0 0.0
    %3186 = vmatpush1.msra.mxu0 0.0
    %3187 = vmatprep.subr.mxu0 0.0
    %3188 = vmatpush1.msra.mxu0 0.0
    %3189 = vmatprep.subr.mxu0 0.0
    %3190 = vmatpush1.msra.mxu0 0.0
    %3191 = vmatprep.subr.mxu0 0.0
    %3192 = vmatpush1.msra.mxu0 0.0
    %3193 = vmatprep.subr.mxu0 0.0
    %3194 = vmatpush1.msra.mxu0 0.0
    %3195 = vmatprep.subr.mxu0 0.0
    %3196 = vmatpush1.msra.mxu0 0.0
    %3197 = vmatprep.subr.mxu0 0.0
    %3198 = vmatpush1.msra.mxu0 0.0
    %3199 = vmatprep.subr.mxu0 0.0
    %3200 = vmatpush1.msra.mxu0 0.0
    %3201 = vmatprep.subr.mxu0 0.0
    %3202 = vmatpush1.msra.mxu0 0.0
    %3203 = vmatprep.subr.mxu0 0.0
    %3204 = vmatpush1.msra.mxu0 0.0
    %3205 = vmatprep.subr.mxu0 0.0
    %3206 = vmatpush1.msra.mxu0 0.0
    %3207 = vmatprep.subr.mxu0 0.0
    %3208 = vmatpush1.msra.mxu0 0.0
    %3209 = vmatprep.subr.mxu0 0.0
    %3210 = vmatpush1.msra.mxu0 0.0
    %3211 = vmatprep.subr.mxu0 0.0
    %3212 = vmatpush1.msra.mxu0 0.0
    %3213 = vmatprep.subr.mxu0 0.0
    %3214 = vmatpush1.msra.mxu0 0.0
    %3215 = vmatprep.mubr.f32.mxu0 0.0
    %3216 = vmatmul.mubr.f32.gmra.mrb[0].mxu0 %v3149
    %v3217 = vpop.f32.mrb[0].mxu0
    %v3218 = vadd.f32 0.0, %v3217
    %v3219 = vpop.f32.mrb[0].mxu0
    %3220 = vdwg.mxu0
    %v3222 = vrot.slane %v3218, 4
    %3223 = vrot.lane.b32.xlu0 %v3222, 96
    %v3224 = vpop.permute.xlu0 %3223
    %v3226 = vadd.f32 %v2305, %v3224
    %v3227 = vadd.f32 %v2307, %v3224
    %v3228 = vrot.slane %v101, 4
    %3229 = vrot.lane.b32.xlu0 %v3228, 96
    %v3230 = vpop.permute.xlu0 %3229
    %v3232 = vadd.f32 %v3226, %v3230
    %v3233 = vadd.f32 %v3227, %v3230
    %v3234 = vxor.u32 %v3232, 2147483648
    %v3235 = vxor.u32 %v3233, 2147483648
    %v3236 = vmul.f32 %v3234, 1.442695
    %v3237 = vpow.pop %v3236
    %v3238 = vmul.f32 %v3235, 1.442695
    %v3239 = vpow.pop %v3238
    %v3240 = vadd.f32 %v3237, 1.0
    %v3241 = vadd.f32 %v3239, 1.0
    %v3242 = vrcp.pop %v3240
    %v3243 = vmul.f32 1.0, %v3242
    %v3244 = vrcp.pop %v3241
    %v3245 = vmul.f32 1.0, %v3244
    %v3246 = vadd.f32 %v2307, %v3230
    %v3247 = vadd.f32 %v3218, %v2510
    %v3249 = vrot.slane %v3247, 4
    %3250 = vrot.lane.b32.xlu0 %v3249, 32
    %v3251 = vpop.permute.xlu0 %3250
    %v3253 = vmul.f32 %v3243, %v3251
    %3255 = vrot.lane.b32.xlu0 %v3253, 64
    %v3256 = vpop.permute.xlu0 %3255
    %v3258 = vadd.f32 %v3246, %v3256
    %v3259 = vtanh.pop %v3258
    %v3260 = vsub.f32 1.0, %v3245
    %3262 = vrot.lane.b32.xlu0 %v3259, 96
    %v3263 = vpop.permute.xlu0 %3262
    %v3265 = vmul.f32 %v3260, %v3263
    %v3266 = vrot.slane %v3023, 1
    %v3268 = vmul.f32 %v3245, %v3266
    %v3269 = vadd.f32 %v3265, %v3268
    %v3270 = vlaneseq
    %v3271 = vshrl.u32 %v3270, 7
    %v3272 = vsub.s32 3, %v3271
    %v3273 = vrot.slane %v3146, %v3272
    %v3274 = vsel %vm1170, %v3273, %v3028
    %v3275 = vlaneseq
    %v3276 = vshrl.u32 %v3275, 7
    %v3277 = vsub.s32 4, %v3276
    %v3278 = vrot.slane %v3269, %v3277
    %v3279 = vsel %vm1176, %v3278, %v3033
    %v3281 = vrot.slane %v3146, 3
    %3282 = vrot.lane.b32.xlu0 %v3281, 96
    %v3283 = vpop.permute.xlu0 %3282
    %v3284 = vsel %vm125, %v3283, 0
    %3286 = vmatprep.subr.mxu0 0.0
    %3287 = vmatpush1.msra.mxu0 %v70
    %3288 = vmatprep.subr.mxu0 0.0
    %3289 = vmatpush1.msra.mxu0 %v71
    %3290 = vmatprep.subr.mxu0 0.0
    %3291 = vmatpush1.msra.mxu0 %v72
    %3292 = vmatprep.subr.mxu0 0.0
    %3293 = vmatpush1.msra.mxu0 %v73
    %3294 = vmatprep.subr.mxu0 0.0
    %3295 = vmatpush1.msra.mxu0 0.0
    %3296 = vmatprep.subr.mxu0 0.0
    %3297 = vmatpush1.msra.mxu0 0.0
    %3298 = vmatprep.subr.mxu0 0.0
    %3299 = vmatpush1.msra.mxu0 0.0
    %3300 = vmatprep.subr.mxu0 0.0
    %3301 = vmatpush1.msra.mxu0 0.0
    %3302 = vmatprep.subr.mxu0 0.0
    %3303 = vmatpush1.msra.mxu0 0.0
    %3304 = vmatprep.subr.mxu0 0.0
    %3305 = vmatpush1.msra.mxu0 0.0
    %3306 = vmatprep.subr.mxu0 0.0
    %3307 = vmatpush1.msra.mxu0 0.0
    %3308 = vmatprep.subr.mxu0 0.0
    %3309 = vmatpush1.msra.mxu0 0.0
    %3310 = vmatprep.subr.mxu0 0.0
    %3311 = vmatpush1.msra.mxu0 0.0
    %3312 = vmatprep.subr.mxu0 0.0
    %3313 = vmatpush1.msra.mxu0 0.0
    %3314 = vmatprep.subr.mxu0 0.0
    %3315 = vmatpush1.msra.mxu0 0.0
    %3316 = vmatprep.subr.mxu0 0.0
    %3317 = vmatpush1.msra.mxu0 0.0
    %3318 = vmatprep.subr.mxu0 0.0
    %3319 = vmatpush1.msra.mxu0 0.0
    %3320 = vmatprep.subr.mxu0 0.0
    %3321 = vmatpush1.msra.mxu0 0.0
    %3322 = vmatprep.subr.mxu0 0.0
    %3323 = vmatpush1.msra.mxu0 0.0
    %3324 = vmatprep.subr.mxu0 0.0
    %3325 = vmatpush1.msra.mxu0 0.0
    %3326 = vmatprep.subr.mxu0 0.0
    %3327 = vmatpush1.msra.mxu0 0.0
    %3328 = vmatprep.subr.mxu0 0.0
    %3329 = vmatpush1.msra.mxu0 0.0
    %3330 = vmatprep.subr.mxu0 0.0
    %3331 = vmatpush1.msra.mxu0 0.0
    %3332 = vmatprep.subr.mxu0 0.0
    %3333 = vmatpush1.msra.mxu0 0.0
    %3334 = vmatprep.subr.mxu0 0.0
    %3335 = vmatpush1.msra.mxu0 0.0
    %3336 = vmatprep.subr.mxu0 0.0
    %3337 = vmatpush1.msra.mxu0 0.0
    %3338 = vmatprep.subr.mxu0 0.0
    %3339 = vmatpush1.msra.mxu0 0.0
    %3340 = vmatprep.subr.mxu0 0.0
    %3341 = vmatpush1.msra.mxu0 0.0
    %3342 = vmatprep.subr.mxu0 0.0
    %3343 = vmatpush1.msra.mxu0 0.0
    %3344 = vmatprep.subr.mxu0 0.0
    %3345 = vmatpush1.msra.mxu0 0.0
    %3346 = vmatprep.subr.mxu0 0.0
    %3347 = vmatpush1.msra.mxu0 0.0
    %3348 = vmatprep.subr.mxu0 0.0
    %3349 = vmatpush1.msra.mxu0 0.0
    %3350 = vmatprep.mubr.f32.mxu0 0.0
    %3351 = vmatmul.mubr.f32.gmra.mrb[0].mxu0 %v3284
    %v3352 = vpop.f32.mrb[0].mxu0
    %v3353 = vadd.f32 0.0, %v3352
    %v3354 = vpop.f32.mrb[0].mxu0
    %3355 = vdwg.mxu0
    %v3357 = vrot.slane %v3353, 4
    %v3359 = vadd.f32 %v2305, %v3357
    %v3360 = vrot.slane %v100, 4
    %v3362 = vadd.f32 %v3359, %v3360
    %v3363 = vxor.u32 %v3362, 2147483648
    %v3364 = vmul.f32 %v3363, 1.442695
    %v3365 = vpow.pop %v3364
    %v3366 = vadd.f32 %v3365, 1.0
    %v3367 = vrcp.pop %v3366
    %v3368 = vmul.f32 1.0, %v3367
    %v3369 = vadd.f32 %v2305, %v3360
    %v3370 = vadd.f32 %v3353, %v2390
    %v3372 = vrot.slane %v3370, 4
    %3373 = vrot.lane.b32.xlu0 %v3372, 64
    %v3374 = vpop.permute.xlu0 %3373
    %v3376 = vmul.f32 %v3368, %v3374
    %3378 = vrot.lane.b32.xlu0 %v3376, 64
    %v3379 = vpop.permute.xlu0 %3378
    %v3381 = vadd.f32 %v3369, %v3379
    %v3382 = vtanh.pop %v3381
    %v3383 = vsub.f32 1.0, %v3368
    %3385 = vrot.lane.b32.xlu0 %v3382, 96
    %v3386 = vpop.permute.xlu0 %3385
    %v3388 = vmul.f32 %v3383, %v3386
    %v3389 = vrot.slane %v3146, 7
    %v3391 = vmul.f32 %v3368, %v3389
    %v3392 = vadd.f32 %v3388, %v3391
    %v3394 = vrot.slane %v3269, 4
    %v3395 = vsel %vm125, %v3394, 0
    %3397 = vmatprep.subr.mxu0 0.0
    %3398 = vmatpush1.msra.mxu0 %v74
    %3399 = vmatprep.subr.mxu0 0.0
    %3400 = vmatpush1.msra.mxu0 %v75
    %3401 = vmatprep.subr.mxu0 0.0
    %3402 = vmatpush1.msra.mxu0 %v76
    %3403 = vmatprep.subr.mxu0 0.0
    %3404 = vmatpush1.msra.mxu0 %v77
    %3405 = vmatprep.subr.mxu0 0.0
    %3406 = vmatpush1.msra.mxu0 0.0
    %3407 = vmatprep.subr.mxu0 0.0
    %3408 = vmatpush1.msra.mxu0 0.0
    %3409 = vmatprep.subr.mxu0 0.0
    %3410 = vmatpush1.msra.mxu0 0.0
    %3411 = vmatprep.subr.mxu0 0.0
    %3412 = vmatpush1.msra.mxu0 0.0
    %3413 = vmatprep.subr.mxu0 0.0
    %3414 = vmatpush1.msra.mxu0 0.0
    %3415 = vmatprep.subr.mxu0 0.0
    %3416 = vmatpush1.msra.mxu0 0.0
    %3417 = vmatprep.subr.mxu0 0.0
    %3418 = vmatpush1.msra.mxu0 0.0
    %3419 = vmatprep.subr.mxu0 0.0
    %3420 = vmatpush1.msra.mxu0 0.0
    %3421 = vmatprep.subr.mxu0 0.0
    %3422 = vmatpush1.msra.mxu0 0.0
    %3423 = vmatprep.subr.mxu0 0.0
    %3424 = vmatpush1.msra.mxu0 0.0
    %3425 = vmatprep.subr.mxu0 0.0
    %3426 = vmatpush1.msra.mxu0 0.0
    %3427 = vmatprep.subr.mxu0 0.0
    %3428 = vmatpush1.msra.mxu0 0.0
    %3429 = vmatprep.subr.mxu0 0.0
    %3430 = vmatpush1.msra.mxu0 0.0
    %3431 = vmatprep.subr.mxu0 0.0
    %3432 = vmatpush1.msra.mxu0 0.0
    %3433 = vmatprep.subr.mxu0 0.0
    %3434 = vmatpush1.msra.mxu0 0.0
    %3435 = vmatprep.subr.mxu0 0.0
    %3436 = vmatpush1.msra.mxu0 0.0
    %3437 = vmatprep.subr.mxu0 0.0
    %3438 = vmatpush1.msra.mxu0 0.0
    %3439 = vmatprep.subr.mxu0 0.0
    %3440 = vmatpush1.msra.mxu0 0.0
    %3441 = vmatprep.subr.mxu0 0.0
    %3442 = vmatpush1.msra.mxu0 0.0
    %3443 = vmatprep.subr.mxu0 0.0
    %3444 = vmatpush1.msra.mxu0 0.0
    %3445 = vmatprep.subr.mxu0 0.0
    %3446 = vmatpush1.msra.mxu0 0.0
    %3447 = vmatprep.subr.mxu0 0.0
    %3448 = vmatpush1.msra.mxu0 0.0
    %3449 = vmatprep.subr.mxu0 0.0
    %3450 = vmatpush1.msra.mxu0 0.0
    %3451 = vmatprep.subr.mxu0 0.0
    %3452 = vmatpush1.msra.mxu0 0.0
    %3453 = vmatprep.subr.mxu0 0.0
    %3454 = vmatpush1.msra.mxu0 0.0
    %3455 = vmatprep.subr.mxu0 0.0
    %3456 = vmatpush1.msra.mxu0 0.0
    %3457 = vmatprep.subr.mxu0 0.0
    %3458 = vmatpush1.msra.mxu0 0.0
    %3459 = vmatprep.subr.mxu0 0.0
    %3460 = vmatpush1.msra.mxu0 0.0
    %3461 = vmatprep.mubr.f32.mxu0 0.0
    %3462 = vmatmul.mubr.f32.gmra.mrb[0].mxu0 %v3395
    %v3463 = vpop.f32.mrb[0].mxu0
    %v3464 = vadd.f32 0.0, %v3463
    %v3465 = vpop.f32.mrb[0].mxu0
    %3466 = vdwg.mxu0
    %v3468 = vrot.slane %v3464, 5
    %3469 = vrot.lane.b32.xlu0 %v3468, 96
    %v3470 = vpop.permute.xlu0 %3469
    %v3472 = vadd.f32 %v2305, %v3470
    %v3473 = vadd.f32 %v2307, %v3470
    %v3474 = vrot.slane %v101, 5
    %3475 = vrot.lane.b32.xlu0 %v3474, 96
    %v3476 = vpop.permute.xlu0 %3475
    %v3478 = vadd.f32 %v3472, %v3476
    %v3479 = vadd.f32 %v3473, %v3476
    %v3480 = vxor.u32 %v3478, 2147483648
    %v3481 = vxor.u32 %v3479, 2147483648
    %v3482 = vmul.f32 %v3480, 1.442695
    %v3483 = vpow.pop %v3482
    %v3484 = vmul.f32 %v3481, 1.442695
    %v3485 = vpow.pop %v3484
    %v3486 = vadd.f32 %v3483, 1.0
    %v3487 = vadd.f32 %v3485, 1.0
    %v3488 = vrcp.pop %v3486
    %v3489 = vmul.f32 1.0, %v3488
    %v3490 = vrcp.pop %v3487
    %v3491 = vmul.f32 1.0, %v3490
    %v3492 = vadd.f32 %v2307, %v3476
    %v3493 = vadd.f32 %v3464, %v2510
    %v3495 = vrot.slane %v3493, 5
    %3496 = vrot.lane.b32.xlu0 %v3495, 32
    %v3497 = vpop.permute.xlu0 %3496
    %v3499 = vmul.f32 %v3489, %v3497
    %3501 = vrot.lane.b32.xlu0 %v3499, 64
    %v3502 = vpop.permute.xlu0 %3501
    %v3504 = vadd.f32 %v3492, %v3502
    %v3505 = vtanh.pop %v3504
    %v3506 = vsub.f32 1.0, %v3491
    %3508 = vrot.lane.b32.xlu0 %v3505, 96
    %v3509 = vpop.permute.xlu0 %3508
    %v3511 = vmul.f32 %v3506, %v3509
    %v3512 = vrot.slane %v3269, 1
    %v3514 = vmul.f32 %v3491, %v3512
    %v3515 = vadd.f32 %v3511, %v3514
    %v3516 = vlaneseq
    %v3517 = vshrl.u32 %v3516, 7
    %v3518 = vsub.s32 4, %v3517
    %v3519 = vrot.slane %v3392, %v3518
    %v3520 = vsel %vm1176, %v3519, %v3274
    %v3521 = vlaneseq
    %v3522 = vshrl.u32 %v3521, 7
    %v3523 = vsub.s32 3, %v3522
    %v3524 = vrot.slane %v3515, %v3523
    %v3525 = vsel %vm1170, %v3524, %v3279
    %v3527 = vrot.slane %v3392, 4
    %3528 = vrot.lane.b32.xlu0 %v3527, 96
    %v3529 = vpop.permute.xlu0 %3528
    %v3530 = vsel %vm125, %v3529, 0
    %3532 = vmatprep.subr.mxu0 0.0
    %3533 = vmatpush1.msra.mxu0 %v70
    %3534 = vmatprep.subr.mxu0 0.0
    %3535 = vmatpush1.msra.mxu0 %v71
    %3536 = vmatprep.subr.mxu0 0.0
    %3537 = vmatpush1.msra.mxu0 %v72
    %3538 = vmatprep.subr.mxu0 0.0
    %3539 = vmatpush1.msra.mxu0 %v73
    %3540 = vmatprep.subr.mxu0 0.0
    %3541 = vmatpush1.msra.mxu0 0.0
    %3542 = vmatprep.subr.mxu0 0.0
    %3543 = vmatpush1.msra.mxu0 0.0
    %3544 = vmatprep.subr.mxu0 0.0
    %3545 = vmatpush1.msra.mxu0 0.0
    %3546 = vmatprep.subr.mxu0 0.0
    %3547 = vmatpush1.msra.mxu0 0.0
    %3548 = vmatprep.subr.mxu0 0.0
    %3549 = vmatpush1.msra.mxu0 0.0
    %3550 = vmatprep.subr.mxu0 0.0
    %3551 = vmatpush1.msra.mxu0 0.0
    %3552 = vmatprep.subr.mxu0 0.0
    %3553 = vmatpush1.msra.mxu0 0.0
    %3554 = vmatprep.subr.mxu0 0.0
    %3555 = vmatpush1.msra.mxu0 0.0
    %3556 = vmatprep.subr.mxu0 0.0
    %3557 = vmatpush1.msra.mxu0 0.0
    %3558 = vmatprep.subr.mxu0 0.0
    %3559 = vmatpush1.msra.mxu0 0.0
    %3560 = vmatprep.subr.mxu0 0.0
    %3561 = vmatpush1.msra.mxu0 0.0
    %3562 = vmatprep.subr.mxu0 0.0
    %3563 = vmatpush1.msra.mxu0 0.0
    %3564 = vmatprep.subr.mxu0 0.0
    %3565 = vmatpush1.msra.mxu0 0.0
    %3566 = vmatprep.subr.mxu0 0.0
    %3567 = vmatpush1.msra.mxu0 0.0
    %3568 = vmatprep.subr.mxu0 0.0
    %3569 = vmatpush1.msra.mxu0 0.0
    %3570 = vmatprep.subr.mxu0 0.0
    %3571 = vmatpush1.msra.mxu0 0.0
    %3572 = vmatprep.subr.mxu0 0.0
    %3573 = vmatpush1.msra.mxu0 0.0
    %3574 = vmatprep.subr.mxu0 0.0
    %3575 = vmatpush1.msra.mxu0 0.0
    %3576 = vmatprep.subr.mxu0 0.0
    %3577 = vmatpush1.msra.mxu0 0.0
    %3578 = vmatprep.subr.mxu0 0.0
    %3579 = vmatpush1.msra.mxu0 0.0
    %3580 = vmatprep.subr.mxu0 0.0
    %3581 = vmatpush1.msra.mxu0 0.0
    %3582 = vmatprep.subr.mxu0 0.0
    %3583 = vmatpush1.msra.mxu0 0.0
    %3584 = vmatprep.subr.mxu0 0.0
    %3585 = vmatpush1.msra.mxu0 0.0
    %3586 = vmatprep.subr.mxu0 0.0
    %3587 = vmatpush1.msra.mxu0 0.0
    %3588 = vmatprep.subr.mxu0 0.0
    %3589 = vmatpush1.msra.mxu0 0.0
    %3590 = vmatprep.subr.mxu0 0.0
    %3591 = vmatpush1.msra.mxu0 0.0
    %3592 = vmatprep.subr.mxu0 0.0
    %3593 = vmatpush1.msra.mxu0 0.0
    %3594 = vmatprep.subr.mxu0 0.0
    %3595 = vmatpush1.msra.mxu0 0.0
    %3596 = vmatprep.mubr.f32.mxu0 0.0
    %3597 = vmatmul.mubr.f32.gmra.mrb[0].mxu0 %v3530
    %v3598 = vpop.f32.mrb[0].mxu0
    %v3599 = vadd.f32 0.0, %v3598
    %v3600 = vpop.f32.mrb[0].mxu0
    %3601 = vdwg.mxu0
    %v3603 = vrot.slane %v3599, 3
    %v3605 = vadd.f32 %v2305, %v3603
    %v3606 = vrot.slane %v100, 3
    %v3608 = vadd.f32 %v3605, %v3606
    %v3609 = vxor.u32 %v3608, 2147483648
    %v3610 = vmul.f32 %v3609, 1.442695
    %v3611 = vpow.pop %v3610
    %v3612 = vadd.f32 %v3611, 1.0
    %v3613 = vrcp.pop %v3612
    %v3614 = vmul.f32 1.0, %v3613
    %v3615 = vadd.f32 %v2305, %v3606
    %v3616 = vadd.f32 %v3599, %v2390
    %v3618 = vrot.slane %v3616, 3
    %3619 = vrot.lane.b32.xlu0 %v3618, 64
    %v3620 = vpop.permute.xlu0 %3619
    %v3622 = vmul.f32 %v3614, %v3620
    %3624 = vrot.lane.b32.xlu0 %v3622, 64
    %v3625 = vpop.permute.xlu0 %3624
    %v3627 = vadd.f32 %v3615, %v3625
    %v3628 = vtanh.pop %v3627
    %v3629 = vsub.f32 1.0, %v3614
    %3631 = vrot.lane.b32.xlu0 %v3628, 96
    %v3632 = vpop.permute.xlu0 %3631
    %v3634 = vmul.f32 %v3629, %v3632
    %v3635 = vrot.slane %v3392, 7
    %v3637 = vmul.f32 %v3614, %v3635
    %v3638 = vadd.f32 %v3634, %v3637
    %v3640 = vrot.slane %v3515, 3
    %v3641 = vsel %vm125, %v3640, 0
    %3643 = vmatprep.subr.mxu0 0.0
    %3644 = vmatpush1.msra.mxu0 %v74
    %3645 = vmatprep.subr.mxu0 0.0
    %3646 = vmatpush1.msra.mxu0 %v75
    %3647 = vmatprep.subr.mxu0 0.0
    %3648 = vmatpush1.msra.mxu0 %v76
    %3649 = vmatprep.subr.mxu0 0.0
    %3650 = vmatpush1.msra.mxu0 %v77
    %3651 = vmatprep.subr.mxu0 0.0
    %3652 = vmatpush1.msra.mxu0 0.0
    %3653 = vmatprep.subr.mxu0 0.0
    %3654 = vmatpush1.msra.mxu0 0.0
    %3655 = vmatprep.subr.mxu0 0.0
    %3656 = vmatpush1.msra.mxu0 0.0
    %3657 = vmatprep.subr.mxu0 0.0
    %3658 = vmatpush1.msra.mxu0 0.0
    %3659 = vmatprep.subr.mxu0 0.0
    %3660 = vmatpush1.msra.mxu0 0.0
    %3661 = vmatprep.subr.mxu0 0.0
    %3662 = vmatpush1.msra.mxu0 0.0
    %3663 = vmatprep.subr.mxu0 0.0
    %3664 = vmatpush1.msra.mxu0 0.0
    %3665 = vmatprep.subr.mxu0 0.0
    %3666 = vmatpush1.msra.mxu0 0.0
    %3667 = vmatprep.subr.mxu0 0.0
    %3668 = vmatpush1.msra.mxu0 0.0
    %3669 = vmatprep.subr.mxu0 0.0
    %3670 = vmatpush1.msra.mxu0 0.0
    %3671 = vmatprep.subr.mxu0 0.0
    %3672 = vmatpush1.msra.mxu0 0.0
    %3673 = vmatprep.subr.mxu0 0.0
    %3674 = vmatpush1.msra.mxu0 0.0
    %3675 = vmatprep.subr.mxu0 0.0
    %3676 = vmatpush1.msra.mxu0 0.0
    %3677 = vmatprep.subr.mxu0 0.0
    %3678 = vmatpush1.msra.mxu0 0.0
    %3679 = vmatprep.subr.mxu0 0.0
    %3680 = vmatpush1.msra.mxu0 0.0
    %3681 = vmatprep.subr.mxu0 0.0
    %3682 = vmatpush1.msra.mxu0 0.0
    %3683 = vmatprep.subr.mxu0 0.0
    %3684 = vmatpush1.msra.mxu0 0.0
    %3685 = vmatprep.subr.mxu0 0.0
    %3686 = vmatpush1.msra.mxu0 0.0
    %3687 = vmatprep.subr.mxu0 0.0
    %3688 = vmatpush1.msra.mxu0 0.0
    %3689 = vmatprep.subr.mxu0 0.0
    %3690 = vmatpush1.msra.mxu0 0.0
    %3691 = vmatprep.subr.mxu0 0.0
    %3692 = vmatpush1.msra.mxu0 0.0
    %3693 = vmatprep.subr.mxu0 0.0
    %3694 = vmatpush1.msra.mxu0 0.0
    %3695 = vmatprep.subr.mxu0 0.0
    %3696 = vmatpush1.msra.mxu0 0.0
    %3697 = vmatprep.subr.mxu0 0.0
    %3698 = vmatpush1.msra.mxu0 0.0
    %3699 = vmatprep.subr.mxu0 0.0
    %3700 = vmatpush1.msra.mxu0 0.0
    %3701 = vmatprep.subr.mxu0 0.0
    %3702 = vmatpush1.msra.mxu0 0.0
    %3703 = vmatprep.subr.mxu0 0.0
    %3704 = vmatpush1.msra.mxu0 0.0
    %3705 = vmatprep.subr.mxu0 0.0
    %3706 = vmatpush1.msra.mxu0 0.0
    %3707 = vmatprep.mubr.f32.mxu0 0.0
    %3708 = vmatmul.mubr.f32.gmra.mrb[0].mxu0 %v3641
    %v3709 = vpop.f32.mrb[0].mxu0
    %v3710 = vadd.f32 0.0, %v3709
    %v3711 = vpop.f32.mrb[0].mxu0
    %3712 = vdwg.mxu0
    %v3714 = vrot.slane %v3710, 6
    %3715 = vrot.lane.b32.xlu0 %v3714, 96
    %v3716 = vpop.permute.xlu0 %3715
    %v3718 = vadd.f32 %v2305, %v3716
    %v3719 = vadd.f32 %v2307, %v3716
    %v3720 = vrot.slane %v101, 6
    %3721 = vrot.lane.b32.xlu0 %v3720, 96
    %v3722 = vpop.permute.xlu0 %3721
    %v3724 = vadd.f32 %v3718, %v3722
    %v3725 = vadd.f32 %v3719, %v3722
    %v3726 = vxor.u32 %v3724, 2147483648
    %v3727 = vxor.u32 %v3725, 2147483648
    %v3728 = vmul.f32 %v3726, 1.442695
    %v3729 = vpow.pop %v3728
    %v3730 = vmul.f32 %v3727, 1.442695
    %v3731 = vpow.pop %v3730
    %v3732 = vadd.f32 %v3729, 1.0
    %v3733 = vadd.f32 %v3731, 1.0
    %v3734 = vrcp.pop %v3732
    %v3735 = vmul.f32 1.0, %v3734
    %v3736 = vrcp.pop %v3733
    %v3737 = vmul.f32 1.0, %v3736
    %v3738 = vadd.f32 %v2307, %v3722
    %v3739 = vadd.f32 %v3710, %v2510
    %v3741 = vrot.slane %v3739, 6
    %3742 = vrot.lane.b32.xlu0 %v3741, 32
    %v3743 = vpop.permute.xlu0 %3742
    %v3745 = vmul.f32 %v3735, %v3743
    %3747 = vrot.lane.b32.xlu0 %v3745, 64
    %v3748 = vpop.permute.xlu0 %3747
    %v3750 = vadd.f32 %v3738, %v3748
    %v3751 = vtanh.pop %v3750
    %v3752 = vsub.f32 1.0, %v3737
    %3754 = vrot.lane.b32.xlu0 %v3751, 96
    %v3755 = vpop.permute.xlu0 %3754
    %v3757 = vmul.f32 %v3752, %v3755
    %v3758 = vrot.slane %v3515, 1
    %v3760 = vmul.f32 %v3737, %v3758
    %v3761 = vadd.f32 %v3757, %v3760
    %v3762 = vlaneseq
    %v3763 = vshrl.u32 %v3762, 7
    %v3764 = vsub.s32 5, %v3763
    %v3765 = vrot.slane %v3638, %v3764
    %v3766 = vsel %vm928, %v3765, %v3520
    %v3767 = vlaneseq
    %v3768 = vshrl.u32 %v3767, 7
    %v3769 = vsub.s32 2, %v3768
    %v3770 = vrot.slane %v3761, %v3769
    %v3771 = vsel %vm922, %v3770, %v3525
    %v3773 = vrot.slane %v3638, 5
    %3774 = vrot.lane.b32.xlu0 %v3773, 96
    %v3775 = vpop.permute.xlu0 %3774
    %v3776 = vsel %vm125, %v3775, 0
    %3778 = vmatprep.subr.mxu0 0.0
    %3779 = vmatpush1.msra.mxu0 %v70
    %3780 = vmatprep.subr.mxu0 0.0
    %3781 = vmatpush1.msra.mxu0 %v71
    %3782 = vmatprep.subr.mxu0 0.0
    %3783 = vmatpush1.msra.mxu0 %v72
    %3784 = vmatprep.subr.mxu0 0.0
    %3785 = vmatpush1.msra.mxu0 %v73
    %3786 = vmatprep.subr.mxu0 0.0
    %3787 = vmatpush1.msra.mxu0 0.0
    %3788 = vmatprep.subr.mxu0 0.0
    %3789 = vmatpush1.msra.mxu0 0.0
    %3790 = vmatprep.subr.mxu0 0.0
    %3791 = vmatpush1.msra.mxu0 0.0
    %3792 = vmatprep.subr.mxu0 0.0
    %3793 = vmatpush1.msra.mxu0 0.0
    %3794 = vmatprep.subr.mxu0 0.0
    %3795 = vmatpush1.msra.mxu0 0.0
    %3796 = vmatprep.subr.mxu0 0.0
    %3797 = vmatpush1.msra.mxu0 0.0
    %3798 = vmatprep.subr.mxu0 0.0
    %3799 = vmatpush1.msra.mxu0 0.0
    %3800 = vmatprep.subr.mxu0 0.0
    %3801 = vmatpush1.msra.mxu0 0.0
    %3802 = vmatprep.subr.mxu0 0.0
    %3803 = vmatpush1.msra.mxu0 0.0
    %3804 = vmatprep.subr.mxu0 0.0
    %3805 = vmatpush1.msra.mxu0 0.0
    %3806 = vmatprep.subr.mxu0 0.0
    %3807 = vmatpush1.msra.mxu0 0.0
    %3808 = vmatprep.subr.mxu0 0.0
    %3809 = vmatpush1.msra.mxu0 0.0
    %3810 = vmatprep.subr.mxu0 0.0
    %3811 = vmatpush1.msra.mxu0 0.0
    %3812 = vmatprep.subr.mxu0 0.0
    %3813 = vmatpush1.msra.mxu0 0.0
    %3814 = vmatprep.subr.mxu0 0.0
    %3815 = vmatpush1.msra.mxu0 0.0
    %3816 = vmatprep.subr.mxu0 0.0
    %3817 = vmatpush1.msra.mxu0 0.0
    %3818 = vmatprep.subr.mxu0 0.0
    %3819 = vmatpush1.msra.mxu0 0.0
    %3820 = vmatprep.subr.mxu0 0.0
    %3821 = vmatpush1.msra.mxu0 0.0
    %3822 = vmatprep.subr.mxu0 0.0
    %3823 = vmatpush1.msra.mxu0 0.0
    %3824 = vmatprep.subr.mxu0 0.0
    %3825 = vmatpush1.msra.mxu0 0.0
    %3826 = vmatprep.subr.mxu0 0.0
    %3827 = vmatpush1.msra.mxu0 0.0
    %3828 = vmatprep.subr.mxu0 0.0
    %3829 = vmatpush1.msra.mxu0 0.0
    %3830 = vmatprep.subr.mxu0 0.0
    %3831 = vmatpush1.msra.mxu0 0.0
    %3832 = vmatprep.subr.mxu0 0.0
    %3833 = vmatpush1.msra.mxu0 0.0
    %3834 = vmatprep.subr.mxu0 0.0
    %3835 = vmatpush1.msra.mxu0 0.0
    %3836 = vmatprep.subr.mxu0 0.0
    %3837 = vmatpush1.msra.mxu0 0.0
    %3838 = vmatprep.subr.mxu0 0.0
    %3839 = vmatpush1.msra.mxu0 0.0
    %3840 = vmatprep.subr.mxu0 0.0
    %3841 = vmatpush1.msra.mxu0 0.0
    %3842 = vmatprep.mubr.f32.mxu0 0.0
    %3843 = vmatmul.mubr.f32.gmra.mrb[0].mxu0 %v3776
    %v3844 = vpop.f32.mrb[0].mxu0
    %v3845 = vadd.f32 0.0, %v3844
    %v3846 = vpop.f32.mrb[0].mxu0
    %3847 = vdwg.mxu0
    %v3849 = vrot.slane %v3845, 2
    %v3851 = vadd.f32 %v2305, %v3849
    %v3852 = vrot.slane %v100, 2
    %v3854 = vadd.f32 %v3851, %v3852
    %v3855 = vxor.u32 %v3854, 2147483648
    %v3856 = vmul.f32 %v3855, 1.442695
    %v3857 = vpow.pop %v3856
    %v3858 = vadd.f32 %v3857, 1.0
    %v3859 = vrcp.pop %v3858
    %v3860 = vmul.f32 1.0, %v3859
    %v3861 = vadd.f32 %v2305, %v3852
    %v3862 = vadd.f32 %v3845, %v2390
    %v3864 = vrot.slane %v3862, 2
    %3865 = vrot.lane.b32.xlu0 %v3864, 64
    %v3866 = vpop.permute.xlu0 %3865
    %v3868 = vmul.f32 %v3860, %v3866
    %3870 = vrot.lane.b32.xlu0 %v3868, 64
    %v3871 = vpop.permute.xlu0 %3870
    %v3873 = vadd.f32 %v3861, %v3871
    %v3874 = vtanh.pop %v3873
    %v3875 = vsub.f32 1.0, %v3860
    %3877 = vrot.lane.b32.xlu0 %v3874, 96
    %v3878 = vpop.permute.xlu0 %3877
    %v3880 = vmul.f32 %v3875, %v3878
    %v3881 = vrot.slane %v3638, 7
    %v3883 = vmul.f32 %v3860, %v3881
    %v3884 = vadd.f32 %v3880, %v3883
    %v3886 = vrot.slane %v3761, 2
    %v3887 = vsel %vm125, %v3886, 0
    %3889 = vmatprep.subr.mxu0 0.0
    %3890 = vmatpush1.msra.mxu0 %v74
    %3891 = vmatprep.subr.mxu0 0.0
    %3892 = vmatpush1.msra.mxu0 %v75
    %3893 = vmatprep.subr.mxu0 0.0
    %3894 = vmatpush1.msra.mxu0 %v76
    %3895 = vmatprep.subr.mxu0 0.0
    %3896 = vmatpush1.msra.mxu0 %v77
    %3897 = vmatprep.subr.mxu0 0.0
    %3898 = vmatpush1.msra.mxu0 0.0
    %3899 = vmatprep.subr.mxu0 0.0
    %3900 = vmatpush1.msra.mxu0 0.0
    %3901 = vmatprep.subr.mxu0 0.0
    %3902 = vmatpush1.msra.mxu0 0.0
    %3903 = vmatprep.subr.mxu0 0.0
    %3904 = vmatpush1.msra.mxu0 0.0
    %3905 = vmatprep.subr.mxu0 0.0
    %3906 = vmatpush1.msra.mxu0 0.0
    %3907 = vmatprep.subr.mxu0 0.0
    %3908 = vmatpush1.msra.mxu0 0.0
    %3909 = vmatprep.subr.mxu0 0.0
    %3910 = vmatpush1.msra.mxu0 0.0
    %3911 = vmatprep.subr.mxu0 0.0
    %3912 = vmatpush1.msra.mxu0 0.0
    %3913 = vmatprep.subr.mxu0 0.0
    %3914 = vmatpush1.msra.mxu0 0.0
    %3915 = vmatprep.subr.mxu0 0.0
    %3916 = vmatpush1.msra.mxu0 0.0
    %3917 = vmatprep.subr.mxu0 0.0
    %3918 = vmatpush1.msra.mxu0 0.0
    %3919 = vmatprep.subr.mxu0 0.0
    %3920 = vmatpush1.msra.mxu0 0.0
    %3921 = vmatprep.subr.mxu0 0.0
    %3922 = vmatpush1.msra.mxu0 0.0
    %3923 = vmatprep.subr.mxu0 0.0
    %3924 = vmatpush1.msra.mxu0 0.0
    %3925 = vmatprep.subr.mxu0 0.0
    %3926 = vmatpush1.msra.mxu0 0.0
    %3927 = vmatprep.subr.mxu0 0.0
    %3928 = vmatpush1.msra.mxu0 0.0
    %3929 = vmatprep.subr.mxu0 0.0
    %3930 = vmatpush1.msra.mxu0 0.0
    %3931 = vmatprep.subr.mxu0 0.0
    %3932 = vmatpush1.msra.mxu0 0.0
    %3933 = vmatprep.subr.mxu0 0.0
    %3934 = vmatpush1.msra.mxu0 0.0
    %3935 = vmatprep.subr.mxu0 0.0
    %3936 = vmatpush1.msra.mxu0 0.0
    %3937 = vmatprep.subr.mxu0 0.0
    %3938 = vmatpush1.msra.mxu0 0.0
    %3939 = vmatprep.subr.mxu0 0.0
    %3940 = vmatpush1.msra.mxu0 0.0
    %3941 = vmatprep.subr.mxu0 0.0
    %3942 = vmatpush1.msra.mxu0 0.0
    %3943 = vmatprep.subr.mxu0 0.0
    %3944 = vmatpush1.msra.mxu0 0.0
    %3945 = vmatprep.subr.mxu0 0.0
    %3946 = vmatpush1.msra.mxu0 0.0
    %3947 = vmatprep.subr.mxu0 0.0
    %3948 = vmatpush1.msra.mxu0 0.0
    %3949 = vmatprep.subr.mxu0 0.0
    %3950 = vmatpush1.msra.mxu0 0.0
    %3951 = vmatprep.subr.mxu0 0.0
    %3952 = vmatpush1.msra.mxu0 0.0
    %3953 = vmatprep.mubr.f32.mxu0 0.0
    %3954 = vmatmul.mubr.f32.gmra.mrb[0].mxu0 %v3887
    %v3955 = vpop.f32.mrb[0].mxu0
    %v3956 = vadd.f32 0.0, %v3955
    %v3957 = vpop.f32.mrb[0].mxu0
    %3958 = vdwg.mxu0
    %v3960 = vrot.slane %v3956, 7
    %3961 = vrot.lane.b32.xlu0 %v3960, 96
    %v3962 = vpop.permute.xlu0 %3961
    %v3964 = vadd.f32 %v2305, %v3962
    %v3965 = vadd.f32 %v2307, %v3962
    %v3966 = vrot.slane %v101, 7
    %3967 = vrot.lane.b32.xlu0 %v3966, 96
    %v3968 = vpop.permute.xlu0 %3967
    %v3970 = vadd.f32 %v3964, %v3968
    %v3971 = vadd.f32 %v3965, %v3968
    %v3972 = vxor.u32 %v3970, 2147483648
    %v3973 = vxor.u32 %v3971, 2147483648
    %v3974 = vmul.f32 %v3972, 1.442695
    %v3975 = vpow.pop %v3974
    %v3976 = vmul.f32 %v3973, 1.442695
    %v3977 = vpow.pop %v3976
    %v3978 = vadd.f32 %v3975, 1.0
    %v3979 = vadd.f32 %v3977, 1.0
    %v3980 = vrcp.pop %v3978
    %v3981 = vmul.f32 1.0, %v3980
    %v3982 = vrcp.pop %v3979
    %v3983 = vmul.f32 1.0, %v3982
    %v3984 = vadd.f32 %v2307, %v3968
    %v3985 = vadd.f32 %v3956, %v2510
    %v3987 = vrot.slane %v3985, 7
    %3988 = vrot.lane.b32.xlu0 %v3987, 32
    %v3989 = vpop.permute.xlu0 %3988
    %v3991 = vmul.f32 %v3981, %v3989
    %3993 = vrot.lane.b32.xlu0 %v3991, 64
    %v3994 = vpop.permute.xlu0 %3993
    %v3996 = vadd.f32 %v3984, %v3994
    %v3997 = vtanh.pop %v3996
    %v3998 = vsub.f32 1.0, %v3983
    %4000 = vrot.lane.b32.xlu0 %v3997, 96
    %v4001 = vpop.permute.xlu0 %4000
    %v4003 = vmul.f32 %v3998, %v4001
    %v4004 = vrot.slane %v3761, 1
    %v4006 = vmul.f32 %v3983, %v4004
    %v4007 = vadd.f32 %v4003, %v4006
    %v4008 = vlaneseq
    %v4009 = vshrl.u32 %v4008, 7
    %v4010 = vsub.s32 6, %v4009
    %v4011 = vrot.slane %v3884, %v4010
    %v4012 = vsel %vm680, %v4011, %v3766
    %v4013 = vlaneseq
    %v4014 = vshrl.u32 %v4013, 7
    %v4015 = vsub.s32 1, %v4014
    %v4016 = vrot.slane %v4007, %v4015
    %v4017 = vsel %vm674, %v4016, %v3771
    %v4019 = vrot.slane %v3884, 6
    %4020 = vrot.lane.b32.xlu0 %v4019, 96
    %v4021 = vpop.permute.xlu0 %4020
    %v4022 = vsel %vm125, %v4021, 0
    %4024 = vmatprep.subr.mxu0 0.0
    %4025 = vmatpush1.msra.mxu0 %v70
    %4026 = vmatprep.subr.mxu0 0.0
    %4027 = vmatpush1.msra.mxu0 %v71
    %4028 = vmatprep.subr.mxu0 0.0
    %4029 = vmatpush1.msra.mxu0 %v72
    %4030 = vmatprep.subr.mxu0 0.0
    %4031 = vmatpush1.msra.mxu0 %v73
    %4032 = vmatprep.subr.mxu0 0.0
    %4033 = vmatpush1.msra.mxu0 0.0
    %4034 = vmatprep.subr.mxu0 0.0
    %4035 = vmatpush1.msra.mxu0 0.0
    %4036 = vmatprep.subr.mxu0 0.0
    %4037 = vmatpush1.msra.mxu0 0.0
    %4038 = vmatprep.subr.mxu0 0.0
    %4039 = vmatpush1.msra.mxu0 0.0
    %4040 = vmatprep.subr.mxu0 0.0
    %4041 = vmatpush1.msra.mxu0 0.0
    %4042 = vmatprep.subr.mxu0 0.0
    %4043 = vmatpush1.msra.mxu0 0.0
    %4044 = vmatprep.subr.mxu0 0.0
    %4045 = vmatpush1.msra.mxu0 0.0
    %4046 = vmatprep.subr.mxu0 0.0
    %4047 = vmatpush1.msra.mxu0 0.0
    %4048 = vmatprep.subr.mxu0 0.0
    %4049 = vmatpush1.msra.mxu0 0.0
    %4050 = vmatprep.subr.mxu0 0.0
    %4051 = vmatpush1.msra.mxu0 0.0
    %4052 = vmatprep.subr.mxu0 0.0
    %4053 = vmatpush1.msra.mxu0 0.0
    %4054 = vmatprep.subr.mxu0 0.0
    %4055 = vmatpush1.msra.mxu0 0.0
    %4056 = vmatprep.subr.mxu0 0.0
    %4057 = vmatpush1.msra.mxu0 0.0
    %4058 = vmatprep.subr.mxu0 0.0
    %4059 = vmatpush1.msra.mxu0 0.0
    %4060 = vmatprep.subr.mxu0 0.0
    %4061 = vmatpush1.msra.mxu0 0.0
    %4062 = vmatprep.subr.mxu0 0.0
    %4063 = vmatpush1.msra.mxu0 0.0
    %4064 = vmatprep.subr.mxu0 0.0
    %4065 = vmatpush1.msra.mxu0 0.0
    %4066 = vmatprep.subr.mxu0 0.0
    %4067 = vmatpush1.msra.mxu0 0.0
    %4068 = vmatprep.subr.mxu0 0.0
    %4069 = vmatpush1.msra.mxu0 0.0
    %4070 = vmatprep.subr.mxu0 0.0
    %4071 = vmatpush1.msra.mxu0 0.0
    %4072 = vmatprep.subr.mxu0 0.0
    %4073 = vmatpush1.msra.mxu0 0.0
    %4074 = vmatprep.subr.mxu0 0.0
    %4075 = vmatpush1.msra.mxu0 0.0
    %4076 = vmatprep.subr.mxu0 0.0
    %4077 = vmatpush1.msra.mxu0 0.0
    %4078 = vmatprep.subr.mxu0 0.0
    %4079 = vmatpush1.msra.mxu0 0.0
    %4080 = vmatprep.subr.mxu0 0.0
    %4081 = vmatpush1.msra.mxu0 0.0
    %4082 = vmatprep.subr.mxu0 0.0
    %4083 = vmatpush1.msra.mxu0 0.0
    %4084 = vmatprep.subr.mxu0 0.0
    %4085 = vmatpush1.msra.mxu0 0.0
    %4086 = vmatprep.subr.mxu0 0.0
    %4087 = vmatpush1.msra.mxu0 0.0
    %4088 = vmatprep.mubr.f32.mxu0 0.0
    %4089 = vmatmul.mubr.f32.gmra.mrb[0].mxu0 %v4022
    %v4090 = vpop.f32.mrb[0].mxu0
    %v4091 = vadd.f32 0.0, %v4090
    %v4092 = vpop.f32.mrb[0].mxu0
    %4093 = vdwg.mxu0
    %v4095 = vrot.slane %v4091, 1
    %v4097 = vadd.f32 %v2305, %v4095
    %v4098 = vrot.slane %v100, 1
    %v4100 = vadd.f32 %v4097, %v4098
    %v4101 = vxor.u32 %v4100, 2147483648
    %v4102 = vmul.f32 %v4101, 1.442695
    %v4103 = vpow.pop %v4102
    %v4104 = vadd.f32 %v4103, 1.0
    %v4105 = vrcp.pop %v4104
    %v4106 = vmul.f32 1.0, %v4105
    %v4107 = vadd.f32 %v2305, %v4098
    %v4108 = vadd.f32 %v4091, %v2390
    %v4110 = vrot.slane %v4108, 1
    %4111 = vrot.lane.b32.xlu0 %v4110, 64
    %v4112 = vpop.permute.xlu0 %4111
    %v4114 = vmul.f32 %v4106, %v4112
    %4116 = vrot.lane.b32.xlu0 %v4114, 64
    %v4117 = vpop.permute.xlu0 %4116
    %v4119 = vadd.f32 %v4107, %v4117
    %v4120 = vtanh.pop %v4119
    %v4121 = vsub.f32 1.0, %v4106
    %4123 = vrot.lane.b32.xlu0 %v4120, 96
    %v4124 = vpop.permute.xlu0 %4123
    %v4126 = vmul.f32 %v4121, %v4124
    %v4127 = vrot.slane %v3884, 7
    %v4129 = vmul.f32 %v4106, %v4127
    %v4130 = vadd.f32 %v4126, %v4129
    %v4132 = vrot.slane %v4007, 1
    %v4133 = vsel %vm125, %v4132, 0
    %4135 = vmatprep.subr.mxu0 0.0
    %4136 = vmatpush1.msra.mxu0 %v74
    %4137 = vmatprep.subr.mxu0 0.0
    %4138 = vmatpush1.msra.mxu0 %v75
    %4139 = vmatprep.subr.mxu0 0.0
    %4140 = vmatpush1.msra.mxu0 %v76
    %4141 = vmatprep.subr.mxu0 0.0
    %4142 = vmatpush1.msra.mxu0 %v77
    %4143 = vmatprep.subr.mxu0 0.0
    %4144 = vmatpush1.msra.mxu0 0.0
    %4145 = vmatprep.subr.mxu0 0.0
    %4146 = vmatpush1.msra.mxu0 0.0
    %4147 = vmatprep.subr.mxu0 0.0
    %4148 = vmatpush1.msra.mxu0 0.0
    %4149 = vmatprep.subr.mxu0 0.0
    %4150 = vmatpush1.msra.mxu0 0.0
    %4151 = vmatprep.subr.mxu0 0.0
    %4152 = vmatpush1.msra.mxu0 0.0
    %4153 = vmatprep.subr.mxu0 0.0
    %4154 = vmatpush1.msra.mxu0 0.0
    %4155 = vmatprep.subr.mxu0 0.0
    %4156 = vmatpush1.msra.mxu0 0.0
    %4157 = vmatprep.subr.mxu0 0.0
    %4158 = vmatpush1.msra.mxu0 0.0
    %4159 = vmatprep.subr.mxu0 0.0
    %4160 = vmatpush1.msra.mxu0 0.0
    %4161 = vmatprep.subr.mxu0 0.0
    %4162 = vmatpush1.msra.mxu0 0.0
    %4163 = vmatprep.subr.mxu0 0.0
    %4164 = vmatpush1.msra.mxu0 0.0
    %4165 = vmatprep.subr.mxu0 0.0
    %4166 = vmatpush1.msra.mxu0 0.0
    %4167 = vmatprep.subr.mxu0 0.0
    %4168 = vmatpush1.msra.mxu0 0.0
    %4169 = vmatprep.subr.mxu0 0.0
    %4170 = vmatpush1.msra.mxu0 0.0
    %4171 = vmatprep.subr.mxu0 0.0
    %4172 = vmatpush1.msra.mxu0 0.0
    %4173 = vmatprep.subr.mxu0 0.0
    %4174 = vmatpush1.msra.mxu0 0.0
    %4175 = vmatprep.subr.mxu0 0.0
    %4176 = vmatpush1.msra.mxu0 0.0
    %4177 = vmatprep.subr.mxu0 0.0
    %4178 = vmatpush1.msra.mxu0 0.0
    %4179 = vmatprep.subr.mxu0 0.0
    %4180 = vmatpush1.msra.mxu0 0.0
    %4181 = vmatprep.subr.mxu0 0.0
    %4182 = vmatpush1.msra.mxu0 0.0
    %4183 = vmatprep.subr.mxu0 0.0
    %4184 = vmatpush1.msra.mxu0 0.0
    %4185 = vmatprep.subr.mxu0 0.0
    %4186 = vmatpush1.msra.mxu0 0.0
    %4187 = vmatprep.subr.mxu0 0.0
    %4188 = vmatpush1.msra.mxu0 0.0
    %4189 = vmatprep.subr.mxu0 0.0
    %4190 = vmatpush1.msra.mxu0 0.0
    %4191 = vmatprep.subr.mxu0 0.0
    %4192 = vmatpush1.msra.mxu0 0.0
    %4193 = vmatprep.subr.mxu0 0.0
    %4194 = vmatpush1.msra.mxu0 0.0
    %4195 = vmatprep.subr.mxu0 0.0
    %4196 = vmatpush1.msra.mxu0 0.0
    %4197 = vmatprep.subr.mxu0 0.0
    %4198 = vmatpush1.msra.mxu0 0.0
    %4199 = vmatprep.mubr.f32.mxu0 0.0
    %4200 = vmatmul.mubr.f32.gmra.mrb[0].mxu0 %v4133
    %v4201 = vpop.f32.mrb[0].mxu0
    %v4202 = vadd.f32 0.0, %v4201
    %v4203 = vpop.f32.mrb[0].mxu0
    %4204 = vdwg.mxu0
    %4206 = vrot.lane.b32.xlu0 %v4202, 96
    %v4207 = vpop.permute.xlu0 %4206
    %v4209 = vadd.f32 %v2305, %v4207
    %v4210 = vadd.f32 %v2307, %v4207
    %v4211 = vadd.f32 %v4209, %v2510
    %v4212 = vadd.f32 %v4210, %v2510
    %v4213 = vxor.u32 %v4211, 2147483648
    %v4214 = vxor.u32 %v4212, 2147483648
    %v4215 = vmul.f32 %v4213, 1.442695
    %v4216 = vpow.pop %v4215
    %v4217 = vmul.f32 %v4214, 1.442695
    %v4218 = vpow.pop %v4217
    %v4219 = vadd.f32 %v4216, 1.0
    %v4220 = vadd.f32 %v4218, 1.0
    %v4221 = vrcp.pop %v4219
    %v4222 = vmul.f32 1.0, %v4221
    %v4223 = vrcp.pop %v4220
    %v4224 = vmul.f32 1.0, %v4223
    %v4225 = vadd.f32 %v2307, %v2510
    %v4226 = vadd.f32 %v4202, %v2510
    %4228 = vrot.lane.b32.xlu0 %v4226, 32
    %v4229 = vpop.permute.xlu0 %4228
    %v4231 = vmul.f32 %v4222, %v4229
    %4233 = vrot.lane.b32.xlu0 %v4231, 64
    %v4234 = vpop.permute.xlu0 %4233
    %v4236 = vadd.f32 %v4225, %v4234
    %v4237 = vtanh.pop %v4236
    %v4238 = vsub.f32 1.0, %v4224
    %4240 = vrot.lane.b32.xlu0 %v4237, 96
    %v4241 = vpop.permute.xlu0 %4240
    %v4243 = vmul.f32 %v4238, %v4241
    %v4245 = vmul.f32 %v4224, %v4132
    %v4246 = vadd.f32 %v4243, %v4245
    %v4247 = vlaneseq
    %v4248 = vshrl.u32 %v4247, 7
    %v4249 = vsub.s32 7, %v4248
    %v4250 = vrot.slane %v4130, %v4249
    %v4251 = vsel %vm433, %v4250, %v4012
    %v4252 = vlaneseq
    %v4253 = vshrl.u32 %v4252, 7
    %v4254 = vsub.s32 0, %v4253
    %v4255 = vrot.slane %v4246, %v4254
    %v4256 = vsel %vm427, %v4255, %v4017
    %4258 = vrot.lane.b32.xlu0 %v4256, 32
    %v4259 = vpop.permute.xlu0 %4258
    %v4261 = vadd.f32 %v4251, %v4259
    %4263 = vrot.lane.b32.xlu0 %v4261, 96
    %v4264 = vpop.permute.xlu0 %4263
    %v4265 = vsel %vm125, %v4264, 0
    %4267 = vmatprep.subr.mxu0 0.0
    %4268 = vmatpush1.msra.mxu0 %v116
    %4269 = vmatprep.subr.mxu0 0.0
    %4270 = vmatpush1.msra.mxu0 %v117
    %4271 = vmatprep.subr.mxu0 0.0
    %4272 = vmatpush1.msra.mxu0 %v118
    %4273 = vmatprep.subr.mxu0 0.0
    %4274 = vmatpush1.msra.mxu0 %v119
    %4275 = vmatprep.subr.mxu0 0.0
    %4276 = vmatpush1.msra.mxu0 0.0
    %4277 = vmatprep.subr.mxu0 0.0
    %4278 = vmatpush1.msra.mxu0 0.0
    %4279 = vmatprep.subr.mxu0 0.0
    %4280 = vmatpush1.msra.mxu0 0.0
    %4281 = vmatprep.subr.mxu0 0.0
    %4282 = vmatpush1.msra.mxu0 0.0
    %4283 = vmatprep.subr.mxu0 0.0
    %4284 = vmatpush1.msra.mxu0 0.0
    %4285 = vmatprep.subr.mxu0 0.0
    %4286 = vmatpush1.msra.mxu0 0.0
    %4287 = vmatprep.subr.mxu0 0.0
    %4288 = vmatpush1.msra.mxu0 0.0
    %4289 = vmatprep.subr.mxu0 0.0
    %4290 = vmatpush1.msra.mxu0 0.0
    %4291 = vmatprep.subr.mxu0 0.0
    %4292 = vmatpush1.msra.mxu0 0.0
    %4293 = vmatprep.subr.mxu0 0.0
    %4294 = vmatpush1.msra.mxu0 0.0
    %4295 = vmatprep.subr.mxu0 0.0
    %4296 = vmatpush1.msra.mxu0 0.0
    %4297 = vmatprep.subr.mxu0 0.0
    %4298 = vmatpush1.msra.mxu0 0.0
    %4299 = vmatprep.subr.mxu0 0.0
    %4300 = vmatpush1.msra.mxu0 0.0
    %4301 = vmatprep.subr.mxu0 0.0
    %4302 = vmatpush1.msra.mxu0 0.0
    %4303 = vmatprep.subr.mxu0 0.0
    %4304 = vmatpush1.msra.mxu0 0.0
    %4305 = vmatprep.subr.mxu0 0.0
    %4306 = vmatpush1.msra.mxu0 0.0
    %4307 = vmatprep.subr.mxu0 0.0
    %4308 = vmatpush1.msra.mxu0 0.0
    %4309 = vmatprep.subr.mxu0 0.0
    %4310 = vmatpush1.msra.mxu0 0.0
    %4311 = vmatprep.subr.mxu0 0.0
    %4312 = vmatpush1.msra.mxu0 0.0
    %4313 = vmatprep.subr.mxu0 0.0
    %4314 = vmatpush1.msra.mxu0 0.0
    %4315 = vmatprep.subr.mxu0 0.0
    %4316 = vmatpush1.msra.mxu0 0.0
    %4317 = vmatprep.subr.mxu0 0.0
    %4318 = vmatpush1.msra.mxu0 0.0
    %4319 = vmatprep.subr.mxu0 0.0
    %4320 = vmatpush1.msra.mxu0 0.0
    %4321 = vmatprep.subr.mxu0 0.0
    %4322 = vmatpush1.msra.mxu0 0.0
    %4323 = vmatprep.subr.mxu0 0.0
    %4324 = vmatpush1.msra.mxu0 0.0
    %4325 = vmatprep.subr.mxu0 0.0
    %4326 = vmatpush1.msra.mxu0 0.0
    %4327 = vmatprep.subr.mxu0 0.0
    %4328 = vmatpush1.msra.mxu0 0.0
    %4329 = vmatprep.subr.mxu0 0.0
    %4330 = vmatpush1.msra.mxu0 0.0
    %4331 = vmatprep.mubr.f32.mxu0 0.0
    %4332 = vmatmul.mubr.f32.gmra.mrb[0].mxu0 %v4265
    %v4333 = vpop.f32.mrb[0].mxu0
    %v4334 = vadd.f32 0.0, %v4333
    %v4335 = vpop.f32.mrb[0].mxu0
    %4336 = vdwg.mxu0
    %v4337 = vlaneseq
    %v4338 = vand.u32 %v4337, 127
    %vm4339 = vcmp.eq.s32.totalorder %v4338, 1
    %v4340 = vsel %vm4339, 1, 0
    %v4341 = vcvt.s32.f32 %v4340
    %vm4342 = vcmask 523264
    %v4344 = vsel %vm4342, %v4341, 0
    %4346 = vmatprep.subr.mxu0 0.0
    %4347 = vmatpush1.msra.mxu0 %v90
    %4348 = vmatprep.subr.mxu0 0.0
    %4349 = vmatpush1.msra.mxu0 %v91
    %4350 = vmatprep.subr.mxu0 0.0
    %4351 = vmatpush1.msra.mxu0 %v92
    %4352 = vmatprep.subr.mxu0 0.0
    %4353 = vmatpush1.msra.mxu0 %v93
    %4354 = vmatprep.subr.mxu0 0.0
    %4355 = vmatpush1.msra.mxu0 %v94
    %4356 = vmatprep.subr.mxu0 0.0
    %4357 = vmatpush1.msra.mxu0 %v95
    %4358 = vmatprep.subr.mxu0 0.0
    %4359 = vmatpush1.msra.mxu0 %v96
    %4360 = vmatprep.subr.mxu0 0.0
    %4361 = vmatpush1.msra.mxu0 %v97
    %4362 = vmatprep.subr.mxu0 0.0
    %4363 = vmatpush1.msra.mxu0 0.0
    %4364 = vmatprep.subr.mxu0 0.0
    %4365 = vmatpush1.msra.mxu0 0.0
    %4366 = vmatprep.subr.mxu0 0.0
    %4367 = vmatpush1.msra.mxu0 0.0
    %4368 = vmatprep.subr.mxu0 0.0
    %4369 = vmatpush1.msra.mxu0 0.0
    %4370 = vmatprep.subr.mxu0 0.0
    %4371 = vmatpush1.msra.mxu0 0.0
    %4372 = vmatprep.subr.mxu0 0.0
    %4373 = vmatpush1.msra.mxu0 0.0
    %4374 = vmatprep.subr.mxu0 0.0
    %4375 = vmatpush1.msra.mxu0 0.0
    %4376 = vmatprep.subr.mxu0 0.0
    %4377 = vmatpush1.msra.mxu0 0.0
    %4378 = vmatprep.subr.mxu0 0.0
    %4379 = vmatpush1.msra.mxu0 0.0
    %4380 = vmatprep.subr.mxu0 0.0
    %4381 = vmatpush1.msra.mxu0 0.0
    %4382 = vmatprep.subr.mxu0 0.0
    %4383 = vmatpush1.msra.mxu0 0.0
    %4384 = vmatprep.subr.mxu0 0.0
    %4385 = vmatpush1.msra.mxu0 0.0
    %4386 = vmatprep.subr.mxu0 0.0
    %4387 = vmatpush1.msra.mxu0 0.0
    %4388 = vmatprep.subr.mxu0 0.0
    %4389 = vmatpush1.msra.mxu0 0.0
    %4390 = vmatprep.subr.mxu0 0.0
    %4391 = vmatpush1.msra.mxu0 0.0
    %4392 = vmatprep.subr.mxu0 0.0
    %4393 = vmatpush1.msra.mxu0 0.0
    %4394 = vmatprep.subr.mxu0 0.0
    %4395 = vmatpush1.msra.mxu0 0.0
    %4396 = vmatprep.subr.mxu0 0.0
    %4397 = vmatpush1.msra.mxu0 0.0
    %4398 = vmatprep.subr.mxu0 0.0
    %4399 = vmatpush1.msra.mxu0 0.0
    %4400 = vmatprep.subr.mxu0 0.0
    %4401 = vmatpush1.msra.mxu0 0.0
    %4402 = vmatprep.subr.mxu0 0.0
    %4403 = vmatpush1.msra.mxu0 0.0
    %4404 = vmatprep.subr.mxu0 0.0
    %4405 = vmatpush1.msra.mxu0 0.0
    %4406 = vmatprep.subr.mxu0 0.0
    %4407 = vmatpush1.msra.mxu0 0.0
    %4408 = vmatprep.subr.mxu0 0.0
    %4409 = vmatpush1.msra.mxu0 0.0
    %4410 = vmatprep.mubr.f32.mxu0 0.0
    %4411 = vmatmul.mubr.f32.gmra.mrb[0].mxu0 %v4344
    %v4412 = vpop.f32.mrb[0].mxu0
    %v4413 = vadd.f32 0.0, %v4412
    %v4414 = vpop.f32.mrb[0].mxu0
    %4415 = vdwg.mxu0
    %v4417 = vrot.slane %v2032, 7
    %4418 = vrot.lane.b32.xlu0 %v4417, 96
    %v4419 = vpop.permute.xlu0 %4418
    %v4420 = vsel %vm125, %v4419, 0
    %4422 = vmatprep.subr.mxu0 0.0
    %4423 = vmatpush1.msra.mxu0 %v78
    %4424 = vmatprep.subr.mxu0 0.0
    %4425 = vmatpush1.msra.mxu0 %v79
    %4426 = vmatprep.subr.mxu0 0.0
    %4427 = vmatpush1.msra.mxu0 %v80
    %4428 = vmatprep.subr.mxu0 0.0
    %4429 = vmatpush1.msra.mxu0 %v81
    %4430 = vmatprep.subr.mxu0 0.0
    %4431 = vmatpush1.msra.mxu0 0.0
    %4432 = vmatprep.subr.mxu0 0.0
    %4433 = vmatpush1.msra.mxu0 0.0
    %4434 = vmatprep.subr.mxu0 0.0
    %4435 = vmatpush1.msra.mxu0 0.0
    %4436 = vmatprep.subr.mxu0 0.0
    %4437 = vmatpush1.msra.mxu0 0.0
    %4438 = vmatprep.subr.mxu0 0.0
    %4439 = vmatpush1.msra.mxu0 0.0
    %4440 = vmatprep.subr.mxu0 0.0
    %4441 = vmatpush1.msra.mxu0 0.0
    %4442 = vmatprep.subr.mxu0 0.0
    %4443 = vmatpush1.msra.mxu0 0.0
    %4444 = vmatprep.subr.mxu0 0.0
    %4445 = vmatpush1.msra.mxu0 0.0
    %4446 = vmatprep.subr.mxu0 0.0
    %4447 = vmatpush1.msra.mxu0 0.0
    %4448 = vmatprep.subr.mxu0 0.0
    %4449 = vmatpush1.msra.mxu0 0.0
    %4450 = vmatprep.subr.mxu0 0.0
    %4451 = vmatpush1.msra.mxu0 0.0
    %4452 = vmatprep.subr.mxu0 0.0
    %4453 = vmatpush1.msra.mxu0 0.0
    %4454 = vmatprep.subr.mxu0 0.0
    %4455 = vmatpush1.msra.mxu0 0.0
    %4456 = vmatprep.subr.mxu0 0.0
    %4457 = vmatpush1.msra.mxu0 0.0
    %4458 = vmatprep.subr.mxu0 0.0
    %4459 = vmatpush1.msra.mxu0 0.0
    %4460 = vmatprep.subr.mxu0 0.0
    %4461 = vmatpush1.msra.mxu0 0.0
    %4462 = vmatprep.subr.mxu0 0.0
    %4463 = vmatpush1.msra.mxu0 0.0
    %4464 = vmatprep.subr.mxu0 0.0
    %4465 = vmatpush1.msra.mxu0 0.0
    %4466 = vmatprep.subr.mxu0 0.0
    %4467 = vmatpush1.msra.mxu0 0.0
    %4468 = vmatprep.subr.mxu0 0.0
    %4469 = vmatpush1.msra.mxu0 0.0
    %4470 = vmatprep.subr.mxu0 0.0
    %4471 = vmatpush1.msra.mxu0 0.0
    %4472 = vmatprep.subr.mxu0 0.0
    %4473 = vmatpush1.msra.mxu0 0.0
    %4474 = vmatprep.subr.mxu0 0.0
    %4475 = vmatpush1.msra.mxu0 0.0
    %4476 = vmatprep.subr.mxu0 0.0
    %4477 = vmatpush1.msra.mxu0 0.0
    %4478 = vmatprep.subr.mxu0 0.0
    %4479 = vmatpush1.msra.mxu0 0.0
    %4480 = vmatprep.subr.mxu0 0.0
    %4481 = vmatpush1.msra.mxu0 0.0
    %4482 = vmatprep.subr.mxu0 0.0
    %4483 = vmatpush1.msra.mxu0 0.0
    %4484 = vmatprep.subr.mxu0 0.0
    %4485 = vmatpush1.msra.mxu0 0.0
    %4486 = vmatprep.mubr.f32.mxu0 0.0
    %4487 = vmatmul.mubr.f32.gmra.mrb[0].mxu0 %v4420
    %v4488 = vpop.f32.mrb[0].mxu0
    %v4489 = vadd.f32 0.0, %v4488
    %v4490 = vpop.f32.mrb[0].mxu0
    %4491 = vdwg.mxu0
    %v4492 = vadd.f32 %v4413, %v4489
    %v4493 = vadd.f32 %v4492, %v102
    %v4494 = vxor.u32 %v4493, 2147483648
    %v4495 = vmul.f32 %v4494, 1.442695
    %v4496 = vpow.pop %v4495
    %v4497 = vadd.f32 %v4496, 1.0
    %v4498 = vrcp.pop %v4497
    %v4499 = vmul.f32 1.0, %v4498
    %v4500 = vadd.f32 %v4413, %v102
    %4502 = vrot.lane.b32.xlu0 %v102, 96
    %v4503 = vpop.permute.xlu0 %4502
    %v4505 = vadd.f32 %v4489, %v4503
    %4507 = vrot.lane.b32.xlu0 %v4505, 64
    %v4508 = vpop.permute.xlu0 %4507
    %v4510 = vmul.f32 %v4499, %v4508
    %4512 = vrot.lane.b32.xlu0 %v4510, 64
    %v4513 = vpop.permute.xlu0 %4512
    %v4515 = vadd.f32 %v4500, %v4513
    %v4516 = vtanh.pop %v4515
    %v4517 = vsub.f32 1.0, %v4499
    %4519 = vrot.lane.b32.xlu0 %v4516, 96
    %v4520 = vpop.permute.xlu0 %4519
    %v4522 = vmul.f32 %v4517, %v4520
    %v4524 = vmul.f32 %v4499, %v4417
    %v4525 = vadd.f32 %v4522, %v4524
    %4527 = vrot.lane.b32.xlu0 %v4525, 96
    %v4528 = vpop.permute.xlu0 %4527
    %v4529 = vsel %vm125, %v4528, 0
    %4531 = vmatprep.subr.mxu0 0.0
    %4532 = vmatpush1.msra.mxu0 %v86
    %4533 = vmatprep.subr.mxu0 0.0
    %4534 = vmatpush1.msra.mxu0 %v87
    %4535 = vmatprep.subr.mxu0 0.0
    %4536 = vmatpush1.msra.mxu0 %v88
    %4537 = vmatprep.subr.mxu0 0.0
    %4538 = vmatpush1.msra.mxu0 %v89
    %4539 = vmatprep.subr.mxu0 0.0
    %4540 = vmatpush1.msra.mxu0 0.0
    %4541 = vmatprep.subr.mxu0 0.0
    %4542 = vmatpush1.msra.mxu0 0.0
    %4543 = vmatprep.subr.mxu0 0.0
    %4544 = vmatpush1.msra.mxu0 0.0
    %4545 = vmatprep.subr.mxu0 0.0
    %4546 = vmatpush1.msra.mxu0 0.0
    %4547 = vmatprep.subr.mxu0 0.0
    %4548 = vmatpush1.msra.mxu0 0.0
    %4549 = vmatprep.subr.mxu0 0.0
    %4550 = vmatpush1.msra.mxu0 0.0
    %4551 = vmatprep.subr.mxu0 0.0
    %4552 = vmatpush1.msra.mxu0 0.0
    %4553 = vmatprep.subr.mxu0 0.0
    %4554 = vmatpush1.msra.mxu0 0.0
    %4555 = vmatprep.subr.mxu0 0.0
    %4556 = vmatpush1.msra.mxu0 0.0
    %4557 = vmatprep.subr.mxu0 0.0
    %4558 = vmatpush1.msra.mxu0 0.0
    %4559 = vmatprep.subr.mxu0 0.0
    %4560 = vmatpush1.msra.mxu0 0.0
    %4561 = vmatprep.subr.mxu0 0.0
    %4562 = vmatpush1.msra.mxu0 0.0
    %4563 = vmatprep.subr.mxu0 0.0
    %4564 = vmatpush1.msra.mxu0 0.0
    %4565 = vmatprep.subr.mxu0 0.0
    %4566 = vmatpush1.msra.mxu0 0.0
    %4567 = vmatprep.subr.mxu0 0.0
    %4568 = vmatpush1.msra.mxu0 0.0
    %4569 = vmatprep.subr.mxu0 0.0
    %4570 = vmatpush1.msra.mxu0 0.0
    %4571 = vmatprep.subr.mxu0 0.0
    %4572 = vmatpush1.msra.mxu0 0.0
    %4573 = vmatprep.subr.mxu0 0.0
    %4574 = vmatpush1.msra.mxu0 0.0
    %4575 = vmatprep.subr.mxu0 0.0
    %4576 = vmatpush1.msra.mxu0 0.0
    %4577 = vmatprep.subr.mxu0 0.0
    %4578 = vmatpush1.msra.mxu0 0.0
    %4579 = vmatprep.subr.mxu0 0.0
    %4580 = vmatpush1.msra.mxu0 0.0
    %4581 = vmatprep.subr.mxu0 0.0
    %4582 = vmatpush1.msra.mxu0 0.0
    %4583 = vmatprep.subr.mxu0 0.0
    %4584 = vmatpush1.msra.mxu0 0.0
    %4585 = vmatprep.subr.mxu0 0.0
    %4586 = vmatpush1.msra.mxu0 0.0
    %4587 = vmatprep.subr.mxu0 0.0
    %4588 = vmatpush1.msra.mxu0 0.0
    %4589 = vmatprep.subr.mxu0 0.0
    %4590 = vmatpush1.msra.mxu0 0.0
    %4591 = vmatprep.subr.mxu0 0.0
    %4592 = vmatpush1.msra.mxu0 0.0
    %4593 = vmatprep.subr.mxu0 0.0
    %4594 = vmatpush1.msra.mxu0 0.0
    %4595 = vmatprep.mubr.f32.mxu0 0.0
    %4596 = vmatmul.mubr.f32.gmra.mrb[0].mxu0 %v4529
    %v4597 = vpop.f32.mrb[0].mxu0
    %v4598 = vadd.f32 0.0, %v4597
    %v4599 = vpop.f32.mrb[0].mxu0
    %4600 = vdwg.mxu0
    %v4602 = vsel %vm125, %v2148, 0
    %4604 = vmatprep.subr.mxu0 0.0
    %4605 = vmatpush1.msra.mxu0 %v82
    %4606 = vmatprep.subr.mxu0 0.0
    %4607 = vmatpush1.msra.mxu0 %v83
    %4608 = vmatprep.subr.mxu0 0.0
    %4609 = vmatpush1.msra.mxu0 %v84
    %4610 = vmatprep.subr.mxu0 0.0
    %4611 = vmatpush1.msra.mxu0 %v85
    %4612 = vmatprep.subr.mxu0 0.0
    %4613 = vmatpush1.msra.mxu0 0.0
    %4614 = vmatprep.subr.mxu0 0.0
    %4615 = vmatpush1.msra.mxu0 0.0
    %4616 = vmatprep.subr.mxu0 0.0
    %4617 = vmatpush1.msra.mxu0 0.0
    %4618 = vmatprep.subr.mxu0 0.0
    %4619 = vmatpush1.msra.mxu0 0.0
    %4620 = vmatprep.subr.mxu0 0.0
    %4621 = vmatpush1.msra.mxu0 0.0
    %4622 = vmatprep.subr.mxu0 0.0
    %4623 = vmatpush1.msra.mxu0 0.0
    %4624 = vmatprep.subr.mxu0 0.0
    %4625 = vmatpush1.msra.mxu0 0.0
    %4626 = vmatprep.subr.mxu0 0.0
    %4627 = vmatpush1.msra.mxu0 0.0
    %4628 = vmatprep.subr.mxu0 0.0
    %4629 = vmatpush1.msra.mxu0 0.0
    %4630 = vmatprep.subr.mxu0 0.0
    %4631 = vmatpush1.msra.mxu0 0.0
    %4632 = vmatprep.subr.mxu0 0.0
    %4633 = vmatpush1.msra.mxu0 0.0
    %4634 = vmatprep.subr.mxu0 0.0
    %4635 = vmatpush1.msra.mxu0 0.0
    %4636 = vmatprep.subr.mxu0 0.0
    %4637 = vmatpush1.msra.mxu0 0.0
    %4638 = vmatprep.subr.mxu0 0.0
    %4639 = vmatpush1.msra.mxu0 0.0
    %4640 = vmatprep.subr.mxu0 0.0
    %4641 = vmatpush1.msra.mxu0 0.0
    %4642 = vmatprep.subr.mxu0 0.0
    %4643 = vmatpush1.msra.mxu0 0.0
    %4644 = vmatprep.subr.mxu0 0.0
    %4645 = vmatpush1.msra.mxu0 0.0
    %4646 = vmatprep.subr.mxu0 0.0
    %4647 = vmatpush1.msra.mxu0 0.0
    %4648 = vmatprep.subr.mxu0 0.0
    %4649 = vmatpush1.msra.mxu0 0.0
    %4650 = vmatprep.subr.mxu0 0.0
    %4651 = vmatpush1.msra.mxu0 0.0
    %4652 = vmatprep.subr.mxu0 0.0
    %4653 = vmatpush1.msra.mxu0 0.0
    %4654 = vmatprep.subr.mxu0 0.0
    %4655 = vmatpush1.msra.mxu0 0.0
    %4656 = vmatprep.subr.mxu0 0.0
    %4657 = vmatpush1.msra.mxu0 0.0
    %4658 = vmatprep.subr.mxu0 0.0
    %4659 = vmatpush1.msra.mxu0 0.0
    %4660 = vmatprep.subr.mxu0 0.0
    %4661 = vmatpush1.msra.mxu0 0.0
    %4662 = vmatprep.subr.mxu0 0.0
    %4663 = vmatpush1.msra.mxu0 0.0
    %4664 = vmatprep.subr.mxu0 0.0
    %4665 = vmatpush1.msra.mxu0 0.0
    %4666 = vmatprep.subr.mxu0 0.0
    %4667 = vmatpush1.msra.mxu0 0.0
    %4668 = vmatprep.mubr.f32.mxu0 0.0
    %4669 = vmatmul.mubr.f32.gmra.mrb[0].mxu0 %v4602
    %v4670 = vpop.f32.mrb[0].mxu0
    %v4671 = vadd.f32 0.0, %v4670
    %v4672 = vpop.f32.mrb[0].mxu0
    %4673 = vdwg.mxu0
    %v4674 = vadd.f32 %v4598, %v4671
    %v4675 = vadd.f32 %v4674, %v103
    %v4676 = vxor.u32 %v4675, 2147483648
    %v4677 = vmul.f32 %v4676, 1.442695
    %v4678 = vpow.pop %v4677
    %v4679 = vadd.f32 %v4678, 1.0
    %v4680 = vrcp.pop %v4679
    %v4681 = vmul.f32 1.0, %v4680
    %v4682 = vadd.f32 %v4598, %v103
    %4684 = vrot.lane.b32.xlu0 %v103, 96
    %v4685 = vpop.permute.xlu0 %4684
    %v4687 = vadd.f32 %v4671, %v4685
    %4689 = vrot.lane.b32.xlu0 %v4687, 64
    %v4690 = vpop.permute.xlu0 %4689
    %v4692 = vmul.f32 %v4681, %v4690
    %4694 = vrot.lane.b32.xlu0 %v4692, 64
    %v4695 = vpop.permute.xlu0 %4694
    %v4697 = vadd.f32 %v4682, %v4695
    %v4698 = vtanh.pop %v4697
    %v4699 = vsub.f32 1.0, %v4681
    %4701 = vrot.lane.b32.xlu0 %v4698, 96
    %v4702 = vpop.permute.xlu0 %4701
    %v4704 = vmul.f32 %v4699, %v4702
    %4705 = vrot.lane.b32.xlu0 %v2148, 32
    %v4706 = vpop.permute.xlu0 %4705
    %v4708 = vmul.f32 %v4681, %v4706
    %v4709 = vadd.f32 %v4704, %v4708
    %4711 = vrot.lane.b32.xlu0 %v4709, 96
    %v4712 = vpop.permute.xlu0 %4711
    %v4713 = vsel %vm125, %v4712, 0
    %4715 = vmatprep.subr.mxu0 0.0
    %4716 = vmatpush1.xpose.msra.mxu0 %v4265
    %4717 = vmatprep.subr.mxu0 0.0
    %4718 = vmatpush1.xpose.msra.mxu0 0.0
    %4719 = vmatprep.subr.mxu0 0.0
    %4720 = vmatpush1.xpose.msra.mxu0 0.0
    %4721 = vmatprep.subr.mxu0 0.0
    %4722 = vmatpush1.xpose.msra.mxu0 0.0
    %4723 = vmatprep.subr.mxu0 0.0
    %4724 = vmatpush1.xpose.msra.mxu0 0.0
    %4725 = vmatprep.subr.mxu0 0.0
    %4726 = vmatpush1.xpose.msra.mxu0 0.0
    %4727 = vmatprep.subr.mxu0 0.0
    %4728 = vmatpush1.xpose.msra.mxu0 0.0
    %4729 = vmatprep.subr.mxu0 0.0
    %4730 = vmatpush1.xpose.msra.mxu0 0.0
    %4731 = vmatprep.subr.mxu0 0.0
    %4732 = vmatpush1.xpose.msra.mxu0 0.0
    %4733 = vmatprep.subr.mxu0 0.0
    %4734 = vmatpush1.xpose.msra.mxu0 0.0
    %4735 = vmatprep.subr.mxu0 0.0
    %4736 = vmatpush1.xpose.msra.mxu0 0.0
    %4737 = vmatprep.subr.mxu0 0.0
    %4738 = vmatpush1.xpose.msra.mxu0 0.0
    %4739 = vmatprep.subr.mxu0 0.0
    %4740 = vmatpush1.xpose.msra.mxu0 0.0
    %4741 = vmatprep.subr.mxu0 0.0
    %4742 = vmatpush1.xpose.msra.mxu0 0.0
    %4743 = vmatprep.subr.mxu0 0.0
    %4744 = vmatpush1.xpose.msra.mxu0 0.0
    %4745 = vmatprep.subr.mxu0 0.0
    %4746 = vmatpush1.xpose.msra.mxu0 0.0
    %4747 = vmatprep.subr.mxu0 0.0
    %4748 = vmatpush1.xpose.msra.mxu0 0.0
    %4749 = vmatprep.subr.mxu0 0.0
    %4750 = vmatpush1.xpose.msra.mxu0 0.0
    %4751 = vmatprep.subr.mxu0 0.0
    %4752 = vmatpush1.xpose.msra.mxu0 0.0
    %4753 = vmatprep.subr.mxu0 0.0
    %4754 = vmatpush1.xpose.msra.mxu0 0.0
    %4755 = vmatprep.subr.mxu0 0.0
    %4756 = vmatpush1.xpose.msra.mxu0 0.0
    %4757 = vmatprep.subr.mxu0 0.0
    %4758 = vmatpush1.xpose.msra.mxu0 0.0
    %4759 = vmatprep.subr.mxu0 0.0
    %4760 = vmatpush1.xpose.msra.mxu0 0.0
    %4761 = vmatprep.subr.mxu0 0.0
    %4762 = vmatpush1.xpose.msra.mxu0 0.0
    %4763 = vmatprep.subr.mxu0 0.0
    %4764 = vmatpush1.xpose.msra.mxu0 0.0
    %4765 = vmatprep.subr.mxu0 0.0
    %4766 = vmatpush1.xpose.msra.mxu0 0.0
    %4767 = vmatprep.subr.mxu0 0.0
    %4768 = vmatpush1.xpose.msra.mxu0 0.0
    %4769 = vmatprep.subr.mxu0 0.0
    %4770 = vmatpush1.xpose.msra.mxu0 0.0
    %4771 = vmatprep.subr.mxu0 0.0
    %4772 = vmatpush1.xpose.msra.mxu0 0.0
    %4773 = vmatprep.subr.mxu0 0.0
    %4774 = vmatpush1.xpose.msra.mxu0 0.0
    %4775 = vmatprep.subr.mxu0 0.0
    %4776 = vmatpush1.xpose.msra.mxu0 0.0
    %4777 = vmatprep.subr.mxu0 0.0
    %4778 = vmatpush1.xpose.msra.mxu0 0.0
    %4779 = vmatprep.mubr.f32.mxu0 0.0
    %4780 = vmatmul.mubr.f32.gmra.mrb[0].mxu0 %v4713
    %v4781 = vpop.f32.mrb[0].mxu0
    %v4782 = vadd.f32 0.0, %v4781
    %v4783 = vpop.f32.mrb[0].mxu0
    %4784 = vdwg.mxu0
    %vm4785 = vcmask 57344
    %v4786 = vsel %vm4785, %v4782, -inf
    %4787 = vmax.xlane.f32.xlu0 %v4786
    %v4788 = vpop.xlane.xlu0 %4787
    %v4789 = vsub.f32 %v4782, %v4788
    %v4790 = vmul.f32 %v4789, 1.442695
    %v4791 = vpow.pop %v4790
    %v4792 = vsel %vm4785, %v4791, 0.0
    %4793 = vadd.xlane.f32.xlu0 %v4792
    %v4794 = vpop.xlane.xlu0 %4793
    %v4795 = vrcp.pop %v4794
    %v4796 = vmul.f32 %v4791, %v4795
    %vm4797 = vcmask 64512
    %v4799 = vsel %vm4797, %v4796, 0
    %4801 = vmatprep.subr.mxu0 0.0
    %4802 = vmatpush1.msra.mxu0 %v4334
    %4803 = vmatprep.subr.mxu0 0.0
    %4804 = vmatpush1.msra.mxu0 0.0
    %4805 = vmatprep.subr.mxu0 0.0
    %4806 = vmatpush1.msra.mxu0 0.0
    %4807 = vmatprep.subr.mxu0 0.0
    %4808 = vmatpush1.msra.mxu0 0.0
    %4809 = vmatprep.subr.mxu0 0.0
    %4810 = vmatpush1.msra.mxu0 0.0
    %4811 = vmatprep.subr.mxu0 0.0
    %4812 = vmatpush1.msra.mxu0 0.0
    %4813 = vmatprep.subr.mxu0 0.0
    %4814 = vmatpush1.msra.mxu0 0.0
    %4815 = vmatprep.subr.mxu0 0.0
    %4816 = vmatpush1.msra.mxu0 0.0
    %4817 = vmatprep.subr.mxu0 0.0
    %4818 = vmatpush1.msra.mxu0 0.0
    %4819 = vmatprep.subr.mxu0 0.0
    %4820 = vmatpush1.msra.mxu0 0.0
    %4821 = vmatprep.subr.mxu0 0.0
    %4822 = vmatpush1.msra.mxu0 0.0
    %4823 = vmatprep.subr.mxu0 0.0
    %4824 = vmatpush1.msra.mxu0 0.0
    %4825 = vmatprep.subr.mxu0 0.0
    %4826 = vmatpush1.msra.mxu0 0.0
    %4827 = vmatprep.subr.mxu0 0.0
    %4828 = vmatpush1.msra.mxu0 0.0
    %4829 = vmatprep.subr.mxu0 0.0
    %4830 = vmatpush1.msra.mxu0 0.0
    %4831 = vmatprep.subr.mxu0 0.0
    %4832 = vmatpush1.msra.mxu0 0.0
    %4833 = vmatprep.subr.mxu0 0.0
    %4834 = vmatpush1.msra.mxu0 0.0
    %4835 = vmatprep.subr.mxu0 0.0
    %4836 = vmatpush1.msra.mxu0 0.0
    %4837 = vmatprep.subr.mxu0 0.0
    %4838 = vmatpush1.msra.mxu0 0.0
    %4839 = vmatprep.subr.mxu0 0.0
    %4840 = vmatpush1.msra.mxu0 0.0
    %4841 = vmatprep.subr.mxu0 0.0
    %4842 = vmatpush1.msra.mxu0 0.0
    %4843 = vmatprep.subr.mxu0 0.0
    %4844 = vmatpush1.msra.mxu0 0.0
    %4845 = vmatprep.subr.mxu0 0.0
    %4846 = vmatpush1.msra.mxu0 0.0
    %4847 = vmatprep.subr.mxu0 0.0
    %4848 = vmatpush1.msra.mxu0 0.0
    %4849 = vmatprep.subr.mxu0 0.0
    %4850 = vmatpush1.msra.mxu0 0.0
    %4851 = vmatprep.subr.mxu0 0.0
    %4852 = vmatpush1.msra.mxu0 0.0
    %4853 = vmatprep.subr.mxu0 0.0
    %4854 = vmatpush1.msra.mxu0 0.0
    %4855 = vmatprep.subr.mxu0 0.0
    %4856 = vmatpush1.msra.mxu0 0.0
    %4857 = vmatprep.subr.mxu0 0.0
    %4858 = vmatpush1.msra.mxu0 0.0
    %4859 = vmatprep.subr.mxu0 0.0
    %4860 = vmatpush1.msra.mxu0 0.0
    %4861 = vmatprep.subr.mxu0 0.0
    %4862 = vmatpush1.msra.mxu0 0.0
    %4863 = vmatprep.subr.mxu0 0.0
    %4864 = vmatpush1.msra.mxu0 0.0
    %4865 = vmatprep.mubr.f32.mxu0 0.0
    %4866 = vmatmul.mubr.f32.gmra.mrb[0].mxu0 %v4799
    %v4867 = vpop.f32.mrb[0].mxu0
    %v4868 = vadd.f32 0.0, %v4867
    %v4869 = vpop.f32.mrb[0].mxu0
    %4870 = vdwg.mxu0
    %4871 = vmatprep.subr.mxu0 0.0
    %4872 = vmatpush1.msra.mxu0 %v112
    %4873 = vmatprep.subr.mxu0 0.0
    %4874 = vmatpush1.msra.mxu0 %v113
    %4875 = vmatprep.subr.mxu0 0.0
    %4876 = vmatpush1.msra.mxu0 %v114
    %4877 = vmatprep.subr.mxu0 0.0
    %4878 = vmatpush1.msra.mxu0 %v115
    %4879 = vmatprep.subr.mxu0 0.0
    %4880 = vmatpush1.msra.mxu0 0.0
    %4881 = vmatprep.subr.mxu0 0.0
    %4882 = vmatpush1.msra.mxu0 0.0
    %4883 = vmatprep.subr.mxu0 0.0
    %4884 = vmatpush1.msra.mxu0 0.0
    %4885 = vmatprep.subr.mxu0 0.0
    %4886 = vmatpush1.msra.mxu0 0.0
    %4887 = vmatprep.subr.mxu0 0.0
    %4888 = vmatpush1.msra.mxu0 0.0
    %4889 = vmatprep.subr.mxu0 0.0
    %4890 = vmatpush1.msra.mxu0 0.0
    %4891 = vmatprep.subr.mxu0 0.0
    %4892 = vmatpush1.msra.mxu0 0.0
    %4893 = vmatprep.subr.mxu0 0.0
    %4894 = vmatpush1.msra.mxu0 0.0
    %4895 = vmatprep.subr.mxu0 0.0
    %4896 = vmatpush1.msra.mxu0 0.0
    %4897 = vmatprep.subr.mxu0 0.0
    %4898 = vmatpush1.msra.mxu0 0.0
    %4899 = vmatprep.subr.mxu0 0.0
    %4900 = vmatpush1.msra.mxu0 0.0
    %4901 = vmatprep.subr.mxu0 0.0
    %4902 = vmatpush1.msra.mxu0 0.0
    %4903 = vmatprep.subr.mxu0 0.0
    %4904 = vmatpush1.msra.mxu0 0.0
    %4905 = vmatprep.subr.mxu0 0.0
    %4906 = vmatpush1.msra.mxu0 0.0
    %4907 = vmatprep.subr.mxu0 0.0
    %4908 = vmatpush1.msra.mxu0 0.0
    %4909 = vmatprep.subr.mxu0 0.0
    %4910 = vmatpush1.msra.mxu0 0.0
    %4911 = vmatprep.subr.mxu0 0.0
    %4912 = vmatpush1.msra.mxu0 0.0
    %4913 = vmatprep.subr.mxu0 0.0
    %4914 = vmatpush1.msra.mxu0 0.0
    %4915 = vmatprep.subr.mxu0 0.0
    %4916 = vmatpush1.msra.mxu0 0.0
    %4917 = vmatprep.subr.mxu0 0.0
    %4918 = vmatpush1.msra.mxu0 0.0
    %4919 = vmatprep.subr.mxu0 0.0
    %4920 = vmatpush1.msra.mxu0 0.0
    %4921 = vmatprep.subr.mxu0 0.0
    %4922 = vmatpush1.msra.mxu0 0.0
    %4923 = vmatprep.subr.mxu0 0.0
    %4924 = vmatpush1.msra.mxu0 0.0
    %4925 = vmatprep.subr.mxu0 0.0
    %4926 = vmatpush1.msra.mxu0 0.0
    %4927 = vmatprep.subr.mxu0 0.0
    %4928 = vmatpush1.msra.mxu0 0.0
    %4929 = vmatprep.subr.mxu0 0.0
    %4930 = vmatpush1.msra.mxu0 0.0
    %4931 = vmatprep.subr.mxu0 0.0
    %4932 = vmatpush1.msra.mxu0 0.0
    %4933 = vmatprep.subr.mxu0 0.0
    %4934 = vmatpush1.msra.mxu0 0.0
    %4935 = vmatprep.mubr.f32.mxu0 0.0
    %4936 = vmatmul.mubr.f32.gmra.mrb[0].mxu0 %v4713
    %v4937 = vpop.f32.mrb[0].mxu0
    %v4938 = vadd.f32 %v4868, %v4937
    %v4939 = vpop.f32.mrb[0].mxu0
    %4940 = vdwg.mxu0
    %v4941 = vadd.f32 %v4938, %v121
    %v4942 = vtanh.pop %v4941
    %v4944 = vsel %vm4342, %v4942, 0
    %4946 = vmatprep.subr.mxu0 0.0
    %4947 = vmatpush1.msra.mxu0 %v104
    %4948 = vmatprep.subr.mxu0 0.0
    %4949 = vmatpush1.msra.mxu0 %v105
    %4950 = vmatprep.subr.mxu0 0.0
    %4951 = vmatpush1.msra.mxu0 %v106
    %4952 = vmatprep.subr.mxu0 0.0
    %4953 = vmatpush1.msra.mxu0 %v107
    %4954 = vmatprep.subr.mxu0 0.0
    %4955 = vmatpush1.msra.mxu0 %v108
    %4956 = vmatprep.subr.mxu0 0.0
    %4957 = vmatpush1.msra.mxu0 %v109
    %4958 = vmatprep.subr.mxu0 0.0
    %4959 = vmatpush1.msra.mxu0 %v110
    %4960 = vmatprep.subr.mxu0 0.0
    %4961 = vmatpush1.msra.mxu0 %v111
    %4962 = vmatprep.subr.mxu0 0.0
    %4963 = vmatpush1.msra.mxu0 0.0
    %4964 = vmatprep.subr.mxu0 0.0
    %4965 = vmatpush1.msra.mxu0 0.0
    %4966 = vmatprep.subr.mxu0 0.0
    %4967 = vmatpush1.msra.mxu0 0.0
    %4968 = vmatprep.subr.mxu0 0.0
    %4969 = vmatpush1.msra.mxu0 0.0
    %4970 = vmatprep.subr.mxu0 0.0
    %4971 = vmatpush1.msra.mxu0 0.0
    %4972 = vmatprep.subr.mxu0 0.0
    %4973 = vmatpush1.msra.mxu0 0.0
    %4974 = vmatprep.subr.mxu0 0.0
    %4975 = vmatpush1.msra.mxu0 0.0
    %4976 = vmatprep.subr.mxu0 0.0
    %4977 = vmatpush1.msra.mxu0 0.0
    %4978 = vmatprep.subr.mxu0 0.0
    %4979 = vmatpush1.msra.mxu0 0.0
    %4980 = vmatprep.subr.mxu0 0.0
    %4981 = vmatpush1.msra.mxu0 0.0
    %4982 = vmatprep.subr.mxu0 0.0
    %4983 = vmatpush1.msra.mxu0 0.0
    %4984 = vmatprep.subr.mxu0 0.0
    %4985 = vmatpush1.msra.mxu0 0.0
    %4986 = vmatprep.subr.mxu0 0.0
    %4987 = vmatpush1.msra.mxu0 0.0
    %4988 = vmatprep.subr.mxu0 0.0
    %4989 = vmatpush1.msra.mxu0 0.0
    %4990 = vmatprep.subr.mxu0 0.0
    %4991 = vmatpush1.msra.mxu0 0.0
    %4992 = vmatprep.subr.mxu0 0.0
    %4993 = vmatpush1.msra.mxu0 0.0
    %4994 = vmatprep.subr.mxu0 0.0
    %4995 = vmatpush1.msra.mxu0 0.0
    %4996 = vmatprep.subr.mxu0 0.0
    %4997 = vmatpush1.msra.mxu0 0.0
    %4998 = vmatprep.subr.mxu0 0.0
    %4999 = vmatpush1.msra.mxu0 0.0
    %5000 = vmatprep.subr.mxu0 0.0
    %5001 = vmatpush1.msra.mxu0 0.0
    %5002 = vmatprep.subr.mxu0 0.0
    %5003 = vmatpush1.msra.mxu0 0.0
    %5004 = vmatprep.subr.mxu0 0.0
    %5005 = vmatpush1.msra.mxu0 0.0
    %5006 = vmatprep.subr.mxu0 0.0
    %5007 = vmatpush1.msra.mxu0 0.0
    %5008 = vmatprep.subr.mxu0 0.0
    %5009 = vmatpush1.msra.mxu0 0.0
    %5010 = vmatprep.mubr.f32.mxu0 0.0
    %5011 = vmatmul.mubr.f32.gmra.mrb[0].mxu0 %v4944
    %v5012 = vpop.f32.mrb[0].mxu0
    %v5013 = vadd.f32 %v120, %v5012
    %v5014 = vpop.f32.mrb[0].mxu0
    %5015 = vdwg.mxu0
    %vm5016 = vcmask 516096
    %v5017 = vsel %vm5016, %v5013, -inf
    %5018 = vmax.xlane.f32.xlu0 %v5017
    %v5019 = vpop.xlane.xlu0 %5018
    %v5020 = vsub.f32 %v5013, %v5019
    %v5021 = vmul.f32 %v5020, 1.442695
    %v5022 = vpow.pop %v5021
    %v5023 = vsel %vm5016, %v5022, 0.0
    %5024 = vadd.xlane.f32.xlu0 %v5023
    %v5025 = vpop.xlane.xlu0 %5024
    %v5026 = vrcp.pop %v5025
    %v5027 = vmul.f32 1.0, %v5026
    %vm5028 = vcmp.eq.f32.partialorder %v5013, %v5019
    %v5029 = vsel %vm5028, %v4338, 64
    %v5030 = vsel %vm5016, %v5029, 2147483647
    %v5031 = vand.u32 %v5030, 65535
    %v5032 = vshra.s32 %v5030, 16
    %v5033 = vcvt.s32.f32 %v5031
    %v5034 = vcvt.s32.f32 %v5032
    %5035 = vmin.xlane.f32.xlu0 %v5034
    %v5036 = vpop.xlane.xlu0 %5035
    %vm5037 = vcmp.eq.f32.partialorder %v5034, %v5036
    %v5038 = vsel %vm5037, %v5033, inf
    %5039 = vmin.xlane.f32.xlu0 %v5038
    %v5040 = vpop.xlane.xlu0 %5039
    %v5041 = vcvt.f32.s32 %v5040
    %v5042 = vcvt.f32.s32 %v5036
    %v5043 = vshll.u32 %v5042, 16
    %v5044 = vadd.s32 %v5043, %v5041
    %vm5045 = vcmp.eq.s32.totalorder %v4338, 0
    %v5046 = vsel %vm5045, %v5044, 0
    %v5047 = vsel %vm5045, %v5027, 0.0
    %vm5048 = vcmp.eq.s32.totalorder %v4338, %v5044
    %v5049 = vsel %vm5048, 1, 0
    %v5050 = vcvt.s32.f32 %v5049
    %v5052 = vsel %vm4342, %v5050, 0
    %5054 = vmatprep.subr.mxu0 0.0
    %5055 = vmatpush1.msra.mxu0 %v90
    %5056 = vmatprep.subr.mxu0 0.0
    %5057 = vmatpush1.msra.mxu0 %v91
    %5058 = vmatprep.subr.mxu0 0.0
    %5059 = vmatpush1.msra.mxu0 %v92
    %5060 = vmatprep.subr.mxu0 0.0
    %5061 = vmatpush1.msra.mxu0 %v93
    %5062 = vmatprep.subr.mxu0 0.0
    %5063 = vmatpush1.msra.mxu0 %v94
    %5064 = vmatprep.subr.mxu0 0.0
    %5065 = vmatpush1.msra.mxu0 %v95
    %5066 = vmatprep.subr.mxu0 0.0
    %5067 = vmatpush1.msra.mxu0 %v96
    %5068 = vmatprep.subr.mxu0 0.0
    %5069 = vmatpush1.msra.mxu0 %v97
    %5070 = vmatprep.subr.mxu0 0.0
    %5071 = vmatpush1.msra.mxu0 0.0
    %5072 = vmatprep.subr.mxu0 0.0
    %5073 = vmatpush1.msra.mxu0 0.0
    %5074 = vmatprep.subr.mxu0 0.0
    %5075 = vmatpush1.msra.mxu0 0.0
    %5076 = vmatprep.subr.mxu0 0.0
    %5077 = vmatpush1.msra.mxu0 0.0
    %5078 = vmatprep.subr.mxu0 0.0
    %5079 = vmatpush1.msra.mxu0 0.0
    %5080 = vmatprep.subr.mxu0 0.0
    %5081 = vmatpush1.msra.mxu0 0.0
    %5082 = vmatprep.subr.mxu0 0.0
    %5083 = vmatpush1.msra.mxu0 0.0
    %5084 = vmatprep.subr.mxu0 0.0
    %5085 = vmatpush1.msra.mxu0 0.0
    %5086 = vmatprep.subr.mxu0 0.0
    %5087 = vmatpush1.msra.mxu0 0.0
    %5088 = vmatprep.subr.mxu0 0.0
    %5089 = vmatpush1.msra.mxu0 0.0
    %5090 = vmatprep.subr.mxu0 0.0
    %5091 = vmatpush1.msra.mxu0 0.0
    %5092 = vmatprep.subr.mxu0 0.0
    %5093 = vmatpush1.msra.mxu0 0.0
    %5094 = vmatprep.subr.mxu0 0.0
    %5095 = vmatpush1.msra.mxu0 0.0
    %5096 = vmatprep.subr.mxu0 0.0
    %5097 = vmatpush1.msra.mxu0 0.0
    %5098 = vmatprep.subr.mxu0 0.0
    %5099 = vmatpush1.msra.mxu0 0.0
    %5100 = vmatprep.subr.mxu0 0.0
    %5101 = vmatpush1.msra.mxu0 0.0
    %5102 = vmatprep.subr.mxu0 0.0
    %5103 = vmatpush1.msra.mxu0 0.0
    %5104 = vmatprep.subr.mxu0 0.0
    %5105 = vmatpush1.msra.mxu0 0.0
    %5106 = vmatprep.subr.mxu0 0.0
    %5107 = vmatpush1.msra.mxu0 0.0
    %5108 = vmatprep.subr.mxu0 0.0
    %5109 = vmatpush1.msra.mxu0 0.0
    %5110 = vmatprep.subr.mxu0 0.0
    %5111 = vmatpush1.msra.mxu0 0.0
    %5112 = vmatprep.subr.mxu0 0.0
    %5113 = vmatpush1.msra.mxu0 0.0
    %5114 = vmatprep.subr.mxu0 0.0
    %5115 = vmatpush1.msra.mxu0 0.0
    %5116 = vmatprep.subr.mxu0 0.0
    %5117 = vmatpush1.msra.mxu0 0.0
    %5118 = vmatprep.mubr.f32.mxu0 0.0
    %5119 = vmatmul.mubr.f32.gmra.mrb[0].mxu0 %v5052
    %v5120 = vpop.f32.mrb[0].mxu0
    %v5121 = vadd.f32 0.0, %v5120
    %v5122 = vpop.f32.mrb[0].mxu0
    %5123 = vdwg.mxu0
    %5124 = vmatprep.subr.mxu0 0.0
    %5125 = vmatpush1.msra.mxu0 %v78
    %5126 = vmatprep.subr.mxu0 0.0
    %5127 = vmatpush1.msra.mxu0 %v79
    %5128 = vmatprep.subr.mxu0 0.0
    %5129 = vmatpush1.msra.mxu0 %v80
    %5130 = vmatprep.subr.mxu0 0.0
    %5131 = vmatpush1.msra.mxu0 %v81
    %5132 = vmatprep.subr.mxu0 0.0
    %5133 = vmatpush1.msra.mxu0 0.0
    %5134 = vmatprep.subr.mxu0 0.0
    %5135 = vmatpush1.msra.mxu0 0.0
    %5136 = vmatprep.subr.mxu0 0.0
    %5137 = vmatpush1.msra.mxu0 0.0
    %5138 = vmatprep.subr.mxu0 0.0
    %5139 = vmatpush1.msra.mxu0 0.0
    %5140 = vmatprep.subr.mxu0 0.0
    %5141 = vmatpush1.msra.mxu0 0.0
    %5142 = vmatprep.subr.mxu0 0.0
    %5143 = vmatpush1.msra.mxu0 0.0
    %5144 = vmatprep.subr.mxu0 0.0
    %5145 = vmatpush1.msra.mxu0 0.0
    %5146 = vmatprep.subr.mxu0 0.0
    %5147 = vmatpush1.msra.mxu0 0.0
    %5148 = vmatprep.subr.mxu0 0.0
    %5149 = vmatpush1.msra.mxu0 0.0
    %5150 = vmatprep.subr.mxu0 0.0
    %5151 = vmatpush1.msra.mxu0 0.0
    %5152 = vmatprep.subr.mxu0 0.0
    %5153 = vmatpush1.msra.mxu0 0.0
    %5154 = vmatprep.subr.mxu0 0.0
    %5155 = vmatpush1.msra.mxu0 0.0
    %5156 = vmatprep.subr.mxu0 0.0
    %5157 = vmatpush1.msra.mxu0 0.0
    %5158 = vmatprep.subr.mxu0 0.0
    %5159 = vmatpush1.msra.mxu0 0.0
    %5160 = vmatprep.subr.mxu0 0.0
    %5161 = vmatpush1.msra.mxu0 0.0
    %5162 = vmatprep.subr.mxu0 0.0
    %5163 = vmatpush1.msra.mxu0 0.0
    %5164 = vmatprep.subr.mxu0 0.0
    %5165 = vmatpush1.msra.mxu0 0.0
    %5166 = vmatprep.subr.mxu0 0.0
    %5167 = vmatpush1.msra.mxu0 0.0
    %5168 = vmatprep.subr.mxu0 0.0
    %5169 = vmatpush1.msra.mxu0 0.0
    %5170 = vmatprep.subr.mxu0 0.0
    %5171 = vmatpush1.msra.mxu0 0.0
    %5172 = vmatprep.subr.mxu0 0.0
    %5173 = vmatpush1.msra.mxu0 0.0
    %5174 = vmatprep.subr.mxu0 0.0
    %5175 = vmatpush1.msra.mxu0 0.0
    %5176 = vmatprep.subr.mxu0 0.0
    %5177 = vmatpush1.msra.mxu0 0.0
    %5178 = vmatprep.subr.mxu0 0.0
    %5179 = vmatpush1.msra.mxu0 0.0
    %5180 = vmatprep.subr.mxu0 0.0
    %5181 = vmatpush1.msra.mxu0 0.0
    %5182 = vmatprep.subr.mxu0 0.0
    %5183 = vmatpush1.msra.mxu0 0.0
    %5184 = vmatprep.subr.mxu0 0.0
    %5185 = vmatpush1.msra.mxu0 0.0
    %5186 = vmatprep.subr.mxu0 0.0
    %5187 = vmatpush1.msra.mxu0 0.0
    %5188 = vmatprep.mubr.f32.mxu0 0.0
    %5189 = vmatmul.mubr.f32.gmra.mrb[0].mxu0 %v4529
    %v5190 = vpop.f32.mrb[0].mxu0
    %v5191 = vadd.f32 0.0, %v5190
    %v5192 = vpop.f32.mrb[0].mxu0
    %5193 = vdwg.mxu0
    %v5194 = vadd.f32 %v5121, %v5191
    %v5195 = vadd.f32 %v5194, %v102
    %v5196 = vxor.u32 %v5195, 2147483648
    %v5197 = vmul.f32 %v5196, 1.442695
    %v5198 = vpow.pop %v5197
    %v5199 = vadd.f32 %v5198, 1.0
    %v5200 = vrcp.pop %v5199
    %v5201 = vmul.f32 1.0, %v5200
    %v5202 = vadd.f32 %v5121, %v102
    %v5203 = vadd.f32 %v5191, %v4503
    %5205 = vrot.lane.b32.xlu0 %v5203, 64
    %v5206 = vpop.permute.xlu0 %5205
    %v5208 = vmul.f32 %v5201, %v5206
    %5210 = vrot.lane.b32.xlu0 %v5208, 64
    %v5211 = vpop.permute.xlu0 %5210
    %v5213 = vadd.f32 %v5202, %v5211
    %v5214 = vtanh.pop %v5213
    %v5215 = vsub.f32 1.0, %v5201
    %5217 = vrot.lane.b32.xlu0 %v5214, 96
    %v5218 = vpop.permute.xlu0 %5217
    %v5220 = vmul.f32 %v5215, %v5218
    %v5221 = vmul.f32 %v5201, %v4525
    %v5222 = vadd.f32 %v5220, %v5221
    %5224 = vrot.lane.b32.xlu0 %v5222, 96
    %v5225 = vpop.permute.xlu0 %5224
    %v5226 = vsel %vm125, %v5225, 0
    %5228 = vmatprep.subr.mxu0 0.0
    %5229 = vmatpush1.msra.mxu0 %v86
    %5230 = vmatprep.subr.mxu0 0.0
    %5231 = vmatpush1.msra.mxu0 %v87
    %5232 = vmatprep.subr.mxu0 0.0
    %5233 = vmatpush1.msra.mxu0 %v88
    %5234 = vmatprep.subr.mxu0 0.0
    %5235 = vmatpush1.msra.mxu0 %v89
    %5236 = vmatprep.subr.mxu0 0.0
    %5237 = vmatpush1.msra.mxu0 0.0
    %5238 = vmatprep.subr.mxu0 0.0
    %5239 = vmatpush1.msra.mxu0 0.0
    %5240 = vmatprep.subr.mxu0 0.0
    %5241 = vmatpush1.msra.mxu0 0.0
    %5242 = vmatprep.subr.mxu0 0.0
    %5243 = vmatpush1.msra.mxu0 0.0
    %5244 = vmatprep.subr.mxu0 0.0
    %5245 = vmatpush1.msra.mxu0 0.0
    %5246 = vmatprep.subr.mxu0 0.0
    %5247 = vmatpush1.msra.mxu0 0.0
    %5248 = vmatprep.subr.mxu0 0.0
    %5249 = vmatpush1.msra.mxu0 0.0
    %5250 = vmatprep.subr.mxu0 0.0
    %5251 = vmatpush1.msra.mxu0 0.0
    %5252 = vmatprep.subr.mxu0 0.0
    %5253 = vmatpush1.msra.mxu0 0.0
    %5254 = vmatprep.subr.mxu0 0.0
    %5255 = vmatpush1.msra.mxu0 0.0
    %5256 = vmatprep.subr.mxu0 0.0
    %5257 = vmatpush1.msra.mxu0 0.0
    %5258 = vmatprep.subr.mxu0 0.0
    %5259 = vmatpush1.msra.mxu0 0.0
    %5260 = vmatprep.subr.mxu0 0.0
    %5261 = vmatpush1.msra.mxu0 0.0
    %5262 = vmatprep.subr.mxu0 0.0
    %5263 = vmatpush1.msra.mxu0 0.0
    %5264 = vmatprep.subr.mxu0 0.0
    %5265 = vmatpush1.msra.mxu0 0.0
    %5266 = vmatprep.subr.mxu0 0.0
    %5267 = vmatpush1.msra.mxu0 0.0
    %5268 = vmatprep.subr.mxu0 0.0
    %5269 = vmatpush1.msra.mxu0 0.0
    %5270 = vmatprep.subr.mxu0 0.0
    %5271 = vmatpush1.msra.mxu0 0.0
    %5272 = vmatprep.subr.mxu0 0.0
    %5273 = vmatpush1.msra.mxu0 0.0
    %5274 = vmatprep.subr.mxu0 0.0
    %5275 = vmatpush1.msra.mxu0 0.0
    %5276 = vmatprep.subr.mxu0 0.0
    %5277 = vmatpush1.msra.mxu0 0.0
    %5278 = vmatprep.subr.mxu0 0.0
    %5279 = vmatpush1.msra.mxu0 0.0
    %5280 = vmatprep.subr.mxu0 0.0
    %5281 = vmatpush1.msra.mxu0 0.0
    %5282 = vmatprep.subr.mxu0 0.0
    %5283 = vmatpush1.msra.mxu0 0.0
    %5284 = vmatprep.subr.mxu0 0.0
    %5285 = vmatpush1.msra.mxu0 0.0
    %5286 = vmatprep.subr.mxu0 0.0
    %5287 = vmatpush1.msra.mxu0 0.0
    %5288 = vmatprep.subr.mxu0 0.0
    %5289 = vmatpush1.msra.mxu0 0.0
    %5290 = vmatprep.subr.mxu0 0.0
    %5291 = vmatpush1.msra.mxu0 0.0
    %5292 = vmatprep.mubr.f32.mxu0 0.0
    %5293 = vmatmul.mubr.f32.gmra.mrb[0].mxu0 %v5226
    %v5294 = vpop.f32.mrb[0].mxu0
    %v5295 = vadd.f32 0.0, %v5294
    %v5296 = vpop.f32.mrb[0].mxu0
    %5297 = vdwg.mxu0
    %5298 = vmatprep.subr.mxu0 0.0
    %5299 = vmatpush1.msra.mxu0 %v82
    %5300 = vmatprep.subr.mxu0 0.0
    %5301 = vmatpush1.msra.mxu0 %v83
    %5302 = vmatprep.subr.mxu0 0.0
    %5303 = vmatpush1.msra.mxu0 %v84
    %5304 = vmatprep.subr.mxu0 0.0
    %5305 = vmatpush1.msra.mxu0 %v85
    %5306 = vmatprep.subr.mxu0 0.0
    %5307 = vmatpush1.msra.mxu0 0.0
    %5308 = vmatprep.subr.mxu0 0.0
    %5309 = vmatpush1.msra.mxu0 0.0
    %5310 = vmatprep.subr.mxu0 0.0
    %5311 = vmatpush1.msra.mxu0 0.0
    %5312 = vmatprep.subr.mxu0 0.0
    %5313 = vmatpush1.msra.mxu0 0.0
    %5314 = vmatprep.subr.mxu0 0.0
    %5315 = vmatpush1.msra.mxu0 0.0
    %5316 = vmatprep.subr.mxu0 0.0
    %5317 = vmatpush1.msra.mxu0 0.0
    %5318 = vmatprep.subr.mxu0 0.0
    %5319 = vmatpush1.msra.mxu0 0.0
    %5320 = vmatprep.subr.mxu0 0.0
    %5321 = vmatpush1.msra.mxu0 0.0
    %5322 = vmatprep.subr.mxu0 0.0
    %5323 = vmatpush1.msra.mxu0 0.0
    %5324 = vmatprep.subr.mxu0 0.0
    %5325 = vmatpush1.msra.mxu0 0.0
    %5326 = vmatprep.subr.mxu0 0.0
    %5327 = vmatpush1.msra.mxu0 0.0
    %5328 = vmatprep.subr.mxu0 0.0
    %5329 = vmatpush1.msra.mxu0 0.0
    %5330 = vmatprep.subr.mxu0 0.0
    %5331 = vmatpush1.msra.mxu0 0.0
    %5332 = vmatprep.subr.mxu0 0.0
    %5333 = vmatpush1.msra.mxu0 0.0
    %5334 = vmatprep.subr.mxu0 0.0
    %5335 = vmatpush1.msra.mxu0 0.0
    %5336 = vmatprep.subr.mxu0 0.0
    %5337 = vmatpush1.msra.mxu0 0.0
    %5338 = vmatprep.subr.mxu0 0.0
    %5339 = vmatpush1.msra.mxu0 0.0
    %5340 = vmatprep.subr.mxu0 0.0
    %5341 = vmatpush1.msra.mxu0 0.0
    %5342 = vmatprep.subr.mxu0 0.0
    %5343 = vmatpush1.msra.mxu0 0.0
    %5344 = vmatprep.subr.mxu0 0.0
    %5345 = vmatpush1.msra.mxu0 0.0
    %5346 = vmatprep.subr.mxu0 0.0
    %5347 = vmatpush1.msra.mxu0 0.0
    %5348 = vmatprep.subr.mxu0 0.0
    %5349 = vmatpush1.msra.mxu0 0.0
    %5350 = vmatprep.subr.mxu0 0.0
    %5351 = vmatpush1.msra.mxu0 0.0
    %5352 = vmatprep.subr.mxu0 0.0
    %5353 = vmatpush1.msra.mxu0 0.0
    %5354 = vmatprep.subr.mxu0 0.0
    %5355 = vmatpush1.msra.mxu0 0.0
    %5356 = vmatprep.subr.mxu0 0.0
    %5357 = vmatpush1.msra.mxu0 0.0
    %5358 = vmatprep.subr.mxu0 0.0
    %5359 = vmatpush1.msra.mxu0 0.0
    %5360 = vmatprep.subr.mxu0 0.0
    %5361 = vmatpush1.msra.mxu0 0.0
    %5362 = vmatprep.mubr.f32.mxu0 0.0
    %5363 = vmatmul.mubr.f32.gmra.mrb[0].mxu0 %v4713
    %v5364 = vpop.f32.mrb[0].mxu0
    %v5365 = vadd.f32 0.0, %v5364
    %v5366 = vpop.f32.mrb[0].mxu0
    %5367 = vdwg.mxu0
    %v5368 = vadd.f32 %v5295, %v5365
    %v5369 = vadd.f32 %v5368, %v103
    %v5370 = vxor.u32 %v5369, 2147483648
    %v5371 = vmul.f32 %v5370, 1.442695
    %v5372 = vpow.pop %v5371
    %v5373 = vadd.f32 %v5372, 1.0
    %v5374 = vrcp.pop %v5373
    %v5375 = vmul.f32 1.0, %v5374
    %v5376 = vadd.f32 %v5295, %v103
    %v5377 = vadd.f32 %v5365, %v4685
    %5379 = vrot.lane.b32.xlu0 %v5377, 64
    %v5380 = vpop.permute.xlu0 %5379
    %v5382 = vmul.f32 %v5375, %v5380
    %5384 = vrot.lane.b32.xlu0 %v5382, 64
    %v5385 = vpop.permute.xlu0 %5384
    %v5387 = vadd.f32 %v5376, %v5385
    %v5388 = vtanh.pop %v5387
    %v5389 = vsub.f32 1.0, %v5375
    %5391 = vrot.lane.b32.xlu0 %v5388, 96
    %v5392 = vpop.permute.xlu0 %5391
    %v5394 = vmul.f32 %v5389, %v5392
    %v5395 = vmul.f32 %v5375, %v4709
    %v5396 = vadd.f32 %v5394, %v5395
    %5398 = vrot.lane.b32.xlu0 %v5396, 96
    %v5399 = vpop.permute.xlu0 %5398
    %v5400 = vsel %vm125, %v5399, 0
    %5402 = vmatprep.subr.mxu0 0.0
    %5403 = vmatpush1.xpose.msra.mxu0 %v4265
    %5404 = vmatprep.subr.mxu0 0.0
    %5405 = vmatpush1.xpose.msra.mxu0 0.0
    %5406 = vmatprep.subr.mxu0 0.0
    %5407 = vmatpush1.xpose.msra.mxu0 0.0
    %5408 = vmatprep.subr.mxu0 0.0
    %5409 = vmatpush1.xpose.msra.mxu0 0.0
    %5410 = vmatprep.subr.mxu0 0.0
    %5411 = vmatpush1.xpose.msra.mxu0 0.0
    %5412 = vmatprep.subr.mxu0 0.0
    %5413 = vmatpush1.xpose.msra.mxu0 0.0
    %5414 = vmatprep.subr.mxu0 0.0
    %5415 = vmatpush1.xpose.msra.mxu0 0.0
    %5416 = vmatprep.subr.mxu0 0.0
    %5417 = vmatpush1.xpose.msra.mxu0 0.0
    %5418 = vmatprep.subr.mxu0 0.0
    %5419 = vmatpush1.xpose.msra.mxu0 0.0
    %5420 = vmatprep.subr.mxu0 0.0
    %5421 = vmatpush1.xpose.msra.mxu0 0.0
    %5422 = vmatprep.subr.mxu0 0.0
    %5423 = vmatpush1.xpose.msra.mxu0 0.0
    %5424 = vmatprep.subr.mxu0 0.0
    %5425 = vmatpush1.xpose.msra.mxu0 0.0
    %5426 = vmatprep.subr.mxu0 0.0
    %5427 = vmatpush1.xpose.msra.mxu0 0.0
    %5428 = vmatprep.subr.mxu0 0.0
    %5429 = vmatpush1.xpose.msra.mxu0 0.0
    %5430 = vmatprep.subr.mxu0 0.0
    %5431 = vmatpush1.xpose.msra.mxu0 0.0
    %5432 = vmatprep.subr.mxu0 0.0
    %5433 = vmatpush1.xpose.msra.mxu0 0.0
    %5434 = vmatprep.subr.mxu0 0.0
    %5435 = vmatpush1.xpose.msra.mxu0 0.0
    %5436 = vmatprep.subr.mxu0 0.0
    %5437 = vmatpush1.xpose.msra.mxu0 0.0
    %5438 = vmatprep.subr.mxu0 0.0
    %5439 = vmatpush1.xpose.msra.mxu0 0.0
    %5440 = vmatprep.subr.mxu0 0.0
    %5441 = vmatpush1.xpose.msra.mxu0 0.0
    %5442 = vmatprep.subr.mxu0 0.0
    %5443 = vmatpush1.xpose.msra.mxu0 0.0
    %5444 = vmatprep.subr.mxu0 0.0
    %5445 = vmatpush1.xpose.msra.mxu0 0.0
    %5446 = vmatprep.subr.mxu0 0.0
    %5447 = vmatpush1.xpose.msra.mxu0 0.0
    %5448 = vmatprep.subr.mxu0 0.0
    %5449 = vmatpush1.xpose.msra.mxu0 0.0
    %5450 = vmatprep.subr.mxu0 0.0
    %5451 = vmatpush1.xpose.msra.mxu0 0.0
    %5452 = vmatprep.subr.mxu0 0.0
    %5453 = vmatpush1.xpose.msra.mxu0 0.0
    %5454 = vmatprep.subr.mxu0 0.0
    %5455 = vmatpush1.xpose.msra.mxu0 0.0
    %5456 = vmatprep.subr.mxu0 0.0
    %5457 = vmatpush1.xpose.msra.mxu0 0.0
    %5458 = vmatprep.subr.mxu0 0.0
    %5459 = vmatpush1.xpose.msra.mxu0 0.0
    %5460 = vmatprep.subr.mxu0 0.0
    %5461 = vmatpush1.xpose.msra.mxu0 0.0
    %5462 = vmatprep.subr.mxu0 0.0
    %5463 = vmatpush1.xpose.msra.mxu0 0.0
    %5464 = vmatprep.subr.mxu0 0.0
    %5465 = vmatpush1.xpose.msra.mxu0 0.0
    %5466 = vmatprep.mubr.f32.mxu0 0.0
    %5467 = vmatmul.mubr.f32.gmra.mrb[0].mxu0 %v5400
    %v5468 = vpop.f32.mrb[0].mxu0
    %v5469 = vadd.f32 0.0, %v5468
    %v5470 = vpop.f32.mrb[0].mxu0
    %5471 = vdwg.mxu0
    %v5472 = vsel %vm4785, %v5469, -inf
    %5473 = vmax.xlane.f32.xlu0 %v5472
    %v5474 = vpop.xlane.xlu0 %5473
    %v5475 = vsub.f32 %v5469, %v5474
    %v5476 = vmul.f32 %v5475, 1.442695
    %v5477 = vpow.pop %v5476
    %v5478 = vsel %vm4785, %v5477, 0.0
    %5479 = vadd.xlane.f32.xlu0 %v5478
    %v5480 = vpop.xlane.xlu0 %5479
    %v5481 = vrcp.pop %v5480
    %v5482 = vmul.f32 %v5477, %v5481
    %v5484 = vsel %vm4797, %v5482, 0
    %5486 = vmatprep.subr.mxu0 0.0
    %5487 = vmatpush1.msra.mxu0 %v4334
    %5488 = vmatprep.subr.mxu0 0.0
    %5489 = vmatpush1.msra.mxu0 0.0
    %5490 = vmatprep.subr.mxu0 0.0
    %5491 = vmatpush1.msra.mxu0 0.0
    %5492 = vmatprep.subr.mxu0 0.0
    %5493 = vmatpush1.msra.mxu0 0.0
    %5494 = vmatprep.subr.mxu0 0.0
    %5495 = vmatpush1.msra.mxu0 0.0
    %5496 = vmatprep.subr.mxu0 0.0
    %5497 = vmatpush1.msra.mxu0 0.0
    %5498 = vmatprep.subr.mxu0 0.0
    %5499 = vmatpush1.msra.mxu0 0.0
    %5500 = vmatprep.subr.mxu0 0.0
    %5501 = vmatpush1.msra.mxu0 0.0
    %5502 = vmatprep.subr.mxu0 0.0
    %5503 = vmatpush1.msra.mxu0 0.0
    %5504 = vmatprep.subr.mxu0 0.0
    %5505 = vmatpush1.msra.mxu0 0.0
    %5506 = vmatprep.subr.mxu0 0.0
    %5507 = vmatpush1.msra.mxu0 0.0
    %5508 = vmatprep.subr.mxu0 0.0
    %5509 = vmatpush1.msra.mxu0 0.0
    %5510 = vmatprep.subr.mxu0 0.0
    %5511 = vmatpush1.msra.mxu0 0.0
    %5512 = vmatprep.subr.mxu0 0.0
    %5513 = vmatpush1.msra.mxu0 0.0
    %5514 = vmatprep.subr.mxu0 0.0
    %5515 = vmatpush1.msra.mxu0 0.0
    %5516 = vmatprep.subr.mxu0 0.0
    %5517 = vmatpush1.msra.mxu0 0.0
    %5518 = vmatprep.subr.mxu0 0.0
    %5519 = vmatpush1.msra.mxu0 0.0
    %5520 = vmatprep.subr.mxu0 0.0
    %5521 = vmatpush1.msra.mxu0 0.0
    %5522 = vmatprep.subr.mxu0 0.0
    %5523 = vmatpush1.msra.mxu0 0.0
    %5524 = vmatprep.subr.mxu0 0.0
    %5525 = vmatpush1.msra.mxu0 0.0
    %5526 = vmatprep.subr.mxu0 0.0
    %5527 = vmatpush1.msra.mxu0 0.0
    %5528 = vmatprep.subr.mxu0 0.0
    %5529 = vmatpush1.msra.mxu0 0.0
    %5530 = vmatprep.subr.mxu0 0.0
    %5531 = vmatpush1.msra.mxu0 0.0
    %5532 = vmatprep.subr.mxu0 0.0
    %5533 = vmatpush1.msra.mxu0 0.0
    %5534 = vmatprep.subr.mxu0 0.0
    %5535 = vmatpush1.msra.mxu0 0.0
    %5536 = vmatprep.subr.mxu0 0.0
    %5537 = vmatpush1.msra.mxu0 0.0
    %5538 = vmatprep.subr.mxu0 0.0
    %5539 = vmatpush1.msra.mxu0 0.0
    %5540 = vmatprep.subr.mxu0 0.0
    %5541 = vmatpush1.msra.mxu0 0.0
    %5542 = vmatprep.subr.mxu0 0.0
    %5543 = vmatpush1.msra.mxu0 0.0
    %5544 = vmatprep.subr.mxu0 0.0
    %5545 = vmatpush1.msra.mxu0 0.0
    %5546 = vmatprep.subr.mxu0 0.0
    %5547 = vmatpush1.msra.mxu0 0.0
    %5548 = vmatprep.subr.mxu0 0.0
    %5549 = vmatpush1.msra.mxu0 0.0
    %5550 = vmatprep.mubr.f32.mxu0 0.0
    %5551 = vmatmul.mubr.f32.gmra.mrb[0].mxu0 %v5484
    %v5552 = vpop.f32.mrb[0].mxu0
    %v5553 = vadd.f32 0.0, %v5552
    %v5554 = vpop.f32.mrb[0].mxu0
    %5555 = vdwg.mxu0
    %5556 = vmatprep.subr.mxu0 0.0
    %5557 = vmatpush1.msra.mxu0 %v112
    %5558 = vmatprep.subr.mxu0 0.0
    %5559 = vmatpush1.msra.mxu0 %v113
    %5560 = vmatprep.subr.mxu0 0.0
    %5561 = vmatpush1.msra.mxu0 %v114
    %5562 = vmatprep.subr.mxu0 0.0
    %5563 = vmatpush1.msra.mxu0 %v115
    %5564 = vmatprep.subr.mxu0 0.0
    %5565 = vmatpush1.msra.mxu0 0.0
    %5566 = vmatprep.subr.mxu0 0.0
    %5567 = vmatpush1.msra.mxu0 0.0
    %5568 = vmatprep.subr.mxu0 0.0
    %5569 = vmatpush1.msra.mxu0 0.0
    %5570 = vmatprep.subr.mxu0 0.0
    %5571 = vmatpush1.msra.mxu0 0.0
    %5572 = vmatprep.subr.mxu0 0.0
    %5573 = vmatpush1.msra.mxu0 0.0
    %5574 = vmatprep.subr.mxu0 0.0
    %5575 = vmatpush1.msra.mxu0 0.0
    %5576 = vmatprep.subr.mxu0 0.0
    %5577 = vmatpush1.msra.mxu0 0.0
    %5578 = vmatprep.subr.mxu0 0.0
    %5579 = vmatpush1.msra.mxu0 0.0
    %5580 = vmatprep.subr.mxu0 0.0
    %5581 = vmatpush1.msra.mxu0 0.0
    %5582 = vmatprep.subr.mxu0 0.0
    %5583 = vmatpush1.msra.mxu0 0.0
    %5584 = vmatprep.subr.mxu0 0.0
    %5585 = vmatpush1.msra.mxu0 0.0
    %5586 = vmatprep.subr.mxu0 0.0
    %5587 = vmatpush1.msra.mxu0 0.0
    %5588 = vmatprep.subr.mxu0 0.0
    %5589 = vmatpush1.msra.mxu0 0.0
    %5590 = vmatprep.subr.mxu0 0.0
    %5591 = vmatpush1.msra.mxu0 0.0
    %5592 = vmatprep.subr.mxu0 0.0
    %5593 = vmatpush1.msra.mxu0 0.0
    %5594 = vmatprep.subr.mxu0 0.0
    %5595 = vmatpush1.msra.mxu0 0.0
    %5596 = vmatprep.subr.mxu0 0.0
    %5597 = vmatpush1.msra.mxu0 0.0
    %5598 = vmatprep.subr.mxu0 0.0
    %5599 = vmatpush1.msra.mxu0 0.0
    %5600 = vmatprep.subr.mxu0 0.0
    %5601 = vmatpush1.msra.mxu0 0.0
    %5602 = vmatprep.subr.mxu0 0.0
    %5603 = vmatpush1.msra.mxu0 0.0
    %5604 = vmatprep.subr.mxu0 0.0
    %5605 = vmatpush1.msra.mxu0 0.0
    %5606 = vmatprep.subr.mxu0 0.0
    %5607 = vmatpush1.msra.mxu0 0.0
    %5608 = vmatprep.subr.mxu0 0.0
    %5609 = vmatpush1.msra.mxu0 0.0
    %5610 = vmatprep.subr.mxu0 0.0
    %5611 = vmatpush1.msra.mxu0 0.0
    %5612 = vmatprep.subr.mxu0 0.0
    %5613 = vmatpush1.msra.mxu0 0.0
    %5614 = vmatprep.subr.mxu0 0.0
    %5615 = vmatpush1.msra.mxu0 0.0
    %5616 = vmatprep.subr.mxu0 0.0
    %5617 = vmatpush1.msra.mxu0 0.0
    %5618 = vmatprep.subr.mxu0 0.0
    %5619 = vmatpush1.msra.mxu0 0.0
    %5620 = vmatprep.mubr.f32.mxu0 0.0
    %5621 = vmatmul.mubr.f32.gmra.mrb[0].mxu0 %v5400
    %v5622 = vpop.f32.mrb[0].mxu0
    %v5623 = vadd.f32 %v5553, %v5622
    %v5624 = vpop.f32.mrb[0].mxu0
    %5625 = vdwg.mxu0
    %v5626 = vadd.f32 %v5623, %v121
    %v5627 = vtanh.pop %v5626
    %v5629 = vsel %vm4342, %v5627, 0
    %5631 = vmatprep.subr.mxu0 0.0
    %5632 = vmatpush1.msra.mxu0 %v104
    %5633 = vmatprep.subr.mxu0 0.0
    %5634 = vmatpush1.msra.mxu0 %v105
    %5635 = vmatprep.subr.mxu0 0.0
    %5636 = vmatpush1.msra.mxu0 %v106
    %5637 = vmatprep.subr.mxu0 0.0
    %5638 = vmatpush1.msra.mxu0 %v107
    %5639 = vmatprep.subr.mxu0 0.0
    %5640 = vmatpush1.msra.mxu0 %v108
    %5641 = vmatprep.subr.mxu0 0.0
    %5642 = vmatpush1.msra.mxu0 %v109
    %5643 = vmatprep.subr.mxu0 0.0
    %5644 = vmatpush1.msra.mxu0 %v110
    %5645 = vmatprep.subr.mxu0 0.0
    %5646 = vmatpush1.msra.mxu0 %v111
    %5647 = vmatprep.subr.mxu0 0.0
    %5648 = vmatpush1.msra.mxu0 0.0
    %5649 = vmatprep.subr.mxu0 0.0
    %5650 = vmatpush1.msra.mxu0 0.0
    %5651 = vmatprep.subr.mxu0 0.0
    %5652 = vmatpush1.msra.mxu0 0.0
    %5653 = vmatprep.subr.mxu0 0.0
    %5654 = vmatpush1.msra.mxu0 0.0
    %5655 = vmatprep.subr.mxu0 0.0
    %5656 = vmatpush1.msra.mxu0 0.0
    %5657 = vmatprep.subr.mxu0 0.0
    %5658 = vmatpush1.msra.mxu0 0.0
    %5659 = vmatprep.subr.mxu0 0.0
    %5660 = vmatpush1.msra.mxu0 0.0
    %5661 = vmatprep.subr.mxu0 0.0
    %5662 = vmatpush1.msra.mxu0 0.0
    %5663 = vmatprep.subr.mxu0 0.0
    %5664 = vmatpush1.msra.mxu0 0.0
    %5665 = vmatprep.subr.mxu0 0.0
    %5666 = vmatpush1.msra.mxu0 0.0
    %5667 = vmatprep.subr.mxu0 0.0
    %5668 = vmatpush1.msra.mxu0 0.0
    %5669 = vmatprep.subr.mxu0 0.0
    %5670 = vmatpush1.msra.mxu0 0.0
    %5671 = vmatprep.subr.mxu0 0.0
    %5672 = vmatpush1.msra.mxu0 0.0
    %5673 = vmatprep.subr.mxu0 0.0
    %5674 = vmatpush1.msra.mxu0 0.0
    %5675 = vmatprep.subr.mxu0 0.0
    %5676 = vmatpush1.msra.mxu0 0.0
    %5677 = vmatprep.subr.mxu0 0.0
    %5678 = vmatpush1.msra.mxu0 0.0
    %5679 = vmatprep.subr.mxu0 0.0
    %5680 = vmatpush1.msra.mxu0 0.0
    %5681 = vmatprep.subr.mxu0 0.0
    %5682 = vmatpush1.msra.mxu0 0.0
    %5683 = vmatprep.subr.mxu0 0.0
    %5684 = vmatpush1.msra.mxu0 0.0
    %5685 = vmatprep.subr.mxu0 0.0
    %5686 = vmatpush1.msra.mxu0 0.0
    %5687 = vmatprep.subr.mxu0 0.0
    %5688 = vmatpush1.msra.mxu0 0.0
    %5689 = vmatprep.subr.mxu0 0.0
    %5690 = vmatpush1.msra.mxu0 0.0
    %5691 = vmatprep.subr.mxu0 0.0
    %5692 = vmatpush1.msra.mxu0 0.0
    %5693 = vmatprep.subr.mxu0 0.0
    %5694 = vmatpush1.msra.mxu0 0.0
    %5695 = vmatprep.mubr.f32.mxu0 0.0
    %5696 = vmatmul.mubr.f32.gmra.mrb[0].mxu0 %v5629
    %v5697 = vpop.f32.mrb[0].mxu0
    %v5698 = vadd.f32 %v120, %v5697
    %v5699 = vpop.f32.mrb[0].mxu0
    %5700 = vdwg.mxu0
    %v5701 = vsel %vm5016, %v5698, -inf
    %5702 = vmax.xlane.f32.xlu0 %v5701
    %v5703 = vpop.xlane.xlu0 %5702
    %v5704 = vsub.f32 %v5698, %v5703
    %v5705 = vmul.f32 %v5704, 1.442695
    %v5706 = vpow.pop %v5705
    %v5707 = vsel %vm5016, %v5706, 0.0
    %5708 = vadd.xlane.f32.xlu0 %v5707
    %v5709 = vpop.xlane.xlu0 %5708
    %v5710 = vrcp.pop %v5709
    %v5711 = vmul.f32 1.0, %v5710
    %vm5712 = vcmp.eq.f32.partialorder %v5698, %v5703
    %v5713 = vsel %vm5712, %v4338, 64
    %v5714 = vsel %vm5016, %v5713, 2147483647
    %v5715 = vand.u32 %v5714, 65535
    %v5716 = vshra.s32 %v5714, 16
    %v5717 = vcvt.s32.f32 %v5715
    %v5718 = vcvt.s32.f32 %v5716
    %5719 = vmin.xlane.f32.xlu0 %v5718
    %v5720 = vpop.xlane.xlu0 %5719
    %vm5721 = vcmp.eq.f32.partialorder %v5718, %v5720
    %v5722 = vsel %vm5721, %v5717, inf
    %5723 = vmin.xlane.f32.xlu0 %v5722
    %v5724 = vpop.xlane.xlu0 %5723
    %v5725 = vcvt.f32.s32 %v5724
    %v5726 = vcvt.f32.s32 %v5720
    %v5727 = vshll.u32 %v5726, 16
    %v5728 = vadd.s32 %v5727, %v5725
    %v5729 = vsel %vm4339, %v5728, %v5046
    %v5730 = vsel %vm4339, %v5711, %v5047
    %vm5731 = vcmp.eq.s32.totalorder %v4338, %v5728
    %v5732 = vsel %vm5731, 1, 0
    %v5733 = vcvt.s32.f32 %v5732
    %v5735 = vsel %vm4342, %v5733, 0
    %5737 = vmatprep.subr.mxu0 0.0
    %5738 = vmatpush1.msra.mxu0 %v90
    %5739 = vmatprep.subr.mxu0 0.0
    %5740 = vmatpush1.msra.mxu0 %v91
    %5741 = vmatprep.subr.mxu0 0.0
    %5742 = vmatpush1.msra.mxu0 %v92
    %5743 = vmatprep.subr.mxu0 0.0
    %5744 = vmatpush1.msra.mxu0 %v93
    %5745 = vmatprep.subr.mxu0 0.0
    %5746 = vmatpush1.msra.mxu0 %v94
    %5747 = vmatprep.subr.mxu0 0.0
    %5748 = vmatpush1.msra.mxu0 %v95
    %5749 = vmatprep.subr.mxu0 0.0
    %5750 = vmatpush1.msra.mxu0 %v96
    %5751 = vmatprep.subr.mxu0 0.0
    %5752 = vmatpush1.msra.mxu0 %v97
    %5753 = vmatprep.subr.mxu0 0.0
    %5754 = vmatpush1.msra.mxu0 0.0
    %5755 = vmatprep.subr.mxu0 0.0
    %5756 = vmatpush1.msra.mxu0 0.0
    %5757 = vmatprep.subr.mxu0 0.0
    %5758 = vmatpush1.msra.mxu0 0.0
    %5759 = vmatprep.subr.mxu0 0.0
    %5760 = vmatpush1.msra.mxu0 0.0
    %5761 = vmatprep.subr.mxu0 0.0
    %5762 = vmatpush1.msra.mxu0 0.0
    %5763 = vmatprep.subr.mxu0 0.0
    %5764 = vmatpush1.msra.mxu0 0.0
    %5765 = vmatprep.subr.mxu0 0.0
    %5766 = vmatpush1.msra.mxu0 0.0
    %5767 = vmatprep.subr.mxu0 0.0
    %5768 = vmatpush1.msra.mxu0 0.0
    %5769 = vmatprep.subr.mxu0 0.0
    %5770 = vmatpush1.msra.mxu0 0.0
    %5771 = vmatprep.subr.mxu0 0.0
    %5772 = vmatpush1.msra.mxu0 0.0
    %5773 = vmatprep.subr.mxu0 0.0
    %5774 = vmatpush1.msra.mxu0 0.0
    %5775 = vmatprep.subr.mxu0 0.0
    %5776 = vmatpush1.msra.mxu0 0.0
    %5777 = vmatprep.subr.mxu0 0.0
    %5778 = vmatpush1.msra.mxu0 0.0
    %5779 = vmatprep.subr.mxu0 0.0
    %5780 = vmatpush1.msra.mxu0 0.0
    %5781 = vmatprep.subr.mxu0 0.0
    %5782 = vmatpush1.msra.mxu0 0.0
    %5783 = vmatprep.subr.mxu0 0.0
    %5784 = vmatpush1.msra.mxu0 0.0
    %5785 = vmatprep.subr.mxu0 0.0
    %5786 = vmatpush1.msra.mxu0 0.0
    %5787 = vmatprep.subr.mxu0 0.0
    %5788 = vmatpush1.msra.mxu0 0.0
    %5789 = vmatprep.subr.mxu0 0.0
    %5790 = vmatpush1.msra.mxu0 0.0
    %5791 = vmatprep.subr.mxu0 0.0
    %5792 = vmatpush1.msra.mxu0 0.0
    %5793 = vmatprep.subr.mxu0 0.0
    %5794 = vmatpush1.msra.mxu0 0.0
    %5795 = vmatprep.subr.mxu0 0.0
    %5796 = vmatpush1.msra.mxu0 0.0
    %5797 = vmatprep.subr.mxu0 0.0
    %5798 = vmatpush1.msra.mxu0 0.0
    %5799 = vmatprep.subr.mxu0 0.0
    %5800 = vmatpush1.msra.mxu0 0.0
    %5801 = vmatprep.mubr.f32.mxu0 0.0
    %5802 = vmatmul.mubr.f32.gmra.mrb[0].mxu0 %v5735
    %v5803 = vpop.f32.mrb[0].mxu0
    %v5804 = vadd.f32 0.0, %v5803
    %v5805 = vpop.f32.mrb[0].mxu0
    %5806 = vdwg.mxu0
    %5807 = vmatprep.subr.mxu0 0.0
    %5808 = vmatpush1.msra.mxu0 %v78
    %5809 = vmatprep.subr.mxu0 0.0
    %5810 = vmatpush1.msra.mxu0 %v79
    %5811 = vmatprep.subr.mxu0 0.0
    %5812 = vmatpush1.msra.mxu0 %v80
    %5813 = vmatprep.subr.mxu0 0.0
    %5814 = vmatpush1.msra.mxu0 %v81
    %5815 = vmatprep.subr.mxu0 0.0
    %5816 = vmatpush1.msra.mxu0 0.0
    %5817 = vmatprep.subr.mxu0 0.0
    %5818 = vmatpush1.msra.mxu0 0.0
    %5819 = vmatprep.subr.mxu0 0.0
    %5820 = vmatpush1.msra.mxu0 0.0
    %5821 = vmatprep.subr.mxu0 0.0
    %5822 = vmatpush1.msra.mxu0 0.0
    %5823 = vmatprep.subr.mxu0 0.0
    %5824 = vmatpush1.msra.mxu0 0.0
    %5825 = vmatprep.subr.mxu0 0.0
    %5826 = vmatpush1.msra.mxu0 0.0
    %5827 = vmatprep.subr.mxu0 0.0
    %5828 = vmatpush1.msra.mxu0 0.0
    %5829 = vmatprep.subr.mxu0 0.0
    %5830 = vmatpush1.msra.mxu0 0.0
    %5831 = vmatprep.subr.mxu0 0.0
    %5832 = vmatpush1.msra.mxu0 0.0
    %5833 = vmatprep.subr.mxu0 0.0
    %5834 = vmatpush1.msra.mxu0 0.0
    %5835 = vmatprep.subr.mxu0 0.0
    %5836 = vmatpush1.msra.mxu0 0.0
    %5837 = vmatprep.subr.mxu0 0.0
    %5838 = vmatpush1.msra.mxu0 0.0
    %5839 = vmatprep.subr.mxu0 0.0
    %5840 = vmatpush1.msra.mxu0 0.0
    %5841 = vmatprep.subr.mxu0 0.0
    %5842 = vmatpush1.msra.mxu0 0.0
    %5843 = vmatprep.subr.mxu0 0.0
    %5844 = vmatpush1.msra.mxu0 0.0
    %5845 = vmatprep.subr.mxu0 0.0
    %5846 = vmatpush1.msra.mxu0 0.0
    %5847 = vmatprep.subr.mxu0 0.0
    %5848 = vmatpush1.msra.mxu0 0.0
    %5849 = vmatprep.subr.mxu0 0.0
    %5850 = vmatpush1.msra.mxu0 0.0
    %5851 = vmatprep.subr.mxu0 0.0
    %5852 = vmatpush1.msra.mxu0 0.0
    %5853 = vmatprep.subr.mxu0 0.0
    %5854 = vmatpush1.msra.mxu0 0.0
    %5855 = vmatprep.subr.mxu0 0.0
    %5856 = vmatpush1.msra.mxu0 0.0
    %5857 = vmatprep.subr.mxu0 0.0
    %5858 = vmatpush1.msra.mxu0 0.0
    %5859 = vmatprep.subr.mxu0 0.0
    %5860 = vmatpush1.msra.mxu0 0.0
    %5861 = vmatprep.subr.mxu0 0.0
    %5862 = vmatpush1.msra.mxu0 0.0
    %5863 = vmatprep.subr.mxu0 0.0
    %5864 = vmatpush1.msra.mxu0 0.0
    %5865 = vmatprep.subr.mxu0 0.0
    %5866 = vmatpush1.msra.mxu0 0.0
    %5867 = vmatprep.subr.mxu0 0.0
    %5868 = vmatpush1.msra.mxu0 0.0
    %5869 = vmatprep.subr.mxu0 0.0
    %5870 = vmatpush1.msra.mxu0 0.0
    %5871 = vmatprep.mubr.f32.mxu0 0.0
    %5872 = vmatmul.mubr.f32.gmra.mrb[0].mxu0 %v5226
    %v5873 = vpop.f32.mrb[0].mxu0
    %v5874 = vadd.f32 0.0, %v5873
    %v5875 = vpop.f32.mrb[0].mxu0
    %5876 = vdwg.mxu0
    %v5877 = vadd.f32 %v5804, %v5874
    %v5878 = vadd.f32 %v5877, %v102
    %v5879 = vxor.u32 %v5878, 2147483648
    %v5880 = vmul.f32 %v5879, 1.442695
    %v5881 = vpow.pop %v5880
    %v5882 = vadd.f32 %v5881, 1.0
    %v5883 = vrcp.pop %v5882
    %v5884 = vmul.f32 1.0, %v5883
    %v5885 = vadd.f32 %v5804, %v102
    %v5886 = vadd.f32 %v5874, %v4503
    %5888 = vrot.lane.b32.xlu0 %v5886, 64
    %v5889 = vpop.permute.xlu0 %5888
    %v5891 = vmul.f32 %v5884, %v5889
    %5893 = vrot.lane.b32.xlu0 %v5891, 64
    %v5894 = vpop.permute.xlu0 %5893
    %v5896 = vadd.f32 %v5885, %v5894
    %v5897 = vtanh.pop %v5896
    %v5898 = vsub.f32 1.0, %v5884
    %5900 = vrot.lane.b32.xlu0 %v5897, 96
    %v5901 = vpop.permute.xlu0 %5900
    %v5903 = vmul.f32 %v5898, %v5901
    %v5904 = vmul.f32 %v5884, %v5222
    %v5905 = vadd.f32 %v5903, %v5904
    %5907 = vrot.lane.b32.xlu0 %v5905, 96
    %v5908 = vpop.permute.xlu0 %5907
    %v5909 = vsel %vm125, %v5908, 0
    %5911 = vmatprep.subr.mxu0 0.0
    %5912 = vmatpush1.msra.mxu0 %v86
    %5913 = vmatprep.subr.mxu0 0.0
    %5914 = vmatpush1.msra.mxu0 %v87
    %5915 = vmatprep.subr.mxu0 0.0
    %5916 = vmatpush1.msra.mxu0 %v88
    %5917 = vmatprep.subr.mxu0 0.0
    %5918 = vmatpush1.msra.mxu0 %v89
    %5919 = vmatprep.subr.mxu0 0.0
    %5920 = vmatpush1.msra.mxu0 0.0
    %5921 = vmatprep.subr.mxu0 0.0
    %5922 = vmatpush1.msra.mxu0 0.0
    %5923 = vmatprep.subr.mxu0 0.0
    %5924 = vmatpush1.msra.mxu0 0.0
    %5925 = vmatprep.subr.mxu0 0.0
    %5926 = vmatpush1.msra.mxu0 0.0
    %5927 = vmatprep.subr.mxu0 0.0
    %5928 = vmatpush1.msra.mxu0 0.0
    %5929 = vmatprep.subr.mxu0 0.0
    %5930 = vmatpush1.msra.mxu0 0.0
    %5931 = vmatprep.subr.mxu0 0.0
    %5932 = vmatpush1.msra.mxu0 0.0
    %5933 = vmatprep.subr.mxu0 0.0
    %5934 = vmatpush1.msra.mxu0 0.0
    %5935 = vmatprep.subr.mxu0 0.0
    %5936 = vmatpush1.msra.mxu0 0.0
    %5937 = vmatprep.subr.mxu0 0.0
    %5938 = vmatpush1.msra.mxu0 0.0
    %5939 = vmatprep.subr.mxu0 0.0
    %5940 = vmatpush1.msra.mxu0 0.0
    %5941 = vmatprep.subr.mxu0 0.0
    %5942 = vmatpush1.msra.mxu0 0.0
    %5943 = vmatprep.subr.mxu0 0.0
    %5944 = vmatpush1.msra.mxu0 0.0
    %5945 = vmatprep.subr.mxu0 0.0
    %5946 = vmatpush1.msra.mxu0 0.0
    %5947 = vmatprep.subr.mxu0 0.0
    %5948 = vmatpush1.msra.mxu0 0.0
    %5949 = vmatprep.subr.mxu0 0.0
    %5950 = vmatpush1.msra.mxu0 0.0
    %5951 = vmatprep.subr.mxu0 0.0
    %5952 = vmatpush1.msra.mxu0 0.0
    %5953 = vmatprep.subr.mxu0 0.0
    %5954 = vmatpush1.msra.mxu0 0.0
    %5955 = vmatprep.subr.mxu0 0.0
    %5956 = vmatpush1.msra.mxu0 0.0
    %5957 = vmatprep.subr.mxu0 0.0
    %5958 = vmatpush1.msra.mxu0 0.0
    %5959 = vmatprep.subr.mxu0 0.0
    %5960 = vmatpush1.msra.mxu0 0.0
    %5961 = vmatprep.subr.mxu0 0.0
    %5962 = vmatpush1.msra.mxu0 0.0
    %5963 = vmatprep.subr.mxu0 0.0
    %5964 = vmatpush1.msra.mxu0 0.0
    %5965 = vmatprep.subr.mxu0 0.0
    %5966 = vmatpush1.msra.mxu0 0.0
    %5967 = vmatprep.subr.mxu0 0.0
    %5968 = vmatpush1.msra.mxu0 0.0
    %5969 = vmatprep.subr.mxu0 0.0
    %5970 = vmatpush1.msra.mxu0 0.0
    %5971 = vmatprep.subr.mxu0 0.0
    %5972 = vmatpush1.msra.mxu0 0.0
    %5973 = vmatprep.subr.mxu0 0.0
    %5974 = vmatpush1.msra.mxu0 0.0
    %5975 = vmatprep.mubr.f32.mxu0 0.0
    %5976 = vmatmul.mubr.f32.gmra.mrb[0].mxu0 %v5909
    %v5977 = vpop.f32.mrb[0].mxu0
    %v5978 = vadd.f32 0.0, %v5977
    %v5979 = vpop.f32.mrb[0].mxu0
    %5980 = vdwg.mxu0
    %5981 = vmatprep.subr.mxu0 0.0
    %5982 = vmatpush1.msra.mxu0 %v82
    %5983 = vmatprep.subr.mxu0 0.0
    %5984 = vmatpush1.msra.mxu0 %v83
    %5985 = vmatprep.subr.mxu0 0.0
    %5986 = vmatpush1.msra.mxu0 %v84
    %5987 = vmatprep.subr.mxu0 0.0
    %5988 = vmatpush1.msra.mxu0 %v85
    %5989 = vmatprep.subr.mxu0 0.0
    %5990 = vmatpush1.msra.mxu0 0.0
    %5991 = vmatprep.subr.mxu0 0.0
    %5992 = vmatpush1.msra.mxu0 0.0
    %5993 = vmatprep.subr.mxu0 0.0
    %5994 = vmatpush1.msra.mxu0 0.0
    %5995 = vmatprep.subr.mxu0 0.0
    %5996 = vmatpush1.msra.mxu0 0.0
    %5997 = vmatprep.subr.mxu0 0.0
    %5998 = vmatpush1.msra.mxu0 0.0
    %5999 = vmatprep.subr.mxu0 0.0
    %6000 = vmatpush1.msra.mxu0 0.0
    %6001 = vmatprep.subr.mxu0 0.0
    %6002 = vmatpush1.msra.mxu0 0.0
    %6003 = vmatprep.subr.mxu0 0.0
    %6004 = vmatpush1.msra.mxu0 0.0
    %6005 = vmatprep.subr.mxu0 0.0
    %6006 = vmatpush1.msra.mxu0 0.0
    %6007 = vmatprep.subr.mxu0 0.0
    %6008 = vmatpush1.msra.mxu0 0.0
    %6009 = vmatprep.subr.mxu0 0.0
    %6010 = vmatpush1.msra.mxu0 0.0
    %6011 = vmatprep.subr.mxu0 0.0
    %6012 = vmatpush1.msra.mxu0 0.0
    %6013 = vmatprep.subr.mxu0 0.0
    %6014 = vmatpush1.msra.mxu0 0.0
    %6015 = vmatprep.subr.mxu0 0.0
    %6016 = vmatpush1.msra.mxu0 0.0
    %6017 = vmatprep.subr.mxu0 0.0
    %6018 = vmatpush1.msra.mxu0 0.0
    %6019 = vmatprep.subr.mxu0 0.0
    %6020 = vmatpush1.msra.mxu0 0.0
    %6021 = vmatprep.subr.mxu0 0.0
    %6022 = vmatpush1.msra.mxu0 0.0
    %6023 = vmatprep.subr.mxu0 0.0
    %6024 = vmatpush1.msra.mxu0 0.0
    %6025 = vmatprep.subr.mxu0 0.0
    %6026 = vmatpush1.msra.mxu0 0.0
    %6027 = vmatprep.subr.mxu0 0.0
    %6028 = vmatpush1.msra.mxu0 0.0
    %6029 = vmatprep.subr.mxu0 0.0
    %6030 = vmatpush1.msra.mxu0 0.0
    %6031 = vmatprep.subr.mxu0 0.0
    %6032 = vmatpush1.msra.mxu0 0.0
    %6033 = vmatprep.subr.mxu0 0.0
    %6034 = vmatpush1.msra.mxu0 0.0
    %6035 = vmatprep.subr.mxu0 0.0
    %6036 = vmatpush1.msra.mxu0 0.0
    %6037 = vmatprep.subr.mxu0 0.0
    %6038 = vmatpush1.msra.mxu0 0.0
    %6039 = vmatprep.subr.mxu0 0.0
    %6040 = vmatpush1.msra.mxu0 0.0
    %6041 = vmatprep.subr.mxu0 0.0
    %6042 = vmatpush1.msra.mxu0 0.0
    %6043 = vmatprep.subr.mxu0 0.0
    %6044 = vmatpush1.msra.mxu0 0.0
    %6045 = vmatprep.mubr.f32.mxu0 0.0
    %6046 = vmatmul.mubr.f32.gmra.mrb[0].mxu0 %v5400
    %v6047 = vpop.f32.mrb[0].mxu0
    %v6048 = vadd.f32 0.0, %v6047
    %v6049 = vpop.f32.mrb[0].mxu0
    %6050 = vdwg.mxu0
    %v6051 = vadd.f32 %v5978, %v6048
    %v6052 = vadd.f32 %v6051, %v103
    %v6053 = vxor.u32 %v6052, 2147483648
    %v6054 = vmul.f32 %v6053, 1.442695
    %v6055 = vpow.pop %v6054
    %v6056 = vadd.f32 %v6055, 1.0
    %v6057 = vrcp.pop %v6056
    %v6058 = vmul.f32 1.0, %v6057
    %v6059 = vadd.f32 %v5978, %v103
    %v6060 = vadd.f32 %v6048, %v4685
    %6062 = vrot.lane.b32.xlu0 %v6060, 64
    %v6063 = vpop.permute.xlu0 %6062
    %v6065 = vmul.f32 %v6058, %v6063
    %6067 = vrot.lane.b32.xlu0 %v6065, 64
    %v6068 = vpop.permute.xlu0 %6067
    %v6070 = vadd.f32 %v6059, %v6068
    %v6071 = vtanh.pop %v6070
    %v6072 = vsub.f32 1.0, %v6058
    %6074 = vrot.lane.b32.xlu0 %v6071, 96
    %v6075 = vpop.permute.xlu0 %6074
    %v6077 = vmul.f32 %v6072, %v6075
    %v6078 = vmul.f32 %v6058, %v5396
    %v6079 = vadd.f32 %v6077, %v6078
    %6081 = vrot.lane.b32.xlu0 %v6079, 96
    %v6082 = vpop.permute.xlu0 %6081
    %v6083 = vsel %vm125, %v6082, 0
    %6085 = vmatprep.subr.mxu0 0.0
    %6086 = vmatpush1.xpose.msra.mxu0 %v4265
    %6087 = vmatprep.subr.mxu0 0.0
    %6088 = vmatpush1.xpose.msra.mxu0 0.0
    %6089 = vmatprep.subr.mxu0 0.0
    %6090 = vmatpush1.xpose.msra.mxu0 0.0
    %6091 = vmatprep.subr.mxu0 0.0
    %6092 = vmatpush1.xpose.msra.mxu0 0.0
    %6093 = vmatprep.subr.mxu0 0.0
    %6094 = vmatpush1.xpose.msra.mxu0 0.0
    %6095 = vmatprep.subr.mxu0 0.0
    %6096 = vmatpush1.xpose.msra.mxu0 0.0
    %6097 = vmatprep.subr.mxu0 0.0
    %6098 = vmatpush1.xpose.msra.mxu0 0.0
    %6099 = vmatprep.subr.mxu0 0.0
    %6100 = vmatpush1.xpose.msra.mxu0 0.0
    %6101 = vmatprep.subr.mxu0 0.0
    %6102 = vmatpush1.xpose.msra.mxu0 0.0
    %6103 = vmatprep.subr.mxu0 0.0
    %6104 = vmatpush1.xpose.msra.mxu0 0.0
    %6105 = vmatprep.subr.mxu0 0.0
    %6106 = vmatpush1.xpose.msra.mxu0 0.0
    %6107 = vmatprep.subr.mxu0 0.0
    %6108 = vmatpush1.xpose.msra.mxu0 0.0
    %6109 = vmatprep.subr.mxu0 0.0
    %6110 = vmatpush1.xpose.msra.mxu0 0.0
    %6111 = vmatprep.subr.mxu0 0.0
    %6112 = vmatpush1.xpose.msra.mxu0 0.0
    %6113 = vmatprep.subr.mxu0 0.0
    %6114 = vmatpush1.xpose.msra.mxu0 0.0
    %6115 = vmatprep.subr.mxu0 0.0
    %6116 = vmatpush1.xpose.msra.mxu0 0.0
    %6117 = vmatprep.subr.mxu0 0.0
    %6118 = vmatpush1.xpose.msra.mxu0 0.0
    %6119 = vmatprep.subr.mxu0 0.0
    %6120 = vmatpush1.xpose.msra.mxu0 0.0
    %6121 = vmatprep.subr.mxu0 0.0
    %6122 = vmatpush1.xpose.msra.mxu0 0.0
    %6123 = vmatprep.subr.mxu0 0.0
    %6124 = vmatpush1.xpose.msra.mxu0 0.0
    %6125 = vmatprep.subr.mxu0 0.0
    %6126 = vmatpush1.xpose.msra.mxu0 0.0
    %6127 = vmatprep.subr.mxu0 0.0
    %6128 = vmatpush1.xpose.msra.mxu0 0.0
    %6129 = vmatprep.subr.mxu0 0.0
    %6130 = vmatpush1.xpose.msra.mxu0 0.0
    %6131 = vmatprep.subr.mxu0 0.0
    %6132 = vmatpush1.xpose.msra.mxu0 0.0
    %6133 = vmatprep.subr.mxu0 0.0
    %6134 = vmatpush1.xpose.msra.mxu0 0.0
    %6135 = vmatprep.subr.mxu0 0.0
    %6136 = vmatpush1.xpose.msra.mxu0 0.0
    %6137 = vmatprep.subr.mxu0 0.0
    %6138 = vmatpush1.xpose.msra.mxu0 0.0
    %6139 = vmatprep.subr.mxu0 0.0
    %6140 = vmatpush1.xpose.msra.mxu0 0.0
    %6141 = vmatprep.subr.mxu0 0.0
    %6142 = vmatpush1.xpose.msra.mxu0 0.0
    %6143 = vmatprep.subr.mxu0 0.0
    %6144 = vmatpush1.xpose.msra.mxu0 0.0
    %6145 = vmatprep.subr.mxu0 0.0
    %6146 = vmatpush1.xpose.msra.mxu0 0.0
    %6147 = vmatprep.subr.mxu0 0.0
    %6148 = vmatpush1.xpose.msra.mxu0 0.0
    %6149 = vmatprep.mubr.f32.mxu0 0.0
    %6150 = vmatmul.mubr.f32.gmra.mrb[0].mxu0 %v6083
    %v6151 = vpop.f32.mrb[0].mxu0
    %v6152 = vadd.f32 0.0, %v6151
    %v6153 = vpop.f32.mrb[0].mxu0
    %6154 = vdwg.mxu0
    %v6155 = vsel %vm4785, %v6152, -inf
    %6156 = vmax.xlane.f32.xlu0 %v6155
    %v6157 = vpop.xlane.xlu0 %6156
    %v6158 = vsub.f32 %v6152, %v6157
    %v6159 = vmul.f32 %v6158, 1.442695
    %v6160 = vpow.pop %v6159
    %v6161 = vsel %vm4785, %v6160, 0.0
    %6162 = vadd.xlane.f32.xlu0 %v6161
    %v6163 = vpop.xlane.xlu0 %6162
    %v6164 = vrcp.pop %v6163
    %v6165 = vmul.f32 %v6160, %v6164
    %v6167 = vsel %vm4797, %v6165, 0
    %6169 = vmatprep.subr.mxu0 0.0
    %6170 = vmatpush1.msra.mxu0 %v4334
    %6171 = vmatprep.subr.mxu0 0.0
    %6172 = vmatpush1.msra.mxu0 0.0
    %6173 = vmatprep.subr.mxu0 0.0
    %6174 = vmatpush1.msra.mxu0 0.0
    %6175 = vmatprep.subr.mxu0 0.0
    %6176 = vmatpush1.msra.mxu0 0.0
    %6177 = vmatprep.subr.mxu0 0.0
    %6178 = vmatpush1.msra.mxu0 0.0
    %6179 = vmatprep.subr.mxu0 0.0
    %6180 = vmatpush1.msra.mxu0 0.0
    %6181 = vmatprep.subr.mxu0 0.0
    %6182 = vmatpush1.msra.mxu0 0.0
    %6183 = vmatprep.subr.mxu0 0.0
    %6184 = vmatpush1.msra.mxu0 0.0
    %6185 = vmatprep.subr.mxu0 0.0
    %6186 = vmatpush1.msra.mxu0 0.0
    %6187 = vmatprep.subr.mxu0 0.0
    %6188 = vmatpush1.msra.mxu0 0.0
    %6189 = vmatprep.subr.mxu0 0.0
    %6190 = vmatpush1.msra.mxu0 0.0
    %6191 = vmatprep.subr.mxu0 0.0
    %6192 = vmatpush1.msra.mxu0 0.0
    %6193 = vmatprep.subr.mxu0 0.0
    %6194 = vmatpush1.msra.mxu0 0.0
    %6195 = vmatprep.subr.mxu0 0.0
    %6196 = vmatpush1.msra.mxu0 0.0
    %6197 = vmatprep.subr.mxu0 0.0
    %6198 = vmatpush1.msra.mxu0 0.0
    %6199 = vmatprep.subr.mxu0 0.0
    %6200 = vmatpush1.msra.mxu0 0.0
    %6201 = vmatprep.subr.mxu0 0.0
    %6202 = vmatpush1.msra.mxu0 0.0
    %6203 = vmatprep.subr.mxu0 0.0
    %6204 = vmatpush1.msra.mxu0 0.0
    %6205 = vmatprep.subr.mxu0 0.0
    %6206 = vmatpush1.msra.mxu0 0.0
    %6207 = vmatprep.subr.mxu0 0.0
    %6208 = vmatpush1.msra.mxu0 0.0
    %6209 = vmatprep.subr.mxu0 0.0
    %6210 = vmatpush1.msra.mxu0 0.0
    %6211 = vmatprep.subr.mxu0 0.0
    %6212 = vmatpush1.msra.mxu0 0.0
    %6213 = vmatprep.subr.mxu0 0.0
    %6214 = vmatpush1.msra.mxu0 0.0
    %6215 = vmatprep.subr.mxu0 0.0
    %6216 = vmatpush1.msra.mxu0 0.0
    %6217 = vmatprep.subr.mxu0 0.0
    %6218 = vmatpush1.msra.mxu0 0.0
    %6219 = vmatprep.subr.mxu0 0.0
    %6220 = vmatpush1.msra.mxu0 0.0
    %6221 = vmatprep.subr.mxu0 0.0
    %6222 = vmatpush1.msra.mxu0 0.0
    %6223 = vmatprep.subr.mxu0 0.0
    %6224 = vmatpush1.msra.mxu0 0.0
    %6225 = vmatprep.subr.mxu0 0.0
    %6226 = vmatpush1.msra.mxu0 0.0
    %6227 = vmatprep.subr.mxu0 0.0
    %6228 = vmatpush1.msra.mxu0 0.0
    %6229 = vmatprep.subr.mxu0 0.0
    %6230 = vmatpush1.msra.mxu0 0.0
    %6231 = vmatprep.subr.mxu0 0.0
    %6232 = vmatpush1.msra.mxu0 0.0
    %6233 = vmatprep.mubr.f32.mxu0 0.0
    %6234 = vmatmul.mubr.f32.gmra.mrb[0].mxu0 %v6167
    %v6235 = vpop.f32.mrb[0].mxu0
    %v6236 = vadd.f32 0.0, %v6235
    %v6237 = vpop.f32.mrb[0].mxu0
    %6238 = vdwg.mxu0
    %6239 = vmatprep.subr.mxu0 0.0
    %6240 = vmatpush1.msra.mxu0 %v112
    %6241 = vmatprep.subr.mxu0 0.0
    %6242 = vmatpush1.msra.mxu0 %v113
    %6243 = vmatprep.subr.mxu0 0.0
    %6244 = vmatpush1.msra.mxu0 %v114
    %6245 = vmatprep.subr.mxu0 0.0
    %6246 = vmatpush1.msra.mxu0 %v115
    %6247 = vmatprep.subr.mxu0 0.0
    %6248 = vmatpush1.msra.mxu0 0.0
    %6249 = vmatprep.subr.mxu0 0.0
    %6250 = vmatpush1.msra.mxu0 0.0
    %6251 = vmatprep.subr.mxu0 0.0
    %6252 = vmatpush1.msra.mxu0 0.0
    %6253 = vmatprep.subr.mxu0 0.0
    %6254 = vmatpush1.msra.mxu0 0.0
    %6255 = vmatprep.subr.mxu0 0.0
    %6256 = vmatpush1.msra.mxu0 0.0
    %6257 = vmatprep.subr.mxu0 0.0
    %6258 = vmatpush1.msra.mxu0 0.0
    %6259 = vmatprep.subr.mxu0 0.0
    %6260 = vmatpush1.msra.mxu0 0.0
    %6261 = vmatprep.subr.mxu0 0.0
    %6262 = vmatpush1.msra.mxu0 0.0
    %6263 = vmatprep.subr.mxu0 0.0
    %6264 = vmatpush1.msra.mxu0 0.0
    %6265 = vmatprep.subr.mxu0 0.0
    %6266 = vmatpush1.msra.mxu0 0.0
    %6267 = vmatprep.subr.mxu0 0.0
    %6268 = vmatpush1.msra.mxu0 0.0
    %6269 = vmatprep.subr.mxu0 0.0
    %6270 = vmatpush1.msra.mxu0 0.0
    %6271 = vmatprep.subr.mxu0 0.0
    %6272 = vmatpush1.msra.mxu0 0.0
    %6273 = vmatprep.subr.mxu0 0.0
    %6274 = vmatpush1.msra.mxu0 0.0
    %6275 = vmatprep.subr.mxu0 0.0
    %6276 = vmatpush1.msra.mxu0 0.0
    %6277 = vmatprep.subr.mxu0 0.0
    %6278 = vmatpush1.msra.mxu0 0.0
    %6279 = vmatprep.subr.mxu0 0.0
    %6280 = vmatpush1.msra.mxu0 0.0
    %6281 = vmatprep.subr.mxu0 0.0
    %6282 = vmatpush1.msra.mxu0 0.0
    %6283 = vmatprep.subr.mxu0 0.0
    %6284 = vmatpush1.msra.mxu0 0.0
    %6285 = vmatprep.subr.mxu0 0.0
    %6286 = vmatpush1.msra.mxu0 0.0
    %6287 = vmatprep.subr.mxu0 0.0
    %6288 = vmatpush1.msra.mxu0 0.0
    %6289 = vmatprep.subr.mxu0 0.0
    %6290 = vmatpush1.msra.mxu0 0.0
    %6291 = vmatprep.subr.mxu0 0.0
    %6292 = vmatpush1.msra.mxu0 0.0
    %6293 = vmatprep.subr.mxu0 0.0
    %6294 = vmatpush1.msra.mxu0 0.0
    %6295 = vmatprep.subr.mxu0 0.0
    %6296 = vmatpush1.msra.mxu0 0.0
    %6297 = vmatprep.subr.mxu0 0.0
    %6298 = vmatpush1.msra.mxu0 0.0
    %6299 = vmatprep.subr.mxu0 0.0
    %6300 = vmatpush1.msra.mxu0 0.0
    %6301 = vmatprep.subr.mxu0 0.0
    %6302 = vmatpush1.msra.mxu0 0.0
    %6303 = vmatprep.mubr.f32.mxu0 0.0
    %6304 = vmatmul.mubr.f32.gmra.mrb[0].mxu0 %v6083
    %v6305 = vpop.f32.mrb[0].mxu0
    %v6306 = vadd.f32 %v6236, %v6305
    %v6307 = vpop.f32.mrb[0].mxu0
    %6308 = vdwg.mxu0
    %v6309 = vadd.f32 %v6306, %v121
    %v6310 = vtanh.pop %v6309
    %v6312 = vsel %vm4342, %v6310, 0
    %6314 = vmatprep.subr.mxu0 0.0
    %6315 = vmatpush1.msra.mxu0 %v104
    %6316 = vmatprep.subr.mxu0 0.0
    %6317 = vmatpush1.msra.mxu0 %v105
    %6318 = vmatprep.subr.mxu0 0.0
    %6319 = vmatpush1.msra.mxu0 %v106
    %6320 = vmatprep.subr.mxu0 0.0
    %6321 = vmatpush1.msra.mxu0 %v107
    %6322 = vmatprep.subr.mxu0 0.0
    %6323 = vmatpush1.msra.mxu0 %v108
    %6324 = vmatprep.subr.mxu0 0.0
    %6325 = vmatpush1.msra.mxu0 %v109
    %6326 = vmatprep.subr.mxu0 0.0
    %6327 = vmatpush1.msra.mxu0 %v110
    %6328 = vmatprep.subr.mxu0 0.0
    %6329 = vmatpush1.msra.mxu0 %v111
    %6330 = vmatprep.subr.mxu0 0.0
    %6331 = vmatpush1.msra.mxu0 0.0
    %6332 = vmatprep.subr.mxu0 0.0
    %6333 = vmatpush1.msra.mxu0 0.0
    %6334 = vmatprep.subr.mxu0 0.0
    %6335 = vmatpush1.msra.mxu0 0.0
    %6336 = vmatprep.subr.mxu0 0.0
    %6337 = vmatpush1.msra.mxu0 0.0
    %6338 = vmatprep.subr.mxu0 0.0
    %6339 = vmatpush1.msra.mxu0 0.0
    %6340 = vmatprep.subr.mxu0 0.0
    %6341 = vmatpush1.msra.mxu0 0.0
    %6342 = vmatprep.subr.mxu0 0.0
    %6343 = vmatpush1.msra.mxu0 0.0
    %6344 = vmatprep.subr.mxu0 0.0
    %6345 = vmatpush1.msra.mxu0 0.0
    %6346 = vmatprep.subr.mxu0 0.0
    %6347 = vmatpush1.msra.mxu0 0.0
    %6348 = vmatprep.subr.mxu0 0.0
    %6349 = vmatpush1.msra.mxu0 0.0
    %6350 = vmatprep.subr.mxu0 0.0
    %6351 = vmatpush1.msra.mxu0 0.0
    %6352 = vmatprep.subr.mxu0 0.0
    %6353 = vmatpush1.msra.mxu0 0.0
    %6354 = vmatprep.subr.mxu0 0.0
    %6355 = vmatpush1.msra.mxu0 0.0
    %6356 = vmatprep.subr.mxu0 0.0
    %6357 = vmatpush1.msra.mxu0 0.0
    %6358 = vmatprep.subr.mxu0 0.0
    %6359 = vmatpush1.msra.mxu0 0.0
    %6360 = vmatprep.subr.mxu0 0.0
    %6361 = vmatpush1.msra.mxu0 0.0
    %6362 = vmatprep.subr.mxu0 0.0
    %6363 = vmatpush1.msra.mxu0 0.0
    %6364 = vmatprep.subr.mxu0 0.0
    %6365 = vmatpush1.msra.mxu0 0.0
    %6366 = vmatprep.subr.mxu0 0.0
    %6367 = vmatpush1.msra.mxu0 0.0
    %6368 = vmatprep.subr.mxu0 0.0
    %6369 = vmatpush1.msra.mxu0 0.0
    %6370 = vmatprep.subr.mxu0 0.0
    %6371 = vmatpush1.msra.mxu0 0.0
    %6372 = vmatprep.subr.mxu0 0.0
    %6373 = vmatpush1.msra.mxu0 0.0
    %6374 = vmatprep.subr.mxu0 0.0
    %6375 = vmatpush1.msra.mxu0 0.0
    %6376 = vmatprep.subr.mxu0 0.0
    %6377 = vmatpush1.msra.mxu0 0.0
    %6378 = vmatprep.mubr.f32.mxu0 0.0
    %6379 = vmatmul.mubr.f32.gmra.mrb[0].mxu0 %v6312
    %v6380 = vpop.f32.mrb[0].mxu0
    %v6381 = vadd.f32 %v120, %v6380
    %v6382 = vpop.f32.mrb[0].mxu0
    %6383 = vdwg.mxu0
    %v6384 = vsel %vm5016, %v6381, -inf
    %6385 = vmax.xlane.f32.xlu0 %v6384
    %v6386 = vpop.xlane.xlu0 %6385
    %v6387 = vsub.f32 %v6381, %v6386
    %v6388 = vmul.f32 %v6387, 1.442695
    %v6389 = vpow.pop %v6388
    %v6390 = vsel %vm5016, %v6389, 0.0
    %6391 = vadd.xlane.f32.xlu0 %v6390
    %v6392 = vpop.xlane.xlu0 %6391
    %v6393 = vrcp.pop %v6392
    %v6394 = vmul.f32 1.0, %v6393
    %vm6395 = vcmp.eq.f32.partialorder %v6381, %v6386
    %v6396 = vsel %vm6395, %v4338, 64
    %v6397 = vsel %vm5016, %v6396, 2147483647
    %v6398 = vand.u32 %v6397, 65535
    %v6399 = vshra.s32 %v6397, 16
    %v6400 = vcvt.s32.f32 %v6398
    %v6401 = vcvt.s32.f32 %v6399
    %6402 = vmin.xlane.f32.xlu0 %v6401
    %v6403 = vpop.xlane.xlu0 %6402
    %vm6404 = vcmp.eq.f32.partialorder %v6401, %v6403
    %v6405 = vsel %vm6404, %v6400, inf
    %6406 = vmin.xlane.f32.xlu0 %v6405
    %v6407 = vpop.xlane.xlu0 %6406
    %v6408 = vcvt.f32.s32 %v6407
    %v6409 = vcvt.f32.s32 %v6403
    %v6410 = vshll.u32 %v6409, 16
    %v6411 = vadd.s32 %v6410, %v6408
    %vm6412 = vcmp.eq.s32.totalorder %v4338, 2
    %v6413 = vsel %vm6412, %v6411, %v5729
    %v6414 = vsel %vm6412, %v6394, %v5730
    %vm6415 = vcmp.eq.s32.totalorder %v4338, %v6411
    %v6416 = vsel %vm6415, 1, 0
    %v6417 = vcvt.s32.f32 %v6416
    %v6419 = vsel %vm4342, %v6417, 0
    %6421 = vmatprep.subr.mxu0 0.0
    %6422 = vmatpush1.msra.mxu0 %v90
    %6423 = vmatprep.subr.mxu0 0.0
    %6424 = vmatpush1.msra.mxu0 %v91
    %6425 = vmatprep.subr.mxu0 0.0
    %6426 = vmatpush1.msra.mxu0 %v92
    %6427 = vmatprep.subr.mxu0 0.0
    %6428 = vmatpush1.msra.mxu0 %v93
    %6429 = vmatprep.subr.mxu0 0.0
    %6430 = vmatpush1.msra.mxu0 %v94
    %6431 = vmatprep.subr.mxu0 0.0
    %6432 = vmatpush1.msra.mxu0 %v95
    %6433 = vmatprep.subr.mxu0 0.0
    %6434 = vmatpush1.msra.mxu0 %v96
    %6435 = vmatprep.subr.mxu0 0.0
    %6436 = vmatpush1.msra.mxu0 %v97
    %6437 = vmatprep.subr.mxu0 0.0
    %6438 = vmatpush1.msra.mxu0 0.0
    %6439 = vmatprep.subr.mxu0 0.0
    %6440 = vmatpush1.msra.mxu0 0.0
    %6441 = vmatprep.subr.mxu0 0.0
    %6442 = vmatpush1.msra.mxu0 0.0
    %6443 = vmatprep.subr.mxu0 0.0
    %6444 = vmatpush1.msra.mxu0 0.0
    %6445 = vmatprep.subr.mxu0 0.0
    %6446 = vmatpush1.msra.mxu0 0.0
    %6447 = vmatprep.subr.mxu0 0.0
    %6448 = vmatpush1.msra.mxu0 0.0
    %6449 = vmatprep.subr.mxu0 0.0
    %6450 = vmatpush1.msra.mxu0 0.0
    %6451 = vmatprep.subr.mxu0 0.0
    %6452 = vmatpush1.msra.mxu0 0.0
    %6453 = vmatprep.subr.mxu0 0.0
    %6454 = vmatpush1.msra.mxu0 0.0
    %6455 = vmatprep.subr.mxu0 0.0
    %6456 = vmatpush1.msra.mxu0 0.0
    %6457 = vmatprep.subr.mxu0 0.0
    %6458 = vmatpush1.msra.mxu0 0.0
    %6459 = vmatprep.subr.mxu0 0.0
    %6460 = vmatpush1.msra.mxu0 0.0
    %6461 = vmatprep.subr.mxu0 0.0
    %6462 = vmatpush1.msra.mxu0 0.0
    %6463 = vmatprep.subr.mxu0 0.0
    %6464 = vmatpush1.msra.mxu0 0.0
    %6465 = vmatprep.subr.mxu0 0.0
    %6466 = vmatpush1.msra.mxu0 0.0
    %6467 = vmatprep.subr.mxu0 0.0
    %6468 = vmatpush1.msra.mxu0 0.0
    %6469 = vmatprep.subr.mxu0 0.0
    %6470 = vmatpush1.msra.mxu0 0.0
    %6471 = vmatprep.subr.mxu0 0.0
    %6472 = vmatpush1.msra.mxu0 0.0
    %6473 = vmatprep.subr.mxu0 0.0
    %6474 = vmatpush1.msra.mxu0 0.0
    %6475 = vmatprep.subr.mxu0 0.0
    %6476 = vmatpush1.msra.mxu0 0.0
    %6477 = vmatprep.subr.mxu0 0.0
    %6478 = vmatpush1.msra.mxu0 0.0
    %6479 = vmatprep.subr.mxu0 0.0
    %6480 = vmatpush1.msra.mxu0 0.0
    %6481 = vmatprep.subr.mxu0 0.0
    %6482 = vmatpush1.msra.mxu0 0.0
    %6483 = vmatprep.subr.mxu0 0.0
    %6484 = vmatpush1.msra.mxu0 0.0
    %6485 = vmatprep.mubr.f32.mxu0 0.0
    %6486 = vmatmul.mubr.f32.gmra.mrb[0].mxu0 %v6419
    %v6487 = vpop.f32.mrb[0].mxu0
    %v6488 = vadd.f32 0.0, %v6487
    %v6489 = vpop.f32.mrb[0].mxu0
    %6490 = vdwg.mxu0
    %6491 = vmatprep.subr.mxu0 0.0
    %6492 = vmatpush1.msra.mxu0 %v78
    %6493 = vmatprep.subr.mxu0 0.0
    %6494 = vmatpush1.msra.mxu0 %v79
    %6495 = vmatprep.subr.mxu0 0.0
    %6496 = vmatpush1.msra.mxu0 %v80
    %6497 = vmatprep.subr.mxu0 0.0
    %6498 = vmatpush1.msra.mxu0 %v81
    %6499 = vmatprep.subr.mxu0 0.0
    %6500 = vmatpush1.msra.mxu0 0.0
    %6501 = vmatprep.subr.mxu0 0.0
    %6502 = vmatpush1.msra.mxu0 0.0
    %6503 = vmatprep.subr.mxu0 0.0
    %6504 = vmatpush1.msra.mxu0 0.0
    %6505 = vmatprep.subr.mxu0 0.0
    %6506 = vmatpush1.msra.mxu0 0.0
    %6507 = vmatprep.subr.mxu0 0.0
    %6508 = vmatpush1.msra.mxu0 0.0
    %6509 = vmatprep.subr.mxu0 0.0
    %6510 = vmatpush1.msra.mxu0 0.0
    %6511 = vmatprep.subr.mxu0 0.0
    %6512 = vmatpush1.msra.mxu0 0.0
    %6513 = vmatprep.subr.mxu0 0.0
    %6514 = vmatpush1.msra.mxu0 0.0
    %6515 = vmatprep.subr.mxu0 0.0
    %6516 = vmatpush1.msra.mxu0 0.0
    %6517 = vmatprep.subr.mxu0 0.0
    %6518 = vmatpush1.msra.mxu0 0.0
    %6519 = vmatprep.subr.mxu0 0.0
    %6520 = vmatpush1.msra.mxu0 0.0
    %6521 = vmatprep.subr.mxu0 0.0
    %6522 = vmatpush1.msra.mxu0 0.0
    %6523 = vmatprep.subr.mxu0 0.0
    %6524 = vmatpush1.msra.mxu0 0.0
    %6525 = vmatprep.subr.mxu0 0.0
    %6526 = vmatpush1.msra.mxu0 0.0
    %6527 = vmatprep.subr.mxu0 0.0
    %6528 = vmatpush1.msra.mxu0 0.0
    %6529 = vmatprep.subr.mxu0 0.0
    %6530 = vmatpush1.msra.mxu0 0.0
    %6531 = vmatprep.subr.mxu0 0.0
    %6532 = vmatpush1.msra.mxu0 0.0
    %6533 = vmatprep.subr.mxu0 0.0
    %6534 = vmatpush1.msra.mxu0 0.0
    %6535 = vmatprep.subr.mxu0 0.0
    %6536 = vmatpush1.msra.mxu0 0.0
    %6537 = vmatprep.subr.mxu0 0.0
    %6538 = vmatpush1.msra.mxu0 0.0
    %6539 = vmatprep.subr.mxu0 0.0
    %6540 = vmatpush1.msra.mxu0 0.0
    %6541 = vmatprep.subr.mxu0 0.0
    %6542 = vmatpush1.msra.mxu0 0.0
    %6543 = vmatprep.subr.mxu0 0.0
    %6544 = vmatpush1.msra.mxu0 0.0
    %6545 = vmatprep.subr.mxu0 0.0
    %6546 = vmatpush1.msra.mxu0 0.0
    %6547 = vmatprep.subr.mxu0 0.0
    %6548 = vmatpush1.msra.mxu0 0.0
    %6549 = vmatprep.subr.mxu0 0.0
    %6550 = vmatpush1.msra.mxu0 0.0
    %6551 = vmatprep.subr.mxu0 0.0
    %6552 = vmatpush1.msra.mxu0 0.0
    %6553 = vmatprep.subr.mxu0 0.0
    %6554 = vmatpush1.msra.mxu0 0.0
    %6555 = vmatprep.mubr.f32.mxu0 0.0
    %6556 = vmatmul.mubr.f32.gmra.mrb[0].mxu0 %v5909
    %v6557 = vpop.f32.mrb[0].mxu0
    %v6558 = vadd.f32 0.0, %v6557
    %v6559 = vpop.f32.mrb[0].mxu0
    %6560 = vdwg.mxu0
    %v6561 = vadd.f32 %v6488, %v6558
    %v6562 = vadd.f32 %v6561, %v102
    %v6563 = vxor.u32 %v6562, 2147483648
    %v6564 = vmul.f32 %v6563, 1.442695
    %v6565 = vpow.pop %v6564
    %v6566 = vadd.f32 %v6565, 1.0
    %v6567 = vrcp.pop %v6566
    %v6568 = vmul.f32 1.0, %v6567
    %v6569 = vadd.f32 %v6488, %v102
    %v6570 = vadd.f32 %v6558, %v4503
    %6572 = vrot.lane.b32.xlu0 %v6570, 64
    %v6573 = vpop.permute.xlu0 %6572
    %v6575 = vmul.f32 %v6568, %v6573
    %6577 = vrot.lane.b32.xlu0 %v6575, 64
    %v6578 = vpop.permute.xlu0 %6577
    %v6580 = vadd.f32 %v6569, %v6578
    %v6581 = vtanh.pop %v6580
    %v6582 = vsub.f32 1.0, %v6568
    %6584 = vrot.lane.b32.xlu0 %v6581, 96
    %v6585 = vpop.permute.xlu0 %6584
    %v6587 = vmul.f32 %v6582, %v6585
    %v6588 = vmul.f32 %v6568, %v5905
    %v6589 = vadd.f32 %v6587, %v6588
    %6591 = vrot.lane.b32.xlu0 %v6589, 96
    %v6592 = vpop.permute.xlu0 %6591
    %v6593 = vsel %vm125, %v6592, 0
    %6595 = vmatprep.subr.mxu0 0.0
    %6596 = vmatpush1.msra.mxu0 %v86
    %6597 = vmatprep.subr.mxu0 0.0
    %6598 = vmatpush1.msra.mxu0 %v87
    %6599 = vmatprep.subr.mxu0 0.0
    %6600 = vmatpush1.msra.mxu0 %v88
    %6601 = vmatprep.subr.mxu0 0.0
    %6602 = vmatpush1.msra.mxu0 %v89
    %6603 = vmatprep.subr.mxu0 0.0
    %6604 = vmatpush1.msra.mxu0 0.0
    %6605 = vmatprep.subr.mxu0 0.0
    %6606 = vmatpush1.msra.mxu0 0.0
    %6607 = vmatprep.subr.mxu0 0.0
    %6608 = vmatpush1.msra.mxu0 0.0
    %6609 = vmatprep.subr.mxu0 0.0
    %6610 = vmatpush1.msra.mxu0 0.0
    %6611 = vmatprep.subr.mxu0 0.0
    %6612 = vmatpush1.msra.mxu0 0.0
    %6613 = vmatprep.subr.mxu0 0.0
    %6614 = vmatpush1.msra.mxu0 0.0
    %6615 = vmatprep.subr.mxu0 0.0
    %6616 = vmatpush1.msra.mxu0 0.0
    %6617 = vmatprep.subr.mxu0 0.0
    %6618 = vmatpush1.msra.mxu0 0.0
    %6619 = vmatprep.subr.mxu0 0.0
    %6620 = vmatpush1.msra.mxu0 0.0
    %6621 = vmatprep.subr.mxu0 0.0
    %6622 = vmatpush1.msra.mxu0 0.0
    %6623 = vmatprep.subr.mxu0 0.0
    %6624 = vmatpush1.msra.mxu0 0.0
    %6625 = vmatprep.subr.mxu0 0.0
    %6626 = vmatpush1.msra.mxu0 0.0
    %6627 = vmatprep.subr.mxu0 0.0
    %6628 = vmatpush1.msra.mxu0 0.0
    %6629 = vmatprep.subr.mxu0 0.0
    %6630 = vmatpush1.msra.mxu0 0.0
    %6631 = vmatprep.subr.mxu0 0.0
    %6632 = vmatpush1.msra.mxu0 0.0
    %6633 = vmatprep.subr.mxu0 0.0
    %6634 = vmatpush1.msra.mxu0 0.0
    %6635 = vmatprep.subr.mxu0 0.0
    %6636 = vmatpush1.msra.mxu0 0.0
    %6637 = vmatprep.subr.mxu0 0.0
    %6638 = vmatpush1.msra.mxu0 0.0
    %6639 = vmatprep.subr.mxu0 0.0
    %6640 = vmatpush1.msra.mxu0 0.0
    %6641 = vmatprep.subr.mxu0 0.0
    %6642 = vmatpush1.msra.mxu0 0.0
    %6643 = vmatprep.subr.mxu0 0.0
    %6644 = vmatpush1.msra.mxu0 0.0
    %6645 = vmatprep.subr.mxu0 0.0
    %6646 = vmatpush1.msra.mxu0 0.0
    %6647 = vmatprep.subr.mxu0 0.0
    %6648 = vmatpush1.msra.mxu0 0.0
    %6649 = vmatprep.subr.mxu0 0.0
    %6650 = vmatpush1.msra.mxu0 0.0
    %6651 = vmatprep.subr.mxu0 0.0
    %6652 = vmatpush1.msra.mxu0 0.0
    %6653 = vmatprep.subr.mxu0 0.0
    %6654 = vmatpush1.msra.mxu0 0.0
    %6655 = vmatprep.subr.mxu0 0.0
    %6656 = vmatpush1.msra.mxu0 0.0
    %6657 = vmatprep.subr.mxu0 0.0
    %6658 = vmatpush1.msra.mxu0 0.0
    %6659 = vmatprep.mubr.f32.mxu0 0.0
    %6660 = vmatmul.mubr.f32.gmra.mrb[0].mxu0 %v6593
    %v6661 = vpop.f32.mrb[0].mxu0
    %v6662 = vadd.f32 0.0, %v6661
    %v6663 = vpop.f32.mrb[0].mxu0
    %6664 = vdwg.mxu0
    %6665 = vmatprep.subr.mxu0 0.0
    %6666 = vmatpush1.msra.mxu0 %v82
    %6667 = vmatprep.subr.mxu0 0.0
    %6668 = vmatpush1.msra.mxu0 %v83
    %6669 = vmatprep.subr.mxu0 0.0
    %6670 = vmatpush1.msra.mxu0 %v84
    %6671 = vmatprep.subr.mxu0 0.0
    %6672 = vmatpush1.msra.mxu0 %v85
    %6673 = vmatprep.subr.mxu0 0.0
    %6674 = vmatpush1.msra.mxu0 0.0
    %6675 = vmatprep.subr.mxu0 0.0
    %6676 = vmatpush1.msra.mxu0 0.0
    %6677 = vmatprep.subr.mxu0 0.0
    %6678 = vmatpush1.msra.mxu0 0.0
    %6679 = vmatprep.subr.mxu0 0.0
    %6680 = vmatpush1.msra.mxu0 0.0
    %6681 = vmatprep.subr.mxu0 0.0
    %6682 = vmatpush1.msra.mxu0 0.0
    %6683 = vmatprep.subr.mxu0 0.0
    %6684 = vmatpush1.msra.mxu0 0.0
    %6685 = vmatprep.subr.mxu0 0.0
    %6686 = vmatpush1.msra.mxu0 0.0
    %6687 = vmatprep.subr.mxu0 0.0
    %6688 = vmatpush1.msra.mxu0 0.0
    %6689 = vmatprep.subr.mxu0 0.0
    %6690 = vmatpush1.msra.mxu0 0.0
    %6691 = vmatprep.subr.mxu0 0.0
    %6692 = vmatpush1.msra.mxu0 0.0
    %6693 = vmatprep.subr.mxu0 0.0
    %6694 = vmatpush1.msra.mxu0 0.0
    %6695 = vmatprep.subr.mxu0 0.0
    %6696 = vmatpush1.msra.mxu0 0.0
    %6697 = vmatprep.subr.mxu0 0.0
    %6698 = vmatpush1.msra.mxu0 0.0
    %6699 = vmatprep.subr.mxu0 0.0
    %6700 = vmatpush1.msra.mxu0 0.0
    %6701 = vmatprep.subr.mxu0 0.0
    %6702 = vmatpush1.msra.mxu0 0.0
    %6703 = vmatprep.subr.mxu0 0.0
    %6704 = vmatpush1.msra.mxu0 0.0
    %6705 = vmatprep.subr.mxu0 0.0
    %6706 = vmatpush1.msra.mxu0 0.0
    %6707 = vmatprep.subr.mxu0 0.0
    %6708 = vmatpush1.msra.mxu0 0.0
    %6709 = vmatprep.subr.mxu0 0.0
    %6710 = vmatpush1.msra.mxu0 0.0
    %6711 = vmatprep.subr.mxu0 0.0
    %6712 = vmatpush1.msra.mxu0 0.0
    %6713 = vmatprep.subr.mxu0 0.0
    %6714 = vmatpush1.msra.mxu0 0.0
    %6715 = vmatprep.subr.mxu0 0.0
    %6716 = vmatpush1.msra.mxu0 0.0
    %6717 = vmatprep.subr.mxu0 0.0
    %6718 = vmatpush1.msra.mxu0 0.0
    %6719 = vmatprep.subr.mxu0 0.0
    %6720 = vmatpush1.msra.mxu0 0.0
    %6721 = vmatprep.subr.mxu0 0.0
    %6722 = vmatpush1.msra.mxu0 0.0
    %6723 = vmatprep.subr.mxu0 0.0
    %6724 = vmatpush1.msra.mxu0 0.0
    %6725 = vmatprep.subr.mxu0 0.0
    %6726 = vmatpush1.msra.mxu0 0.0
    %6727 = vmatprep.subr.mxu0 0.0
    %6728 = vmatpush1.msra.mxu0 0.0
    %6729 = vmatprep.mubr.f32.mxu0 0.0
    %6730 = vmatmul.mubr.f32.gmra.mrb[0].mxu0 %v6083
    %v6731 = vpop.f32.mrb[0].mxu0
    %v6732 = vadd.f32 0.0, %v6731
    %v6733 = vpop.f32.mrb[0].mxu0
    %6734 = vdwg.mxu0
    %v6735 = vadd.f32 %v6662, %v6732
    %v6736 = vadd.f32 %v6735, %v103
    %v6737 = vxor.u32 %v6736, 2147483648
    %v6738 = vmul.f32 %v6737, 1.442695
    %v6739 = vpow.pop %v6738
    %v6740 = vadd.f32 %v6739, 1.0
    %v6741 = vrcp.pop %v6740
    %v6742 = vmul.f32 1.0, %v6741
    %v6743 = vadd.f32 %v6662, %v103
    %v6744 = vadd.f32 %v6732, %v4685
    %6746 = vrot.lane.b32.xlu0 %v6744, 64
    %v6747 = vpop.permute.xlu0 %6746
    %v6749 = vmul.f32 %v6742, %v6747
    %6751 = vrot.lane.b32.xlu0 %v6749, 64
    %v6752 = vpop.permute.xlu0 %6751
    %v6754 = vadd.f32 %v6743, %v6752
    %v6755 = vtanh.pop %v6754
    %v6756 = vsub.f32 1.0, %v6742
    %6758 = vrot.lane.b32.xlu0 %v6755, 96
    %v6759 = vpop.permute.xlu0 %6758
    %v6761 = vmul.f32 %v6756, %v6759
    %v6762 = vmul.f32 %v6742, %v6079
    %v6763 = vadd.f32 %v6761, %v6762
    %6765 = vrot.lane.b32.xlu0 %v6763, 96
    %v6766 = vpop.permute.xlu0 %6765
    %v6767 = vsel %vm125, %v6766, 0
    %6769 = vmatprep.subr.mxu0 0.0
    %6770 = vmatpush1.xpose.msra.mxu0 %v4265
    %6771 = vmatprep.subr.mxu0 0.0
    %6772 = vmatpush1.xpose.msra.mxu0 0.0
    %6773 = vmatprep.subr.mxu0 0.0
    %6774 = vmatpush1.xpose.msra.mxu0 0.0
    %6775 = vmatprep.subr.mxu0 0.0
    %6776 = vmatpush1.xpose.msra.mxu0 0.0
    %6777 = vmatprep.subr.mxu0 0.0
    %6778 = vmatpush1.xpose.msra.mxu0 0.0
    %6779 = vmatprep.subr.mxu0 0.0
    %6780 = vmatpush1.xpose.msra.mxu0 0.0
    %6781 = vmatprep.subr.mxu0 0.0
    %6782 = vmatpush1.xpose.msra.mxu0 0.0
    %6783 = vmatprep.subr.mxu0 0.0
    %6784 = vmatpush1.xpose.msra.mxu0 0.0
    %6785 = vmatprep.subr.mxu0 0.0
    %6786 = vmatpush1.xpose.msra.mxu0 0.0
    %6787 = vmatprep.subr.mxu0 0.0
    %6788 = vmatpush1.xpose.msra.mxu0 0.0
    %6789 = vmatprep.subr.mxu0 0.0
    %6790 = vmatpush1.xpose.msra.mxu0 0.0
    %6791 = vmatprep.subr.mxu0 0.0
    %6792 = vmatpush1.xpose.msra.mxu0 0.0
    %6793 = vmatprep.subr.mxu0 0.0
    %6794 = vmatpush1.xpose.msra.mxu0 0.0
    %6795 = vmatprep.subr.mxu0 0.0
    %6796 = vmatpush1.xpose.msra.mxu0 0.0
    %6797 = vmatprep.subr.mxu0 0.0
    %6798 = vmatpush1.xpose.msra.mxu0 0.0
    %6799 = vmatprep.subr.mxu0 0.0
    %6800 = vmatpush1.xpose.msra.mxu0 0.0
    %6801 = vmatprep.subr.mxu0 0.0
    %6802 = vmatpush1.xpose.msra.mxu0 0.0
    %6803 = vmatprep.subr.mxu0 0.0
    %6804 = vmatpush1.xpose.msra.mxu0 0.0
    %6805 = vmatprep.subr.mxu0 0.0
    %6806 = vmatpush1.xpose.msra.mxu0 0.0
    %6807 = vmatprep.subr.mxu0 0.0
    %6808 = vmatpush1.xpose.msra.mxu0 0.0
    %6809 = vmatprep.subr.mxu0 0.0
    %6810 = vmatpush1.xpose.msra.mxu0 0.0
    %6811 = vmatprep.subr.mxu0 0.0
    %6812 = vmatpush1.xpose.msra.mxu0 0.0
    %6813 = vmatprep.subr.mxu0 0.0
    %6814 = vmatpush1.xpose.msra.mxu0 0.0
    %6815 = vmatprep.subr.mxu0 0.0
    %6816 = vmatpush1.xpose.msra.mxu0 0.0
    %6817 = vmatprep.subr.mxu0 0.0
    %6818 = vmatpush1.xpose.msra.mxu0 0.0
    %6819 = vmatprep.subr.mxu0 0.0
    %6820 = vmatpush1.xpose.msra.mxu0 0.0
    %6821 = vmatprep.subr.mxu0 0.0
    %6822 = vmatpush1.xpose.msra.mxu0 0.0
    %6823 = vmatprep.subr.mxu0 0.0
    %6824 = vmatpush1.xpose.msra.mxu0 0.0
    %6825 = vmatprep.subr.mxu0 0.0
    %6826 = vmatpush1.xpose.msra.mxu0 0.0
    %6827 = vmatprep.subr.mxu0 0.0
    %6828 = vmatpush1.xpose.msra.mxu0 0.0
    %6829 = vmatprep.subr.mxu0 0.0
    %6830 = vmatpush1.xpose.msra.mxu0 0.0
    %6831 = vmatprep.subr.mxu0 0.0
    %6832 = vmatpush1.xpose.msra.mxu0 0.0
    %6833 = vmatprep.mubr.f32.mxu0 0.0
    %6834 = vmatmul.mubr.f32.gmra.mrb[0].mxu0 %v6767
    %v6835 = vpop.f32.mrb[0].mxu0
    %v6836 = vadd.f32 0.0, %v6835
    %v6837 = vpop.f32.mrb[0].mxu0
    %6838 = vdwg.mxu0
    %v6839 = vsel %vm4785, %v6836, -inf
    %6840 = vmax.xlane.f32.xlu0 %v6839
    %v6841 = vpop.xlane.xlu0 %6840
    %v6842 = vsub.f32 %v6836, %v6841
    %v6843 = vmul.f32 %v6842, 1.442695
    %v6844 = vpow.pop %v6843
    %v6845 = vsel %vm4785, %v6844, 0.0
    %6846 = vadd.xlane.f32.xlu0 %v6845
    %v6847 = vpop.xlane.xlu0 %6846
    %v6848 = vrcp.pop %v6847
    %v6849 = vmul.f32 %v6844, %v6848
    %v6851 = vsel %vm4797, %v6849, 0
    %6853 = vmatprep.subr.mxu0 0.0
    %6854 = vmatpush1.msra.mxu0 %v4334
    %6855 = vmatprep.subr.mxu0 0.0
    %6856 = vmatpush1.msra.mxu0 0.0
    %6857 = vmatprep.subr.mxu0 0.0
    %6858 = vmatpush1.msra.mxu0 0.0
    %6859 = vmatprep.subr.mxu0 0.0
    %6860 = vmatpush1.msra.mxu0 0.0
    %6861 = vmatprep.subr.mxu0 0.0
    %6862 = vmatpush1.msra.mxu0 0.0
    %6863 = vmatprep.subr.mxu0 0.0
    %6864 = vmatpush1.msra.mxu0 0.0
    %6865 = vmatprep.subr.mxu0 0.0
    %6866 = vmatpush1.msra.mxu0 0.0
    %6867 = vmatprep.subr.mxu0 0.0
    %6868 = vmatpush1.msra.mxu0 0.0
    %6869 = vmatprep.subr.mxu0 0.0
    %6870 = vmatpush1.msra.mxu0 0.0
    %6871 = vmatprep.subr.mxu0 0.0
    %6872 = vmatpush1.msra.mxu0 0.0
    %6873 = vmatprep.subr.mxu0 0.0
    %6874 = vmatpush1.msra.mxu0 0.0
    %6875 = vmatprep.subr.mxu0 0.0
    %6876 = vmatpush1.msra.mxu0 0.0
    %6877 = vmatprep.subr.mxu0 0.0
    %6878 = vmatpush1.msra.mxu0 0.0
    %6879 = vmatprep.subr.mxu0 0.0
    %6880 = vmatpush1.msra.mxu0 0.0
    %6881 = vmatprep.subr.mxu0 0.0
    %6882 = vmatpush1.msra.mxu0 0.0
    %6883 = vmatprep.subr.mxu0 0.0
    %6884 = vmatpush1.msra.mxu0 0.0
    %6885 = vmatprep.subr.mxu0 0.0
    %6886 = vmatpush1.msra.mxu0 0.0
    %6887 = vmatprep.subr.mxu0 0.0
    %6888 = vmatpush1.msra.mxu0 0.0
    %6889 = vmatprep.subr.mxu0 0.0
    %6890 = vmatpush1.msra.mxu0 0.0
    %6891 = vmatprep.subr.mxu0 0.0
    %6892 = vmatpush1.msra.mxu0 0.0
    %6893 = vmatprep.subr.mxu0 0.0
    %6894 = vmatpush1.msra.mxu0 0.0
    %6895 = vmatprep.subr.mxu0 0.0
    %6896 = vmatpush1.msra.mxu0 0.0
    %6897 = vmatprep.subr.mxu0 0.0
    %6898 = vmatpush1.msra.mxu0 0.0
    %6899 = vmatprep.subr.mxu0 0.0
    %6900 = vmatpush1.msra.mxu0 0.0
    %6901 = vmatprep.subr.mxu0 0.0
    %6902 = vmatpush1.msra.mxu0 0.0
    %6903 = vmatprep.subr.mxu0 0.0
    %6904 = vmatpush1.msra.mxu0 0.0
    %6905 = vmatprep.subr.mxu0 0.0
    %6906 = vmatpush1.msra.mxu0 0.0
    %6907 = vmatprep.subr.mxu0 0.0
    %6908 = vmatpush1.msra.mxu0 0.0
    %6909 = vmatprep.subr.mxu0 0.0
    %6910 = vmatpush1.msra.mxu0 0.0
    %6911 = vmatprep.subr.mxu0 0.0
    %6912 = vmatpush1.msra.mxu0 0.0
    %6913 = vmatprep.subr.mxu0 0.0
    %6914 = vmatpush1.msra.mxu0 0.0
    %6915 = vmatprep.subr.mxu0 0.0
    %6916 = vmatpush1.msra.mxu0 0.0
    %6917 = vmatprep.mubr.f32.mxu0 0.0
    %6918 = vmatmul.mubr.f32.gmra.mrb[0].mxu0 %v6851
    %v6919 = vpop.f32.mrb[0].mxu0
    %v6920 = vadd.f32 0.0, %v6919
    %v6921 = vpop.f32.mrb[0].mxu0
    %6922 = vdwg.mxu0
    %6923 = vmatprep.subr.mxu0 0.0
    %6924 = vmatpush1.msra.mxu0 %v112
    %6925 = vmatprep.subr.mxu0 0.0
    %6926 = vmatpush1.msra.mxu0 %v113
    %6927 = vmatprep.subr.mxu0 0.0
    %6928 = vmatpush1.msra.mxu0 %v114
    %6929 = vmatprep.subr.mxu0 0.0
    %6930 = vmatpush1.msra.mxu0 %v115
    %6931 = vmatprep.subr.mxu0 0.0
    %6932 = vmatpush1.msra.mxu0 0.0
    %6933 = vmatprep.subr.mxu0 0.0
    %6934 = vmatpush1.msra.mxu0 0.0
    %6935 = vmatprep.subr.mxu0 0.0
    %6936 = vmatpush1.msra.mxu0 0.0
    %6937 = vmatprep.subr.mxu0 0.0
    %6938 = vmatpush1.msra.mxu0 0.0
    %6939 = vmatprep.subr.mxu0 0.0
    %6940 = vmatpush1.msra.mxu0 0.0
    %6941 = vmatprep.subr.mxu0 0.0
    %6942 = vmatpush1.msra.mxu0 0.0
    %6943 = vmatprep.subr.mxu0 0.0
    %6944 = vmatpush1.msra.mxu0 0.0
    %6945 = vmatprep.subr.mxu0 0.0
    %6946 = vmatpush1.msra.mxu0 0.0
    %6947 = vmatprep.subr.mxu0 0.0
    %6948 = vmatpush1.msra.mxu0 0.0
    %6949 = vmatprep.subr.mxu0 0.0
    %6950 = vmatpush1.msra.mxu0 0.0
    %6951 = vmatprep.subr.mxu0 0.0
    %6952 = vmatpush1.msra.mxu0 0.0
    %6953 = vmatprep.subr.mxu0 0.0
    %6954 = vmatpush1.msra.mxu0 0.0
    %6955 = vmatprep.subr.mxu0 0.0
    %6956 = vmatpush1.msra.mxu0 0.0
    %6957 = vmatprep.subr.mxu0 0.0
    %6958 = vmatpush1.msra.mxu0 0.0
    %6959 = vmatprep.subr.mxu0 0.0
    %6960 = vmatpush1.msra.mxu0 0.0
    %6961 = vmatprep.subr.mxu0 0.0
    %6962 = vmatpush1.msra.mxu0 0.0
    %6963 = vmatprep.subr.mxu0 0.0
    %6964 = vmatpush1.msra.mxu0 0.0
    %6965 = vmatprep.subr.mxu0 0.0
    %6966 = vmatpush1.msra.mxu0 0.0
    %6967 = vmatprep.subr.mxu0 0.0
    %6968 = vmatpush1.msra.mxu0 0.0
    %6969 = vmatprep.subr.mxu0 0.0
    %6970 = vmatpush1.msra.mxu0 0.0
    %6971 = vmatprep.subr.mxu0 0.0
    %6972 = vmatpush1.msra.mxu0 0.0
    %6973 = vmatprep.subr.mxu0 0.0
    %6974 = vmatpush1.msra.mxu0 0.0
    %6975 = vmatprep.subr.mxu0 0.0
    %6976 = vmatpush1.msra.mxu0 0.0
    %6977 = vmatprep.subr.mxu0 0.0
    %6978 = vmatpush1.msra.mxu0 0.0
    %6979 = vmatprep.subr.mxu0 0.0
    %6980 = vmatpush1.msra.mxu0 0.0
    %6981 = vmatprep.subr.mxu0 0.0
    %6982 = vmatpush1.msra.mxu0 0.0
    %6983 = vmatprep.subr.mxu0 0.0
    %6984 = vmatpush1.msra.mxu0 0.0
    %6985 = vmatprep.subr.mxu0 0.0
    %6986 = vmatpush1.msra.mxu0 0.0
    %6987 = vmatprep.mubr.f32.mxu0 0.0
    %6988 = vmatmul.mubr.f32.gmra.mrb[0].mxu0 %v6767
    %v6989 = vpop.f32.mrb[0].mxu0
    %v6990 = vadd.f32 %v6920, %v6989
    %v6991 = vpop.f32.mrb[0].mxu0
    %6992 = vdwg.mxu0
    %v6993 = vadd.f32 %v6990, %v121
    %v6994 = vtanh.pop %v6993
    %v6996 = vsel %vm4342, %v6994, 0
    %6998 = vmatprep.subr.mxu0 0.0
    %6999 = vmatpush1.msra.mxu0 %v104
    %7000 = vmatprep.subr.mxu0 0.0
    %7001 = vmatpush1.msra.mxu0 %v105
    %7002 = vmatprep.subr.mxu0 0.0
    %7003 = vmatpush1.msra.mxu0 %v106
    %7004 = vmatprep.subr.mxu0 0.0
    %7005 = vmatpush1.msra.mxu0 %v107
    %7006 = vmatprep.subr.mxu0 0.0
    %7007 = vmatpush1.msra.mxu0 %v108
    %7008 = vmatprep.subr.mxu0 0.0
    %7009 = vmatpush1.msra.mxu0 %v109
    %7010 = vmatprep.subr.mxu0 0.0
    %7011 = vmatpush1.msra.mxu0 %v110
    %7012 = vmatprep.subr.mxu0 0.0
    %7013 = vmatpush1.msra.mxu0 %v111
    %7014 = vmatprep.subr.mxu0 0.0
    %7015 = vmatpush1.msra.mxu0 0.0
    %7016 = vmatprep.subr.mxu0 0.0
    %7017 = vmatpush1.msra.mxu0 0.0
    %7018 = vmatprep.subr.mxu0 0.0
    %7019 = vmatpush1.msra.mxu0 0.0
    %7020 = vmatprep.subr.mxu0 0.0
    %7021 = vmatpush1.msra.mxu0 0.0
    %7022 = vmatprep.subr.mxu0 0.0
    %7023 = vmatpush1.msra.mxu0 0.0
    %7024 = vmatprep.subr.mxu0 0.0
    %7025 = vmatpush1.msra.mxu0 0.0
    %7026 = vmatprep.subr.mxu0 0.0
    %7027 = vmatpush1.msra.mxu0 0.0
    %7028 = vmatprep.subr.mxu0 0.0
    %7029 = vmatpush1.msra.mxu0 0.0
    %7030 = vmatprep.subr.mxu0 0.0
    %7031 = vmatpush1.msra.mxu0 0.0
    %7032 = vmatprep.subr.mxu0 0.0
    %7033 = vmatpush1.msra.mxu0 0.0
    %7034 = vmatprep.subr.mxu0 0.0
    %7035 = vmatpush1.msra.mxu0 0.0
    %7036 = vmatprep.subr.mxu0 0.0
    %7037 = vmatpush1.msra.mxu0 0.0
    %7038 = vmatprep.subr.mxu0 0.0
    %7039 = vmatpush1.msra.mxu0 0.0
    %7040 = vmatprep.subr.mxu0 0.0
    %7041 = vmatpush1.msra.mxu0 0.0
    %7042 = vmatprep.subr.mxu0 0.0
    %7043 = vmatpush1.msra.mxu0 0.0
    %7044 = vmatprep.subr.mxu0 0.0
    %7045 = vmatpush1.msra.mxu0 0.0
    %7046 = vmatprep.subr.mxu0 0.0
    %7047 = vmatpush1.msra.mxu0 0.0
    %7048 = vmatprep.subr.mxu0 0.0
    %7049 = vmatpush1.msra.mxu0 0.0
    %7050 = vmatprep.subr.mxu0 0.0
    %7051 = vmatpush1.msra.mxu0 0.0
    %7052 = vmatprep.subr.mxu0 0.0
    %7053 = vmatpush1.msra.mxu0 0.0
    %7054 = vmatprep.subr.mxu0 0.0
    %7055 = vmatpush1.msra.mxu0 0.0
    %7056 = vmatprep.subr.mxu0 0.0
    %7057 = vmatpush1.msra.mxu0 0.0
    %7058 = vmatprep.subr.mxu0 0.0
    %7059 = vmatpush1.msra.mxu0 0.0
    %7060 = vmatprep.subr.mxu0 0.0
    %7061 = vmatpush1.msra.mxu0 0.0
    %7062 = vmatprep.mubr.f32.mxu0 0.0
    %7063 = vmatmul.mubr.f32.gmra.mrb[0].mxu0 %v6996
    %v7064 = vpop.f32.mrb[0].mxu0
    %v7065 = vadd.f32 %v120, %v7064
    %v7066 = vpop.f32.mrb[0].mxu0
    %7067 = vdwg.mxu0
    %v7068 = vsel %vm5016, %v7065, -inf
    %7069 = vmax.xlane.f32.xlu0 %v7068
    %v7070 = vpop.xlane.xlu0 %7069
    %v7071 = vsub.f32 %v7065, %v7070
    %v7072 = vmul.f32 %v7071, 1.442695
    %v7073 = vpow.pop %v7072
    %v7074 = vsel %vm5016, %v7073, 0.0
    %7075 = vadd.xlane.f32.xlu0 %v7074
    %v7076 = vpop.xlane.xlu0 %7075
    %v7077 = vrcp.pop %v7076
    %v7078 = vmul.f32 1.0, %v7077
    %vm7079 = vcmp.eq.f32.partialorder %v7065, %v7070
    %v7080 = vsel %vm7079, %v4338, 64
    %v7081 = vsel %vm5016, %v7080, 2147483647
    %v7082 = vand.u32 %v7081, 65535
    %v7083 = vshra.s32 %v7081, 16
    %v7084 = vcvt.s32.f32 %v7082
    %v7085 = vcvt.s32.f32 %v7083
    %7086 = vmin.xlane.f32.xlu0 %v7085
    %v7087 = vpop.xlane.xlu0 %7086
    %vm7088 = vcmp.eq.f32.partialorder %v7085, %v7087
    %v7089 = vsel %vm7088, %v7084, inf
    %7090 = vmin.xlane.f32.xlu0 %v7089
    %v7091 = vpop.xlane.xlu0 %7090
    %v7092 = vcvt.f32.s32 %v7091
    %v7093 = vcvt.f32.s32 %v7087
    %v7094 = vshll.u32 %v7093, 16
    %v7095 = vadd.s32 %v7094, %v7092
    %vm7096 = vcmp.eq.s32.totalorder %v4338, 3
    %v7097 = vsel %vm7096, %v7095, %v6413
    %v7098 = vsel %vm7096, %v7078, %v6414
    %vm7099 = vcmp.eq.s32.totalorder %v4338, %v7095
    %v7100 = vsel %vm7099, 1, 0
    %v7101 = vcvt.s32.f32 %v7100
    %v7103 = vsel %vm4342, %v7101, 0
    %7105 = vmatprep.subr.mxu0 0.0
    %7106 = vmatpush1.msra.mxu0 %v90
    %7107 = vmatprep.subr.mxu0 0.0
    %7108 = vmatpush1.msra.mxu0 %v91
    %7109 = vmatprep.subr.mxu0 0.0
    %7110 = vmatpush1.msra.mxu0 %v92
    %7111 = vmatprep.subr.mxu0 0.0
    %7112 = vmatpush1.msra.mxu0 %v93
    %7113 = vmatprep.subr.mxu0 0.0
    %7114 = vmatpush1.msra.mxu0 %v94
    %7115 = vmatprep.subr.mxu0 0.0
    %7116 = vmatpush1.msra.mxu0 %v95
    %7117 = vmatprep.subr.mxu0 0.0
    %7118 = vmatpush1.msra.mxu0 %v96
    %7119 = vmatprep.subr.mxu0 0.0
    %7120 = vmatpush1.msra.mxu0 %v97
    %7121 = vmatprep.subr.mxu0 0.0
    %7122 = vmatpush1.msra.mxu0 0.0
    %7123 = vmatprep.subr.mxu0 0.0
    %7124 = vmatpush1.msra.mxu0 0.0
    %7125 = vmatprep.subr.mxu0 0.0
    %7126 = vmatpush1.msra.mxu0 0.0
    %7127 = vmatprep.subr.mxu0 0.0
    %7128 = vmatpush1.msra.mxu0 0.0
    %7129 = vmatprep.subr.mxu0 0.0
    %7130 = vmatpush1.msra.mxu0 0.0
    %7131 = vmatprep.subr.mxu0 0.0
    %7132 = vmatpush1.msra.mxu0 0.0
    %7133 = vmatprep.subr.mxu0 0.0
    %7134 = vmatpush1.msra.mxu0 0.0
    %7135 = vmatprep.subr.mxu0 0.0
    %7136 = vmatpush1.msra.mxu0 0.0
    %7137 = vmatprep.subr.mxu0 0.0
    %7138 = vmatpush1.msra.mxu0 0.0
    %7139 = vmatprep.subr.mxu0 0.0
    %7140 = vmatpush1.msra.mxu0 0.0
    %7141 = vmatprep.subr.mxu0 0.0
    %7142 = vmatpush1.msra.mxu0 0.0
    %7143 = vmatprep.subr.mxu0 0.0
    %7144 = vmatpush1.msra.mxu0 0.0
    %7145 = vmatprep.subr.mxu0 0.0
    %7146 = vmatpush1.msra.mxu0 0.0
    %7147 = vmatprep.subr.mxu0 0.0
    %7148 = vmatpush1.msra.mxu0 0.0
    %7149 = vmatprep.subr.mxu0 0.0
    %7150 = vmatpush1.msra.mxu0 0.0
    %7151 = vmatprep.subr.mxu0 0.0
    %7152 = vmatpush1.msra.mxu0 0.0
    %7153 = vmatprep.subr.mxu0 0.0
    %7154 = vmatpush1.msra.mxu0 0.0
    %7155 = vmatprep.subr.mxu0 0.0
    %7156 = vmatpush1.msra.mxu0 0.0
    %7157 = vmatprep.subr.mxu0 0.0
    %7158 = vmatpush1.msra.mxu0 0.0
    %7159 = vmatprep.subr.mxu0 0.0
    %7160 = vmatpush1.msra.mxu0 0.0
    %7161 = vmatprep.subr.mxu0 0.0
    %7162 = vmatpush1.msra.mxu0 0.0
    %7163 = vmatprep.subr.mxu0 0.0
    %7164 = vmatpush1.msra.mxu0 0.0
    %7165 = vmatprep.subr.mxu0 0.0
    %7166 = vmatpush1.msra.mxu0 0.0
    %7167 = vmatprep.subr.mxu0 0.0
    %7168 = vmatpush1.msra.mxu0 0.0
    %7169 = vmatprep.mubr.f32.mxu0 0.0
    %7170 = vmatmul.mubr.f32.gmra.mrb[0].mxu0 %v7103
    %v7171 = vpop.f32.mrb[0].mxu0
    %v7172 = vadd.f32 0.0, %v7171
    %v7173 = vpop.f32.mrb[0].mxu0
    %7174 = vdwg.mxu0
    %7175 = vmatprep.subr.mxu0 0.0
    %7176 = vmatpush1.msra.mxu0 %v78
    %7177 = vmatprep.subr.mxu0 0.0
    %7178 = vmatpush1.msra.mxu0 %v79
    %7179 = vmatprep.subr.mxu0 0.0
    %7180 = vmatpush1.msra.mxu0 %v80
    %7181 = vmatprep.subr.mxu0 0.0
    %7182 = vmatpush1.msra.mxu0 %v81
    %7183 = vmatprep.subr.mxu0 0.0
    %7184 = vmatpush1.msra.mxu0 0.0
    %7185 = vmatprep.subr.mxu0 0.0
    %7186 = vmatpush1.msra.mxu0 0.0
    %7187 = vmatprep.subr.mxu0 0.0
    %7188 = vmatpush1.msra.mxu0 0.0
    %7189 = vmatprep.subr.mxu0 0.0
    %7190 = vmatpush1.msra.mxu0 0.0
    %7191 = vmatprep.subr.mxu0 0.0
    %7192 = vmatpush1.msra.mxu0 0.0
    %7193 = vmatprep.subr.mxu0 0.0
    %7194 = vmatpush1.msra.mxu0 0.0
    %7195 = vmatprep.subr.mxu0 0.0
    %7196 = vmatpush1.msra.mxu0 0.0
    %7197 = vmatprep.subr.mxu0 0.0
    %7198 = vmatpush1.msra.mxu0 0.0
    %7199 = vmatprep.subr.mxu0 0.0
    %7200 = vmatpush1.msra.mxu0 0.0
    %7201 = vmatprep.subr.mxu0 0.0
    %7202 = vmatpush1.msra.mxu0 0.0
    %7203 = vmatprep.subr.mxu0 0.0
    %7204 = vmatpush1.msra.mxu0 0.0
    %7205 = vmatprep.subr.mxu0 0.0
    %7206 = vmatpush1.msra.mxu0 0.0
    %7207 = vmatprep.subr.mxu0 0.0
    %7208 = vmatpush1.msra.mxu0 0.0
    %7209 = vmatprep.subr.mxu0 0.0
    %7210 = vmatpush1.msra.mxu0 0.0
    %7211 = vmatprep.subr.mxu0 0.0
    %7212 = vmatpush1.msra.mxu0 0.0
    %7213 = vmatprep.subr.mxu0 0.0
    %7214 = vmatpush1.msra.mxu0 0.0
    %7215 = vmatprep.subr.mxu0 0.0
    %7216 = vmatpush1.msra.mxu0 0.0
    %7217 = vmatprep.subr.mxu0 0.0
    %7218 = vmatpush1.msra.mxu0 0.0
    %7219 = vmatprep.subr.mxu0 0.0
    %7220 = vmatpush1.msra.mxu0 0.0
    %7221 = vmatprep.subr.mxu0 0.0
    %7222 = vmatpush1.msra.mxu0 0.0
    %7223 = vmatprep.subr.mxu0 0.0
    %7224 = vmatpush1.msra.mxu0 0.0
    %7225 = vmatprep.subr.mxu0 0.0
    %7226 = vmatpush1.msra.mxu0 0.0
    %7227 = vmatprep.subr.mxu0 0.0
    %7228 = vmatpush1.msra.mxu0 0.0
    %7229 = vmatprep.subr.mxu0 0.0
    %7230 = vmatpush1.msra.mxu0 0.0
    %7231 = vmatprep.subr.mxu0 0.0
    %7232 = vmatpush1.msra.mxu0 0.0
    %7233 = vmatprep.subr.mxu0 0.0
    %7234 = vmatpush1.msra.mxu0 0.0
    %7235 = vmatprep.subr.mxu0 0.0
    %7236 = vmatpush1.msra.mxu0 0.0
    %7237 = vmatprep.subr.mxu0 0.0
    %7238 = vmatpush1.msra.mxu0 0.0
    %7239 = vmatprep.mubr.f32.mxu0 0.0
    %7240 = vmatmul.mubr.f32.gmra.mrb[0].mxu0 %v6593
    %v7241 = vpop.f32.mrb[0].mxu0
    %v7242 = vadd.f32 0.0, %v7241
    %v7243 = vpop.f32.mrb[0].mxu0
    %7244 = vdwg.mxu0
    %v7245 = vadd.f32 %v7172, %v7242
    %v7246 = vadd.f32 %v7245, %v102
    %v7247 = vxor.u32 %v7246, 2147483648
    %v7248 = vmul.f32 %v7247, 1.442695
    %v7249 = vpow.pop %v7248
    %v7250 = vadd.f32 %v7249, 1.0
    %v7251 = vrcp.pop %v7250
    %v7252 = vmul.f32 1.0, %v7251
    %v7253 = vadd.f32 %v7172, %v102
    %v7254 = vadd.f32 %v7242, %v4503
    %7256 = vrot.lane.b32.xlu0 %v7254, 64
    %v7257 = vpop.permute.xlu0 %7256
    %v7259 = vmul.f32 %v7252, %v7257
    %7261 = vrot.lane.b32.xlu0 %v7259, 64
    %v7262 = vpop.permute.xlu0 %7261
    %v7264 = vadd.f32 %v7253, %v7262
    %v7265 = vtanh.pop %v7264
    %v7266 = vsub.f32 1.0, %v7252
    %7268 = vrot.lane.b32.xlu0 %v7265, 96
    %v7269 = vpop.permute.xlu0 %7268
    %v7271 = vmul.f32 %v7266, %v7269
    %v7272 = vmul.f32 %v7252, %v6589
    %v7273 = vadd.f32 %v7271, %v7272
    %7275 = vrot.lane.b32.xlu0 %v7273, 96
    %v7276 = vpop.permute.xlu0 %7275
    %v7277 = vsel %vm125, %v7276, 0
    %7279 = vmatprep.subr.mxu0 0.0
    %7280 = vmatpush1.msra.mxu0 %v86
    %7281 = vmatprep.subr.mxu0 0.0
    %7282 = vmatpush1.msra.mxu0 %v87
    %7283 = vmatprep.subr.mxu0 0.0
    %7284 = vmatpush1.msra.mxu0 %v88
    %7285 = vmatprep.subr.mxu0 0.0
    %7286 = vmatpush1.msra.mxu0 %v89
    %7287 = vmatprep.subr.mxu0 0.0
    %7288 = vmatpush1.msra.mxu0 0.0
    %7289 = vmatprep.subr.mxu0 0.0
    %7290 = vmatpush1.msra.mxu0 0.0
    %7291 = vmatprep.subr.mxu0 0.0
    %7292 = vmatpush1.msra.mxu0 0.0
    %7293 = vmatprep.subr.mxu0 0.0
    %7294 = vmatpush1.msra.mxu0 0.0
    %7295 = vmatprep.subr.mxu0 0.0
    %7296 = vmatpush1.msra.mxu0 0.0
    %7297 = vmatprep.subr.mxu0 0.0
    %7298 = vmatpush1.msra.mxu0 0.0
    %7299 = vmatprep.subr.mxu0 0.0
    %7300 = vmatpush1.msra.mxu0 0.0
    %7301 = vmatprep.subr.mxu0 0.0
    %7302 = vmatpush1.msra.mxu0 0.0
    %7303 = vmatprep.subr.mxu0 0.0
    %7304 = vmatpush1.msra.mxu0 0.0
    %7305 = vmatprep.subr.mxu0 0.0
    %7306 = vmatpush1.msra.mxu0 0.0
    %7307 = vmatprep.subr.mxu0 0.0
    %7308 = vmatpush1.msra.mxu0 0.0
    %7309 = vmatprep.subr.mxu0 0.0
    %7310 = vmatpush1.msra.mxu0 0.0
    %7311 = vmatprep.subr.mxu0 0.0
    %7312 = vmatpush1.msra.mxu0 0.0
    %7313 = vmatprep.subr.mxu0 0.0
    %7314 = vmatpush1.msra.mxu0 0.0
    %7315 = vmatprep.subr.mxu0 0.0
    %7316 = vmatpush1.msra.mxu0 0.0
    %7317 = vmatprep.subr.mxu0 0.0
    %7318 = vmatpush1.msra.mxu0 0.0
    %7319 = vmatprep.subr.mxu0 0.0
    %7320 = vmatpush1.msra.mxu0 0.0
    %7321 = vmatprep.subr.mxu0 0.0
    %7322 = vmatpush1.msra.mxu0 0.0
    %7323 = vmatprep.subr.mxu0 0.0
    %7324 = vmatpush1.msra.mxu0 0.0
    %7325 = vmatprep.subr.mxu0 0.0
    %7326 = vmatpush1.msra.mxu0 0.0
    %7327 = vmatprep.subr.mxu0 0.0
    %7328 = vmatpush1.msra.mxu0 0.0
    %7329 = vmatprep.subr.mxu0 0.0
    %7330 = vmatpush1.msra.mxu0 0.0
    %7331 = vmatprep.subr.mxu0 0.0
    %7332 = vmatpush1.msra.mxu0 0.0
    %7333 = vmatprep.subr.mxu0 0.0
    %7334 = vmatpush1.msra.mxu0 0.0
    %7335 = vmatprep.subr.mxu0 0.0
    %7336 = vmatpush1.msra.mxu0 0.0
    %7337 = vmatprep.subr.mxu0 0.0
    %7338 = vmatpush1.msra.mxu0 0.0
    %7339 = vmatprep.subr.mxu0 0.0
    %7340 = vmatpush1.msra.mxu0 0.0
    %7341 = vmatprep.subr.mxu0 0.0
    %7342 = vmatpush1.msra.mxu0 0.0
    %7343 = vmatprep.mubr.f32.mxu0 0.0
    %7344 = vmatmul.mubr.f32.gmra.mrb[0].mxu0 %v7277
    %v7345 = vpop.f32.mrb[0].mxu0
    %v7346 = vadd.f32 0.0, %v7345
    %v7347 = vpop.f32.mrb[0].mxu0
    %7348 = vdwg.mxu0
    %7349 = vmatprep.subr.mxu0 0.0
    %7350 = vmatpush1.msra.mxu0 %v82
    %7351 = vmatprep.subr.mxu0 0.0
    %7352 = vmatpush1.msra.mxu0 %v83
    %7353 = vmatprep.subr.mxu0 0.0
    %7354 = vmatpush1.msra.mxu0 %v84
    %7355 = vmatprep.subr.mxu0 0.0
    %7356 = vmatpush1.msra.mxu0 %v85
    %7357 = vmatprep.subr.mxu0 0.0
    %7358 = vmatpush1.msra.mxu0 0.0
    %7359 = vmatprep.subr.mxu0 0.0
    %7360 = vmatpush1.msra.mxu0 0.0
    %7361 = vmatprep.subr.mxu0 0.0
    %7362 = vmatpush1.msra.mxu0 0.0
    %7363 = vmatprep.subr.mxu0 0.0
    %7364 = vmatpush1.msra.mxu0 0.0
    %7365 = vmatprep.subr.mxu0 0.0
    %7366 = vmatpush1.msra.mxu0 0.0
    %7367 = vmatprep.subr.mxu0 0.0
    %7368 = vmatpush1.msra.mxu0 0.0
    %7369 = vmatprep.subr.mxu0 0.0
    %7370 = vmatpush1.msra.mxu0 0.0
    %7371 = vmatprep.subr.mxu0 0.0
    %7372 = vmatpush1.msra.mxu0 0.0
    %7373 = vmatprep.subr.mxu0 0.0
    %7374 = vmatpush1.msra.mxu0 0.0
    %7375 = vmatprep.subr.mxu0 0.0
    %7376 = vmatpush1.msra.mxu0 0.0
    %7377 = vmatprep.subr.mxu0 0.0
    %7378 = vmatpush1.msra.mxu0 0.0
    %7379 = vmatprep.subr.mxu0 0.0
    %7380 = vmatpush1.msra.mxu0 0.0
    %7381 = vmatprep.subr.mxu0 0.0
    %7382 = vmatpush1.msra.mxu0 0.0
    %7383 = vmatprep.subr.mxu0 0.0
    %7384 = vmatpush1.msra.mxu0 0.0
    %7385 = vmatprep.subr.mxu0 0.0
    %7386 = vmatpush1.msra.mxu0 0.0
    %7387 = vmatprep.subr.mxu0 0.0
    %7388 = vmatpush1.msra.mxu0 0.0
    %7389 = vmatprep.subr.mxu0 0.0
    %7390 = vmatpush1.msra.mxu0 0.0
    %7391 = vmatprep.subr.mxu0 0.0
    %7392 = vmatpush1.msra.mxu0 0.0
    %7393 = vmatprep.subr.mxu0 0.0
    %7394 = vmatpush1.msra.mxu0 0.0
    %7395 = vmatprep.subr.mxu0 0.0
    %7396 = vmatpush1.msra.mxu0 0.0
    %7397 = vmatprep.subr.mxu0 0.0
    %7398 = vmatpush1.msra.mxu0 0.0
    %7399 = vmatprep.subr.mxu0 0.0
    %7400 = vmatpush1.msra.mxu0 0.0
    %7401 = vmatprep.subr.mxu0 0.0
    %7402 = vmatpush1.msra.mxu0 0.0
    %7403 = vmatprep.subr.mxu0 0.0
    %7404 = vmatpush1.msra.mxu0 0.0
    %7405 = vmatprep.subr.mxu0 0.0
    %7406 = vmatpush1.msra.mxu0 0.0
    %7407 = vmatprep.subr.mxu0 0.0
    %7408 = vmatpush1.msra.mxu0 0.0
    %7409 = vmatprep.subr.mxu0 0.0
    %7410 = vmatpush1.msra.mxu0 0.0
    %7411 = vmatprep.subr.mxu0 0.0
    %7412 = vmatpush1.msra.mxu0 0.0
    %7413 = vmatprep.mubr.f32.mxu0 0.0
    %7414 = vmatmul.mubr.f32.gmra.mrb[0].mxu0 %v6767
    %v7415 = vpop.f32.mrb[0].mxu0
    %v7416 = vadd.f32 0.0, %v7415
    %v7417 = vpop.f32.mrb[0].mxu0
    %7418 = vdwg.mxu0
    %v7419 = vadd.f32 %v7346, %v7416
    %v7420 = vadd.f32 %v7419, %v103
    %v7421 = vxor.u32 %v7420, 2147483648
    %v7422 = vmul.f32 %v7421, 1.442695
    %v7423 = vpow.pop %v7422
    %v7424 = vadd.f32 %v7423, 1.0
    %v7425 = vrcp.pop %v7424
    %v7426 = vmul.f32 1.0, %v7425
    %v7427 = vadd.f32 %v7346, %v103
    %v7428 = vadd.f32 %v7416, %v4685
    %7430 = vrot.lane.b32.xlu0 %v7428, 64
    %v7431 = vpop.permute.xlu0 %7430
    %v7433 = vmul.f32 %v7426, %v7431
    %7435 = vrot.lane.b32.xlu0 %v7433, 64
    %v7436 = vpop.permute.xlu0 %7435
    %v7438 = vadd.f32 %v7427, %v7436
    %v7439 = vtanh.pop %v7438
    %v7440 = vsub.f32 1.0, %v7426
    %7442 = vrot.lane.b32.xlu0 %v7439, 96
    %v7443 = vpop.permute.xlu0 %7442
    %v7445 = vmul.f32 %v7440, %v7443
    %v7446 = vmul.f32 %v7426, %v6763
    %v7447 = vadd.f32 %v7445, %v7446
    %7449 = vrot.lane.b32.xlu0 %v7447, 96
    %v7450 = vpop.permute.xlu0 %7449
    %v7451 = vsel %vm125, %v7450, 0
    %7453 = vmatprep.subr.mxu0 0.0
    %7454 = vmatpush1.xpose.msra.mxu0 %v4265
    %7455 = vmatprep.subr.mxu0 0.0
    %7456 = vmatpush1.xpose.msra.mxu0 0.0
    %7457 = vmatprep.subr.mxu0 0.0
    %7458 = vmatpush1.xpose.msra.mxu0 0.0
    %7459 = vmatprep.subr.mxu0 0.0
    %7460 = vmatpush1.xpose.msra.mxu0 0.0
    %7461 = vmatprep.subr.mxu0 0.0
    %7462 = vmatpush1.xpose.msra.mxu0 0.0
    %7463 = vmatprep.subr.mxu0 0.0
    %7464 = vmatpush1.xpose.msra.mxu0 0.0
    %7465 = vmatprep.subr.mxu0 0.0
    %7466 = vmatpush1.xpose.msra.mxu0 0.0
    %7467 = vmatprep.subr.mxu0 0.0
    %7468 = vmatpush1.xpose.msra.mxu0 0.0
    %7469 = vmatprep.subr.mxu0 0.0
    %7470 = vmatpush1.xpose.msra.mxu0 0.0
    %7471 = vmatprep.subr.mxu0 0.0
    %7472 = vmatpush1.xpose.msra.mxu0 0.0
    %7473 = vmatprep.subr.mxu0 0.0
    %7474 = vmatpush1.xpose.msra.mxu0 0.0
    %7475 = vmatprep.subr.mxu0 0.0
    %7476 = vmatpush1.xpose.msra.mxu0 0.0
    %7477 = vmatprep.subr.mxu0 0.0
    %7478 = vmatpush1.xpose.msra.mxu0 0.0
    %7479 = vmatprep.subr.mxu0 0.0
    %7480 = vmatpush1.xpose.msra.mxu0 0.0
    %7481 = vmatprep.subr.mxu0 0.0
    %7482 = vmatpush1.xpose.msra.mxu0 0.0
    %7483 = vmatprep.subr.mxu0 0.0
    %7484 = vmatpush1.xpose.msra.mxu0 0.0
    %7485 = vmatprep.subr.mxu0 0.0
    %7486 = vmatpush1.xpose.msra.mxu0 0.0
    %7487 = vmatprep.subr.mxu0 0.0
    %7488 = vmatpush1.xpose.msra.mxu0 0.0
    %7489 = vmatprep.subr.mxu0 0.0
    %7490 = vmatpush1.xpose.msra.mxu0 0.0
    %7491 = vmatprep.subr.mxu0 0.0
    %7492 = vmatpush1.xpose.msra.mxu0 0.0
    %7493 = vmatprep.subr.mxu0 0.0
    %7494 = vmatpush1.xpose.msra.mxu0 0.0
    %7495 = vmatprep.subr.mxu0 0.0
    %7496 = vmatpush1.xpose.msra.mxu0 0.0
    %7497 = vmatprep.subr.mxu0 0.0
    %7498 = vmatpush1.xpose.msra.mxu0 0.0
    %7499 = vmatprep.subr.mxu0 0.0
    %7500 = vmatpush1.xpose.msra.mxu0 0.0
    %7501 = vmatprep.subr.mxu0 0.0
    %7502 = vmatpush1.xpose.msra.mxu0 0.0
    %7503 = vmatprep.subr.mxu0 0.0
    %7504 = vmatpush1.xpose.msra.mxu0 0.0
    %7505 = vmatprep.subr.mxu0 0.0
    %7506 = vmatpush1.xpose.msra.mxu0 0.0
    %7507 = vmatprep.subr.mxu0 0.0
    %7508 = vmatpush1.xpose.msra.mxu0 0.0
    %7509 = vmatprep.subr.mxu0 0.0
    %7510 = vmatpush1.xpose.msra.mxu0 0.0
    %7511 = vmatprep.subr.mxu0 0.0
    %7512 = vmatpush1.xpose.msra.mxu0 0.0
    %7513 = vmatprep.subr.mxu0 0.0
    %7514 = vmatpush1.xpose.msra.mxu0 0.0
    %7515 = vmatprep.subr.mxu0 0.0
    %7516 = vmatpush1.xpose.msra.mxu0 0.0
    %7517 = vmatprep.mubr.f32.mxu0 0.0
    %7518 = vmatmul.mubr.f32.gmra.mrb[0].mxu0 %v7451
    %v7519 = vpop.f32.mrb[0].mxu0
    %v7520 = vadd.f32 0.0, %v7519
    %v7521 = vpop.f32.mrb[0].mxu0
    %7522 = vdwg.mxu0
    %v7523 = vsel %vm4785, %v7520, -inf
    %7524 = vmax.xlane.f32.xlu0 %v7523
    %v7525 = vpop.xlane.xlu0 %7524
    %v7526 = vsub.f32 %v7520, %v7525
    %v7527 = vmul.f32 %v7526, 1.442695
    %v7528 = vpow.pop %v7527
    %v7529 = vsel %vm4785, %v7528, 0.0
    %7530 = vadd.xlane.f32.xlu0 %v7529
    %v7531 = vpop.xlane.xlu0 %7530
    %v7532 = vrcp.pop %v7531
    %v7533 = vmul.f32 %v7528, %v7532
    %v7535 = vsel %vm4797, %v7533, 0
    %7537 = vmatprep.subr.mxu0 0.0
    %7538 = vmatpush1.msra.mxu0 %v4334
    %7539 = vmatprep.subr.mxu0 0.0
    %7540 = vmatpush1.msra.mxu0 0.0
    %7541 = vmatprep.subr.mxu0 0.0
    %7542 = vmatpush1.msra.mxu0 0.0
    %7543 = vmatprep.subr.mxu0 0.0
    %7544 = vmatpush1.msra.mxu0 0.0
    %7545 = vmatprep.subr.mxu0 0.0
    %7546 = vmatpush1.msra.mxu0 0.0
    %7547 = vmatprep.subr.mxu0 0.0
    %7548 = vmatpush1.msra.mxu0 0.0
    %7549 = vmatprep.subr.mxu0 0.0
    %7550 = vmatpush1.msra.mxu0 0.0
    %7551 = vmatprep.subr.mxu0 0.0
    %7552 = vmatpush1.msra.mxu0 0.0
    %7553 = vmatprep.subr.mxu0 0.0
    %7554 = vmatpush1.msra.mxu0 0.0
    %7555 = vmatprep.subr.mxu0 0.0
    %7556 = vmatpush1.msra.mxu0 0.0
    %7557 = vmatprep.subr.mxu0 0.0
    %7558 = vmatpush1.msra.mxu0 0.0
    %7559 = vmatprep.subr.mxu0 0.0
    %7560 = vmatpush1.msra.mxu0 0.0
    %7561 = vmatprep.subr.mxu0 0.0
    %7562 = vmatpush1.msra.mxu0 0.0
    %7563 = vmatprep.subr.mxu0 0.0
    %7564 = vmatpush1.msra.mxu0 0.0
    %7565 = vmatprep.subr.mxu0 0.0
    %7566 = vmatpush1.msra.mxu0 0.0
    %7567 = vmatprep.subr.mxu0 0.0
    %7568 = vmatpush1.msra.mxu0 0.0
    %7569 = vmatprep.subr.mxu0 0.0
    %7570 = vmatpush1.msra.mxu0 0.0
    %7571 = vmatprep.subr.mxu0 0.0
    %7572 = vmatpush1.msra.mxu0 0.0
    %7573 = vmatprep.subr.mxu0 0.0
    %7574 = vmatpush1.msra.mxu0 0.0
    %7575 = vmatprep.subr.mxu0 0.0
    %7576 = vmatpush1.msra.mxu0 0.0
    %7577 = vmatprep.subr.mxu0 0.0
    %7578 = vmatpush1.msra.mxu0 0.0
    %7579 = vmatprep.subr.mxu0 0.0
    %7580 = vmatpush1.msra.mxu0 0.0
    %7581 = vmatprep.subr.mxu0 0.0
    %7582 = vmatpush1.msra.mxu0 0.0
    %7583 = vmatprep.subr.mxu0 0.0
    %7584 = vmatpush1.msra.mxu0 0.0
    %7585 = vmatprep.subr.mxu0 0.0
    %7586 = vmatpush1.msra.mxu0 0.0
    %7587 = vmatprep.subr.mxu0 0.0
    %7588 = vmatpush1.msra.mxu0 0.0
    %7589 = vmatprep.subr.mxu0 0.0
    %7590 = vmatpush1.msra.mxu0 0.0
    %7591 = vmatprep.subr.mxu0 0.0
    %7592 = vmatpush1.msra.mxu0 0.0
    %7593 = vmatprep.subr.mxu0 0.0
    %7594 = vmatpush1.msra.mxu0 0.0
    %7595 = vmatprep.subr.mxu0 0.0
    %7596 = vmatpush1.msra.mxu0 0.0
    %7597 = vmatprep.subr.mxu0 0.0
    %7598 = vmatpush1.msra.mxu0 0.0
    %7599 = vmatprep.subr.mxu0 0.0
    %7600 = vmatpush1.msra.mxu0 0.0
    %7601 = vmatprep.mubr.f32.mxu0 0.0
    %7602 = vmatmul.mubr.f32.gmra.mrb[0].mxu0 %v7535
    %v7603 = vpop.f32.mrb[0].mxu0
    %v7604 = vadd.f32 0.0, %v7603
    %v7605 = vpop.f32.mrb[0].mxu0
    %7606 = vdwg.mxu0
    %7607 = vmatprep.subr.mxu0 0.0
    %7608 = vmatpush1.msra.mxu0 %v112
    %7609 = vmatprep.subr.mxu0 0.0
    %7610 = vmatpush1.msra.mxu0 %v113
    %7611 = vmatprep.subr.mxu0 0.0
    %7612 = vmatpush1.msra.mxu0 %v114
    %7613 = vmatprep.subr.mxu0 0.0
    %7614 = vmatpush1.msra.mxu0 %v115
    %7615 = vmatprep.subr.mxu0 0.0
    %7616 = vmatpush1.msra.mxu0 0.0
    %7617 = vmatprep.subr.mxu0 0.0
    %7618 = vmatpush1.msra.mxu0 0.0
    %7619 = vmatprep.subr.mxu0 0.0
    %7620 = vmatpush1.msra.mxu0 0.0
    %7621 = vmatprep.subr.mxu0 0.0
    %7622 = vmatpush1.msra.mxu0 0.0
    %7623 = vmatprep.subr.mxu0 0.0
    %7624 = vmatpush1.msra.mxu0 0.0
    %7625 = vmatprep.subr.mxu0 0.0
    %7626 = vmatpush1.msra.mxu0 0.0
    %7627 = vmatprep.subr.mxu0 0.0
    %7628 = vmatpush1.msra.mxu0 0.0
    %7629 = vmatprep.subr.mxu0 0.0
    %7630 = vmatpush1.msra.mxu0 0.0
    %7631 = vmatprep.subr.mxu0 0.0
    %7632 = vmatpush1.msra.mxu0 0.0
    %7633 = vmatprep.subr.mxu0 0.0
    %7634 = vmatpush1.msra.mxu0 0.0
    %7635 = vmatprep.subr.mxu0 0.0
    %7636 = vmatpush1.msra.mxu0 0.0
    %7637 = vmatprep.subr.mxu0 0.0
    %7638 = vmatpush1.msra.mxu0 0.0
    %7639 = vmatprep.subr.mxu0 0.0
    %7640 = vmatpush1.msra.mxu0 0.0
    %7641 = vmatprep.subr.mxu0 0.0
    %7642 = vmatpush1.msra.mxu0 0.0
    %7643 = vmatprep.subr.mxu0 0.0
    %7644 = vmatpush1.msra.mxu0 0.0
    %7645 = vmatprep.subr.mxu0 0.0
    %7646 = vmatpush1.msra.mxu0 0.0
    %7647 = vmatprep.subr.mxu0 0.0
    %7648 = vmatpush1.msra.mxu0 0.0
    %7649 = vmatprep.subr.mxu0 0.0
    %7650 = vmatpush1.msra.mxu0 0.0
    %7651 = vmatprep.subr.mxu0 0.0
    %7652 = vmatpush1.msra.mxu0 0.0
    %7653 = vmatprep.subr.mxu0 0.0
    %7654 = vmatpush1.msra.mxu0 0.0
    %7655 = vmatprep.subr.mxu0 0.0
    %7656 = vmatpush1.msra.mxu0 0.0
    %7657 = vmatprep.subr.mxu0 0.0
    %7658 = vmatpush1.msra.mxu0 0.0
    %7659 = vmatprep.subr.mxu0 0.0
    %7660 = vmatpush1.msra.mxu0 0.0
    %7661 = vmatprep.subr.mxu0 0.0
    %7662 = vmatpush1.msra.mxu0 0.0
    %7663 = vmatprep.subr.mxu0 0.0
    %7664 = vmatpush1.msra.mxu0 0.0
    %7665 = vmatprep.subr.mxu0 0.0
    %7666 = vmatpush1.msra.mxu0 0.0
    %7667 = vmatprep.subr.mxu0 0.0
    %7668 = vmatpush1.msra.mxu0 0.0
    %7669 = vmatprep.subr.mxu0 0.0
    %7670 = vmatpush1.msra.mxu0 0.0
    %7671 = vmatprep.mubr.f32.mxu0 0.0
    %7672 = vmatmul.mubr.f32.gmra.mrb[0].mxu0 %v7451
    %v7673 = vpop.f32.mrb[0].mxu0
    %v7674 = vadd.f32 %v7604, %v7673
    %v7675 = vpop.f32.mrb[0].mxu0
    %7676 = vdwg.mxu0
    %v7677 = vadd.f32 %v7674, %v121
    %v7678 = vtanh.pop %v7677
    %v7680 = vsel %vm4342, %v7678, 0
    %7682 = vmatprep.subr.mxu0 0.0
    %7683 = vmatpush1.msra.mxu0 %v104
    %7684 = vmatprep.subr.mxu0 0.0
    %7685 = vmatpush1.msra.mxu0 %v105
    %7686 = vmatprep.subr.mxu0 0.0
    %7687 = vmatpush1.msra.mxu0 %v106
    %7688 = vmatprep.subr.mxu0 0.0
    %7689 = vmatpush1.msra.mxu0 %v107
    %7690 = vmatprep.subr.mxu0 0.0
    %7691 = vmatpush1.msra.mxu0 %v108
    %7692 = vmatprep.subr.mxu0 0.0
    %7693 = vmatpush1.msra.mxu0 %v109
    %7694 = vmatprep.subr.mxu0 0.0
    %7695 = vmatpush1.msra.mxu0 %v110
    %7696 = vmatprep.subr.mxu0 0.0
    %7697 = vmatpush1.msra.mxu0 %v111
    %7698 = vmatprep.subr.mxu0 0.0
    %7699 = vmatpush1.msra.mxu0 0.0
    %7700 = vmatprep.subr.mxu0 0.0
    %7701 = vmatpush1.msra.mxu0 0.0
    %7702 = vmatprep.subr.mxu0 0.0
    %7703 = vmatpush1.msra.mxu0 0.0
    %7704 = vmatprep.subr.mxu0 0.0
    %7705 = vmatpush1.msra.mxu0 0.0
    %7706 = vmatprep.subr.mxu0 0.0
    %7707 = vmatpush1.msra.mxu0 0.0
    %7708 = vmatprep.subr.mxu0 0.0
    %7709 = vmatpush1.msra.mxu0 0.0
    %7710 = vmatprep.subr.mxu0 0.0
    %7711 = vmatpush1.msra.mxu0 0.0
    %7712 = vmatprep.subr.mxu0 0.0
    %7713 = vmatpush1.msra.mxu0 0.0
    %7714 = vmatprep.subr.mxu0 0.0
    %7715 = vmatpush1.msra.mxu0 0.0
    %7716 = vmatprep.subr.mxu0 0.0
    %7717 = vmatpush1.msra.mxu0 0.0
    %7718 = vmatprep.subr.mxu0 0.0
    %7719 = vmatpush1.msra.mxu0 0.0
    %7720 = vmatprep.subr.mxu0 0.0
    %7721 = vmatpush1.msra.mxu0 0.0
    %7722 = vmatprep.subr.mxu0 0.0
    %7723 = vmatpush1.msra.mxu0 0.0
    %7724 = vmatprep.subr.mxu0 0.0
    %7725 = vmatpush1.msra.mxu0 0.0
    %7726 = vmatprep.subr.mxu0 0.0
    %7727 = vmatpush1.msra.mxu0 0.0
    %7728 = vmatprep.subr.mxu0 0.0
    %7729 = vmatpush1.msra.mxu0 0.0
    %7730 = vmatprep.subr.mxu0 0.0
    %7731 = vmatpush1.msra.mxu0 0.0
    %7732 = vmatprep.subr.mxu0 0.0
    %7733 = vmatpush1.msra.mxu0 0.0
    %7734 = vmatprep.subr.mxu0 0.0
    %7735 = vmatpush1.msra.mxu0 0.0
    %7736 = vmatprep.subr.mxu0 0.0
    %7737 = vmatpush1.msra.mxu0 0.0
    %7738 = vmatprep.subr.mxu0 0.0
    %7739 = vmatpush1.msra.mxu0 0.0
    %7740 = vmatprep.subr.mxu0 0.0
    %7741 = vmatpush1.msra.mxu0 0.0
    %7742 = vmatprep.subr.mxu0 0.0
    %7743 = vmatpush1.msra.mxu0 0.0
    %7744 = vmatprep.subr.mxu0 0.0
    %7745 = vmatpush1.msra.mxu0 0.0
    %7746 = vmatprep.mubr.f32.mxu0 0.0
    %7747 = vmatmul.mubr.f32.gmra.mrb[0].mxu0 %v7680
    %v7748 = vpop.f32.mrb[0].mxu0
    %v7749 = vadd.f32 %v120, %v7748
    %v7750 = vpop.f32.mrb[0].mxu0
    %7751 = vdwg.mxu0
    %v7752 = vsel %vm5016, %v7749, -inf
    %7753 = vmax.xlane.f32.xlu0 %v7752
    %v7754 = vpop.xlane.xlu0 %7753
    %v7755 = vsub.f32 %v7749, %v7754
    %v7756 = vmul.f32 %v7755, 1.442695
    %v7757 = vpow.pop %v7756
    %v7758 = vsel %vm5016, %v7757, 0.0
    %7759 = vadd.xlane.f32.xlu0 %v7758
    %v7760 = vpop.xlane.xlu0 %7759
    %v7761 = vrcp.pop %v7760
    %v7762 = vmul.f32 1.0, %v7761
    %vm7763 = vcmp.eq.f32.partialorder %v7749, %v7754
    %v7764 = vsel %vm7763, %v4338, 64
    %v7765 = vsel %vm5016, %v7764, 2147483647
    %v7766 = vand.u32 %v7765, 65535
    %v7767 = vshra.s32 %v7765, 16
    %v7768 = vcvt.s32.f32 %v7766
    %v7769 = vcvt.s32.f32 %v7767
    %7770 = vmin.xlane.f32.xlu0 %v7769
    %v7771 = vpop.xlane.xlu0 %7770
    %vm7772 = vcmp.eq.f32.partialorder %v7769, %v7771
    %v7773 = vsel %vm7772, %v7768, inf
    %7774 = vmin.xlane.f32.xlu0 %v7773
    %v7775 = vpop.xlane.xlu0 %7774
    %v7776 = vcvt.f32.s32 %v7775
    %v7777 = vcvt.f32.s32 %v7771
    %v7778 = vshll.u32 %v7777, 16
    %v7779 = vadd.s32 %v7778, %v7776
    %vm7780 = vcmp.eq.s32.totalorder %v4338, 4
    %v7781 = vsel %vm7780, %v7779, %v7097
    %v7782 = vsel %vm7780, %v7762, %v7098
    %vm7783 = vcmp.eq.s32.totalorder %v4338, %v7779
    %v7784 = vsel %vm7783, 1, 0
    %v7785 = vcvt.s32.f32 %v7784
    %v7787 = vsel %vm4342, %v7785, 0
    %7789 = vmatprep.subr.mxu0 0.0
    %7790 = vmatpush1.msra.mxu0 %v90
    %7791 = vmatprep.subr.mxu0 0.0
    %7792 = vmatpush1.msra.mxu0 %v91
    %7793 = vmatprep.subr.mxu0 0.0
    %7794 = vmatpush1.msra.mxu0 %v92
    %7795 = vmatprep.subr.mxu0 0.0
    %7796 = vmatpush1.msra.mxu0 %v93
    %7797 = vmatprep.subr.mxu0 0.0
    %7798 = vmatpush1.msra.mxu0 %v94
    %7799 = vmatprep.subr.mxu0 0.0
    %7800 = vmatpush1.msra.mxu0 %v95
    %7801 = vmatprep.subr.mxu0 0.0
    %7802 = vmatpush1.msra.mxu0 %v96
    %7803 = vmatprep.subr.mxu0 0.0
    %7804 = vmatpush1.msra.mxu0 %v97
    %7805 = vmatprep.subr.mxu0 0.0
    %7806 = vmatpush1.msra.mxu0 0.0
    %7807 = vmatprep.subr.mxu0 0.0
    %7808 = vmatpush1.msra.mxu0 0.0
    %7809 = vmatprep.subr.mxu0 0.0
    %7810 = vmatpush1.msra.mxu0 0.0
    %7811 = vmatprep.subr.mxu0 0.0
    %7812 = vmatpush1.msra.mxu0 0.0
    %7813 = vmatprep.subr.mxu0 0.0
    %7814 = vmatpush1.msra.mxu0 0.0
    %7815 = vmatprep.subr.mxu0 0.0
    %7816 = vmatpush1.msra.mxu0 0.0
    %7817 = vmatprep.subr.mxu0 0.0
    %7818 = vmatpush1.msra.mxu0 0.0
    %7819 = vmatprep.subr.mxu0 0.0
    %7820 = vmatpush1.msra.mxu0 0.0
    %7821 = vmatprep.subr.mxu0 0.0
    %7822 = vmatpush1.msra.mxu0 0.0
    %7823 = vmatprep.subr.mxu0 0.0
    %7824 = vmatpush1.msra.mxu0 0.0
    %7825 = vmatprep.subr.mxu0 0.0
    %7826 = vmatpush1.msra.mxu0 0.0
    %7827 = vmatprep.subr.mxu0 0.0
    %7828 = vmatpush1.msra.mxu0 0.0
    %7829 = vmatprep.subr.mxu0 0.0
    %7830 = vmatpush1.msra.mxu0 0.0
    %7831 = vmatprep.subr.mxu0 0.0
    %7832 = vmatpush1.msra.mxu0 0.0
    %7833 = vmatprep.subr.mxu0 0.0
    %7834 = vmatpush1.msra.mxu0 0.0
    %7835 = vmatprep.subr.mxu0 0.0
    %7836 = vmatpush1.msra.mxu0 0.0
    %7837 = vmatprep.subr.mxu0 0.0
    %7838 = vmatpush1.msra.mxu0 0.0
    %7839 = vmatprep.subr.mxu0 0.0
    %7840 = vmatpush1.msra.mxu0 0.0
    %7841 = vmatprep.subr.mxu0 0.0
    %7842 = vmatpush1.msra.mxu0 0.0
    %7843 = vmatprep.subr.mxu0 0.0
    %7844 = vmatpush1.msra.mxu0 0.0
    %7845 = vmatprep.subr.mxu0 0.0
    %7846 = vmatpush1.msra.mxu0 0.0
    %7847 = vmatprep.subr.mxu0 0.0
    %7848 = vmatpush1.msra.mxu0 0.0
    %7849 = vmatprep.subr.mxu0 0.0
    %7850 = vmatpush1.msra.mxu0 0.0
    %7851 = vmatprep.subr.mxu0 0.0
    %7852 = vmatpush1.msra.mxu0 0.0
    %7853 = vmatprep.mubr.f32.mxu0 0.0
    %7854 = vmatmul.mubr.f32.gmra.mrb[0].mxu0 %v7787
    %v7855 = vpop.f32.mrb[0].mxu0
    %v7856 = vadd.f32 0.0, %v7855
    %v7857 = vpop.f32.mrb[0].mxu0
    %7858 = vdwg.mxu0
    %7859 = vmatprep.subr.mxu0 0.0
    %7860 = vmatpush1.msra.mxu0 %v78
    %7861 = vmatprep.subr.mxu0 0.0
    %7862 = vmatpush1.msra.mxu0 %v79
    %7863 = vmatprep.subr.mxu0 0.0
    %7864 = vmatpush1.msra.mxu0 %v80
    %7865 = vmatprep.subr.mxu0 0.0
    %7866 = vmatpush1.msra.mxu0 %v81
    %7867 = vmatprep.subr.mxu0 0.0
    %7868 = vmatpush1.msra.mxu0 0.0
    %7869 = vmatprep.subr.mxu0 0.0
    %7870 = vmatpush1.msra.mxu0 0.0
    %7871 = vmatprep.subr.mxu0 0.0
    %7872 = vmatpush1.msra.mxu0 0.0
    %7873 = vmatprep.subr.mxu0 0.0
    %7874 = vmatpush1.msra.mxu0 0.0
    %7875 = vmatprep.subr.mxu0 0.0
    %7876 = vmatpush1.msra.mxu0 0.0
    %7877 = vmatprep.subr.mxu0 0.0
    %7878 = vmatpush1.msra.mxu0 0.0
    %7879 = vmatprep.subr.mxu0 0.0
    %7880 = vmatpush1.msra.mxu0 0.0
    %7881 = vmatprep.subr.mxu0 0.0
    %7882 = vmatpush1.msra.mxu0 0.0
    %7883 = vmatprep.subr.mxu0 0.0
    %7884 = vmatpush1.msra.mxu0 0.0
    %7885 = vmatprep.subr.mxu0 0.0
    %7886 = vmatpush1.msra.mxu0 0.0
    %7887 = vmatprep.subr.mxu0 0.0
    %7888 = vmatpush1.msra.mxu0 0.0
    %7889 = vmatprep.subr.mxu0 0.0
    %7890 = vmatpush1.msra.mxu0 0.0
    %7891 = vmatprep.subr.mxu0 0.0
    %7892 = vmatpush1.msra.mxu0 0.0
    %7893 = vmatprep.subr.mxu0 0.0
    %7894 = vmatpush1.msra.mxu0 0.0
    %7895 = vmatprep.subr.mxu0 0.0
    %7896 = vmatpush1.msra.mxu0 0.0
    %7897 = vmatprep.subr.mxu0 0.0
    %7898 = vmatpush1.msra.mxu0 0.0
    %7899 = vmatprep.subr.mxu0 0.0
    %7900 = vmatpush1.msra.mxu0 0.0
    %7901 = vmatprep.subr.mxu0 0.0
    %7902 = vmatpush1.msra.mxu0 0.0
    %7903 = vmatprep.subr.mxu0 0.0
    %7904 = vmatpush1.msra.mxu0 0.0
    %7905 = vmatprep.subr.mxu0 0.0
    %7906 = vmatpush1.msra.mxu0 0.0
    %7907 = vmatprep.subr.mxu0 0.0
    %7908 = vmatpush1.msra.mxu0 0.0
    %7909 = vmatprep.subr.mxu0 0.0
    %7910 = vmatpush1.msra.mxu0 0.0
    %7911 = vmatprep.subr.mxu0 0.0
    %7912 = vmatpush1.msra.mxu0 0.0
    %7913 = vmatprep.subr.mxu0 0.0
    %7914 = vmatpush1.msra.mxu0 0.0
    %7915 = vmatprep.subr.mxu0 0.0
    %7916 = vmatpush1.msra.mxu0 0.0
    %7917 = vmatprep.subr.mxu0 0.0
    %7918 = vmatpush1.msra.mxu0 0.0
    %7919 = vmatprep.subr.mxu0 0.0
    %7920 = vmatpush1.msra.mxu0 0.0
    %7921 = vmatprep.subr.mxu0 0.0
    %7922 = vmatpush1.msra.mxu0 0.0
    %7923 = vmatprep.mubr.f32.mxu0 0.0
    %7924 = vmatmul.mubr.f32.gmra.mrb[0].mxu0 %v7277
    %v7925 = vpop.f32.mrb[0].mxu0
    %v7926 = vadd.f32 0.0, %v7925
    %v7927 = vpop.f32.mrb[0].mxu0
    %7928 = vdwg.mxu0
    %v7929 = vadd.f32 %v7856, %v7926
    %v7930 = vadd.f32 %v7929, %v102
    %v7931 = vxor.u32 %v7930, 2147483648
    %v7932 = vmul.f32 %v7931, 1.442695
    %v7933 = vpow.pop %v7932
    %v7934 = vadd.f32 %v7933, 1.0
    %v7935 = vrcp.pop %v7934
    %v7936 = vmul.f32 1.0, %v7935
    %v7937 = vadd.f32 %v7856, %v102
    %v7938 = vadd.f32 %v7926, %v4503
    %7940 = vrot.lane.b32.xlu0 %v7938, 64
    %v7941 = vpop.permute.xlu0 %7940
    %v7943 = vmul.f32 %v7936, %v7941
    %7945 = vrot.lane.b32.xlu0 %v7943, 64
    %v7946 = vpop.permute.xlu0 %7945
    %v7948 = vadd.f32 %v7937, %v7946
    %v7949 = vtanh.pop %v7948
    %v7950 = vsub.f32 1.0, %v7936
    %7952 = vrot.lane.b32.xlu0 %v7949, 96
    %v7953 = vpop.permute.xlu0 %7952
    %v7955 = vmul.f32 %v7950, %v7953
    %v7956 = vmul.f32 %v7936, %v7273
    %v7957 = vadd.f32 %v7955, %v7956
    %7959 = vrot.lane.b32.xlu0 %v7957, 96
    %v7960 = vpop.permute.xlu0 %7959
    %v7961 = vsel %vm125, %v7960, 0
    %7963 = vmatprep.subr.mxu0 0.0
    %7964 = vmatpush1.msra.mxu0 %v86
    %7965 = vmatprep.subr.mxu0 0.0
    %7966 = vmatpush1.msra.mxu0 %v87
    %7967 = vmatprep.subr.mxu0 0.0
    %7968 = vmatpush1.msra.mxu0 %v88
    %7969 = vmatprep.subr.mxu0 0.0
    %7970 = vmatpush1.msra.mxu0 %v89
    %7971 = vmatprep.subr.mxu0 0.0
    %7972 = vmatpush1.msra.mxu0 0.0
    %7973 = vmatprep.subr.mxu0 0.0
    %7974 = vmatpush1.msra.mxu0 0.0
    %7975 = vmatprep.subr.mxu0 0.0
    %7976 = vmatpush1.msra.mxu0 0.0
    %7977 = vmatprep.subr.mxu0 0.0
    %7978 = vmatpush1.msra.mxu0 0.0
    %7979 = vmatprep.subr.mxu0 0.0
    %7980 = vmatpush1.msra.mxu0 0.0
    %7981 = vmatprep.subr.mxu0 0.0
    %7982 = vmatpush1.msra.mxu0 0.0
    %7983 = vmatprep.subr.mxu0 0.0
    %7984 = vmatpush1.msra.mxu0 0.0
    %7985 = vmatprep.subr.mxu0 0.0
    %7986 = vmatpush1.msra.mxu0 0.0
    %7987 = vmatprep.subr.mxu0 0.0
    %7988 = vmatpush1.msra.mxu0 0.0
    %7989 = vmatprep.subr.mxu0 0.0
    %7990 = vmatpush1.msra.mxu0 0.0
    %7991 = vmatprep.subr.mxu0 0.0
    %7992 = vmatpush1.msra.mxu0 0.0
    %7993 = vmatprep.subr.mxu0 0.0
    %7994 = vmatpush1.msra.mxu0 0.0
    %7995 = vmatprep.subr.mxu0 0.0
    %7996 = vmatpush1.msra.mxu0 0.0
    %7997 = vmatprep.subr.mxu0 0.0
    %7998 = vmatpush1.msra.mxu0 0.0
    %7999 = vmatprep.subr.mxu0 0.0
    %8000 = vmatpush1.msra.mxu0 0.0
    %8001 = vmatprep.subr.mxu0 0.0
    %8002 = vmatpush1.msra.mxu0 0.0
    %8003 = vmatprep.subr.mxu0 0.0
    %8004 = vmatpush1.msra.mxu0 0.0
    %8005 = vmatprep.subr.mxu0 0.0
    %8006 = vmatpush1.msra.mxu0 0.0
    %8007 = vmatprep.subr.mxu0 0.0
    %8008 = vmatpush1.msra.mxu0 0.0
    %8009 = vmatprep.subr.mxu0 0.0
    %8010 = vmatpush1.msra.mxu0 0.0
    %8011 = vmatprep.subr.mxu0 0.0
    %8012 = vmatpush1.msra.mxu0 0.0
    %8013 = vmatprep.subr.mxu0 0.0
    %8014 = vmatpush1.msra.mxu0 0.0
    %8015 = vmatprep.subr.mxu0 0.0
    %8016 = vmatpush1.msra.mxu0 0.0
    %8017 = vmatprep.subr.mxu0 0.0
    %8018 = vmatpush1.msra.mxu0 0.0
    %8019 = vmatprep.subr.mxu0 0.0
    %8020 = vmatpush1.msra.mxu0 0.0
    %8021 = vmatprep.subr.mxu0 0.0
    %8022 = vmatpush1.msra.mxu0 0.0
    %8023 = vmatprep.subr.mxu0 0.0
    %8024 = vmatpush1.msra.mxu0 0.0
    %8025 = vmatprep.subr.mxu0 0.0
    %8026 = vmatpush1.msra.mxu0 0.0
    %8027 = vmatprep.mubr.f32.mxu0 0.0
    %8028 = vmatmul.mubr.f32.gmra.mrb[0].mxu0 %v7961
    %v8029 = vpop.f32.mrb[0].mxu0
    %v8030 = vadd.f32 0.0, %v8029
    %v8031 = vpop.f32.mrb[0].mxu0
    %8032 = vdwg.mxu0
    %8033 = vmatprep.subr.mxu0 0.0
    %8034 = vmatpush1.msra.mxu0 %v82
    %8035 = vmatprep.subr.mxu0 0.0
    %8036 = vmatpush1.msra.mxu0 %v83
    %8037 = vmatprep.subr.mxu0 0.0
    %8038 = vmatpush1.msra.mxu0 %v84
    %8039 = vmatprep.subr.mxu0 0.0
    %8040 = vmatpush1.msra.mxu0 %v85
    %8041 = vmatprep.subr.mxu0 0.0
    %8042 = vmatpush1.msra.mxu0 0.0
    %8043 = vmatprep.subr.mxu0 0.0
    %8044 = vmatpush1.msra.mxu0 0.0
    %8045 = vmatprep.subr.mxu0 0.0
    %8046 = vmatpush1.msra.mxu0 0.0
    %8047 = vmatprep.subr.mxu0 0.0
    %8048 = vmatpush1.msra.mxu0 0.0
    %8049 = vmatprep.subr.mxu0 0.0
    %8050 = vmatpush1.msra.mxu0 0.0
    %8051 = vmatprep.subr.mxu0 0.0
    %8052 = vmatpush1.msra.mxu0 0.0
    %8053 = vmatprep.subr.mxu0 0.0
    %8054 = vmatpush1.msra.mxu0 0.0
    %8055 = vmatprep.subr.mxu0 0.0
    %8056 = vmatpush1.msra.mxu0 0.0
    %8057 = vmatprep.subr.mxu0 0.0
    %8058 = vmatpush1.msra.mxu0 0.0
    %8059 = vmatprep.subr.mxu0 0.0
    %8060 = vmatpush1.msra.mxu0 0.0
    %8061 = vmatprep.subr.mxu0 0.0
    %8062 = vmatpush1.msra.mxu0 0.0
    %8063 = vmatprep.subr.mxu0 0.0
    %8064 = vmatpush1.msra.mxu0 0.0
    %8065 = vmatprep.subr.mxu0 0.0
    %8066 = vmatpush1.msra.mxu0 0.0
    %8067 = vmatprep.subr.mxu0 0.0
    %8068 = vmatpush1.msra.mxu0 0.0
    %8069 = vmatprep.subr.mxu0 0.0
    %8070 = vmatpush1.msra.mxu0 0.0
    %8071 = vmatprep.subr.mxu0 0.0
    %8072 = vmatpush1.msra.mxu0 0.0
    %8073 = vmatprep.subr.mxu0 0.0
    %8074 = vmatpush1.msra.mxu0 0.0
    %8075 = vmatprep.subr.mxu0 0.0
    %8076 = vmatpush1.msra.mxu0 0.0
    %8077 = vmatprep.subr.mxu0 0.0
    %8078 = vmatpush1.msra.mxu0 0.0
    %8079 = vmatprep.subr.mxu0 0.0
    %8080 = vmatpush1.msra.mxu0 0.0
    %8081 = vmatprep.subr.mxu0 0.0
    %8082 = vmatpush1.msra.mxu0 0.0
    %8083 = vmatprep.subr.mxu0 0.0
    %8084 = vmatpush1.msra.mxu0 0.0
    %8085 = vmatprep.subr.mxu0 0.0
    %8086 = vmatpush1.msra.mxu0 0.0
    %8087 = vmatprep.subr.mxu0 0.0
    %8088 = vmatpush1.msra.mxu0 0.0
    %8089 = vmatprep.subr.mxu0 0.0
    %8090 = vmatpush1.msra.mxu0 0.0
    %8091 = vmatprep.subr.mxu0 0.0
    %8092 = vmatpush1.msra.mxu0 0.0
    %8093 = vmatprep.subr.mxu0 0.0
    %8094 = vmatpush1.msra.mxu0 0.0
    %8095 = vmatprep.subr.mxu0 0.0
    %8096 = vmatpush1.msra.mxu0 0.0
    %8097 = vmatprep.mubr.f32.mxu0 0.0
    %8098 = vmatmul.mubr.f32.gmra.mrb[0].mxu0 %v7451
    %v8099 = vpop.f32.mrb[0].mxu0
    %v8100 = vadd.f32 0.0, %v8099
    %v8101 = vpop.f32.mrb[0].mxu0
    %8102 = vdwg.mxu0
    %v8103 = vadd.f32 %v8030, %v8100
    %v8104 = vadd.f32 %v8103, %v103
    %v8105 = vxor.u32 %v8104, 2147483648
    %v8106 = vmul.f32 %v8105, 1.442695
    %v8107 = vpow.pop %v8106
    %v8108 = vadd.f32 %v8107, 1.0
    %v8109 = vrcp.pop %v8108
    %v8110 = vmul.f32 1.0, %v8109
    %v8111 = vadd.f32 %v8030, %v103
    %v8112 = vadd.f32 %v8100, %v4685
    %8114 = vrot.lane.b32.xlu0 %v8112, 64
    %v8115 = vpop.permute.xlu0 %8114
    %v8117 = vmul.f32 %v8110, %v8115
    %8119 = vrot.lane.b32.xlu0 %v8117, 64
    %v8120 = vpop.permute.xlu0 %8119
    %v8122 = vadd.f32 %v8111, %v8120
    %v8123 = vtanh.pop %v8122
    %v8124 = vsub.f32 1.0, %v8110
    %8126 = vrot.lane.b32.xlu0 %v8123, 96
    %v8127 = vpop.permute.xlu0 %8126
    %v8129 = vmul.f32 %v8124, %v8127
    %v8130 = vmul.f32 %v8110, %v7447
    %v8131 = vadd.f32 %v8129, %v8130
    %8133 = vrot.lane.b32.xlu0 %v8131, 96
    %v8134 = vpop.permute.xlu0 %8133
    %v8135 = vsel %vm125, %v8134, 0
    %8137 = vmatprep.subr.mxu0 0.0
    %8138 = vmatpush1.xpose.msra.mxu0 %v4265
    %8139 = vmatprep.subr.mxu0 0.0
    %8140 = vmatpush1.xpose.msra.mxu0 0.0
    %8141 = vmatprep.subr.mxu0 0.0
    %8142 = vmatpush1.xpose.msra.mxu0 0.0
    %8143 = vmatprep.subr.mxu0 0.0
    %8144 = vmatpush1.xpose.msra.mxu0 0.0
    %8145 = vmatprep.subr.mxu0 0.0
    %8146 = vmatpush1.xpose.msra.mxu0 0.0
    %8147 = vmatprep.subr.mxu0 0.0
    %8148 = vmatpush1.xpose.msra.mxu0 0.0
    %8149 = vmatprep.subr.mxu0 0.0
    %8150 = vmatpush1.xpose.msra.mxu0 0.0
    %8151 = vmatprep.subr.mxu0 0.0
    %8152 = vmatpush1.xpose.msra.mxu0 0.0
    %8153 = vmatprep.subr.mxu0 0.0
    %8154 = vmatpush1.xpose.msra.mxu0 0.0
    %8155 = vmatprep.subr.mxu0 0.0
    %8156 = vmatpush1.xpose.msra.mxu0 0.0
    %8157 = vmatprep.subr.mxu0 0.0
    %8158 = vmatpush1.xpose.msra.mxu0 0.0
    %8159 = vmatprep.subr.mxu0 0.0
    %8160 = vmatpush1.xpose.msra.mxu0 0.0
    %8161 = vmatprep.subr.mxu0 0.0
    %8162 = vmatpush1.xpose.msra.mxu0 0.0
    %8163 = vmatprep.subr.mxu0 0.0
    %8164 = vmatpush1.xpose.msra.mxu0 0.0
    %8165 = vmatprep.subr.mxu0 0.0
    %8166 = vmatpush1.xpose.msra.mxu0 0.0
    %8167 = vmatprep.subr.mxu0 0.0
    %8168 = vmatpush1.xpose.msra.mxu0 0.0
    %8169 = vmatprep.subr.mxu0 0.0
    %8170 = vmatpush1.xpose.msra.mxu0 0.0
    %8171 = vmatprep.subr.mxu0 0.0
    %8172 = vmatpush1.xpose.msra.mxu0 0.0
    %8173 = vmatprep.subr.mxu0 0.0
    %8174 = vmatpush1.xpose.msra.mxu0 0.0
    %8175 = vmatprep.subr.mxu0 0.0
    %8176 = vmatpush1.xpose.msra.mxu0 0.0
    %8177 = vmatprep.subr.mxu0 0.0
    %8178 = vmatpush1.xpose.msra.mxu0 0.0
    %8179 = vmatprep.subr.mxu0 0.0
    %8180 = vmatpush1.xpose.msra.mxu0 0.0
    %8181 = vmatprep.subr.mxu0 0.0
    %8182 = vmatpush1.xpose.msra.mxu0 0.0
    %8183 = vmatprep.subr.mxu0 0.0
    %8184 = vmatpush1.xpose.msra.mxu0 0.0
    %8185 = vmatprep.subr.mxu0 0.0
    %8186 = vmatpush1.xpose.msra.mxu0 0.0
    %8187 = vmatprep.subr.mxu0 0.0
    %8188 = vmatpush1.xpose.msra.mxu0 0.0
    %8189 = vmatprep.subr.mxu0 0.0
    %8190 = vmatpush1.xpose.msra.mxu0 0.0
    %8191 = vmatprep.subr.mxu0 0.0
    %8192 = vmatpush1.xpose.msra.mxu0 0.0
    %8193 = vmatprep.subr.mxu0 0.0
    %8194 = vmatpush1.xpose.msra.mxu0 0.0
    %8195 = vmatprep.subr.mxu0 0.0
    %8196 = vmatpush1.xpose.msra.mxu0 0.0
    %8197 = vmatprep.subr.mxu0 0.0
    %8198 = vmatpush1.xpose.msra.mxu0 0.0
    %8199 = vmatprep.subr.mxu0 0.0
    %8200 = vmatpush1.xpose.msra.mxu0 0.0
    %8201 = vmatprep.mubr.f32.mxu0 0.0
    %8202 = vmatmul.mubr.f32.gmra.mrb[0].mxu0 %v8135
    %v8203 = vpop.f32.mrb[0].mxu0
    %v8204 = vadd.f32 0.0, %v8203
    %v8205 = vpop.f32.mrb[0].mxu0
    %8206 = vdwg.mxu0
    %v8207 = vsel %vm4785, %v8204, -inf
    %8208 = vmax.xlane.f32.xlu0 %v8207
    %v8209 = vpop.xlane.xlu0 %8208
    %v8210 = vsub.f32 %v8204, %v8209
    %v8211 = vmul.f32 %v8210, 1.442695
    %v8212 = vpow.pop %v8211
    %v8213 = vsel %vm4785, %v8212, 0.0
    %8214 = vadd.xlane.f32.xlu0 %v8213
    %v8215 = vpop.xlane.xlu0 %8214
    %v8216 = vrcp.pop %v8215
    %v8217 = vmul.f32 %v8212, %v8216
    %v8219 = vsel %vm4797, %v8217, 0
    %8221 = vmatprep.subr.mxu0 0.0
    %8222 = vmatpush1.msra.mxu0 %v4334
    %8223 = vmatprep.subr.mxu0 0.0
    %8224 = vmatpush1.msra.mxu0 0.0
    %8225 = vmatprep.subr.mxu0 0.0
    %8226 = vmatpush1.msra.mxu0 0.0
    %8227 = vmatprep.subr.mxu0 0.0
    %8228 = vmatpush1.msra.mxu0 0.0
    %8229 = vmatprep.subr.mxu0 0.0
    %8230 = vmatpush1.msra.mxu0 0.0
    %8231 = vmatprep.subr.mxu0 0.0
    %8232 = vmatpush1.msra.mxu0 0.0
    %8233 = vmatprep.subr.mxu0 0.0
    %8234 = vmatpush1.msra.mxu0 0.0
    %8235 = vmatprep.subr.mxu0 0.0
    %8236 = vmatpush1.msra.mxu0 0.0
    %8237 = vmatprep.subr.mxu0 0.0
    %8238 = vmatpush1.msra.mxu0 0.0
    %8239 = vmatprep.subr.mxu0 0.0
    %8240 = vmatpush1.msra.mxu0 0.0
    %8241 = vmatprep.subr.mxu0 0.0
    %8242 = vmatpush1.msra.mxu0 0.0
    %8243 = vmatprep.subr.mxu0 0.0
    %8244 = vmatpush1.msra.mxu0 0.0
    %8245 = vmatprep.subr.mxu0 0.0
    %8246 = vmatpush1.msra.mxu0 0.0
    %8247 = vmatprep.subr.mxu0 0.0
    %8248 = vmatpush1.msra.mxu0 0.0
    %8249 = vmatprep.subr.mxu0 0.0
    %8250 = vmatpush1.msra.mxu0 0.0
    %8251 = vmatprep.subr.mxu0 0.0
    %8252 = vmatpush1.msra.mxu0 0.0
    %8253 = vmatprep.subr.mxu0 0.0
    %8254 = vmatpush1.msra.mxu0 0.0
    %8255 = vmatprep.subr.mxu0 0.0
    %8256 = vmatpush1.msra.mxu0 0.0
    %8257 = vmatprep.subr.mxu0 0.0
    %8258 = vmatpush1.msra.mxu0 0.0
    %8259 = vmatprep.subr.mxu0 0.0
    %8260 = vmatpush1.msra.mxu0 0.0
    %8261 = vmatprep.subr.mxu0 0.0
    %8262 = vmatpush1.msra.mxu0 0.0
    %8263 = vmatprep.subr.mxu0 0.0
    %8264 = vmatpush1.msra.mxu0 0.0
    %8265 = vmatprep.subr.mxu0 0.0
    %8266 = vmatpush1.msra.mxu0 0.0
    %8267 = vmatprep.subr.mxu0 0.0
    %8268 = vmatpush1.msra.mxu0 0.0
    %8269 = vmatprep.subr.mxu0 0.0
    %8270 = vmatpush1.msra.mxu0 0.0
    %8271 = vmatprep.subr.mxu0 0.0
    %8272 = vmatpush1.msra.mxu0 0.0
    %8273 = vmatprep.subr.mxu0 0.0
    %8274 = vmatpush1.msra.mxu0 0.0
    %8275 = vmatprep.subr.mxu0 0.0
    %8276 = vmatpush1.msra.mxu0 0.0
    %8277 = vmatprep.subr.mxu0 0.0
    %8278 = vmatpush1.msra.mxu0 0.0
    %8279 = vmatprep.subr.mxu0 0.0
    %8280 = vmatpush1.msra.mxu0 0.0
    %8281 = vmatprep.subr.mxu0 0.0
    %8282 = vmatpush1.msra.mxu0 0.0
    %8283 = vmatprep.subr.mxu0 0.0
    %8284 = vmatpush1.msra.mxu0 0.0
    %8285 = vmatprep.mubr.f32.mxu0 0.0
    %8286 = vmatmul.mubr.f32.gmra.mrb[0].mxu0 %v8219
    %v8287 = vpop.f32.mrb[0].mxu0
    %v8288 = vadd.f32 0.0, %v8287
    %v8289 = vpop.f32.mrb[0].mxu0
    %8290 = vdwg.mxu0
    %8291 = vmatprep.subr.mxu0 0.0
    %8292 = vmatpush1.msra.mxu0 %v112
    %8293 = vmatprep.subr.mxu0 0.0
    %8294 = vmatpush1.msra.mxu0 %v113
    %8295 = vmatprep.subr.mxu0 0.0
    %8296 = vmatpush1.msra.mxu0 %v114
    %8297 = vmatprep.subr.mxu0 0.0
    %8298 = vmatpush1.msra.mxu0 %v115
    %8299 = vmatprep.subr.mxu0 0.0
    %8300 = vmatpush1.msra.mxu0 0.0
    %8301 = vmatprep.subr.mxu0 0.0
    %8302 = vmatpush1.msra.mxu0 0.0
    %8303 = vmatprep.subr.mxu0 0.0
    %8304 = vmatpush1.msra.mxu0 0.0
    %8305 = vmatprep.subr.mxu0 0.0
    %8306 = vmatpush1.msra.mxu0 0.0
    %8307 = vmatprep.subr.mxu0 0.0
    %8308 = vmatpush1.msra.mxu0 0.0
    %8309 = vmatprep.subr.mxu0 0.0
    %8310 = vmatpush1.msra.mxu0 0.0
    %8311 = vmatprep.subr.mxu0 0.0
    %8312 = vmatpush1.msra.mxu0 0.0
    %8313 = vmatprep.subr.mxu0 0.0
    %8314 = vmatpush1.msra.mxu0 0.0
    %8315 = vmatprep.subr.mxu0 0.0
    %8316 = vmatpush1.msra.mxu0 0.0
    %8317 = vmatprep.subr.mxu0 0.0
    %8318 = vmatpush1.msra.mxu0 0.0
    %8319 = vmatprep.subr.mxu0 0.0
    %8320 = vmatpush1.msra.mxu0 0.0
    %8321 = vmatprep.subr.mxu0 0.0
    %8322 = vmatpush1.msra.mxu0 0.0
    %8323 = vmatprep.subr.mxu0 0.0
    %8324 = vmatpush1.msra.mxu0 0.0
    %8325 = vmatprep.subr.mxu0 0.0
    %8326 = vmatpush1.msra.mxu0 0.0
    %8327 = vmatprep.subr.mxu0 0.0
    %8328 = vmatpush1.msra.mxu0 0.0
    %8329 = vmatprep.subr.mxu0 0.0
    %8330 = vmatpush1.msra.mxu0 0.0
    %8331 = vmatprep.subr.mxu0 0.0
    %8332 = vmatpush1.msra.mxu0 0.0
    %8333 = vmatprep.subr.mxu0 0.0
    %8334 = vmatpush1.msra.mxu0 0.0
    %8335 = vmatprep.subr.mxu0 0.0
    %8336 = vmatpush1.msra.mxu0 0.0
    %8337 = vmatprep.subr.mxu0 0.0
    %8338 = vmatpush1.msra.mxu0 0.0
    %8339 = vmatprep.subr.mxu0 0.0
    %8340 = vmatpush1.msra.mxu0 0.0
    %8341 = vmatprep.subr.mxu0 0.0
    %8342 = vmatpush1.msra.mxu0 0.0
    %8343 = vmatprep.subr.mxu0 0.0
    %8344 = vmatpush1.msra.mxu0 0.0
    %8345 = vmatprep.subr.mxu0 0.0
    %8346 = vmatpush1.msra.mxu0 0.0
    %8347 = vmatprep.subr.mxu0 0.0
    %8348 = vmatpush1.msra.mxu0 0.0
    %8349 = vmatprep.subr.mxu0 0.0
    %8350 = vmatpush1.msra.mxu0 0.0
    %8351 = vmatprep.subr.mxu0 0.0
    %8352 = vmatpush1.msra.mxu0 0.0
    %8353 = vmatprep.subr.mxu0 0.0
    %8354 = vmatpush1.msra.mxu0 0.0
    %8355 = vmatprep.mubr.f32.mxu0 0.0
    %8356 = vmatmul.mubr.f32.gmra.mrb[0].mxu0 %v8135
    %v8357 = vpop.f32.mrb[0].mxu0
    %v8358 = vadd.f32 %v8288, %v8357
    %v8359 = vpop.f32.mrb[0].mxu0
    %8360 = vdwg.mxu0
    %v8361 = vadd.f32 %v8358, %v121
    %v8362 = vtanh.pop %v8361
    %v8364 = vsel %vm4342, %v8362, 0
    %8366 = vmatprep.subr.mxu0 0.0
    %8367 = vmatpush1.msra.mxu0 %v104
    %8368 = vmatprep.subr.mxu0 0.0
    %8369 = vmatpush1.msra.mxu0 %v105
    %8370 = vmatprep.subr.mxu0 0.0
    %8371 = vmatpush1.msra.mxu0 %v106
    %8372 = vmatprep.subr.mxu0 0.0
    %8373 = vmatpush1.msra.mxu0 %v107
    %8374 = vmatprep.subr.mxu0 0.0
    %8375 = vmatpush1.msra.mxu0 %v108
    %8376 = vmatprep.subr.mxu0 0.0
    %8377 = vmatpush1.msra.mxu0 %v109
    %8378 = vmatprep.subr.mxu0 0.0
    %8379 = vmatpush1.msra.mxu0 %v110
    %8380 = vmatprep.subr.mxu0 0.0
    %8381 = vmatpush1.msra.mxu0 %v111
    %8382 = vmatprep.subr.mxu0 0.0
    %8383 = vmatpush1.msra.mxu0 0.0
    %8384 = vmatprep.subr.mxu0 0.0
    %8385 = vmatpush1.msra.mxu0 0.0
    %8386 = vmatprep.subr.mxu0 0.0
    %8387 = vmatpush1.msra.mxu0 0.0
    %8388 = vmatprep.subr.mxu0 0.0
    %8389 = vmatpush1.msra.mxu0 0.0
    %8390 = vmatprep.subr.mxu0 0.0
    %8391 = vmatpush1.msra.mxu0 0.0
    %8392 = vmatprep.subr.mxu0 0.0
    %8393 = vmatpush1.msra.mxu0 0.0
    %8394 = vmatprep.subr.mxu0 0.0
    %8395 = vmatpush1.msra.mxu0 0.0
    %8396 = vmatprep.subr.mxu0 0.0
    %8397 = vmatpush1.msra.mxu0 0.0
    %8398 = vmatprep.subr.mxu0 0.0
    %8399 = vmatpush1.msra.mxu0 0.0
    %8400 = vmatprep.subr.mxu0 0.0
    %8401 = vmatpush1.msra.mxu0 0.0
    %8402 = vmatprep.subr.mxu0 0.0
    %8403 = vmatpush1.msra.mxu0 0.0
    %8404 = vmatprep.subr.mxu0 0.0
    %8405 = vmatpush1.msra.mxu0 0.0
    %8406 = vmatprep.subr.mxu0 0.0
    %8407 = vmatpush1.msra.mxu0 0.0
    %8408 = vmatprep.subr.mxu0 0.0
    %8409 = vmatpush1.msra.mxu0 0.0
    %8410 = vmatprep.subr.mxu0 0.0
    %8411 = vmatpush1.msra.mxu0 0.0
    %8412 = vmatprep.subr.mxu0 0.0
    %8413 = vmatpush1.msra.mxu0 0.0
    %8414 = vmatprep.subr.mxu0 0.0
    %8415 = vmatpush1.msra.mxu0 0.0
    %8416 = vmatprep.subr.mxu0 0.0
    %8417 = vmatpush1.msra.mxu0 0.0
    %8418 = vmatprep.subr.mxu0 0.0
    %8419 = vmatpush1.msra.mxu0 0.0
    %8420 = vmatprep.subr.mxu0 0.0
    %8421 = vmatpush1.msra.mxu0 0.0
    %8422 = vmatprep.subr.mxu0 0.0
    %8423 = vmatpush1.msra.mxu0 0.0
    %8424 = vmatprep.subr.mxu0 0.0
    %8425 = vmatpush1.msra.mxu0 0.0
    %8426 = vmatprep.subr.mxu0 0.0
    %8427 = vmatpush1.msra.mxu0 0.0
    %8428 = vmatprep.subr.mxu0 0.0
    %8429 = vmatpush1.msra.mxu0 0.0
    %8430 = vmatprep.mubr.f32.mxu0 0.0
    %8431 = vmatmul.mubr.f32.gmra.mrb[0].mxu0 %v8364
    %v8432 = vpop.f32.mrb[0].mxu0
    %v8433 = vadd.f32 %v120, %v8432
    %v8434 = vpop.f32.mrb[0].mxu0
    %8435 = vdwg.mxu0
    %v8436 = vsel %vm5016, %v8433, -inf
    %8437 = vmax.xlane.f32.xlu0 %v8436
    %v8438 = vpop.xlane.xlu0 %8437
    %v8439 = vsub.f32 %v8433, %v8438
    %v8440 = vmul.f32 %v8439, 1.442695
    %v8441 = vpow.pop %v8440
    %v8442 = vsel %vm5016, %v8441, 0.0
    %8443 = vadd.xlane.f32.xlu0 %v8442
    %v8444 = vpop.xlane.xlu0 %8443
    %v8445 = vrcp.pop %v8444
    %v8446 = vmul.f32 1.0, %v8445
    %vm8447 = vcmp.eq.f32.partialorder %v8433, %v8438
    %v8448 = vsel %vm8447, %v4338, 64
    %v8449 = vsel %vm5016, %v8448, 2147483647
    %v8450 = vand.u32 %v8449, 65535
    %v8451 = vshra.s32 %v8449, 16
    %v8452 = vcvt.s32.f32 %v8450
    %v8453 = vcvt.s32.f32 %v8451
    %8454 = vmin.xlane.f32.xlu0 %v8453
    %v8455 = vpop.xlane.xlu0 %8454
    %vm8456 = vcmp.eq.f32.partialorder %v8453, %v8455
    %v8457 = vsel %vm8456, %v8452, inf
    %8458 = vmin.xlane.f32.xlu0 %v8457
    %v8459 = vpop.xlane.xlu0 %8458
    %v8460 = vcvt.f32.s32 %v8459
    %v8461 = vcvt.f32.s32 %v8455
    %v8462 = vshll.u32 %v8461, 16
    %v8463 = vadd.s32 %v8462, %v8460
    %vm8464 = vcmp.eq.s32.totalorder %v4338, 5
    %v8465 = vsel %vm8464, %v8463, %v7781
    %v8466 = vsel %vm8464, %v8446, %v7782
    %vm8467 = vcmask 40960
    %8468 = vst.msk [vmem:[#allocation5] sm:$0x1] %vm8467, %v8465
    %8469 = vst.msk [vmem:[#allocation6] sm:$0x1] %vm8467, %v8466
    // Predicated region
    $region26: #{greedy_search.1} parent=1 // pred_check
      _
    $region27: #{greedy_search.1} parent=1 // pred_check_branch
      %8471 = sbr.rel (0) target = $region29
    $region28: #{greedy_search.1} parent=1 // pred_region
      %s8473 = ssub.s32 16, 16
      %8474 = vsyncadd [#allocation4], %s8473
      %s8476 = sshll.u32 [#allocation5], 4
      %s8477 = int_to_ptr.vmem [resolvable:$true] %s8476
      %8479 = dma.vmem_to_hbm [thread:$0]  %s8477, 16, %s5, [#allocation4]
    $region29: #{greedy_search.1} parent=1 // pred_fallthru
      _
    // Predicated region
    $region30: #{greedy_search.1} parent=1 // pred_check
      _
    $region31: #{greedy_search.1} parent=1 // pred_check_branch
      %8481 = sbr.rel (0) target = $region33
    $region32: #{greedy_search.1} parent=1 // pred_region
      %s8483 = ssub.s32 16, 16
      %8484 = vsyncadd [#allocation7], %s8483
      %s8486 = sshll.u32 [#allocation6], 4
      %s8487 = int_to_ptr.vmem [resolvable:$true] %s8486
      %8489 = dma.vmem_to_hbm [thread:$0]  %s8487, 16, %s6, [#allocation7]
    $region33: #{greedy_search.1} parent=1 // pred_fallthru
      _
    // Predicated region
    $region34: #{greedy_search.1} parent=1 // pred_check
      _
    $region35: #{greedy_search.1} parent=1 // pred_check_branch
      %8491 = sbr.rel (0) target = $region37
    $region36: #{greedy_search.1} parent=1 // pred_region
      %8492 = dma.done [#allocation4], 16
    $region37: #{greedy_search.1} parent=1 // pred_fallthru
      _
    // Predicated region
    $region38: #{greedy_search.1} parent=1 // pred_check
      _
    $region39: #{greedy_search.1} parent=1 // pred_check_branch
      %8494 = sbr.rel (0) target = $region41
    $region40: #{greedy_search.1} parent=1 // pred_region
      %8495 = dma.done [#allocation7], 16
    $region41: #{greedy_search.1} parent=1 // pred_fallthru
      _
    %8496 = vsyncpa [#allocation3], 1
    %8497 = vsyncpa [#allocation4], 1
    %8498 = vsyncpa [#allocation7], 1

</llo_original>
